<compile_context>
chip_gen: v7x
topology: tpu7x:2x2x1
jax: 0.10.0
libtpu: 0.0.40
codegen_flags: <defaults>
</compile_context>

<pallas_src>
import functools
import math

import jax
import jax.numpy as jnp
from jax.experimental import pallas as pl
from jax.experimental.pallas import tpu as pltpu

VMEM_LIMIT_BYTES = 32 * 1024 * 1024   # headroom under v7x's 64 MiB VMEM (128 MiB on v5e/v6e)

# Operand dtype for every matmul (kernel + reference).  f32 keeps the script portable (the host
# dot thunk used by the sandbox does not support bf16 x bf16 = f32); use jnp.bfloat16 on real TPU
# hardware for ~2-4x MXU throughput.
MATMUL_DTYPE = jnp.float32


def _gelu(x):
    # tanh-approximated GELU. TODO(synk): torch nn.GELU uses the exact erf form; the tanh
    # approximation (also used by the pure-JAX reference below) differs by ~1e-3.
    c = 0.7978845608028654  # sqrt(2 / pi)
    return 0.5 * x * (1.0 + jnp.tanh(c * (x + 0.044715 * x * x * x)))


# ---------------------------------------------------------------------------
# Kernel 1: BonzEmbedding  (DMA row-gather + scale Linear + LayerNorm), tiled over tokens.
# ---------------------------------------------------------------------------
def _embed_kernel(ids_ref, pids_ref,                   # scalar-prefetch (SMEM): flat token / pos ids
                  tok_hbm, pos_hbm,                    # embedding tables, left in HBM (pl.ANY)
                  w_ref, b_ref, gamma_ref, beta_ref,   # scale Linear (W^T) + LayerNorm params
                  out_ref,                             # (TILE_N, emb_dim) f32
                  tok_buf, pos_buf, sems,              # VMEM gather buffers + DMA semaphores
                  *, eps, tile_n, use_scale):
    base = pl.program_id(0) * tile_n

    # Gather only the rows this tile needs, straight from HBM (no one-hot matmul).
    def _issue(r, carry):
        tid = ids_ref[base + r]
        pid = pids_ref[base + r]
        pltpu.make_async_copy(tok_hbm.at[pl.ds(tid, 1)], tok_buf.at[pl.ds(r, 1)], sems.at[0]).start()
        pltpu.make_async_copy(pos_hbm.at[pl.ds(pid, 1)], pos_buf.at[pl.ds(r, 1)], sems.at[1]).start()
        return carry

    jax.lax.fori_loop(0, tile_n, _issue, 0)

    # Drain all outstanding row copies (wait amounts match the issued per-row transfer sizes).
    def _drain(r, carry):
        pltpu.make_async_copy(tok_hbm.at[pl.ds(0, 1)], tok_buf.at[pl.ds(r, 1)], sems.at[0]).wait()
        pltpu.make_async_copy(pos_hbm.at[pl.ds(0, 1)], pos_buf.at[pl.ds(r, 1)], sems.at[1]).wait()
        return carry

    jax.lax.fori_loop(0, tile_n, _drain, 0)

    x = tok_buf[...] + pos_buf[...]                    # (TILE_N, word_dim) f32

    if use_scale:                                      # scale Linear (absent when emb_dim == word_dim)
        y = jnp.dot(x.astype(w_ref.dtype), w_ref[...],
                    preferred_element_type=jnp.float32) + b_ref[...]
    else:
        y = x

    # LayerNorm over emb_dim, in f32.
    mean = jnp.mean(y, axis=-1, keepdims=True)
    var = jnp.mean(jnp.square(y - mean), axis=-1, keepdims=True)
    out_ref[...] = (y - mean) * jax.lax.rsqrt(var + eps) * gamma_ref[...] + beta_ref[...]


def bonz_embedding_pallas(input_ids, positional_ids, prepped, cfg, *, tile_n=128):
    batch, seq = input_ids.shape
    dw, e, eps = cfg["word_dim"], cfg["emb_dim"], cfg["eps"]
    use_scale = cfg["emb_dim"] != cfg["word_dim"]
    n = batch * seq
    tile_n = min(tile_n, n)
    assert n % tile_n == 0 and tile_n % 8 == 0
    # Lane-dense layout: word_dim / emb_dim must be multiples of 128.
    assert dw % 128 == 0 and e % 128 == 0

    ids = input_ids.reshape(n).astype(jnp.int32)
    pids = positional_ids.reshape(n).astype(jnp.int32)

    cost = pl.CostEstimate(
        flops=2 * n * dw * e,
        transcendentals=n,
        bytes_accessed=n * 8 + 2 * n * dw * 4 + dw * e * 4 + 3 * e * 4 + n * e * 4,
    )

    out = pl.pallas_call(
        functools.partial(_embed_kernel, eps=eps, tile_n=tile_n, use_scale=use_scale),
        out_shape=jax.ShapeDtypeStruct((n, e), jnp.float32),
        grid_spec=pltpu.PrefetchScalarGridSpec(
            num_scalar_prefetch=2,
            grid=(n // tile_n,),
            in_specs=[
                pl.BlockSpec(memory_space=pl.ANY),                     # token table: stays in HBM
                pl.BlockSpec(memory_space=pl.ANY),                     # positional table: stays in HBM
                pl.BlockSpec((dw, e), lambda t, ids, pids: (0, 0)),    # W^T, loaded once
                pl.BlockSpec((1, e), lambda t, ids, pids: (0, 0)),
                pl.BlockSpec((1, e), lambda t, ids, pids: (0, 0)),
                pl.BlockSpec((1, e), lambda t, ids, pids: (0, 0)),
            ],
            out_specs=pl.BlockSpec((tile_n, e), lambda t, ids, pids: (t, 0)),
            scratch_shapes=[
                pltpu.VMEM((tile_n, dw), jnp.float32),
                pltpu.VMEM((tile_n, dw), jnp.float32),
                pltpu.SemaphoreType.DMA((2,)),
            ],
        ),
        compiler_params=pltpu.CompilerParams(
            dimension_semantics=("parallel",),
            vmem_limit_bytes=VMEM_LIMIT_BYTES),
        cost_estimate=cost,
    )(ids, pids, prepped["tok_tab"], prepped["pos_tab"],
      prepped["scale_w_t"], prepped["scale_b"], prepped["emb_gamma"], prepped["emb_beta"])
    return out.reshape(batch, seq, e)


# ---------------------------------------------------------------------------
# Kernel 2: generic row-tiled dense layer  y = x @ W (+ b), optional GELU / GLU-GELU epilogue.
# Used for the (fused) grouped 1x1 convs (as block-diagonal dense weights), the feed-forward and
# the classification head.
# ---------------------------------------------------------------------------
def _linear_kernel(x_ref, w_ref, b_ref, o_ref, *, epilogue):
    y = jnp.dot(x_ref[...].astype(w_ref.dtype), w_ref[...],
                preferred_element_type=jnp.float32) + b_ref[...]
    if epilogue == "gelu":
        y = _gelu(y)
    elif epilogue == "glu_gelu":            # GLU: gelu(first half) * second half
        half = y.shape[-1] // 2
        y = _gelu(y[:, :half]) * y[:, half:]
    o_ref[...] = y


def linear_pallas(x, w, b_row, *, epilogue="none", tile_n=128):
    n, din = x.shape
    dout = w.shape[1]
    out_dim = dout // 2 if epilogue == "glu_gelu" else dout
    tile_n = min(tile_n, n)
    assert n % tile_n == 0
    cost = pl.CostEstimate(
        flops=2 * n * din * dout,
        transcendentals=n * out_dim if epilogue != "none" else 0,
        bytes_accessed=n * din * 4 + din * dout * 4 + n * out_dim * 4,
    )
    return pl.pallas_call(
        functools.partial(_linear_kernel, epilogue=epilogue),
        out_shape=jax.ShapeDtypeStruct((n, out_dim), jnp.float32),
        grid=(n // tile_n,),
        in_specs=[
            pl.BlockSpec((tile_n, din), lambda i: (i, 0)),
            pl.BlockSpec((din, dout), lambda i: (0, 0)),
            pl.BlockSpec((1, dout), lambda i: (0, 0)),
        ],
        out_specs=pl.BlockSpec((tile_n, out_dim), lambda i: (i, 0)),
        compiler_params=pltpu.CompilerParams(
            dimension_semantics=("parallel",),
            vmem_limit_bytes=VMEM_LIMIT_BYTES),
        cost_estimate=cost,
    )(x, w, b_row)


# ---------------------------------------------------------------------------
# Kernel 3: Linformer sequence projection   out[b] = P^T @ x[b]   (shared project_k).
# ---------------------------------------------------------------------------
def _seq_project_kernel(x_ref, pt_ref, o_ref):
    o_ref[...] = jnp.dot(pt_ref[...], x_ref[...].astype(pt_ref.dtype),
                         preferred_element_type=jnp.float32)


def seq_project_pallas(x, p_t):
    b, s, e = x.shape
    kd = p_t.shape[0]
    cost = pl.CostEstimate(flops=2 * b * kd * s * e, transcendentals=0,
                           bytes_accessed=b * s * e * 4 + kd * s * 4 + b * kd * e * 4)
    return pl.pallas_call(
        _seq_project_kernel,
        out_shape=jax.ShapeDtypeStruct((b, kd, e), jnp.float32),
        grid=(b,),
        in_specs=[pl.BlockSpec((None, s, e), lambda i: (i, 0, 0)),
                  pl.BlockSpec((kd, s), lambda i: (0, 0))],
        out_specs=pl.BlockSpec((None, kd, e), lambda i: (i, 0, 0)),
        compiler_params=pltpu.CompilerParams(
            dimension_semantics=("parallel",),
            vmem_limit_bytes=VMEM_LIMIT_BYTES),
        cost_estimate=cost,
    )(x, p_t)


# ---------------------------------------------------------------------------
# Kernel 4: attention core per (batch, head): softmax(q k^T / sqrt(dh)) v.
# ---------------------------------------------------------------------------
def _attn_core_kernel(q_ref, k_ref, v_ref, o_ref, *, sm_scale):
    q = q_ref[...].astype(MATMUL_DTYPE)
    k = k_ref[...].astype(MATMUL_DTYPE)
    v = v_ref[...].astype(MATMUL_DTYPE)
    dots = jax.lax.dot_general(q, k, (((1,), (1,)), ((), ())),
                               preferred_element_type=jnp.float32) * sm_scale   # (S, Kd)
    m = jnp.max(dots, axis=-1, keepdims=True)
    p = jnp.exp(dots - m)
    attn = p / jnp.sum(p, axis=-1, keepdims=True)
    o_ref[...] = jnp.dot(attn.astype(MATMUL_DTYPE), v, preferred_element_type=jnp.float32)


def attn_core_pallas(q, k, v, *, sm_scale):
    bh, s, dh = q.shape
    kd = k.shape[1]
    cost = pl.CostEstimate(flops=4 * bh * s * kd * dh, transcendentals=bh * s * kd,
                           bytes_accessed=(q.size + k.size + v.size + q.size) * 4)
    return pl.pallas_call(
        functools.partial(_attn_core_kernel, sm_scale=sm_scale),
        out_shape=jax.ShapeDtypeStruct((bh, s, dh), jnp.float32),
        grid=(bh,),
        in_specs=[pl.BlockSpec((None, s, dh), lambda i: (i, 0, 0)),
                  pl.BlockSpec((None, kd, dh), lambda i: (i, 0, 0)),
                  pl.BlockSpec((None, kd, dh), lambda i: (i, 0, 0))],
        out_specs=pl.BlockSpec((None, s, dh), lambda i: (i, 0, 0)),
        compiler_params=pltpu.CompilerParams(
            dimension_semantics=("parallel",),
            vmem_limit_bytes=VMEM_LIMIT_BYTES),
        cost_estimate=cost,
    )(q, k, v)


# ---------------------------------------------------------------------------
# Model forward (kernel path).
# ---------------------------------------------------------------------------
def encoder_layer_forward(x, lp, prepped, cfg):
    b, s, e = x.shape
    h = cfg["num_head"]
    dh = e // h
    p_t = prepped["p_t"]
    kd = p_t.shape[0]
    x2 = x.reshape(b * s, e)

    # CNN "attention" projections: 1x1 grouped convs == block-diagonal dense matmuls (no bias).
    # Q and K are fused into a single (E, 2E) matmul (activations read once, lane-dense output).
    qk = linear_pallas(x2, lp["wqk_bd"], prepped["zero_bias_2e"])
    q = qk[:, :e].reshape(b, s, e)
    k = qk[:, e:].reshape(b, s, e)
    # NOTE: the torch module computes `values` with the *key* conv as well, so keys and values
    # share the same sequence-projected tensor.
    kv = seq_project_pallas(k, p_t)                                   # (b, kd, e)

    # TODO(synk): torch's keys.permute(0, 2, 1).view(b, kd, h, dh) is an invalid view on a
    # non-contiguous tensor (it raises); reshape (.contiguous()) semantics are used here.
    keys = jnp.transpose(kv, (0, 2, 1)).reshape(b, kd, h, dh)
    keys = jnp.transpose(keys, (0, 2, 1, 3)).reshape(b * h, kd, dh)
    values = jnp.transpose(kv.reshape(b, kd, h, dh), (0, 2, 1, 3)).reshape(b * h, kd, dh)
    queries = jnp.transpose(q.reshape(b, s, h, dh), (0, 2, 1, 3)).reshape(b * h, s, dh)

    att = attn_core_pallas(queries, keys, values, sm_scale=1.0 / math.sqrt(dh))
    att = jnp.transpose(att.reshape(b, h, s, dh), (0, 2, 1, 3)).reshape(b, s, e)
    att_out = x + lp["alpha_att"] * att                               # ReZero (dropout: eval no-op)

    # Feed-forward: grouped 1x1 conv -> GLU(gelu) -> grouped 1x1 conv, with ReZero.
    a2 = att_out.reshape(b * s, e)
    hmid = linear_pallas(a2, lp["w1_bd"], lp["w1_b"], epilogue="glu_gelu")
    ff = linear_pallas(hmid, lp["w2_bd"], lp["w2_b"]).reshape(b, s, e)
    return att_out + lp["alpha_ff"] * ff                              # ReZero


def bonz_discriminator_forward(input_ids, positional_ids, prepped, cfg):
    batch, seq = input_ids.shape
    e = cfg["emb_dim"]
    if positional_ids is None:
        positional_ids = jnp.tile(jnp.arange(seq, dtype=jnp.int32), (batch,)).reshape(batch, seq)

    x = bonz_embedding_pallas(input_ids, positional_ids, prepped, cfg)
    for lp in prepped["layers"]:
        x = encoder_layer_forward(x, lp, prepped, cfg)

    # Classification head (applied at every position, as in the torch module).
    x2 = x.reshape(batch * seq, e)
    hid = linear_pallas(x2, prepped["pooler_w_t"], prepped["pooler_b"], epilogue="gelu")
    logits = linear_pallas(hid, prepped["logits_w_t"], prepped["logits_b"])
    return logits.reshape(batch, seq, -1)


# ---------------------------------------------------------------------------
# Parameters (torch layout) and one-time prep for the kernels.
# ---------------------------------------------------------------------------
def _grouped_to_dense(wg):
    """(G, Cout_g, Cin_g) grouped 1x1-conv weight -> (Cin, Cout) block-diagonal dense weight."""
    g, cout_g, cin_g = wg.shape
    dense = jnp.zeros((g * cin_g, g * cout_g), jnp.float32)
    for i in range(g):
        dense = dense.at[i * cin_g:(i + 1) * cin_g, i * cout_g:(i + 1) * cout_g].set(
            jnp.transpose(wg[i]))
    return dense


def init_params(key, cfg):
    e, dw = cfg["emb_dim"], cfg["word_dim"]
    v, s, kd = cfg["vocab_size"], cfg["seq_len"], cfg["k_dim"]
    ga, gf = cfg["group_att"], cfg["group_ff"]
    f = e * cfg["ff_mul"]
    keys = iter(jax.random.split(key, 64))

    def rnd(shape, scale):
        return scale * jax.random.normal(next(keys), shape, jnp.float32)

    params = {
        "token_embedding": rnd((v, dw), 0.02).at[0].set(0.0),        # padding_idx=0
        "positional_embedding": rnd((s, dw), 0.02).at[0].set(0.0),   # padding_idx=0
        "emb_ln_gamma": 1.0 + rnd((e,), 0.05),
        "emb_ln_beta": rnd((e,), 0.05),
        "project_k": rnd((s, kd), 1.0 / math.sqrt(kd)),              # shared K (one_project=True)
        "pooler_w": rnd((e, e), 0.05), "pooler_b": rnd((e,), 0.05),
        "logits_w": rnd((cfg["num_label"], e), 0.05), "logits_b": rnd((cfg["num_label"],), 0.05),
        "layers": [],
    }
    if e != dw:                                                      # scale Linear exists only then
        params["scale_w"] = rnd((e, dw), 0.05)
        params["scale_b"] = rnd((e,), 0.05)
    for _ in range(cfg["num_layer"]):
        params["layers"].append({
            "q_wg": rnd((ga, e // ga, e // ga), 0.05),               # Conv1d(E, E, 1, groups=ga), no bias
            "k_wg": rnd((ga, e // ga, e // ga), 0.05),
            "w1_wg": rnd((gf, 2 * f // gf, e // gf), 0.05),          # Conv1d(E, 2F, 1, groups=gf)
            "w1_b": rnd((2 * f,), 0.05),
            "w2_wg": rnd((gf, e // gf, f // gf), 0.05),              # Conv1d(F, E, 1, groups=gf)
            "w2_b": rnd((e,), 0.05),
            "alpha_att": jnp.float32(0.5),                           # ReZero (0 at torch init)
            "alpha_ff": jnp.float32(0.5),
        })
    return params


def prepare_params(params, cfg):
    """One-time prep hoisted out of the per-call path: transposes, block-diagonal dense weights,
    MATMUL_DTYPE casts for MXU operands, (1, D) bias / LayerNorm rows."""
    e, dw = cfg["emb_dim"], cfg["word_dim"]
    mdt = MATMUL_DTYPE
    prepped = {
        "tok_tab": params["token_embedding"],
        "pos_tab": params["positional_embedding"],
        "emb_gamma": params["emb_ln_gamma"].reshape(1, -1),
        "emb_beta": params["emb_ln_beta"].reshape(1, -1),
        "p_t": jnp.transpose(params["project_k"]).astype(mdt),       # (k_dim, seq_len)
        "pooler_w_t": jnp.transpose(params["pooler_w"]).astype(mdt),
        "pooler_b": params["pooler_b"].reshape(1, -1),
        "logits_w_t": jnp.transpose(params["logits_w"]).astype(mdt),
        "logits_b": params["logits_b"].reshape(1, -1),
        "zero_bias_2e": jnp.zeros((1, 2 * e), jnp.float32),
        "layers": [],
    }
    if "scale_w" in params:
        prepped["scale_w_t"] = jnp.transpose(params["scale_w"]).astype(mdt)   # (word_dim, emb_dim)
        prepped["scale_b"] = params["scale_b"].reshape(1, -1)
    else:  # emb_dim == word_dim: no scale Linear; placeholders are unused by the kernel.
        prepped["scale_w_t"] = jnp.zeros((dw, e), mdt)
        prepped["scale_b"] = jnp.zeros((1, e), jnp.float32)
    for lp in params["layers"]:
        wq = _grouped_to_dense(lp["q_wg"])
        wk = _grouped_to_dense(lp["k_wg"])
        prepped["layers"].append({
            "wqk_bd": jnp.concatenate([wq, wk], axis=1).astype(mdt),  # fused Q|K projection (E, 2E)
            "w1_bd": _grouped_to_dense(lp["w1_wg"]).astype(mdt),
            "w1_b": lp["w1_b"].reshape(1, -1),
            "w2_bd": _grouped_to_dense(lp["w2_wg"]).astype(mdt),
            "w2_b": lp["w2_b"].reshape(1, -1),
            "alpha_att": lp["alpha_att"],
            "alpha_ff": lp["alpha_ff"],
        })
    return prepped


# ---------------------------------------------------------------------------
# Pure-JAX reference (mirrors the torch module op-for-op; dots executed in f32 after rounding
# the operands to MATMUL_DTYPE so the host dot thunk never sees a bf16 x bf16 = f32 dot).
# ---------------------------------------------------------------------------
def _ref_dot(a, b):
    a = a.astype(MATMUL_DTYPE).astype(jnp.float32)
    b = b.astype(MATMUL_DTYPE).astype(jnp.float32)
    return jnp.dot(a, b, preferred_element_type=jnp.float32)


def _ref_einsum(eq, a, b):
    a = a.astype(MATMUL_DTYPE).astype(jnp.float32)
    b = b.astype(MATMUL_DTYPE).astype(jnp.float32)
    return jnp.einsum(eq, a, b, preferred_element_type=jnp.float32)


def _ref_grouped_conv1x1(x, wg, bias):
    g, cout_g, cin_g = wg.shape
    outs = [_ref_dot(x[..., i * cin_g:(i + 1) * cin_g], jnp.transpose(wg[i])) for i in range(g)]
    y = jnp.concatenate(outs, axis=-1)
    return y if bias is None else y + bias


def reference_forward(input_ids, positional_ids, params, cfg):
    batch, seq = input_ids.shape
    e, h = cfg["emb_dim"], cfg["num_head"]
    dh, kd, f = e // h, cfg["k_dim"], cfg["emb_dim"] * cfg["ff_mul"]
    if positional_ids is None:
        positional_ids = jnp.tile(jnp.arange(seq, dtype=jnp.int32), (batch,)).reshape(batch, seq)

    # BonzEmbedding
    x = params["token_embedding"][input_ids] + params["positional_embedding"][positional_ids]
    if "scale_w" in params:
        x = _ref_dot(x, jnp.transpose(params["scale_w"])) + params["scale_b"]
    mean = jnp.mean(x, axis=-1, keepdims=True)
    var = jnp.mean(jnp.square(x - mean), axis=-1, keepdims=True)
    x = (x - mean) * jax.lax.rsqrt(var + cfg["eps"]) * params["emb_ln_gamma"] + params["emb_ln_beta"]

    p = params["project_k"]
    for lp in params["layers"]:
        q = _ref_grouped_conv1x1(x, lp["q_wg"], None)
        k = _ref_grouped_conv1x1(x, lp["k_wg"], None)
        v = _ref_grouped_conv1x1(x, lp["k_wg"], None)       # module uses the key conv for values
        keys = _ref_einsum("bnd,nk->bkd", k, p)
        values = _ref_einsum("bnd,nk->bkd", v, p)
        keys = jnp.transpose(keys, (0, 2, 1)).reshape(batch, kd, h, dh)   # reshape semantics
        keys = jnp.transpose(keys, (0, 2, 1, 3))
        values = jnp.transpose(values.reshape(batch, kd, h, dh), (0, 2, 1, 3))
        queries = jnp.transpose(q.reshape(batch, seq, h, dh), (0, 2, 1, 3))
        dots = _ref_einsum("bhnd,bhkd->bhnk", queries, keys) * (1.0 / math.sqrt(dh))
        attn = jax.nn.softmax(dots, axis=-1)
        att = _ref_einsum("bhnk,bhkd->bhnd", attn, values)
        att = jnp.transpose(att, (0, 2, 1, 3)).reshape(batch, seq, e)
        att_out = x + lp["alpha_att"] * att
        hid = _ref_grouped_conv1x1(att_out, lp["w1_wg"], lp["w1_b"])
        hid = _gelu(hid[..., :f]) * hid[..., f:]
        ff = _ref_grouped_conv1x1(hid, lp["w2_wg"], lp["w2_b"])
        x = att_out + lp["alpha_ff"] * ff

    hid = _gelu(_ref_dot(x, jnp.transpose(params["pooler_w"])) + params["pooler_b"])
    return _ref_dot(hid, jnp.transpose(params["logits_w"])) + params["logits_b"]


if __name__ == "__main__":
    cfg = dict(
        vocab_size=512, seq_len=128, word_dim=128, emb_dim=256, k_dim=128,
        num_head=2, ff_mul=2, group_att=4, group_ff=4,
        num_layer=2, num_label=2, eps=1e-12,
    )  # kernel_att = kernel_ff = 1, glu=True, one_project=True (BonzConfig defaults)

    key = jax.random.PRNGKey(0)
    k_params, k_ids = jax.random.split(key)
    params = init_params(k_params, cfg)
    prepped = prepare_params(params, cfg)            # hoisted one-time param prep

    batch, seq = 2, cfg["seq_len"]
    input_ids = jax.random.randint(k_ids, (batch, seq), 0, cfg["vocab_size"], dtype=jnp.int32)
    positional_ids = None                            # exercise the default arange path

    fwd = jax.jit(lambda ids, prep: bonz_discriminator_forward(ids, positional_ids, prep, cfg))
    logits = jax.block_until_ready(fwd(input_ids, prepped))

    ref = jax.block_until_ready(reference_forward(input_ids, positional_ids, params, cfg))
    assert logits.shape == (batch, seq, cfg["num_label"]), logits.shape
    err = float(jnp.max(jnp.abs(logits - ref)))
    assert jnp.allclose(logits, ref, rtol=1e-2, atol=1e-2), f"max abs err = {err}"

    print("KERNEL_OK")
</pallas_src>

<mosaic_0001>
module attributes {stable_mosaic.version = 11 : i64} {
  func.func @_linear_kernel(%arg0: i32, %arg1: memref<128x256xf32, #tpu.memory_space<vmem>>, %arg2: memref<256x512xf32, #tpu.memory_space<vmem>>, %arg3: memref<1x512xf32, #tpu.memory_space<vmem>>, %arg4: memref<128x512xf32, #tpu.memory_space<vmem>>) attributes {dimension_semantics = [#tpu.dimension_semantics<parallel>], iteration_bounds = array<i64: 2>, scalar_prefetch = 0 : i64, scratch_operands = 0 : i64, tpu.core_type = #tpu.core_type<tc>, window_params = [{transform_indices = @transform_0, window_bounds = array<i64: 128, 256>}, {pipeline_mode = #tpu.pipeline_mode<synchronous>, transform_indices = @transform_1, window_bounds = array<i64: 256, 512>}, {pipeline_mode = #tpu.pipeline_mode<synchronous>, transform_indices = @transform_2, window_bounds = array<i64: 1, 512>}, {transform_indices = @transform_3, window_bounds = array<i64: 128, 512>}]} {
    %c0 = arith.constant 0 : index
    %c0_0 = arith.constant 0 : index
    %0 = vector.load %arg1[%c0, %c0_0] : memref<128x256xf32, #tpu.memory_space<vmem>>, vector<128x256xf32>
    %c0_1 = arith.constant 0 : index
    %c0_2 = arith.constant 0 : index
    %1 = vector.load %arg2[%c0_1, %c0_2] : memref<256x512xf32, #tpu.memory_space<vmem>>, vector<256x512xf32>
    %cst = arith.constant dense<0.000000e+00> : vector<128x512xf32>
    %2 = tpu.matmul %0, %1, %cst {dimension_numbers = #tpu.dot_dimension_numbers<[1], [0], [0], [1], [0, 0, 1, 1], [], []>} : vector<128x256xf32>, vector<256x512xf32>, vector<128x512xf32> -> vector<128x512xf32>
    %c0_3 = arith.constant 0 : index
    %c0_4 = arith.constant 0 : index
    %3 = vector.load %arg3[%c0_3, %c0_4] : memref<1x512xf32, #tpu.memory_space<vmem>>, vector<1x512xf32>
    %4 = vector.broadcast %3 : vector<1x512xf32> to vector<128x512xf32>
    %5 = arith.addf %2, %4 : vector<128x512xf32>
    %c0_5 = arith.constant 0 : index
    %c0_6 = arith.constant 0 : index
    %6 = vector.load %arg4[%c0_5, %c0_6] : memref<128x512xf32, #tpu.memory_space<vmem>>, vector<128x512xf32>
    tpu.vector_store %arg4[%c0_5, %c0_6], %5 {strides = array<i32>} : memref<128x512xf32, #tpu.memory_space<vmem>>, vector<128x512xf32>,
    return
  }
  func.func @transform_0(%arg0: i32) -> (i32, i32) {
    %c0_i32 = arith.constant 0 : i32
    %c0_i32_0 = arith.constant 0 : i32
    return %arg0, %c0_i32 : i32, i32
  }
  func.func @transform_1(%arg0: i32) -> (i32, i32) {
    %c0_i32 = arith.constant 0 : i32
    %c0_i32_0 = arith.constant 0 : i32
    %c0_i32_1 = arith.constant 0 : i32
    return %c0_i32, %c0_i32_0 : i32, i32
  }
  func.func @transform_2(%arg0: i32) -> (i32, i32) {
    %c0_i32 = arith.constant 0 : i32
    %c0_i32_0 = arith.constant 0 : i32
    %c0_i32_1 = arith.constant 0 : i32
    return %c0_i32, %c0_i32_0 : i32, i32
  }
  func.func @transform_3(%arg0: i32) -> (i32, i32) {
    %c0_i32 = arith.constant 0 : i32
    %c0_i32_0 = arith.constant 0 : i32
    return %arg0, %c0_i32 : i32, i32
  }
}

module attributes {stable_mosaic.version = 11 : i64} {
  func.func @_embed_kernel(%arg0: i32, %arg1: memref<256xi32, #tpu.memory_space<smem>>, %arg2: memref<256xi32, #tpu.memory_space<smem>>, %arg3: memref<512x128xf32, #tpu.memory_space<any>>, %arg4: memref<128x128xf32, #tpu.memory_space<any>>, %arg5: memref<128x256xf32, #tpu.memory_space<vmem>>, %arg6: memref<1x256xf32, #tpu.memory_space<vmem>>, %arg7: memref<1x256xf32, #tpu.memory_space<vmem>>, %arg8: memref<1x256xf32, #tpu.memory_space<vmem>>, %arg9: memref<128x256xf32, #tpu.memory_space<vmem>>, %arg10: memref<128x128xf32, #tpu.memory_space<vmem>>, %arg11: memref<128x128xf32, #tpu.memory_space<vmem>>, %arg12: memref<2x!tpu.dma_semaphore, #tpu.memory_space<semaphore_mem>>) attributes {dimension_semantics = [#tpu.dimension_semantics<parallel>], iteration_bounds = array<i64: 2>, scalar_prefetch = 2 : i64, scratch_operands = 3 : i64, tpu.core_type = #tpu.core_type<tc>, window_params = [{}, {}, {pipeline_mode = #tpu.pipeline_mode<synchronous>, transform_indices = @transform_2, window_bounds = array<i64: 128, 256>}, {pipeline_mode = #tpu.pipeline_mode<synchronous>, transform_indices = @transform_3, window_bounds = array<i64: 1, 256>}, {pipeline_mode = #tpu.pipeline_mode<synchronous>, transform_indices = @transform_4, window_bounds = array<i64: 1, 256>}, {pipeline_mode = #tpu.pipeline_mode<synchronous>, transform_indices = @transform_5, window_bounds = array<i64: 1, 256>}, {transform_indices = @transform_6, window_bounds = array<i64: 128, 256>}]} {
    %c128_i32 = arith.constant 128 : i32
    %0 = arith.muli %arg0, %c128_i32 : i32
    %c0_i32 = arith.constant 0 : i32
    %c128_i32_0 = arith.constant 128 : i32
    %1 = arith.addi %c0_i32, %c128_i32_0 : i32
    %c1_i32 = arith.constant 1 : i32
    scf.for %arg13 = %c0_i32 to %1 step %c1_i32  : i32 {
      %36 = arith.addi %0, %arg13 : i32
      %37 = arith.index_cast %36 : i32 to index
      %38 = memref.load %arg1[%37] : memref<256xi32, #tpu.memory_space<smem>>
      %39 = arith.addi %0, %arg13 : i32
      %40 = arith.index_cast %39 : i32 to index
      %41 = memref.load %arg2[%40] : memref<256xi32, #tpu.memory_space<smem>>
      %c0_i32_24 = arith.constant 0 : i32
      %c0_i32_25 = arith.constant 0 : i32
      %42 = tpu.memref_slice %arg3[%38, %c0_i32_25] : memref<512x128xf32, #tpu.memory_space<any>> -> memref<1x128xf32, #tpu.memory_space<any>>
      %c0_i32_26 = arith.constant 0 : i32
      %43 = tpu.memref_slice %arg10[%arg13, %c0_i32_26] : memref<128x128xf32, #tpu.memory_space<vmem>> -> memref<1x128xf32, #tpu.memory_space<vmem>>
      %44 = tpu.memref_slice %arg12[%c0_i32_24] : memref<2x!tpu.dma_semaphore, #tpu.memory_space<semaphore_mem>> -> memref<1x!tpu.dma_semaphore, #tpu.memory_space<semaphore_mem>>
      %45 = tpu.memref_squeeze %44 : memref<1x!tpu.dma_semaphore, #tpu.memory_space<semaphore_mem>> -> memref<!tpu.dma_semaphore, #tpu.memory_space<semaphore_mem>>
      tpu.enqueue_dma source(%42 : memref<1x128xf32, #tpu.memory_space<any>>) target(%43 : memref<1x128xf32, #tpu.memory_space<vmem>>) target_semaphore(%45 : memref<!tpu.dma_semaphore, #tpu.memory_space<semaphore_mem>>)
      %c1_i32_27 = arith.constant 1 : i32
      %c0_i32_28 = arith.constant 0 : i32
      %46 = tpu.memref_slice %arg4[%41, %c0_i32_28] : memref<128x128xf32, #tpu.memory_space<any>> -> memref<1x128xf32, #tpu.memory_space<any>>
      %c0_i32_29 = arith.constant 0 : i32
      %47 = tpu.memref_slice %arg11[%arg13, %c0_i32_29] : memref<128x128xf32, #tpu.memory_space<vmem>> -> memref<1x128xf32, #tpu.memory_space<vmem>>
      %48 = tpu.memref_slice %arg12[%c1_i32_27] : memref<2x!tpu.dma_semaphore, #tpu.memory_space<semaphore_mem>> -> memref<1x!tpu.dma_semaphore, #tpu.memory_space<semaphore_mem>>
      %49 = tpu.memref_squeeze %48 : memref<1x!tpu.dma_semaphore, #tpu.memory_space<semaphore_mem>> -> memref<!tpu.dma_semaphore, #tpu.memory_space<semaphore_mem>>
      tpu.enqueue_dma source(%46 : memref<1x128xf32, #tpu.memory_space<any>>) target(%47 : memref<1x128xf32, #tpu.memory_space<vmem>>) target_semaphore(%49 : memref<!tpu.dma_semaphore, #tpu.memory_space<semaphore_mem>>)
    }
    %c128_i32_1 = arith.constant 128 : i32
    %c0_i32_2 = arith.constant 0 : i32
    %c128_i32_3 = arith.constant 128 : i32
    %2 = arith.addi %c0_i32_2, %c128_i32_3 : i32
    %c1_i32_4 = arith.constant 1 : i32
    scf.for %arg13 = %c0_i32_2 to %2 step %c1_i32_4  : i32 {
      %c0_i32_24 = arith.constant 0 : i32
      %c0_i32_25 = arith.constant 0 : i32
      %c0_i32_26 = arith.constant 0 : i32
      %36 = tpu.memref_slice %arg3[%c0_i32_25, %c0_i32_26] : memref<512x128xf32, #tpu.memory_space<any>> -> memref<1x128xf32, #tpu.memory_space<any>>
      %c0_i32_27 = arith.constant 0 : i32
      %37 = tpu.memref_slice %arg10[%arg13, %c0_i32_27] : memref<128x128xf32, #tpu.memory_space<vmem>> -> memref<1x128xf32, #tpu.memory_space<vmem>>
      %38 = tpu.memref_slice %arg12[%c0_i32_24] : memref<2x!tpu.dma_semaphore, #tpu.memory_space<semaphore_mem>> -> memref<1x!tpu.dma_semaphore, #tpu.memory_space<semaphore_mem>>
      %39 = tpu.memref_squeeze %38 : memref<1x!tpu.dma_semaphore, #tpu.memory_space<semaphore_mem>> -> memref<!tpu.dma_semaphore, #tpu.memory_space<semaphore_mem>>
      tpu.wait_dma2 semaphore(%39 : memref<!tpu.dma_semaphore, #tpu.memory_space<semaphore_mem>>) src(%36 : memref<1x128xf32, #tpu.memory_space<any>>) dst(%37 : memref<1x128xf32, #tpu.memory_space<vmem>>)
      %c1_i32_28 = arith.constant 1 : i32
      %c0_i32_29 = arith.constant 0 : i32
      %c0_i32_30 = arith.constant 0 : i32
      %40 = tpu.memref_slice %arg4[%c0_i32_29, %c0_i32_30] : memref<128x128xf32, #tpu.memory_space<any>> -> memref<1x128xf32, #tpu.memory_space<any>>
      %c0_i32_31 = arith.constant 0 : i32
      %41 = tpu.memref_slice %arg11[%arg13, %c0_i32_31] : memref<128x128xf32, #tpu.memory_space<vmem>> -> memref<1x128xf32, #tpu.memory_space<vmem>>
      %42 = tpu.memref_slice %arg12[%c1_i32_28] : memref<2x!tpu.dma_semaphore, #tpu.memory_space<semaphore_mem>> -> memref<1x!tpu.dma_semaphore, #tpu.memory_space<semaphore_mem>>
      %43 = tpu.memref_squeeze %42 : memref<1x!tpu.dma_semaphore, #tpu.memory_space<semaphore_mem>> -> memref<!tpu.dma_semaphore, #tpu.memory_space<semaphore_mem>>
      tpu.wait_dma2 semaphore(%43 : memref<!tpu.dma_semaphore, #tpu.memory_space<semaphore_mem>>) src(%40 : memref<1x128xf32, #tpu.memory_space<any>>) dst(%41 : memref<1x128xf32, #tpu.memory_space<vmem>>)
    }
    %c128_i32_5 = arith.constant 128 : i32
    %c0 = arith.constant 0 : index
    %c0_6 = arith.constant 0 : index
    %3 = vector.load %arg10[%c0, %c0_6] : memref<128x128xf32, #tpu.memory_space<vmem>>, vector<128x128xf32>
    %c0_7 = arith.constant 0 : index
    %c0_8 = arith.constant 0 : index
    %4 = vector.load %arg11[%c0_7, %c0_8] : memref<128x128xf32, #tpu.memory_space<vmem>>, vector<128x128xf32>
    %5 = arith.addf %3, %4 : vector<128x128xf32>
    %c0_9 = arith.constant 0 : index
    %c0_10 = arith.constant 0 : index
    %6 = vector.load %arg5[%c0_9, %c0_10] : memref<128x256xf32, #tpu.memory_space<vmem>>, vector<128x256xf32>
    %cst = arith.constant dense<0.000000e+00> : vector<128x256xf32>
    %7 = tpu.matmul %5, %6, %cst {dimension_numbers = #tpu.dot_dimension_numbers<[1], [0], [0], [1], [0, 0, 1, 1], [], []>} : vector<128x128xf32>, vector<128x256xf32>, vector<128x256xf32> -> vector<128x256xf32>
    %c0_11 = arith.constant 0 : index
    %c0_12 = arith.constant 0 : index
    %8 = vector.load %arg6[%c0_11, %c0_12] : memref<1x256xf32, #tpu.memory_space<vmem>>, vector<1x256xf32>
    %9 = vector.broadcast %8 : vector<1x256xf32> to vector<128x256xf32>
    %10 = arith.addf %7, %9 : vector<128x256xf32>
    %cst_13 = arith.constant dense<0.000000e+00> : vector<128xf32>
    %11 = vector.multi_reduction <add>, %10, %cst_13 [1] : vector<128x256xf32> to vector<128xf32>
    %12 = vector.shape_cast %11 : vector<128xf32> to vector<128x1xf32>
    %cst_14 = arith.constant 2.560000e+02 : f32
    %13 = vector.broadcast %cst_14 : f32 to vector<128x1xf32>
    %14 = arith.divf %12, %13 : vector<128x1xf32>
    %15 = vector.broadcast %14 : vector<128x1xf32> to vector<128x256xf32>
    %16 = arith.subf %10, %15 : vector<128x256xf32>
    %17 = arith.mulf %16, %16 : vector<128x256xf32>
    %cst_15 = arith.constant dense<0.000000e+00> : vector<128xf32>
    %18 = vector.multi_reduction <add>, %17, %cst_15 [1] : vector<128x256xf32> to vector<128xf32>
    %19 = vector.shape_cast %18 : vector<128xf32> to vector<128x1xf32>
    %cst_16 = arith.constant 2.560000e+02 : f32
    %20 = vector.broadcast %cst_16 : f32 to vector<128x1xf32>
    %21 = arith.divf %19, %20 : vector<128x1xf32>
    %22 = vector.broadcast %14 : vector<128x1xf32> to vector<128x256xf32>
    %23 = arith.subf %10, %22 : vector<128x256xf32>
    %cst_17 = arith.constant 9.99999996E-13 : f32
    %24 = vector.broadcast %cst_17 : f32 to vector<128x1xf32>
    %25 = arith.addf %21, %24 : vector<128x1xf32>
    %26 = math.rsqrt %25 : vector<128x1xf32>
    %27 = vector.broadcast %26 : vector<128x1xf32> to vector<128x256xf32>
    %28 = arith.mulf %23, %27 : vector<128x256xf32>
    %c0_18 = arith.constant 0 : index
    %c0_19 = arith.constant 0 : index
    %29 = vector.load %arg7[%c0_18, %c0_19] : memref<1x256xf32, #tpu.memory_space<vmem>>, vector<1x256xf32>
    %30 = vector.broadcast %29 : vector<1x256xf32> to vector<128x256xf32>
    %31 = arith.mulf %28, %30 : vector<128x256xf32>
    %c0_20 = arith.constant 0 : index
    %c0_21 = arith.constant 0 : index
    %32 = vector.load %arg8[%c0_20, %c0_21] : memref<1x256xf32, #tpu.memory_space<vmem>>, vector<1x256xf32>
    %33 = vector.broadcast %32 : vector<1x256xf32> to vector<128x256xf32>
    %34 = arith.addf %31, %33 : vector<128x256xf32>
    %c0_22 = arith.constant 0 : index
    %c0_23 = arith.constant 0 : index
    %35 = vector.load %arg9[%c0_22, %c0_23] : memref<128x256xf32, #tpu.memory_space<vmem>>, vector<128x256xf32>
    tpu.vector_store %arg9[%c0_22, %c0_23], %34 {strides = array<i32>} : memref<128x256xf32, #tpu.memory_space<vmem>>, vector<128x256xf32>,
    return
  }
  func.func @transform_2(%arg0: i32, %arg1: memref<256xi32, #tpu.memory_space<smem>>, %arg2: memref<256xi32, #tpu.memory_space<smem>>) -> (i32, i32) {
    %c0_i32 = arith.constant 0 : i32
    %c0_i32_0 = arith.constant 0 : i32
    %c0_i32_1 = arith.constant 0 : i32
    return %c0_i32, %c0_i32_0 : i32, i32
  }
  func.func @transform_3(%arg0: i32, %arg1: memref<256xi32, #tpu.memory_space<smem>>, %arg2: memref<256xi32, #tpu.memory_space<smem>>) -> (i32, i32) {
    %c0_i32 = arith.constant 0 : i32
    %c0_i32_0 = arith.constant 0 : i32
    %c0_i32_1 = arith.constant 0 : i32
    return %c0_i32, %c0_i32_0 : i32, i32
  }
  func.func @transform_4(%arg0: i32, %arg1: memref<256xi32, #tpu.memory_space<smem>>, %arg2: memref<256xi32, #tpu.memory_space<smem>>) -> (i32, i32) {
    %c0_i32 = arith.constant 0 : i32
    %c0_i32_0 = arith.constant 0 : i32
    %c0_i32_1 = arith.constant 0 : i32
    return %c0_i32, %c0_i32_0 : i32, i32
  }
  func.func @transform_5(%arg0: i32, %arg1: memref<256xi32, #tpu.memory_space<smem>>, %arg2: memref<256xi32, #tpu.memory_space<smem>>) -> (i32, i32) {
    %c0_i32 = arith.constant 0 : i32
    %c0_i32_0 = arith.constant 0 : i32
    %c0_i32_1 = arith.constant 0 : i32
    return %c0_i32, %c0_i32_0 : i32, i32
  }
  func.func @transform_6(%arg0: i32, %arg1: memref<256xi32, #tpu.memory_space<smem>>, %arg2: memref<256xi32, #tpu.memory_space<smem>>) -> (i32, i32) {
    %c0_i32 = arith.constant 0 : i32
    %c0_i32_0 = arith.constant 0 : i32
    return %arg0, %c0_i32 : i32, i32
  }
}

module attributes {stable_mosaic.version = 11 : i64} {
  func.func @_seq_project_kernel(%arg0: i32, %arg1: memref<1x128x256xf32, #tpu.memory_space<vmem>>, %arg2: memref<128x128xf32, #tpu.memory_space<vmem>>, %arg3: memref<1x128x256xf32, #tpu.memory_space<vmem>>) attributes {dimension_semantics = [#tpu.dimension_semantics<parallel>], iteration_bounds = array<i64: 2>, scalar_prefetch = 0 : i64, scratch_operands = 0 : i64, tpu.core_type = #tpu.core_type<tc>, window_params = [{transform_indices = @transform_0, window_bounds = array<i64: 1, 128, 256>}, {pipeline_mode = #tpu.pipeline_mode<synchronous>, transform_indices = @transform_1, window_bounds = array<i64: 128, 128>}, {transform_indices = @transform_2, window_bounds = array<i64: 1, 128, 256>}]} {
    %c0 = arith.constant 0 : index
    %c0_0 = arith.constant 0 : index
    %0 = vector.load %arg2[%c0, %c0_0] : memref<128x128xf32, #tpu.memory_space<vmem>>, vector<128x128xf32>
    %c0_1 = arith.constant 0 : index
    %c0_2 = arith.constant 0 : index
    %c0_3 = arith.constant 0 : index
    %1 = vector.load %arg1[%c0_1, %c0_2, %c0_3] : memref<1x128x256xf32, #tpu.memory_space<vmem>>, vector<1x128x256xf32>
    %2 = vector.shape_cast %1 : vector<1x128x256xf32> to vector<128x256xf32>
    %cst = arith.constant dense<0.000000e+00> : vector<128x256xf32>
    %3 = tpu.matmul %0, %2, %cst {dimension_numbers = #tpu.dot_dimension_numbers<[1], [0], [0], [1], [0, 0, 1, 1], [], []>} : vector<128x128xf32>, vector<128x256xf32>, vector<128x256xf32> -> vector<128x256xf32>
    %c0_4 = arith.constant 0 : index
    %c0_5 = arith.constant 0 : index
    %c0_6 = arith.constant 0 : index
    %4 = vector.load %arg3[%c0_4, %c0_5, %c0_6] : memref<1x128x256xf32, #tpu.memory_space<vmem>>, vector<1x128x256xf32>
    %5 = vector.shape_cast %4 : vector<1x128x256xf32> to vector<128x256xf32>
    %6 = vector.shape_cast %3 : vector<128x256xf32> to vector<1x128x256xf32>
    tpu.vector_store %arg3[%c0_4, %c0_5, %c0_6], %6 {strides = array<i32>} : memref<1x128x256xf32, #tpu.memory_space<vmem>>, vector<1x128x256xf32>,
    return
  }
  func.func @transform_0(%arg0: i32) -> (i32, i32, i32) {
    %c0_i32 = arith.constant 0 : i32
    %c0_i32_0 = arith.constant 0 : i32
    %c0_i32_1 = arith.constant 0 : i32
    return %arg0, %c0_i32, %c0_i32_0 : i32, i32, i32
  }
  func.func @transform_1(%arg0: i32) -> (i32, i32) {
    %c0_i32 = arith.constant 0 : i32
    %c0_i32_0 = arith.constant 0 : i32
    %c0_i32_1 = arith.constant 0 : i32
    return %c0_i32, %c0_i32_0 : i32, i32
  }
  func.func @transform_2(%arg0: i32) -> (i32, i32, i32) {
    %c0_i32 = arith.constant 0 : i32
    %c0_i32_0 = arith.constant 0 : i32
    %c0_i32_1 = arith.constant 0 : i32
    return %arg0, %c0_i32, %c0_i32_0 : i32, i32, i32
  }
}

module attributes {stable_mosaic.version = 11 : i64} {
  func.func @_attn_core_kernel(%arg0: i32, %arg1: memref<1x128x128xf32, #tpu.memory_space<vmem>>, %arg2: memref<1x128x128xf32, #tpu.memory_space<vmem>>, %arg3: memref<1x128x128xf32, #tpu.memory_space<vmem>>, %arg4: memref<1x128x128xf32, #tpu.memory_space<vmem>>) attributes {dimension_semantics = [#tpu.dimension_semantics<parallel>], iteration_bounds = array<i64: 4>, scalar_prefetch = 0 : i64, scratch_operands = 0 : i64, tpu.core_type = #tpu.core_type<tc>, window_params = [{transform_indices = @transform_0, window_bounds = array<i64: 1, 128, 128>}, {transform_indices = @transform_1, window_bounds = array<i64: 1, 128, 128>}, {transform_indices = @transform_2, window_bounds = array<i64: 1, 128, 128>}, {transform_indices = @transform_3, window_bounds = array<i64: 1, 128, 128>}]} {
    %c0 = arith.constant 0 : index
    %c0_0 = arith.constant 0 : index
    %c0_1 = arith.constant 0 : index
    %0 = vector.load %arg1[%c0, %c0_0, %c0_1] : memref<1x128x128xf32, #tpu.memory_space<vmem>>, vector<1x128x128xf32>
    %1 = vector.shape_cast %0 : vector<1x128x128xf32> to vector<128x128xf32>
    %c0_2 = arith.constant 0 : index
    %c0_3 = arith.constant 0 : index
    %c0_4 = arith.constant 0 : index
    %2 = vector.load %arg2[%c0_2, %c0_3, %c0_4] : memref<1x128x128xf32, #tpu.memory_space<vmem>>, vector<1x128x128xf32>
    %3 = vector.shape_cast %2 : vector<1x128x128xf32> to vector<128x128xf32>
    %c0_5 = arith.constant 0 : index
    %c0_6 = arith.constant 0 : index
    %c0_7 = arith.constant 0 : index
    %4 = vector.load %arg3[%c0_5, %c0_6, %c0_7] : memref<1x128x128xf32, #tpu.memory_space<vmem>>, vector<1x128x128xf32>
    %5 = vector.shape_cast %4 : vector<1x128x128xf32> to vector<128x128xf32>
    %cst = arith.constant dense<0.000000e+00> : vector<128x128xf32>
    %6 = tpu.matmul %1, %3, %cst {dimension_numbers = #tpu.dot_dimension_numbers<[1], [1], [0], [0], [0, 0, 1, 0], [], []>} : vector<128x128xf32>, vector<128x128xf32>, vector<128x128xf32> -> vector<128x128xf32>
    %cst_8 = arith.constant 0.0883883461 : f32
    %7 = vector.broadcast %cst_8 : f32 to vector<128x128xf32>
    %8 = arith.mulf %6, %7 : vector<128x128xf32>
    %cst_9 = arith.constant dense<0xFF800000> : vector<128xf32>
    %9 = vector.multi_reduction <maximumf>, %8, %cst_9 [1] : vector<128x128xf32> to vector<128xf32>
    %10 = vector.shape_cast %9 : vector<128xf32> to vector<128x1xf32>
    %11 = vector.broadcast %10 : vector<128x1xf32> to vector<128x128xf32>
    %12 = arith.subf %8, %11 : vector<128x128xf32>
    %13 = math.exp %12 : vector<128x128xf32>
    %cst_10 = arith.constant dense<0.000000e+00> : vector<128xf32>
    %14 = vector.multi_reduction <add>, %13, %cst_10 [1] : vector<128x128xf32> to vector<128xf32>
    %15 = vector.shape_cast %14 : vector<128xf32> to vector<128x1xf32>
    %16 = vector.broadcast %15 : vector<128x1xf32> to vector<128x128xf32>
    %17 = arith.divf %13, %16 : vector<128x128xf32>
    %cst_11 = arith.constant dense<0.000000e+00> : vector<128x128xf32>
    %18 = tpu.matmul %17, %5, %cst_11 {dimension_numbers = #tpu.dot_dimension_numbers<[1], [0], [0], [1], [0, 0, 1, 1], [], []>} : vector<128x128xf32>, vector<128x128xf32>, vector<128x128xf32> -> vector<128x128xf32>
    %c0_12 = arith.constant 0 : index
    %c0_13 = arith.constant 0 : index
    %c0_14 = arith.constant 0 : index
    %19 = vector.load %arg4[%c0_12, %c0_13, %c0_14] : memref<1x128x128xf32, #tpu.memory_space<vmem>>, vector<1x128x128xf32>
    %20 = vector.shape_cast %19 : vector<1x128x128xf32> to vector<128x128xf32>
    %21 = vector.shape_cast %18 : vector<128x128xf32> to vector<1x128x128xf32>
    tpu.vector_store %arg4[%c0_12, %c0_13, %c0_14], %21 {strides = array<i32>} : memref<1x128x128xf32, #tpu.memory_space<vmem>>, vector<1x128x128xf32>,
    return
  }
  func.func @transform_0(%arg0: i32) -> (i32, i32, i32) {
    %c0_i32 = arith.constant 0 : i32
    %c0_i32_0 = arith.constant 0 : i32
    %c0_i32_1 = arith.constant 0 : i32
    return %arg0, %c0_i32, %c0_i32_0 : i32, i32, i32
  }
  func.func @transform_1(%arg0: i32) -> (i32, i32, i32) {
    %c0_i32 = arith.constant 0 : i32
    %c0_i32_0 = arith.constant 0 : i32
    %c0_i32_1 = arith.constant 0 : i32
    return %arg0, %c0_i32, %c0_i32_0 : i32, i32, i32
  }
  func.func @transform_2(%arg0: i32) -> (i32, i32, i32) {
    %c0_i32 = arith.constant 0 : i32
    %c0_i32_0 = arith.constant 0 : i32
    %c0_i32_1 = arith.constant 0 : i32
    return %arg0, %c0_i32, %c0_i32_0 : i32, i32, i32
  }
  func.func @transform_3(%arg0: i32) -> (i32, i32, i32) {
    %c0_i32 = arith.constant 0 : i32
    %c0_i32_0 = arith.constant 0 : i32
    %c0_i32_1 = arith.constant 0 : i32
    return %arg0, %c0_i32, %c0_i32_0 : i32, i32, i32
  }
}

module attributes {stable_mosaic.version = 11 : i64} {
  func.func @_linear_kernel(%arg0: i32, %arg1: memref<128x256xf32, #tpu.memory_space<vmem>>, %arg2: memref<256x1024xf32, #tpu.memory_space<vmem>>, %arg3: memref<1x1024xf32, #tpu.memory_space<vmem>>, %arg4: memref<128x512xf32, #tpu.memory_space<vmem>>) attributes {dimension_semantics = [#tpu.dimension_semantics<parallel>], iteration_bounds = array<i64: 2>, scalar_prefetch = 0 : i64, scratch_operands = 0 : i64, tpu.core_type = #tpu.core_type<tc>, window_params = [{transform_indices = @transform_0, window_bounds = array<i64: 128, 256>}, {pipeline_mode = #tpu.pipeline_mode<synchronous>, transform_indices = @transform_1, window_bounds = array<i64: 256, 1024>}, {pipeline_mode = #tpu.pipeline_mode<synchronous>, transform_indices = @transform_2, window_bounds = array<i64: 1, 1024>}, {transform_indices = @transform_3, window_bounds = array<i64: 128, 512>}]} {
    %c0 = arith.constant 0 : index
    %c0_0 = arith.constant 0 : index
    %0 = vector.load %arg1[%c0, %c0_0] : memref<128x256xf32, #tpu.memory_space<vmem>>, vector<128x256xf32>
    %c0_1 = arith.constant 0 : index
    %c0_2 = arith.constant 0 : index
    %1 = vector.load %arg2[%c0_1, %c0_2] : memref<256x1024xf32, #tpu.memory_space<vmem>>, vector<256x1024xf32>
    %cst = arith.constant dense<0.000000e+00> : vector<128x1024xf32>
    %2 = tpu.matmul %0, %1, %cst {dimension_numbers = #tpu.dot_dimension_numbers<[1], [0], [0], [1], [0, 0, 1, 1], [], []>} : vector<128x256xf32>, vector<256x1024xf32>, vector<128x1024xf32> -> vector<128x1024xf32>
    %c0_3 = arith.constant 0 : index
    %c0_4 = arith.constant 0 : index
    %3 = vector.load %arg3[%c0_3, %c0_4] : memref<1x1024xf32, #tpu.memory_space<vmem>>, vector<1x1024xf32>
    %4 = vector.broadcast %3 : vector<1x1024xf32> to vector<128x1024xf32>
    %5 = arith.addf %2, %4 : vector<128x1024xf32>
    %6 = vector.extract_strided_slice %5 {offsets = [0, 0], sizes = [128, 512], strides = [1, 1]} : vector<128x1024xf32> to vector<128x512xf32>
    %cst_5 = arith.constant 5.000000e-01 : f32
    %7 = vector.broadcast %cst_5 : f32 to vector<128x512xf32>
    %8 = arith.mulf %7, %6 : vector<128x512xf32>
    %cst_6 = arith.constant 4.471500e-02 : f32
    %9 = vector.broadcast %cst_6 : f32 to vector<128x512xf32>
    %10 = arith.mulf %9, %6 : vector<128x512xf32>
    %11 = arith.mulf %10, %6 : vector<128x512xf32>
    %12 = arith.mulf %11, %6 : vector<128x512xf32>
    %13 = arith.addf %6, %12 : vector<128x512xf32>
    %cst_7 = arith.constant 0.797884583 : f32
    %14 = vector.broadcast %cst_7 : f32 to vector<128x512xf32>
    %15 = arith.mulf %14, %13 : vector<128x512xf32>
    %16 = math.tanh %15 : vector<128x512xf32>
    %cst_8 = arith.constant 1.000000e+00 : f32
    %17 = vector.broadcast %cst_8 : f32 to vector<128x512xf32>
    %18 = arith.addf %17, %16 : vector<128x512xf32>
    %19 = arith.mulf %8, %18 : vector<128x512xf32>
    %20 = vector.extract_strided_slice %5 {offsets = [0, 512], sizes = [128, 512], strides = [1, 1]} : vector<128x1024xf32> to vector<128x512xf32>
    %21 = arith.mulf %19, %20 : vector<128x512xf32>
    %c0_9 = arith.constant 0 : index
    %c0_10 = arith.constant 0 : index
    %22 = vector.load %arg4[%c0_9, %c0_10] : memref<128x512xf32, #tpu.memory_space<vmem>>, vector<128x512xf32>
    tpu.vector_store %arg4[%c0_9, %c0_10], %21 {strides = array<i32>} : memref<128x512xf32, #tpu.memory_space<vmem>>, vector<128x512xf32>,
    return
  }
  func.func @transform_0(%arg0: i32) -> (i32, i32) {
    %c0_i32 = arith.constant 0 : i32
    %c0_i32_0 = arith.constant 0 : i32
    return %arg0, %c0_i32 : i32, i32
  }
  func.func @transform_1(%arg0: i32) -> (i32, i32) {
    %c0_i32 = arith.constant 0 : i32
    %c0_i32_0 = arith.constant 0 : i32
    %c0_i32_1 = arith.constant 0 : i32
    return %c0_i32, %c0_i32_0 : i32, i32
  }
  func.func @transform_2(%arg0: i32) -> (i32, i32) {
    %c0_i32 = arith.constant 0 : i32
    %c0_i32_0 = arith.constant 0 : i32
    %c0_i32_1 = arith.constant 0 : i32
    return %c0_i32, %c0_i32_0 : i32, i32
  }
  func.func @transform_3(%arg0: i32) -> (i32, i32) {
    %c0_i32 = arith.constant 0 : i32
    %c0_i32_0 = arith.constant 0 : i32
    return %arg0, %c0_i32 : i32, i32
  }
}

module attributes {stable_mosaic.version = 11 : i64} {
  func.func @_linear_kernel(%arg0: i32, %arg1: memref<128x512xf32, #tpu.memory_space<vmem>>, %arg2: memref<512x256xf32, #tpu.memory_space<vmem>>, %arg3: memref<1x256xf32, #tpu.memory_space<vmem>>, %arg4: memref<128x256xf32, #tpu.memory_space<vmem>>) attributes {dimension_semantics = [#tpu.dimension_semantics<parallel>], iteration_bounds = array<i64: 2>, scalar_prefetch = 0 : i64, scratch_operands = 0 : i64, tpu.core_type = #tpu.core_type<tc>, window_params = [{transform_indices = @transform_0, window_bounds = array<i64: 128, 512>}, {pipeline_mode = #tpu.pipeline_mode<synchronous>, transform_indices = @transform_1, window_bounds = array<i64: 512, 256>}, {pipeline_mode = #tpu.pipeline_mode<synchronous>, transform_indices = @transform_2, window_bounds = array<i64: 1, 256>}, {transform_indices = @transform_3, window_bounds = array<i64: 128, 256>}]} {
    %c0 = arith.constant 0 : index
    %c0_0 = arith.constant 0 : index
    %0 = vector.load %arg1[%c0, %c0_0] : memref<128x512xf32, #tpu.memory_space<vmem>>, vector<128x512xf32>
    %c0_1 = arith.constant 0 : index
    %c0_2 = arith.constant 0 : index
    %1 = vector.load %arg2[%c0_1, %c0_2] : memref<512x256xf32, #tpu.memory_space<vmem>>, vector<512x256xf32>
    %cst = arith.constant dense<0.000000e+00> : vector<128x256xf32>
    %2 = tpu.matmul %0, %1, %cst {dimension_numbers = #tpu.dot_dimension_numbers<[1], [0], [0], [1], [0, 0, 1, 1], [], []>} : vector<128x512xf32>, vector<512x256xf32>, vector<128x256xf32> -> vector<128x256xf32>
    %c0_3 = arith.constant 0 : index
    %c0_4 = arith.constant 0 : index
    %3 = vector.load %arg3[%c0_3, %c0_4] : memref<1x256xf32, #tpu.memory_space<vmem>>, vector<1x256xf32>
    %4 = vector.broadcast %3 : vector<1x256xf32> to vector<128x256xf32>
    %5 = arith.addf %2, %4 : vector<128x256xf32>
    %c0_5 = arith.constant 0 : index
    %c0_6 = arith.constant 0 : index
    %6 = vector.load %arg4[%c0_5, %c0_6] : memref<128x256xf32, #tpu.memory_space<vmem>>, vector<128x256xf32>
    tpu.vector_store %arg4[%c0_5, %c0_6], %5 {strides = array<i32>} : memref<128x256xf32, #tpu.memory_space<vmem>>, vector<128x256xf32>,
    return
  }
  func.func @transform_0(%arg0: i32) -> (i32, i32) {
    %c0_i32 = arith.constant 0 : i32
    %c0_i32_0 = arith.constant 0 : i32
    return %arg0, %c0_i32 : i32, i32
  }
  func.func @transform_1(%arg0: i32) -> (i32, i32) {
    %c0_i32 = arith.constant 0 : i32
    %c0_i32_0 = arith.constant 0 : i32
    %c0_i32_1 = arith.constant 0 : i32
    return %c0_i32, %c0_i32_0 : i32, i32
  }
  func.func @transform_2(%arg0: i32) -> (i32, i32) {
    %c0_i32 = arith.constant 0 : i32
    %c0_i32_0 = arith.constant 0 : i32
    %c0_i32_1 = arith.constant 0 : i32
    return %c0_i32, %c0_i32_0 : i32, i32
  }
  func.func @transform_3(%arg0: i32) -> (i32, i32) {
    %c0_i32 = arith.constant 0 : i32
    %c0_i32_0 = arith.constant 0 : i32
    return %arg0, %c0_i32 : i32, i32
  }
}

module attributes {stable_mosaic.version = 11 : i64} {
  func.func @_linear_kernel(%arg0: i32, %arg1: memref<128x256xf32, #tpu.memory_space<vmem>>, %arg2: memref<256x256xf32, #tpu.memory_space<vmem>>, %arg3: memref<1x256xf32, #tpu.memory_space<vmem>>, %arg4: memref<128x256xf32, #tpu.memory_space<vmem>>) attributes {dimension_semantics = [#tpu.dimension_semantics<parallel>], iteration_bounds = array<i64: 2>, scalar_prefetch = 0 : i64, scratch_operands = 0 : i64, tpu.core_type = #tpu.core_type<tc>, window_params = [{transform_indices = @transform_0, window_bounds = array<i64: 128, 256>}, {pipeline_mode = #tpu.pipeline_mode<synchronous>, transform_indices = @transform_1, window_bounds = array<i64: 256, 256>}, {pipeline_mode = #tpu.pipeline_mode<synchronous>, transform_indices = @transform_2, window_bounds = array<i64: 1, 256>}, {transform_indices = @transform_3, window_bounds = array<i64: 128, 256>}]} {
    %c0 = arith.constant 0 : index
    %c0_0 = arith.constant 0 : index
    %0 = vector.load %arg1[%c0, %c0_0] : memref<128x256xf32, #tpu.memory_space<vmem>>, vector<128x256xf32>
    %c0_1 = arith.constant 0 : index
    %c0_2 = arith.constant 0 : index
    %1 = vector.load %arg2[%c0_1, %c0_2] : memref<256x256xf32, #tpu.memory_space<vmem>>, vector<256x256xf32>
    %cst = arith.constant dense<0.000000e+00> : vector<128x256xf32>
    %2 = tpu.matmul %0, %1, %cst {dimension_numbers = #tpu.dot_dimension_numbers<[1], [0], [0], [1], [0, 0, 1, 1], [], []>} : vector<128x256xf32>, vector<256x256xf32>, vector<128x256xf32> -> vector<128x256xf32>
    %c0_3 = arith.constant 0 : index
    %c0_4 = arith.constant 0 : index
    %3 = vector.load %arg3[%c0_3, %c0_4] : memref<1x256xf32, #tpu.memory_space<vmem>>, vector<1x256xf32>
    %4 = vector.broadcast %3 : vector<1x256xf32> to vector<128x256xf32>
    %5 = arith.addf %2, %4 : vector<128x256xf32>
    %cst_5 = arith.constant 5.000000e-01 : f32
    %6 = vector.broadcast %cst_5 : f32 to vector<128x256xf32>
    %7 = arith.mulf %6, %5 : vector<128x256xf32>
    %cst_6 = arith.constant 4.471500e-02 : f32
    %8 = vector.broadcast %cst_6 : f32 to vector<128x256xf32>
    %9 = arith.mulf %8, %5 : vector<128x256xf32>
    %10 = arith.mulf %9, %5 : vector<128x256xf32>
    %11 = arith.mulf %10, %5 : vector<128x256xf32>
    %12 = arith.addf %5, %11 : vector<128x256xf32>
    %cst_7 = arith.constant 0.797884583 : f32
    %13 = vector.broadcast %cst_7 : f32 to vector<128x256xf32>
    %14 = arith.mulf %13, %12 : vector<128x256xf32>
    %15 = math.tanh %14 : vector<128x256xf32>
    %cst_8 = arith.constant 1.000000e+00 : f32
    %16 = vector.broadcast %cst_8 : f32 to vector<128x256xf32>
    %17 = arith.addf %16, %15 : vector<128x256xf32>
    %18 = arith.mulf %7, %17 : vector<128x256xf32>
    %c0_9 = arith.constant 0 : index
    %c0_10 = arith.constant 0 : index
    %19 = vector.load %arg4[%c0_9, %c0_10] : memref<128x256xf32, #tpu.memory_space<vmem>>, vector<128x256xf32>
    tpu.vector_store %arg4[%c0_9, %c0_10], %18 {strides = array<i32>} : memref<128x256xf32, #tpu.memory_space<vmem>>, vector<128x256xf32>,
    return
  }
  func.func @transform_0(%arg0: i32) -> (i32, i32) {
    %c0_i32 = arith.constant 0 : i32
    %c0_i32_0 = arith.constant 0 : i32
    return %arg0, %c0_i32 : i32, i32
  }
  func.func @transform_1(%arg0: i32) -> (i32, i32) {
    %c0_i32 = arith.constant 0 : i32
    %c0_i32_0 = arith.constant 0 : i32
    %c0_i32_1 = arith.constant 0 : i32
    return %c0_i32, %c0_i32_0 : i32, i32
  }
  func.func @transform_2(%arg0: i32) -> (i32, i32) {
    %c0_i32 = arith.constant 0 : i32
    %c0_i32_0 = arith.constant 0 : i32
    %c0_i32_1 = arith.constant 0 : i32
    return %c0_i32, %c0_i32_0 : i32, i32
  }
  func.func @transform_3(%arg0: i32) -> (i32, i32) {
    %c0_i32 = arith.constant 0 : i32
    %c0_i32_0 = arith.constant 0 : i32
    return %arg0, %c0_i32 : i32, i32
  }
}

module attributes {stable_mosaic.version = 11 : i64} {
  func.func @_linear_kernel(%arg0: i32, %arg1: memref<128x256xf32, #tpu.memory_space<vmem>>, %arg2: memref<256x2xf32, #tpu.memory_space<vmem>>, %arg3: memref<1x2xf32, #tpu.memory_space<vmem>>, %arg4: memref<128x2xf32, #tpu.memory_space<vmem>>) attributes {dimension_semantics = [#tpu.dimension_semantics<parallel>], iteration_bounds = array<i64: 2>, scalar_prefetch = 0 : i64, scratch_operands = 0 : i64, tpu.core_type = #tpu.core_type<tc>, window_params = [{transform_indices = @transform_0, window_bounds = array<i64: 128, 256>}, {pipeline_mode = #tpu.pipeline_mode<synchronous>, transform_indices = @transform_1, window_bounds = array<i64: 256, 2>}, {pipeline_mode = #tpu.pipeline_mode<synchronous>, transform_indices = @transform_2, window_bounds = array<i64: 1, 2>}, {transform_indices = @transform_3, window_bounds = array<i64: 128, 2>}]} {
    %c0 = arith.constant 0 : index
    %c0_0 = arith.constant 0 : index
    %0 = vector.load %arg1[%c0, %c0_0] : memref<128x256xf32, #tpu.memory_space<vmem>>, vector<128x256xf32>
    %c0_1 = arith.constant 0 : index
    %c0_2 = arith.constant 0 : index
    %1 = vector.load %arg2[%c0_1, %c0_2] : memref<256x2xf32, #tpu.memory_space<vmem>>, vector<256x2xf32>
    %cst = arith.constant dense<0.000000e+00> : vector<128x2xf32>
    %2 = tpu.matmul %0, %1, %cst {dimension_numbers = #tpu.dot_dimension_numbers<[1], [0], [0], [1], [0, 0, 1, 1], [], []>} : vector<128x256xf32>, vector<256x2xf32>, vector<128x2xf32> -> vector<128x2xf32>
    %c0_3 = arith.constant 0 : index
    %c0_4 = arith.constant 0 : index
    %3 = vector.load %arg3[%c0_3, %c0_4] : memref<1x2xf32, #tpu.memory_space<vmem>>, vector<1x2xf32>
    %4 = vector.broadcast %3 : vector<1x2xf32> to vector<128x2xf32>
    %5 = arith.addf %2, %4 : vector<128x2xf32>
    %c0_5 = arith.constant 0 : index
    %c0_6 = arith.constant 0 : index
    %6 = vector.load %arg4[%c0_5, %c0_6] : memref<128x2xf32, #tpu.memory_space<vmem>>, vector<128x2xf32>
    tpu.vector_store %arg4[%c0_5, %c0_6], %5 {strides = array<i32>} : memref<128x2xf32, #tpu.memory_space<vmem>>, vector<128x2xf32>,
    return
  }
  func.func @transform_0(%arg0: i32) -> (i32, i32) {
    %c0_i32 = arith.constant 0 : i32
    %c0_i32_0 = arith.constant 0 : i32
    return %arg0, %c0_i32 : i32, i32
  }
  func.func @transform_1(%arg0: i32) -> (i32, i32) {
    %c0_i32 = arith.constant 0 : i32
    %c0_i32_0 = arith.constant 0 : i32
    %c0_i32_1 = arith.constant 0 : i32
    return %c0_i32, %c0_i32_0 : i32, i32
  }
  func.func @transform_2(%arg0: i32) -> (i32, i32) {
    %c0_i32 = arith.constant 0 : i32
    %c0_i32_0 = arith.constant 0 : i32
    %c0_i32_1 = arith.constant 0 : i32
    return %c0_i32, %c0_i32_0 : i32, i32
  }
  func.func @transform_3(%arg0: i32) -> (i32, i32) {
    %c0_i32 = arith.constant 0 : i32
    %c0_i32_0 = arith.constant 0 : i32
    return %arg0, %c0_i32 : i32, i32
  }
}

</mosaic_0001>

<llo_original>
// kernel: _lambda_.15
$region0: #{_lambda_.15}
  #allocation0 [shape = 'u32[]', space=smem, size = 0x4, offset = 0x4, fixed_abs, tag = 'smem constant byte address 0x4 - core index']
  #allocation1 [shape = 'u32[144,128]{1,0:T(1,128)}', space=vmem, size = 0x12000, scoped, tag = 'internal scratch']
  %s0 = inlined_call_operand.vmem [shape: f32[2,128,256], index: 0, kind: input, shape index: {}]
  %s1 = inlined_call_operand.vmem [shape: f32[128,128], index: 1, kind: input, shape index: {}]
  %s2 = inlined_call_operand.vmem [shape: f32[2,128,256], index: 2, kind: output, shape index: {}]
  %s3 = sld [smem:[#allocation0]]
  $region41: #{_lambda_.15} parent=0
    _
  %s5 = ssub.s32 1, %s3
  %s6 = scalar_select 0, %s5, %s3
  loop: start=0, step=1, limit=4
  $region2: #{_lambda_.15} parent=0 // loop_pre_header
    _
  $region3: #{_lambda_.15} parent=0 // loop_header
    %s8 = sphi 0, %s12
    %p9 = scmp.ge.s32.totalorder %s8, 4
    %s18 = sphi 0, %s20
    %s21 = sphi 0, %s18
    %s22 = sphi 0, %s21
    %s38 = sphi 0, %s22
    %s42 = sphi 0, %s42
    %s44 = sphi 0, %s42
    %s45 = sphi 0, %s44
    %s59 = sphi 0, %s45
    %s65 = sphi 0, %s67
    %s68 = sphi 0, %s65
    %s69 = sphi 0, %s68
    %s85 = sphi 0, %s69
  $region4: #{_lambda_.15} parent=0 // loop_header_branch
    %11 = sbr.rel (%p9) target = $region8
  $region5: #{_lambda_.15} parent=0 // loop_body
    %s13 = ssub.s32 %s8, 1
    %s14 = ssub.s32 %s8, 2
    %s15 = sadd.s32 %s8, 1
    %s16 = ssub.s32 %s8, %s15
    %p17 = scmp.eq.s32.totalorder %s16, 0
    %s19 = sadd.s32 %s18, 1
    %s20 = scalar_select %p17, %s18, %s19
    %p23 = pneg %p17
    %p24 = scmp.eq.s32.totalorder %s8, 1
    %p25 = por %p23, %p24
    %p26 = scmp.ne.s32.totalorder %s18, %s21
    %p27 = scmp.eq.s32.totalorder %s8, 0
    %p28 = por %p26, %p27
    %p29 = scmp.ne.s32.totalorder %s18, %s21
    %p30 = scmp.eq.s32.totalorder %s13, 1
    %p31 = por %p29, %p30
    %p32 = scmp.ne.s32.totalorder %s21, %s22
    %p33 = scmp.eq.s32.totalorder %s13, 0
    %p34 = por %p32, %p33
    %p35 = scmp.ne.s32.totalorder %s21, %s22
    %p36 = scmp.eq.s32.totalorder %s14, 1
    %p37 = por %p35, %p36
    %p39 = scmp.ne.s32.totalorder %s22, %s38
    %p40 = scmp.eq.s32.totalorder %s14, 0
    %p41 = por %p39, %p40
    %s43 = sadd.s32 %s42, 1
    %p46 = scmp.eq.s32.totalorder %s8, 1
    %p47 = scmp.ne.s32.totalorder %s42, %s44
    %p48 = scmp.eq.s32.totalorder %s8, 0
    %p49 = por %p47, %p48
    %p50 = scmp.ne.s32.totalorder %s42, %s44
    %p51 = scmp.eq.s32.totalorder %s13, 1
    %p52 = por %p50, %p51
    %p53 = scmp.ne.s32.totalorder %s44, %s45
    %p54 = scmp.eq.s32.totalorder %s13, 0
    %p55 = por %p53, %p54
    %p56 = scmp.ne.s32.totalorder %s44, %s45
    %p57 = scmp.eq.s32.totalorder %s14, 1
    %p58 = por %p56, %p57
    %p60 = scmp.ne.s32.totalorder %s45, %s59
    %p61 = scmp.eq.s32.totalorder %s14, 0
    %p62 = por %p60, %p61
    %s63 = ssub.s32 %s8, %s15
    %p64 = scmp.eq.s32.totalorder %s63, 0
    %s66 = sadd.s32 %s65, 1
    %s67 = scalar_select %p64, %s65, %s66
    %p70 = pneg %p64
    %p71 = scmp.eq.s32.totalorder %s8, 1
    %p72 = por %p70, %p71
    %p73 = scmp.ne.s32.totalorder %s65, %s68
    %p74 = scmp.eq.s32.totalorder %s8, 0
    %p75 = por %p73, %p74
    %p76 = scmp.ne.s32.totalorder %s65, %s68
    %p77 = scmp.eq.s32.totalorder %s13, 1
    %p78 = por %p76, %p77
    %p79 = scmp.ne.s32.totalorder %s68, %s69
    %p80 = scmp.eq.s32.totalorder %s13, 0
    %p81 = por %p79, %p80
    %p82 = scmp.ne.s32.totalorder %s68, %s69
    %p83 = scmp.eq.s32.totalorder %s14, 1
    %p84 = por %p82, %p83
    %p86 = scmp.ne.s32.totalorder %s69, %s85
    %p87 = scmp.eq.s32.totalorder %s14, 0
    %p88 = por %p86, %p87
    %p89 = scmp.le.s32.totalorder 1, %s8
    %p90 = scmp.lt.s32.totalorder %s8, 3
    %p91 = pnand %p89, %p90
    %p92 = pneg %p91
    // Predicated region
    $region9: #{_lambda_.15} parent=5 // pred_check
      _
    $region10: #{_lambda_.15} parent=5 // pred_check_branch
      %94 = sbr.rel (%p91) target = $region12
    $region11: #{_lambda_.15} parent=5 // pred_region
      %s95 = ssub.s32 %s8, 1
      // Predicated region
      $region13: #{_lambda_.15} parent=11 // pred_check
        %p96 = pneg %p55
      $region14: #{_lambda_.15} parent=11 // pred_check_branch
        %98 = sbr.rel (%p96) target = $region16
      $region15: #{_lambda_.15} parent=11 // pred_region
        _
      $region16: #{_lambda_.15} parent=11 // pred_fallthru
        _
    $region12: #{_lambda_.15} parent=5 // pred_fallthru
      _
    %p99 = scmp.lt.s32.totalorder %s8, 2
    // Predicated region
    $region17: #{_lambda_.15} parent=5 // pred_check
      %p100 = pneg %p99
    $region18: #{_lambda_.15} parent=5 // pred_check_branch
      %102 = sbr.rel (%p100) target = $region20
    $region19: #{_lambda_.15} parent=5 // pred_region
      // Predicated region
      $region21: #{_lambda_.15} parent=19 // pred_check
        %p103 = pneg %p28
      $region22: #{_lambda_.15} parent=19 // pred_check_branch
        %105 = sbr.rel (%p103) target = $region24
      $region23: #{_lambda_.15} parent=19 // pred_region
        %p106 = scmp.lt.s32.totalorder %s8, 1
        %s107 = scalar_select %p106, %s8, 1
        %s108 = smul.addr %s107, 32
        %s109 = smul.addr %s108, 8
        %s110 = scalar_lea.vmem %s0, %s109
      $region24: #{_lambda_.15} parent=19 // pred_fallthru
        _
    $region20: #{_lambda_.15} parent=5 // pred_fallthru
      _
    %p111 = scmp.le.s32.totalorder 1, %s8
    %p112 = scmp.lt.s32.totalorder %s8, 3
    %p113 = pnand %p111, %p112
    %p114 = pneg %p113
    // Predicated region
    $region25: #{_lambda_.15} parent=5 // pred_check
      _
    $region26: #{_lambda_.15} parent=5 // pred_check_branch
      %116 = sbr.rel (%p113) target = $region28
    $region27: #{_lambda_.15} parent=5 // pred_region
      %s117 = ssub.s32 %s8, 1
      %p118 = scmp.lt.s32.totalorder %s13, 1
      %s119 = scalar_select %p118, %s13, 1
      %s120 = smul.addr %s119, 32
      %s121 = smul.addr %s120, 8
      %s122 = scalar_lea.vmem %s0, %s121
      %p123 = pneg %p34
      %p124 = pneg %p31
      %p125 = pneg %p55
      %p126 = pneg %p52
      %p127 = pneg %p81
      %p128 = pneg %p78
      %p129 = scmp.lt.s32.totalorder %s13, 1
      %s130 = scalar_select %p129, %s13, 1
      %s131 = smul.addr %s130, 32
      %s132 = smul.addr %s131, 8
      %s133 = scalar_lea.vmem %s2, %s132
      %p134 = scmp.lt.s32.totalorder %s13, 1
      %s135 = scalar_select %p134, %s13, 1
      %s136 = smul.addr %s135, 32
      %s137 = smul.addr %s136, 8
      %s138 = scalar_lea.vmem %s0, %s137
      %p139 = scmp.lt.s32.totalorder %s13, 1
      %s140 = scalar_select %p139, %s13, 1
      %s141 = smul.addr %s140, 32
      %s142 = smul.addr %s141, 8
      %s143 = scalar_lea.vmem %s2, %s142
      %v144 = vld [vmem:[%s1] sm:$0xff]
      %v145 = vld [vmem:[%s1 + $0x8] sm:$0xff]
      %v146 = vld [vmem:[%s1 + $0x10] sm:$0xff]
      %v147 = vld [vmem:[%s1 + $0x18] sm:$0xff]
      %v148 = vld [vmem:[%s1 + $0x20] sm:$0xff]
      %v149 = vld [vmem:[%s1 + $0x28] sm:$0xff]
      %v150 = vld [vmem:[%s1 + $0x30] sm:$0xff]
      %v151 = vld [vmem:[%s1 + $0x38] sm:$0xff]
      %v152 = vld [vmem:[%s1 + $0x40] sm:$0xff]
      %v153 = vld [vmem:[%s1 + $0x48] sm:$0xff]
      %v154 = vld [vmem:[%s1 + $0x50] sm:$0xff]
      %v155 = vld [vmem:[%s1 + $0x58] sm:$0xff]
      %v156 = vld [vmem:[%s1 + $0x60] sm:$0xff]
      %v157 = vld [vmem:[%s1 + $0x68] sm:$0xff]
      %v158 = vld [vmem:[%s1 + $0x70] sm:$0xff]
      %v159 = vld [vmem:[%s1 + $0x78] sm:$0xff]
      %v160 = vld [vmem:[%s138] sm:$0xff]
      %v161 = vld [vmem:[%s138 + $0x8] sm:$0xff]
      %v162 = vld [vmem:[%s138 + $0x10] sm:$0xff]
      %v163 = vld [vmem:[%s138 + $0x18] sm:$0xff]
      %v164 = vld [vmem:[%s138 + $0x20] sm:$0xff]
      %v165 = vld [vmem:[%s138 + $0x28] sm:$0xff]
      %v166 = vld [vmem:[%s138 + $0x30] sm:$0xff]
      %v167 = vld [vmem:[%s138 + $0x38] sm:$0xff]
      %v168 = vld [vmem:[%s138 + $0x40] sm:$0xff]
      %v169 = vld [vmem:[%s138 + $0x48] sm:$0xff]
      %v170 = vld [vmem:[%s138 + $0x50] sm:$0xff]
      %v171 = vld [vmem:[%s138 + $0x58] sm:$0xff]
      %v172 = vld [vmem:[%s138 + $0x60] sm:$0xff]
      %v173 = vld [vmem:[%s138 + $0x68] sm:$0xff]
      %v174 = vld [vmem:[%s138 + $0x70] sm:$0xff]
      %v175 = vld [vmem:[%s138 + $0x78] sm:$0xff]
      %v176 = vld [vmem:[%s138 + $0x80] sm:$0xff]
      %v177 = vld [vmem:[%s138 + $0x88] sm:$0xff]
      %v178 = vld [vmem:[%s138 + $0x90] sm:$0xff]
      %v179 = vld [vmem:[%s138 + $0x98] sm:$0xff]
      %v180 = vld [vmem:[%s138 + $0xa0] sm:$0xff]
      %v181 = vld [vmem:[%s138 + $0xa8] sm:$0xff]
      %v182 = vld [vmem:[%s138 + $0xb0] sm:$0xff]
      %v183 = vld [vmem:[%s138 + $0xb8] sm:$0xff]
      %v184 = vld [vmem:[%s138 + $0xc0] sm:$0xff]
      %v185 = vld [vmem:[%s138 + $0xc8] sm:$0xff]
      %v186 = vld [vmem:[%s138 + $0xd0] sm:$0xff]
      %v187 = vld [vmem:[%s138 + $0xd8] sm:$0xff]
      %v188 = vld [vmem:[%s138 + $0xe0] sm:$0xff]
      %v189 = vld [vmem:[%s138 + $0xe8] sm:$0xff]
      %v190 = vld [vmem:[%s138 + $0xf0] sm:$0xff]
      %v191 = vld [vmem:[%s138 + $0xf8] sm:$0xff]
      %192 = vmatprep.subr.mxu0 %v161
      %193 = vmatpush1.msra.mxu0 %v160
      %194 = vmatprep.subr.mxu0 %v163
      %195 = vmatpush1.msra.mxu0 %v162
      %196 = vmatprep.subr.mxu0 %v165
      %197 = vmatpush1.msra.mxu0 %v164
      %198 = vmatprep.subr.mxu0 %v167
      %199 = vmatpush1.msra.mxu0 %v166
      %200 = vmatprep.subr.mxu0 %v169
      %201 = vmatpush1.msra.mxu0 %v168
      %202 = vmatprep.subr.mxu0 %v171
      %203 = vmatpush1.msra.mxu0 %v170
      %204 = vmatprep.subr.mxu0 %v173
      %205 = vmatpush1.msra.mxu0 %v172
      %206 = vmatprep.subr.mxu0 %v175
      %207 = vmatpush1.msra.mxu0 %v174
      %208 = vmatprep.subr.mxu0 %v177
      %209 = vmatpush1.msra.mxu0 %v176
      %210 = vmatprep.subr.mxu0 %v179
      %211 = vmatpush1.msra.mxu0 %v178
      %212 = vmatprep.subr.mxu0 %v181
      %213 = vmatpush1.msra.mxu0 %v180
      %214 = vmatprep.subr.mxu0 %v183
      %215 = vmatpush1.msra.mxu0 %v182
      %216 = vmatprep.subr.mxu0 %v185
      %217 = vmatpush1.msra.mxu0 %v184
      %218 = vmatprep.subr.mxu0 %v187
      %219 = vmatpush1.msra.mxu0 %v186
      %220 = vmatprep.subr.mxu0 %v189
      %221 = vmatpush1.msra.mxu0 %v188
      %222 = vmatprep.subr.mxu0 %v191
      %223 = vmatpush1.msra.mxu0 %v190
      %224 = vmatprep.subr.mxu0 0.0
      %225 = vmatpush1.msra.mxu0 0.0
      %226 = vmatprep.subr.mxu0 0.0
      %227 = vmatpush1.msra.mxu0 0.0
      %228 = vmatprep.subr.mxu0 0.0
      %229 = vmatpush1.msra.mxu0 0.0
      %230 = vmatprep.subr.mxu0 0.0
      %231 = vmatpush1.msra.mxu0 0.0
      %232 = vmatprep.subr.mxu0 0.0
      %233 = vmatpush1.msra.mxu0 0.0
      %234 = vmatprep.subr.mxu0 0.0
      %235 = vmatpush1.msra.mxu0 0.0
      %236 = vmatprep.subr.mxu0 0.0
      %237 = vmatpush1.msra.mxu0 0.0
      %238 = vmatprep.subr.mxu0 0.0
      %239 = vmatpush1.msra.mxu0 0.0
      %240 = vmatprep.subr.mxu0 0.0
      %241 = vmatpush1.msra.mxu0 0.0
      %242 = vmatprep.subr.mxu0 0.0
      %243 = vmatpush1.msra.mxu0 0.0
      %244 = vmatprep.subr.mxu0 0.0
      %245 = vmatpush1.msra.mxu0 0.0
      %246 = vmatprep.subr.mxu0 0.0
      %247 = vmatpush1.msra.mxu0 0.0
      %248 = vmatprep.subr.mxu0 0.0
      %249 = vmatpush1.msra.mxu0 0.0
      %250 = vmatprep.subr.mxu0 0.0
      %251 = vmatpush1.msra.mxu0 0.0
      %252 = vmatprep.subr.mxu0 0.0
      %253 = vmatpush1.msra.mxu0 0.0
      %254 = vmatprep.subr.mxu0 0.0
      %255 = vmatpush1.msra.mxu0 0.0
      %256 = vmatprep.mubr.f32.mxu0 0.0
      %257 = vmatmul.mubr.f32.gmra.mrb[0].mxu0 %v144
      %v258 = vpop.f32.mrb[0].mxu0
      %v259 = vadd.f32 0.0, %v258
      %v260 = vpop.f32.mrb[0].mxu0
      %v261 = vadd.f32 0.0, %v260
      %262 = vmatprep.mubr.f32.mxu0 0.0
      %263 = vmatmul.mubr.f32.gmra.mrb[0].mxu0 %v145
      %v264 = vpop.f32.mrb[0].mxu0
      %v265 = vadd.f32 0.0, %v264
      %v266 = vpop.f32.mrb[0].mxu0
      %v267 = vadd.f32 0.0, %v266
      %268 = vmatprep.mubr.f32.mxu0 0.0
      %269 = vmatmul.mubr.f32.gmra.mrb[0].mxu0 %v146
      %v270 = vpop.f32.mrb[0].mxu0
      %v271 = vadd.f32 0.0, %v270
      %v272 = vpop.f32.mrb[0].mxu0
      %v273 = vadd.f32 0.0, %v272
      %274 = vmatprep.mubr.f32.mxu0 0.0
      %275 = vmatmul.mubr.f32.gmra.mrb[0].mxu0 %v147
      %v276 = vpop.f32.mrb[0].mxu0
      %v277 = vadd.f32 0.0, %v276
      %v278 = vpop.f32.mrb[0].mxu0
      %v279 = vadd.f32 0.0, %v278
      %280 = vmatprep.mubr.f32.mxu0 0.0
      %281 = vmatmul.mubr.f32.gmra.mrb[0].mxu0 %v148
      %v282 = vpop.f32.mrb[0].mxu0
      %v283 = vadd.f32 0.0, %v282
      %v284 = vpop.f32.mrb[0].mxu0
      %v285 = vadd.f32 0.0, %v284
      %286 = vmatprep.mubr.f32.mxu0 0.0
      %287 = vmatmul.mubr.f32.gmra.mrb[0].mxu0 %v149
      %v288 = vpop.f32.mrb[0].mxu0
      %v289 = vadd.f32 0.0, %v288
      %v290 = vpop.f32.mrb[0].mxu0
      %v291 = vadd.f32 0.0, %v290
      %292 = vmatprep.mubr.f32.mxu0 0.0
      %293 = vmatmul.mubr.f32.gmra.mrb[0].mxu0 %v150
      %v294 = vpop.f32.mrb[0].mxu0
      %v295 = vadd.f32 0.0, %v294
      %v296 = vpop.f32.mrb[0].mxu0
      %v297 = vadd.f32 0.0, %v296
      %298 = vmatprep.mubr.f32.mxu0 0.0
      %299 = vmatmul.mubr.f32.gmra.mrb[0].mxu0 %v151
      %v300 = vpop.f32.mrb[0].mxu0
      %v301 = vadd.f32 0.0, %v300
      %v302 = vpop.f32.mrb[0].mxu0
      %v303 = vadd.f32 0.0, %v302
      %304 = vmatprep.mubr.f32.mxu0 0.0
      %305 = vmatmul.mubr.f32.gmra.mrb[0].mxu0 %v152
      %v306 = vpop.f32.mrb[0].mxu0
      %v307 = vadd.f32 0.0, %v306
      %v308 = vpop.f32.mrb[0].mxu0
      %v309 = vadd.f32 0.0, %v308
      %310 = vmatprep.mubr.f32.mxu0 0.0
      %311 = vmatmul.mubr.f32.gmra.mrb[0].mxu0 %v153
      %v312 = vpop.f32.mrb[0].mxu0
      %v313 = vadd.f32 0.0, %v312
      %v314 = vpop.f32.mrb[0].mxu0
      %v315 = vadd.f32 0.0, %v314
      %316 = vmatprep.mubr.f32.mxu0 0.0
      %317 = vmatmul.mubr.f32.gmra.mrb[0].mxu0 %v154
      %v318 = vpop.f32.mrb[0].mxu0
      %v319 = vadd.f32 0.0, %v318
      %v320 = vpop.f32.mrb[0].mxu0
      %v321 = vadd.f32 0.0, %v320
      %322 = vmatprep.mubr.f32.mxu0 0.0
      %323 = vmatmul.mubr.f32.gmra.mrb[0].mxu0 %v155
      %v324 = vpop.f32.mrb[0].mxu0
      %v325 = vadd.f32 0.0, %v324
      %v326 = vpop.f32.mrb[0].mxu0
      %v327 = vadd.f32 0.0, %v326
      %328 = vmatprep.mubr.f32.mxu0 0.0
      %329 = vmatmul.mubr.f32.gmra.mrb[0].mxu0 %v156
      %v330 = vpop.f32.mrb[0].mxu0
      %v331 = vadd.f32 0.0, %v330
      %v332 = vpop.f32.mrb[0].mxu0
      %v333 = vadd.f32 0.0, %v332
      %334 = vmatprep.mubr.f32.mxu0 0.0
      %335 = vmatmul.mubr.f32.gmra.mrb[0].mxu0 %v157
      %v336 = vpop.f32.mrb[0].mxu0
      %v337 = vadd.f32 0.0, %v336
      %v338 = vpop.f32.mrb[0].mxu0
      %v339 = vadd.f32 0.0, %v338
      %340 = vmatprep.mubr.f32.mxu0 0.0
      %341 = vmatmul.mubr.f32.gmra.mrb[0].mxu0 %v158
      %v342 = vpop.f32.mrb[0].mxu0
      %v343 = vadd.f32 0.0, %v342
      %v344 = vpop.f32.mrb[0].mxu0
      %v345 = vadd.f32 0.0, %v344
      %346 = vmatprep.mubr.f32.mxu0 0.0
      %347 = vmatmul.mubr.f32.gmra.mrb[0].mxu0 %v159
      %v348 = vpop.f32.mrb[0].mxu0
      %v349 = vadd.f32 0.0, %v348
      %v350 = vpop.f32.mrb[0].mxu0
      %v351 = vadd.f32 0.0, %v350
      %352 = vdwg.mxu0
      %353 = vst [vmem:[%s143] sm:$0xff] %v259
      %354 = vst [vmem:[%s143 + $0x8] sm:$0xff] %v261
      %355 = vst [vmem:[%s143 + $0x10] sm:$0xff] %v265
      %356 = vst [vmem:[%s143 + $0x18] sm:$0xff] %v267
      %357 = vst [vmem:[%s143 + $0x20] sm:$0xff] %v271
      %358 = vst [vmem:[%s143 + $0x28] sm:$0xff] %v273
      %359 = vst [vmem:[%s143 + $0x30] sm:$0xff] %v277
      %360 = vst [vmem:[%s143 + $0x38] sm:$0xff] %v279
      %361 = vst [vmem:[%s143 + $0x40] sm:$0xff] %v283
      %362 = vst [vmem:[%s143 + $0x48] sm:$0xff] %v285
      %363 = vst [vmem:[%s143 + $0x50] sm:$0xff] %v289
      %364 = vst [vmem:[%s143 + $0x58] sm:$0xff] %v291
      %365 = vst [vmem:[%s143 + $0x60] sm:$0xff] %v295
      %366 = vst [vmem:[%s143 + $0x68] sm:$0xff] %v297
      %367 = vst [vmem:[%s143 + $0x70] sm:$0xff] %v301
      %368 = vst [vmem:[%s143 + $0x78] sm:$0xff] %v303
      %369 = vst [vmem:[%s143 + $0x80] sm:$0xff] %v307
      %370 = vst [vmem:[%s143 + $0x88] sm:$0xff] %v309
      %371 = vst [vmem:[%s143 + $0x90] sm:$0xff] %v313
      %372 = vst [vmem:[%s143 + $0x98] sm:$0xff] %v315
      %373 = vst [vmem:[%s143 + $0xa0] sm:$0xff] %v319
      %374 = vst [vmem:[%s143 + $0xa8] sm:$0xff] %v321
      %375 = vst [vmem:[%s143 + $0xb0] sm:$0xff] %v325
      %376 = vst [vmem:[%s143 + $0xb8] sm:$0xff] %v327
      %377 = vst [vmem:[%s143 + $0xc0] sm:$0xff] %v331
      %378 = vst [vmem:[%s143 + $0xc8] sm:$0xff] %v333
      %379 = vst [vmem:[%s143 + $0xd0] sm:$0xff] %v337
      %380 = vst [vmem:[%s143 + $0xd8] sm:$0xff] %v339
      %381 = vst [vmem:[%s143 + $0xe0] sm:$0xff] %v343
      %382 = vst [vmem:[%s143 + $0xe8] sm:$0xff] %v345
      %383 = vst [vmem:[%s143 + $0xf0] sm:$0xff] %v349
      %384 = vst [vmem:[%s143 + $0xf8] sm:$0xff] %v351
      %p385 = scmp.lt.s32.totalorder %s13, 1
      %s386 = scalar_select %p385, %s13, 1
      %s387 = smul.addr %s386, 32
      %s388 = smul.addr %s387, 8
      %s389 = scalar_lea.vmem %s2, %s388
      // Predicated region
      $region29: #{_lambda_.15} parent=27 // pred_check
        %p390 = pneg %p78
      $region30: #{_lambda_.15} parent=27 // pred_check_branch
        %392 = sbr.rel (%p390) target = $region32
      $region31: #{_lambda_.15} parent=27 // pred_region
        _
      $region32: #{_lambda_.15} parent=27 // pred_fallthru
        _
    $region28: #{_lambda_.15} parent=5 // pred_fallthru
      _
    %p393 = scmp.le.s32.totalorder 2, %s8
    // Predicated region
    $region33: #{_lambda_.15} parent=5 // pred_check
      %p394 = pneg %p393
    $region34: #{_lambda_.15} parent=5 // pred_check_branch
      %396 = sbr.rel (%p394) target = $region36
    $region35: #{_lambda_.15} parent=5 // pred_region
      %s397 = ssub.s32 %s8, 2
      // Predicated region
      $region37: #{_lambda_.15} parent=35 // pred_check
        %p398 = pneg %p84
      $region38: #{_lambda_.15} parent=35 // pred_check_branch
        %400 = sbr.rel (%p398) target = $region40
      $region39: #{_lambda_.15} parent=35 // pred_region
        %p401 = scmp.lt.s32.totalorder %s14, 1
        %s402 = scalar_select %p401, %s14, 1
        %s403 = smul.addr %s402, 32
        %s404 = smul.addr %s403, 8
        %s405 = scalar_lea.vmem %s2, %s404
      $region40: #{_lambda_.15} parent=35 // pred_fallthru
        _
    $region36: #{_lambda_.15} parent=5 // pred_fallthru
      _
  $region6: #{_lambda_.15} parent=0 // loop_footer
    %s12 = sadd.s32 1, %s8
  $region7: #{_lambda_.15} parent=0 // loop_footer_branch
    %7 = sbr.rel target = $region3
  $region8: #{_lambda_.15} parent=0 // loop_exit
    _

// kernel: _lambda_.14
$region0: #{_lambda_.14}
  #allocation0 [shape = 'u32[]', space=smem, size = 0x4, offset = 0x4, fixed_abs, tag = 'smem constant byte address 0x4 - core index']
  #allocation1 [shape = 'u32[144,128]{1,0:T(1,128)}', space=vmem, size = 0x12000, scoped, tag = 'internal scratch']
  %s0 = inlined_call_operand.vmem [shape: f32[256,256], index: 0, kind: input, shape index: {}]
  %s1 = inlined_call_operand.vmem [shape: f32[256,512], index: 1, kind: input, shape index: {}]
  %s2 = inlined_call_operand.vmem [shape: f32[1,512], index: 2, kind: input, shape index: {}]
  %s3 = inlined_call_operand.vmem [shape: f32[256,512], index: 3, kind: output, shape index: {}]
  %s4 = sld [smem:[#allocation0]]
  $region45: #{_lambda_.14} parent=0
    _
  %s6 = ssub.s32 1, %s4
  %s7 = scalar_select 0, %s6, %s4
  loop: start=0, step=1, limit=4
  $region2: #{_lambda_.14} parent=0 // loop_pre_header
    _
  $region3: #{_lambda_.14} parent=0 // loop_header
    %s9 = sphi 0, %s13
    %p10 = scmp.ge.s32.totalorder %s9, 4
    %s19 = sphi 0, %s21
    %s22 = sphi 0, %s19
    %s23 = sphi 0, %s22
    %s39 = sphi 0, %s23
    %s43 = sphi 0, %s43
    %s45 = sphi 0, %s43
    %s46 = sphi 0, %s45
    %s60 = sphi 0, %s46
    %s64 = sphi 0, %s64
    %s66 = sphi 0, %s64
    %s67 = sphi 0, %s66
    %s81 = sphi 0, %s67
    %s87 = sphi 0, %s89
    %s90 = sphi 0, %s87
    %s91 = sphi 0, %s90
    %s107 = sphi 0, %s91
  $region4: #{_lambda_.14} parent=0 // loop_header_branch
    %12 = sbr.rel (%p10) target = $region8
  $region5: #{_lambda_.14} parent=0 // loop_body
    %s14 = ssub.s32 %s9, 1
    %s15 = ssub.s32 %s9, 2
    %s16 = sadd.s32 %s9, 1
    %s17 = ssub.s32 %s9, %s16
    %p18 = scmp.eq.s32.totalorder %s17, 0
    %s20 = sadd.s32 %s19, 1
    %s21 = scalar_select %p18, %s19, %s20
    %p24 = pneg %p18
    %p25 = scmp.eq.s32.totalorder %s9, 1
    %p26 = por %p24, %p25
    %p27 = scmp.ne.s32.totalorder %s19, %s22
    %p28 = scmp.eq.s32.totalorder %s9, 0
    %p29 = por %p27, %p28
    %p30 = scmp.ne.s32.totalorder %s19, %s22
    %p31 = scmp.eq.s32.totalorder %s14, 1
    %p32 = por %p30, %p31
    %p33 = scmp.ne.s32.totalorder %s22, %s23
    %p34 = scmp.eq.s32.totalorder %s14, 0
    %p35 = por %p33, %p34
    %p36 = scmp.ne.s32.totalorder %s22, %s23
    %p37 = scmp.eq.s32.totalorder %s15, 1
    %p38 = por %p36, %p37
    %p40 = scmp.ne.s32.totalorder %s23, %s39
    %p41 = scmp.eq.s32.totalorder %s15, 0
    %p42 = por %p40, %p41
    %s44 = sadd.s32 %s43, 1
    %p47 = scmp.eq.s32.totalorder %s9, 1
    %p48 = scmp.ne.s32.totalorder %s43, %s45
    %p49 = scmp.eq.s32.totalorder %s9, 0
    %p50 = por %p48, %p49
    %p51 = scmp.ne.s32.totalorder %s43, %s45
    %p52 = scmp.eq.s32.totalorder %s14, 1
    %p53 = por %p51, %p52
    %p54 = scmp.ne.s32.totalorder %s45, %s46
    %p55 = scmp.eq.s32.totalorder %s14, 0
    %p56 = por %p54, %p55
    %p57 = scmp.ne.s32.totalorder %s45, %s46
    %p58 = scmp.eq.s32.totalorder %s15, 1
    %p59 = por %p57, %p58
    %p61 = scmp.ne.s32.totalorder %s46, %s60
    %p62 = scmp.eq.s32.totalorder %s15, 0
    %p63 = por %p61, %p62
    %s65 = sadd.s32 %s64, 1
    %p68 = scmp.eq.s32.totalorder %s9, 1
    %p69 = scmp.ne.s32.totalorder %s64, %s66
    %p70 = scmp.eq.s32.totalorder %s9, 0
    %p71 = por %p69, %p70
    %p72 = scmp.ne.s32.totalorder %s64, %s66
    %p73 = scmp.eq.s32.totalorder %s14, 1
    %p74 = por %p72, %p73
    %p75 = scmp.ne.s32.totalorder %s66, %s67
    %p76 = scmp.eq.s32.totalorder %s14, 0
    %p77 = por %p75, %p76
    %p78 = scmp.ne.s32.totalorder %s66, %s67
    %p79 = scmp.eq.s32.totalorder %s15, 1
    %p80 = por %p78, %p79
    %p82 = scmp.ne.s32.totalorder %s67, %s81
    %p83 = scmp.eq.s32.totalorder %s15, 0
    %p84 = por %p82, %p83
    %s85 = ssub.s32 %s9, %s16
    %p86 = scmp.eq.s32.totalorder %s85, 0
    %s88 = sadd.s32 %s87, 1
    %s89 = scalar_select %p86, %s87, %s88
    %p92 = pneg %p86
    %p93 = scmp.eq.s32.totalorder %s9, 1
    %p94 = por %p92, %p93
    %p95 = scmp.ne.s32.totalorder %s87, %s90
    %p96 = scmp.eq.s32.totalorder %s9, 0
    %p97 = por %p95, %p96
    %p98 = scmp.ne.s32.totalorder %s87, %s90
    %p99 = scmp.eq.s32.totalorder %s14, 1
    %p100 = por %p98, %p99
    %p101 = scmp.ne.s32.totalorder %s90, %s91
    %p102 = scmp.eq.s32.totalorder %s14, 0
    %p103 = por %p101, %p102
    %p104 = scmp.ne.s32.totalorder %s90, %s91
    %p105 = scmp.eq.s32.totalorder %s15, 1
    %p106 = por %p104, %p105
    %p108 = scmp.ne.s32.totalorder %s91, %s107
    %p109 = scmp.eq.s32.totalorder %s15, 0
    %p110 = por %p108, %p109
    %p111 = scmp.le.s32.totalorder 1, %s9
    %p112 = scmp.lt.s32.totalorder %s9, 3
    %p113 = pnand %p111, %p112
    %p114 = pneg %p113
    // Predicated region
    $region9: #{_lambda_.14} parent=5 // pred_check
      _
    $region10: #{_lambda_.14} parent=5 // pred_check_branch
      %116 = sbr.rel (%p113) target = $region12
    $region11: #{_lambda_.14} parent=5 // pred_region
      %s117 = ssub.s32 %s9, 1
      // Predicated region
      $region13: #{_lambda_.14} parent=11 // pred_check
        %p118 = pneg %p56
      $region14: #{_lambda_.14} parent=11 // pred_check_branch
        %120 = sbr.rel (%p118) target = $region16
      $region15: #{_lambda_.14} parent=11 // pred_region
        _
      $region16: #{_lambda_.14} parent=11 // pred_fallthru
        _
      // Predicated region
      $region17: #{_lambda_.14} parent=11 // pred_check
        %p121 = pneg %p77
      $region18: #{_lambda_.14} parent=11 // pred_check_branch
        %123 = sbr.rel (%p121) target = $region20
      $region19: #{_lambda_.14} parent=11 // pred_region
        _
      $region20: #{_lambda_.14} parent=11 // pred_fallthru
        _
    $region12: #{_lambda_.14} parent=5 // pred_fallthru
      _
    %p124 = scmp.lt.s32.totalorder %s9, 2
    // Predicated region
    $region21: #{_lambda_.14} parent=5 // pred_check
      %p125 = pneg %p124
    $region22: #{_lambda_.14} parent=5 // pred_check_branch
      %127 = sbr.rel (%p125) target = $region24
    $region23: #{_lambda_.14} parent=5 // pred_region
      // Predicated region
      $region25: #{_lambda_.14} parent=23 // pred_check
        %p128 = pneg %p29
      $region26: #{_lambda_.14} parent=23 // pred_check_branch
        %130 = sbr.rel (%p128) target = $region28
      $region27: #{_lambda_.14} parent=23 // pred_region
        %s131 = smul.u32 16, %s9
        %p132 = scmp.lt.s32.totalorder %s131, 31
        %s133 = scalar_select %p132, %s131, 31
        %s134 = smul.addr %s133, 2
        %s135 = smul.addr %s134, 8
        %s136 = scalar_lea.vmem %s0, %s135
        %s137 = smul.u32 16, %s9
      $region28: #{_lambda_.14} parent=23 // pred_fallthru
        _
    $region24: #{_lambda_.14} parent=5 // pred_fallthru
      _
    %p138 = scmp.le.s32.totalorder 1, %s9
    %p139 = scmp.lt.s32.totalorder %s9, 3
    %p140 = pnand %p138, %p139
    %p141 = pneg %p140
    // Predicated region
    $region29: #{_lambda_.14} parent=5 // pred_check
      _
    $region30: #{_lambda_.14} parent=5 // pred_check_branch
      %143 = sbr.rel (%p140) target = $region32
    $region31: #{_lambda_.14} parent=5 // pred_region
      %s144 = ssub.s32 %s9, 1
      %s145 = smul.u32 16, %s14
      %p146 = scmp.lt.s32.totalorder %s145, 31
      %s147 = scalar_select %p146, %s145, 31
      %s148 = smul.addr %s147, 2
      %s149 = smul.addr %s148, 8
      %s150 = scalar_lea.vmem %s0, %s149
      %p151 = pneg %p35
      %p152 = pneg %p32
      %p153 = pneg %p56
      %p154 = pneg %p53
      %p155 = pneg %p77
      %p156 = pneg %p74
      %p157 = pneg %p103
      %p158 = pneg %p100
      %s159 = smul.u32 16, %s14
      %p160 = scmp.lt.s32.totalorder %s159, 31
      %s161 = scalar_select %p160, %s159, 31
      %s162 = smul.addr %s161, 4
      %s163 = smul.addr %s162, 8
      %s164 = scalar_lea.vmem %s3, %s163
      %s165 = smul.u32 16, %s14
      %p166 = scmp.lt.s32.totalorder %s165, 31
      %s167 = scalar_select %p166, %s165, 31
      %s168 = smul.addr %s167, 2
      %s169 = smul.addr %s168, 8
      %s170 = scalar_lea.vmem %s0, %s169
      %s171 = smul.u32 16, %s14
      %s172 = smul.u32 16, %s14
      %p173 = scmp.lt.s32.totalorder %s172, 31
      %s174 = scalar_select %p173, %s172, 31
      %s175 = smul.addr %s174, 4
      %s176 = smul.addr %s175, 8
      %s177 = scalar_lea.vmem %s3, %s176
      %s178 = smul.u32 16, %s14
      %v179 = vld [vmem:[%s170] sm:$0xff]
      %v180 = vld [vmem:[%s170 + $0x8] sm:$0xff]
      %v181 = vld [vmem:[%s170 + $0x10] sm:$0xff]
      %v182 = vld [vmem:[%s170 + $0x18] sm:$0xff]
      %v183 = vld [vmem:[%s170 + $0x20] sm:$0xff]
      %v184 = vld [vmem:[%s170 + $0x28] sm:$0xff]
      %v185 = vld [vmem:[%s170 + $0x30] sm:$0xff]
      %v186 = vld [vmem:[%s170 + $0x38] sm:$0xff]
      %v187 = vld [vmem:[%s170 + $0x40] sm:$0xff]
      %v188 = vld [vmem:[%s170 + $0x48] sm:$0xff]
      %v189 = vld [vmem:[%s170 + $0x50] sm:$0xff]
      %v190 = vld [vmem:[%s170 + $0x58] sm:$0xff]
      %v191 = vld [vmem:[%s170 + $0x60] sm:$0xff]
      %v192 = vld [vmem:[%s170 + $0x68] sm:$0xff]
      %v193 = vld [vmem:[%s170 + $0x70] sm:$0xff]
      %v194 = vld [vmem:[%s170 + $0x78] sm:$0xff]
      %v195 = vld [vmem:[%s170 + $0x80] sm:$0xff]
      %v196 = vld [vmem:[%s170 + $0x88] sm:$0xff]
      %v197 = vld [vmem:[%s170 + $0x90] sm:$0xff]
      %v198 = vld [vmem:[%s170 + $0x98] sm:$0xff]
      %v199 = vld [vmem:[%s170 + $0xa0] sm:$0xff]
      %v200 = vld [vmem:[%s170 + $0xa8] sm:$0xff]
      %v201 = vld [vmem:[%s170 + $0xb0] sm:$0xff]
      %v202 = vld [vmem:[%s170 + $0xb8] sm:$0xff]
      %v203 = vld [vmem:[%s170 + $0xc0] sm:$0xff]
      %v204 = vld [vmem:[%s170 + $0xc8] sm:$0xff]
      %v205 = vld [vmem:[%s170 + $0xd0] sm:$0xff]
      %v206 = vld [vmem:[%s170 + $0xd8] sm:$0xff]
      %v207 = vld [vmem:[%s170 + $0xe0] sm:$0xff]
      %v208 = vld [vmem:[%s170 + $0xe8] sm:$0xff]
      %v209 = vld [vmem:[%s170 + $0xf0] sm:$0xff]
      %v210 = vld [vmem:[%s170 + $0xf8] sm:$0xff]
      %v211 = vld [vmem:[%s1] sm:$0xff]
      %v212 = vld [vmem:[%s1 + $0x8] sm:$0xff]
      %v213 = vld [vmem:[%s1 + $0x10] sm:$0xff]
      %v214 = vld [vmem:[%s1 + $0x18] sm:$0xff]
      %v215 = vld [vmem:[%s1 + $0x20] sm:$0xff]
      %v216 = vld [vmem:[%s1 + $0x28] sm:$0xff]
      %v217 = vld [vmem:[%s1 + $0x30] sm:$0xff]
      %v218 = vld [vmem:[%s1 + $0x38] sm:$0xff]
      %v219 = vld [vmem:[%s1 + $0x40] sm:$0xff]
      %v220 = vld [vmem:[%s1 + $0x48] sm:$0xff]
      %v221 = vld [vmem:[%s1 + $0x50] sm:$0xff]
      %v222 = vld [vmem:[%s1 + $0x58] sm:$0xff]
      %v223 = vld [vmem:[%s1 + $0x60] sm:$0xff]
      %v224 = vld [vmem:[%s1 + $0x68] sm:$0xff]
      %v225 = vld [vmem:[%s1 + $0x70] sm:$0xff]
      %v226 = vld [vmem:[%s1 + $0x78] sm:$0xff]
      %v227 = vld [vmem:[%s1 + $0x80] sm:$0xff]
      %v228 = vld [vmem:[%s1 + $0x88] sm:$0xff]
      %v229 = vld [vmem:[%s1 + $0x90] sm:$0xff]
      %v230 = vld [vmem:[%s1 + $0x98] sm:$0xff]
      %v231 = vld [vmem:[%s1 + $0xa0] sm:$0xff]
      %v232 = vld [vmem:[%s1 + $0xa8] sm:$0xff]
      %v233 = vld [vmem:[%s1 + $0xb0] sm:$0xff]
      %v234 = vld [vmem:[%s1 + $0xb8] sm:$0xff]
      %v235 = vld [vmem:[%s1 + $0xc0] sm:$0xff]
      %v236 = vld [vmem:[%s1 + $0xc8] sm:$0xff]
      %v237 = vld [vmem:[%s1 + $0xd0] sm:$0xff]
      %v238 = vld [vmem:[%s1 + $0xd8] sm:$0xff]
      %v239 = vld [vmem:[%s1 + $0xe0] sm:$0xff]
      %v240 = vld [vmem:[%s1 + $0xe8] sm:$0xff]
      %v241 = vld [vmem:[%s1 + $0xf0] sm:$0xff]
      %v242 = vld [vmem:[%s1 + $0xf8] sm:$0xff]
      %v243 = vld [vmem:[%s1 + $0x100] sm:$0xff]
      %v244 = vld [vmem:[%s1 + $0x108] sm:$0xff]
      %v245 = vld [vmem:[%s1 + $0x110] sm:$0xff]
      %v246 = vld [vmem:[%s1 + $0x118] sm:$0xff]
      %v247 = vld [vmem:[%s1 + $0x120] sm:$0xff]
      %v248 = vld [vmem:[%s1 + $0x128] sm:$0xff]
      %v249 = vld [vmem:[%s1 + $0x130] sm:$0xff]
      %v250 = vld [vmem:[%s1 + $0x138] sm:$0xff]
      %v251 = vld [vmem:[%s1 + $0x140] sm:$0xff]
      %v252 = vld [vmem:[%s1 + $0x148] sm:$0xff]
      %v253 = vld [vmem:[%s1 + $0x150] sm:$0xff]
      %v254 = vld [vmem:[%s1 + $0x158] sm:$0xff]
      %v255 = vld [vmem:[%s1 + $0x160] sm:$0xff]
      %v256 = vld [vmem:[%s1 + $0x168] sm:$0xff]
      %v257 = vld [vmem:[%s1 + $0x170] sm:$0xff]
      %v258 = vld [vmem:[%s1 + $0x178] sm:$0xff]
      %v259 = vld [vmem:[%s1 + $0x180] sm:$0xff]
      %v260 = vld [vmem:[%s1 + $0x188] sm:$0xff]
      %v261 = vld [vmem:[%s1 + $0x190] sm:$0xff]
      %v262 = vld [vmem:[%s1 + $0x198] sm:$0xff]
      %v263 = vld [vmem:[%s1 + $0x1a0] sm:$0xff]
      %v264 = vld [vmem:[%s1 + $0x1a8] sm:$0xff]
      %v265 = vld [vmem:[%s1 + $0x1b0] sm:$0xff]
      %v266 = vld [vmem:[%s1 + $0x1b8] sm:$0xff]
      %v267 = vld [vmem:[%s1 + $0x1c0] sm:$0xff]
      %v268 = vld [vmem:[%s1 + $0x1c8] sm:$0xff]
      %v269 = vld [vmem:[%s1 + $0x1d0] sm:$0xff]
      %v270 = vld [vmem:[%s1 + $0x1d8] sm:$0xff]
      %v271 = vld [vmem:[%s1 + $0x1e0] sm:$0xff]
      %v272 = vld [vmem:[%s1 + $0x1e8] sm:$0xff]
      %v273 = vld [vmem:[%s1 + $0x1f0] sm:$0xff]
      %v274 = vld [vmem:[%s1 + $0x1f8] sm:$0xff]
      %v275 = vld [vmem:[%s1 + $0x200] sm:$0xff]
      %v276 = vld [vmem:[%s1 + $0x208] sm:$0xff]
      %v277 = vld [vmem:[%s1 + $0x210] sm:$0xff]
      %v278 = vld [vmem:[%s1 + $0x218] sm:$0xff]
      %v279 = vld [vmem:[%s1 + $0x220] sm:$0xff]
      %v280 = vld [vmem:[%s1 + $0x228] sm:$0xff]
      %v281 = vld [vmem:[%s1 + $0x230] sm:$0xff]
      %v282 = vld [vmem:[%s1 + $0x238] sm:$0xff]
      %v283 = vld [vmem:[%s1 + $0x240] sm:$0xff]
      %v284 = vld [vmem:[%s1 + $0x248] sm:$0xff]
      %v285 = vld [vmem:[%s1 + $0x250] sm:$0xff]
      %v286 = vld [vmem:[%s1 + $0x258] sm:$0xff]
      %v287 = vld [vmem:[%s1 + $0x260] sm:$0xff]
      %v288 = vld [vmem:[%s1 + $0x268] sm:$0xff]
      %v289 = vld [vmem:[%s1 + $0x270] sm:$0xff]
      %v290 = vld [vmem:[%s1 + $0x278] sm:$0xff]
      %v291 = vld [vmem:[%s1 + $0x280] sm:$0xff]
      %v292 = vld [vmem:[%s1 + $0x288] sm:$0xff]
      %v293 = vld [vmem:[%s1 + $0x290] sm:$0xff]
      %v294 = vld [vmem:[%s1 + $0x298] sm:$0xff]
      %v295 = vld [vmem:[%s1 + $0x2a0] sm:$0xff]
      %v296 = vld [vmem:[%s1 + $0x2a8] sm:$0xff]
      %v297 = vld [vmem:[%s1 + $0x2b0] sm:$0xff]
      %v298 = vld [vmem:[%s1 + $0x2b8] sm:$0xff]
      %v299 = vld [vmem:[%s1 + $0x2c0] sm:$0xff]
      %v300 = vld [vmem:[%s1 + $0x2c8] sm:$0xff]
      %v301 = vld [vmem:[%s1 + $0x2d0] sm:$0xff]
      %v302 = vld [vmem:[%s1 + $0x2d8] sm:$0xff]
      %v303 = vld [vmem:[%s1 + $0x2e0] sm:$0xff]
      %v304 = vld [vmem:[%s1 + $0x2e8] sm:$0xff]
      %v305 = vld [vmem:[%s1 + $0x2f0] sm:$0xff]
      %v306 = vld [vmem:[%s1 + $0x2f8] sm:$0xff]
      %v307 = vld [vmem:[%s1 + $0x300] sm:$0xff]
      %v308 = vld [vmem:[%s1 + $0x308] sm:$0xff]
      %v309 = vld [vmem:[%s1 + $0x310] sm:$0xff]
      %v310 = vld [vmem:[%s1 + $0x318] sm:$0xff]
      %v311 = vld [vmem:[%s1 + $0x320] sm:$0xff]
      %v312 = vld [vmem:[%s1 + $0x328] sm:$0xff]
      %v313 = vld [vmem:[%s1 + $0x330] sm:$0xff]
      %v314 = vld [vmem:[%s1 + $0x338] sm:$0xff]
      %v315 = vld [vmem:[%s1 + $0x340] sm:$0xff]
      %v316 = vld [vmem:[%s1 + $0x348] sm:$0xff]
      %v317 = vld [vmem:[%s1 + $0x350] sm:$0xff]
      %v318 = vld [vmem:[%s1 + $0x358] sm:$0xff]
      %v319 = vld [vmem:[%s1 + $0x360] sm:$0xff]
      %v320 = vld [vmem:[%s1 + $0x368] sm:$0xff]
      %v321 = vld [vmem:[%s1 + $0x370] sm:$0xff]
      %v322 = vld [vmem:[%s1 + $0x378] sm:$0xff]
      %v323 = vld [vmem:[%s1 + $0x380] sm:$0xff]
      %v324 = vld [vmem:[%s1 + $0x388] sm:$0xff]
      %v325 = vld [vmem:[%s1 + $0x390] sm:$0xff]
      %v326 = vld [vmem:[%s1 + $0x398] sm:$0xff]
      %v327 = vld [vmem:[%s1 + $0x3a0] sm:$0xff]
      %v328 = vld [vmem:[%s1 + $0x3a8] sm:$0xff]
      %v329 = vld [vmem:[%s1 + $0x3b0] sm:$0xff]
      %v330 = vld [vmem:[%s1 + $0x3b8] sm:$0xff]
      %v331 = vld [vmem:[%s1 + $0x3c0] sm:$0xff]
      %v332 = vld [vmem:[%s1 + $0x3c8] sm:$0xff]
      %v333 = vld [vmem:[%s1 + $0x3d0] sm:$0xff]
      %v334 = vld [vmem:[%s1 + $0x3d8] sm:$0xff]
      %v335 = vld [vmem:[%s1 + $0x3e0] sm:$0xff]
      %v336 = vld [vmem:[%s1 + $0x3e8] sm:$0xff]
      %v337 = vld [vmem:[%s1 + $0x3f0] sm:$0xff]
      %v338 = vld [vmem:[%s1 + $0x3f8] sm:$0xff]
      %v339 = vld [vmem:[%s2] sm:$0xf]
      %v341 = vlaneseq
      %v342 = vshrl.u32 %v341, 7
      %v343 = vsub.s32 0, %v342
      %v344 = vrot.slane %v339, %v343
      %v345 = vlaneseq
      %v346 = vshrl.u32 %v345, 7
      %v347 = vsub.s32 1, %v346
      %v348 = vrot.slane %v339, %v347
      %v349 = vlaneseq
      %v350 = vshrl.u32 %v349, 7
      %v351 = vsub.s32 2, %v350
      %v352 = vrot.slane %v339, %v351
      %v353 = vlaneseq
      %v354 = vshrl.u32 %v353, 7
      %v355 = vsub.s32 3, %v354
      %v356 = vrot.slane %v339, %v355
      %361 = vmatprep.subr.mxu0 %v212
      %362 = vmatpush1.msra.mxu0 %v211
      %363 = vmatprep.subr.mxu0 %v216
      %364 = vmatpush1.msra.mxu0 %v215
      %365 = vmatprep.subr.mxu0 %v220
      %366 = vmatpush1.msra.mxu0 %v219
      %367 = vmatprep.subr.mxu0 %v224
      %368 = vmatpush1.msra.mxu0 %v223
      %369 = vmatprep.subr.mxu0 %v228
      %370 = vmatpush1.msra.mxu0 %v227
      %371 = vmatprep.subr.mxu0 %v232
      %372 = vmatpush1.msra.mxu0 %v231
      %373 = vmatprep.subr.mxu0 %v236
      %374 = vmatpush1.msra.mxu0 %v235
      %375 = vmatprep.subr.mxu0 %v240
      %376 = vmatpush1.msra.mxu0 %v239
      %377 = vmatprep.subr.mxu0 %v244
      %378 = vmatpush1.msra.mxu0 %v243
      %379 = vmatprep.subr.mxu0 %v248
      %380 = vmatpush1.msra.mxu0 %v247
      %381 = vmatprep.subr.mxu0 %v252
      %382 = vmatpush1.msra.mxu0 %v251
      %383 = vmatprep.subr.mxu0 %v256
      %384 = vmatpush1.msra.mxu0 %v255
      %385 = vmatprep.subr.mxu0 %v260
      %386 = vmatpush1.msra.mxu0 %v259
      %387 = vmatprep.subr.mxu0 %v264
      %388 = vmatpush1.msra.mxu0 %v263
      %389 = vmatprep.subr.mxu0 %v268
      %390 = vmatpush1.msra.mxu0 %v267
      %391 = vmatprep.subr.mxu0 %v272
      %392 = vmatpush1.msra.mxu0 %v271
      %393 = vmatprep.subr.mxu0 %v276
      %394 = vmatpush1.msra.mxu0 %v275
      %395 = vmatprep.subr.mxu0 %v280
      %396 = vmatpush1.msra.mxu0 %v279
      %397 = vmatprep.subr.mxu0 %v284
      %398 = vmatpush1.msra.mxu0 %v283
      %399 = vmatprep.subr.mxu0 %v288
      %400 = vmatpush1.msra.mxu0 %v287
      %401 = vmatprep.subr.mxu0 %v292
      %402 = vmatpush1.msra.mxu0 %v291
      %403 = vmatprep.subr.mxu0 %v296
      %404 = vmatpush1.msra.mxu0 %v295
      %405 = vmatprep.subr.mxu0 %v300
      %406 = vmatpush1.msra.mxu0 %v299
      %407 = vmatprep.subr.mxu0 %v304
      %408 = vmatpush1.msra.mxu0 %v303
      %409 = vmatprep.subr.mxu0 %v308
      %410 = vmatpush1.msra.mxu0 %v307
      %411 = vmatprep.subr.mxu0 %v312
      %412 = vmatpush1.msra.mxu0 %v311
      %413 = vmatprep.subr.mxu0 %v316
      %414 = vmatpush1.msra.mxu0 %v315
      %415 = vmatprep.subr.mxu0 %v320
      %416 = vmatpush1.msra.mxu0 %v319
      %417 = vmatprep.subr.mxu0 %v324
      %418 = vmatpush1.msra.mxu0 %v323
      %419 = vmatprep.subr.mxu0 %v328
      %420 = vmatpush1.msra.mxu0 %v327
      %421 = vmatprep.subr.mxu0 %v332
      %422 = vmatpush1.msra.mxu0 %v331
      %423 = vmatprep.subr.mxu0 %v336
      %424 = vmatpush1.msra.mxu0 %v335
      %425 = vmatprep.mubr.f32.mxu0 %v180
      %426 = vmatmul.mubr.f32.gmra.mrb[0].mxu0 %v179
      %v427 = vpop.f32.mrb[0].mxu0
      %v428 = vadd.f32 %v344, %v427
      %v429 = vpop.f32.mrb[0].mxu0
      %v430 = vadd.f32 %v348, %v429
      %431 = vmatprep.mubr.f32.mxu0 %v182
      %432 = vmatmul.mubr.f32.gmra.mrb[0].mxu0 %v181
      %v433 = vpop.f32.mrb[0].mxu0
      %v434 = vadd.f32 %v344, %v433
      %v435 = vpop.f32.mrb[0].mxu0
      %v436 = vadd.f32 %v348, %v435
      %437 = vmatprep.mubr.f32.mxu0 %v184
      %438 = vmatmul.mubr.f32.gmra.mrb[0].mxu0 %v183
      %v439 = vpop.f32.mrb[0].mxu0
      %v440 = vadd.f32 %v344, %v439
      %v441 = vpop.f32.mrb[0].mxu0
      %v442 = vadd.f32 %v348, %v441
      %443 = vmatprep.mubr.f32.mxu0 %v186
      %444 = vmatmul.mubr.f32.gmra.mrb[0].mxu0 %v185
      %v445 = vpop.f32.mrb[0].mxu0
      %v446 = vadd.f32 %v344, %v445
      %v447 = vpop.f32.mrb[0].mxu0
      %v448 = vadd.f32 %v348, %v447
      %449 = vmatprep.mubr.f32.mxu0 %v188
      %450 = vmatmul.mubr.f32.gmra.mrb[0].mxu0 %v187
      %v451 = vpop.f32.mrb[0].mxu0
      %v452 = vadd.f32 %v344, %v451
      %v453 = vpop.f32.mrb[0].mxu0
      %v454 = vadd.f32 %v348, %v453
      %455 = vmatprep.mubr.f32.mxu0 %v190
      %456 = vmatmul.mubr.f32.gmra.mrb[0].mxu0 %v189
      %v457 = vpop.f32.mrb[0].mxu0
      %v458 = vadd.f32 %v344, %v457
      %v459 = vpop.f32.mrb[0].mxu0
      %v460 = vadd.f32 %v348, %v459
      %461 = vmatprep.mubr.f32.mxu0 %v192
      %462 = vmatmul.mubr.f32.gmra.mrb[0].mxu0 %v191
      %v463 = vpop.f32.mrb[0].mxu0
      %v464 = vadd.f32 %v344, %v463
      %v465 = vpop.f32.mrb[0].mxu0
      %v466 = vadd.f32 %v348, %v465
      %467 = vmatprep.mubr.f32.mxu0 %v194
      %468 = vmatmul.mubr.f32.gmra.mrb[0].mxu0 %v193
      %v469 = vpop.f32.mrb[0].mxu0
      %v470 = vadd.f32 %v344, %v469
      %v471 = vpop.f32.mrb[0].mxu0
      %v472 = vadd.f32 %v348, %v471
      %473 = vmatprep.mubr.f32.mxu0 %v196
      %474 = vmatmul.mubr.f32.gmra.mrb[0].mxu0 %v195
      %v475 = vpop.f32.mrb[0].mxu0
      %v476 = vadd.f32 %v344, %v475
      %v477 = vpop.f32.mrb[0].mxu0
      %v478 = vadd.f32 %v348, %v477
      %479 = vmatprep.mubr.f32.mxu0 %v198
      %480 = vmatmul.mubr.f32.gmra.mrb[0].mxu0 %v197
      %v481 = vpop.f32.mrb[0].mxu0
      %v482 = vadd.f32 %v344, %v481
      %v483 = vpop.f32.mrb[0].mxu0
      %v484 = vadd.f32 %v348, %v483
      %485 = vmatprep.mubr.f32.mxu0 %v200
      %486 = vmatmul.mubr.f32.gmra.mrb[0].mxu0 %v199
      %v487 = vpop.f32.mrb[0].mxu0
      %v488 = vadd.f32 %v344, %v487
      %v489 = vpop.f32.mrb[0].mxu0
      %v490 = vadd.f32 %v348, %v489
      %491 = vmatprep.mubr.f32.mxu0 %v202
      %492 = vmatmul.mubr.f32.gmra.mrb[0].mxu0 %v201
      %v493 = vpop.f32.mrb[0].mxu0
      %v494 = vadd.f32 %v344, %v493
      %v495 = vpop.f32.mrb[0].mxu0
      %v496 = vadd.f32 %v348, %v495
      %497 = vmatprep.mubr.f32.mxu0 %v204
      %498 = vmatmul.mubr.f32.gmra.mrb[0].mxu0 %v203
      %v499 = vpop.f32.mrb[0].mxu0
      %v500 = vadd.f32 %v344, %v499
      %v501 = vpop.f32.mrb[0].mxu0
      %v502 = vadd.f32 %v348, %v501
      %503 = vmatprep.mubr.f32.mxu0 %v206
      %504 = vmatmul.mubr.f32.gmra.mrb[0].mxu0 %v205
      %v505 = vpop.f32.mrb[0].mxu0
      %v506 = vadd.f32 %v344, %v505
      %v507 = vpop.f32.mrb[0].mxu0
      %v508 = vadd.f32 %v348, %v507
      %509 = vmatprep.mubr.f32.mxu0 %v208
      %510 = vmatmul.mubr.f32.gmra.mrb[0].mxu0 %v207
      %v511 = vpop.f32.mrb[0].mxu0
      %v512 = vadd.f32 %v344, %v511
      %v513 = vpop.f32.mrb[0].mxu0
      %v514 = vadd.f32 %v348, %v513
      %515 = vmatprep.mubr.f32.mxu0 %v210
      %516 = vmatmul.mubr.f32.gmra.mrb[0].mxu0 %v209
      %v517 = vpop.f32.mrb[0].mxu0
      %v518 = vadd.f32 %v344, %v517
      %v519 = vpop.f32.mrb[0].mxu0
      %v520 = vadd.f32 %v348, %v519
      %521 = vdwg.mxu0
      %522 = vmatprep.subr.mxu0 %v214
      %523 = vmatpush1.msra.mxu0 %v213
      %524 = vmatprep.subr.mxu0 %v218
      %525 = vmatpush1.msra.mxu0 %v217
      %526 = vmatprep.subr.mxu0 %v222
      %527 = vmatpush1.msra.mxu0 %v221
      %528 = vmatprep.subr.mxu0 %v226
      %529 = vmatpush1.msra.mxu0 %v225
      %530 = vmatprep.subr.mxu0 %v230
      %531 = vmatpush1.msra.mxu0 %v229
      %532 = vmatprep.subr.mxu0 %v234
      %533 = vmatpush1.msra.mxu0 %v233
      %534 = vmatprep.subr.mxu0 %v238
      %535 = vmatpush1.msra.mxu0 %v237
      %536 = vmatprep.subr.mxu0 %v242
      %537 = vmatpush1.msra.mxu0 %v241
      %538 = vmatprep.subr.mxu0 %v246
      %539 = vmatpush1.msra.mxu0 %v245
      %540 = vmatprep.subr.mxu0 %v250
      %541 = vmatpush1.msra.mxu0 %v249
      %542 = vmatprep.subr.mxu0 %v254
      %543 = vmatpush1.msra.mxu0 %v253
      %544 = vmatprep.subr.mxu0 %v258
      %545 = vmatpush1.msra.mxu0 %v257
      %546 = vmatprep.subr.mxu0 %v262
      %547 = vmatpush1.msra.mxu0 %v261
      %548 = vmatprep.subr.mxu0 %v266
      %549 = vmatpush1.msra.mxu0 %v265
      %550 = vmatprep.subr.mxu0 %v270
      %551 = vmatpush1.msra.mxu0 %v269
      %552 = vmatprep.subr.mxu0 %v274
      %553 = vmatpush1.msra.mxu0 %v273
      %554 = vmatprep.subr.mxu0 %v278
      %555 = vmatpush1.msra.mxu0 %v277
      %556 = vmatprep.subr.mxu0 %v282
      %557 = vmatpush1.msra.mxu0 %v281
      %558 = vmatprep.subr.mxu0 %v286
      %559 = vmatpush1.msra.mxu0 %v285
      %560 = vmatprep.subr.mxu0 %v290
      %561 = vmatpush1.msra.mxu0 %v289
      %562 = vmatprep.subr.mxu0 %v294
      %563 = vmatpush1.msra.mxu0 %v293
      %564 = vmatprep.subr.mxu0 %v298
      %565 = vmatpush1.msra.mxu0 %v297
      %566 = vmatprep.subr.mxu0 %v302
      %567 = vmatpush1.msra.mxu0 %v301
      %568 = vmatprep.subr.mxu0 %v306
      %569 = vmatpush1.msra.mxu0 %v305
      %570 = vmatprep.subr.mxu0 %v310
      %571 = vmatpush1.msra.mxu0 %v309
      %572 = vmatprep.subr.mxu0 %v314
      %573 = vmatpush1.msra.mxu0 %v313
      %574 = vmatprep.subr.mxu0 %v318
      %575 = vmatpush1.msra.mxu0 %v317
      %576 = vmatprep.subr.mxu0 %v322
      %577 = vmatpush1.msra.mxu0 %v321
      %578 = vmatprep.subr.mxu0 %v326
      %579 = vmatpush1.msra.mxu0 %v325
      %580 = vmatprep.subr.mxu0 %v330
      %581 = vmatpush1.msra.mxu0 %v329
      %582 = vmatprep.subr.mxu0 %v334
      %583 = vmatpush1.msra.mxu0 %v333
      %584 = vmatprep.subr.mxu0 %v338
      %585 = vmatpush1.msra.mxu0 %v337
      %586 = vmatprep.mubr.f32.mxu0 %v180
      %587 = vmatmul.mubr.f32.gmra.mrb[0].mxu0 %v179
      %v588 = vpop.f32.mrb[0].mxu0
      %v589 = vadd.f32 %v352, %v588
      %v590 = vpop.f32.mrb[0].mxu0
      %v591 = vadd.f32 %v356, %v590
      %592 = vmatprep.mubr.f32.mxu0 %v182
      %593 = vmatmul.mubr.f32.gmra.mrb[0].mxu0 %v181
      %v594 = vpop.f32.mrb[0].mxu0
      %v595 = vadd.f32 %v352, %v594
      %v596 = vpop.f32.mrb[0].mxu0
      %v597 = vadd.f32 %v356, %v596
      %598 = vmatprep.mubr.f32.mxu0 %v184
      %599 = vmatmul.mubr.f32.gmra.mrb[0].mxu0 %v183
      %v600 = vpop.f32.mrb[0].mxu0
      %v601 = vadd.f32 %v352, %v600
      %v602 = vpop.f32.mrb[0].mxu0
      %v603 = vadd.f32 %v356, %v602
      %604 = vmatprep.mubr.f32.mxu0 %v186
      %605 = vmatmul.mubr.f32.gmra.mrb[0].mxu0 %v185
      %v606 = vpop.f32.mrb[0].mxu0
      %v607 = vadd.f32 %v352, %v606
      %v608 = vpop.f32.mrb[0].mxu0
      %v609 = vadd.f32 %v356, %v608
      %610 = vmatprep.mubr.f32.mxu0 %v188
      %611 = vmatmul.mubr.f32.gmra.mrb[0].mxu0 %v187
      %v612 = vpop.f32.mrb[0].mxu0
      %v613 = vadd.f32 %v352, %v612
      %v614 = vpop.f32.mrb[0].mxu0
      %v615 = vadd.f32 %v356, %v614
      %616 = vmatprep.mubr.f32.mxu0 %v190
      %617 = vmatmul.mubr.f32.gmra.mrb[0].mxu0 %v189
      %v618 = vpop.f32.mrb[0].mxu0
      %v619 = vadd.f32 %v352, %v618
      %v620 = vpop.f32.mrb[0].mxu0
      %v621 = vadd.f32 %v356, %v620
      %622 = vmatprep.mubr.f32.mxu0 %v192
      %623 = vmatmul.mubr.f32.gmra.mrb[0].mxu0 %v191
      %v624 = vpop.f32.mrb[0].mxu0
      %v625 = vadd.f32 %v352, %v624
      %v626 = vpop.f32.mrb[0].mxu0
      %v627 = vadd.f32 %v356, %v626
      %628 = vmatprep.mubr.f32.mxu0 %v194
      %629 = vmatmul.mubr.f32.gmra.mrb[0].mxu0 %v193
      %v630 = vpop.f32.mrb[0].mxu0
      %v631 = vadd.f32 %v352, %v630
      %v632 = vpop.f32.mrb[0].mxu0
      %v633 = vadd.f32 %v356, %v632
      %634 = vmatprep.mubr.f32.mxu0 %v196
      %635 = vmatmul.mubr.f32.gmra.mrb[0].mxu0 %v195
      %v636 = vpop.f32.mrb[0].mxu0
      %v637 = vadd.f32 %v352, %v636
      %v638 = vpop.f32.mrb[0].mxu0
      %v639 = vadd.f32 %v356, %v638
      %640 = vmatprep.mubr.f32.mxu0 %v198
      %641 = vmatmul.mubr.f32.gmra.mrb[0].mxu0 %v197
      %v642 = vpop.f32.mrb[0].mxu0
      %v643 = vadd.f32 %v352, %v642
      %v644 = vpop.f32.mrb[0].mxu0
      %v645 = vadd.f32 %v356, %v644
      %646 = vmatprep.mubr.f32.mxu0 %v200
      %647 = vmatmul.mubr.f32.gmra.mrb[0].mxu0 %v199
      %v648 = vpop.f32.mrb[0].mxu0
      %v649 = vadd.f32 %v352, %v648
      %v650 = vpop.f32.mrb[0].mxu0
      %v651 = vadd.f32 %v356, %v650
      %652 = vmatprep.mubr.f32.mxu0 %v202
      %653 = vmatmul.mubr.f32.gmra.mrb[0].mxu0 %v201
      %v654 = vpop.f32.mrb[0].mxu0
      %v655 = vadd.f32 %v352, %v654
      %v656 = vpop.f32.mrb[0].mxu0
      %v657 = vadd.f32 %v356, %v656
      %658 = vmatprep.mubr.f32.mxu0 %v204
      %659 = vmatmul.mubr.f32.gmra.mrb[0].mxu0 %v203
      %v660 = vpop.f32.mrb[0].mxu0
      %v661 = vadd.f32 %v352, %v660
      %v662 = vpop.f32.mrb[0].mxu0
      %v663 = vadd.f32 %v356, %v662
      %664 = vmatprep.mubr.f32.mxu0 %v206
      %665 = vmatmul.mubr.f32.gmra.mrb[0].mxu0 %v205
      %v666 = vpop.f32.mrb[0].mxu0
      %v667 = vadd.f32 %v352, %v666
      %v668 = vpop.f32.mrb[0].mxu0
      %v669 = vadd.f32 %v356, %v668
      %670 = vmatprep.mubr.f32.mxu0 %v208
      %671 = vmatmul.mubr.f32.gmra.mrb[0].mxu0 %v207
      %v672 = vpop.f32.mrb[0].mxu0
      %v673 = vadd.f32 %v352, %v672
      %v674 = vpop.f32.mrb[0].mxu0
      %v675 = vadd.f32 %v356, %v674
      %676 = vmatprep.mubr.f32.mxu0 %v210
      %677 = vmatmul.mubr.f32.gmra.mrb[0].mxu0 %v209
      %v678 = vpop.f32.mrb[0].mxu0
      %v679 = vadd.f32 %v352, %v678
      %v680 = vpop.f32.mrb[0].mxu0
      %v681 = vadd.f32 %v356, %v680
      %682 = vdwg.mxu0
      %683 = vst [vmem:[%s177] sm:$0xff] %v428
      %684 = vst [vmem:[%s177 + $0x8] sm:$0xff] %v430
      %685 = vst [vmem:[%s177 + $0x10] sm:$0xff] %v589
      %686 = vst [vmem:[%s177 + $0x18] sm:$0xff] %v591
      %687 = vst [vmem:[%s177 + $0x20] sm:$0xff] %v434
      %688 = vst [vmem:[%s177 + $0x28] sm:$0xff] %v436
      %689 = vst [vmem:[%s177 + $0x30] sm:$0xff] %v595
      %690 = vst [vmem:[%s177 + $0x38] sm:$0xff] %v597
      %691 = vst [vmem:[%s177 + $0x40] sm:$0xff] %v440
      %692 = vst [vmem:[%s177 + $0x48] sm:$0xff] %v442
      %693 = vst [vmem:[%s177 + $0x50] sm:$0xff] %v601
      %694 = vst [vmem:[%s177 + $0x58] sm:$0xff] %v603
      %695 = vst [vmem:[%s177 + $0x60] sm:$0xff] %v446
      %696 = vst [vmem:[%s177 + $0x68] sm:$0xff] %v448
      %697 = vst [vmem:[%s177 + $0x70] sm:$0xff] %v607
      %698 = vst [vmem:[%s177 + $0x78] sm:$0xff] %v609
      %699 = vst [vmem:[%s177 + $0x80] sm:$0xff] %v452
      %700 = vst [vmem:[%s177 + $0x88] sm:$0xff] %v454
      %701 = vst [vmem:[%s177 + $0x90] sm:$0xff] %v613
      %702 = vst [vmem:[%s177 + $0x98] sm:$0xff] %v615
      %703 = vst [vmem:[%s177 + $0xa0] sm:$0xff] %v458
      %704 = vst [vmem:[%s177 + $0xa8] sm:$0xff] %v460
      %705 = vst [vmem:[%s177 + $0xb0] sm:$0xff] %v619
      %706 = vst [vmem:[%s177 + $0xb8] sm:$0xff] %v621
      %707 = vst [vmem:[%s177 + $0xc0] sm:$0xff] %v464
      %708 = vst [vmem:[%s177 + $0xc8] sm:$0xff] %v466
      %709 = vst [vmem:[%s177 + $0xd0] sm:$0xff] %v625
      %710 = vst [vmem:[%s177 + $0xd8] sm:$0xff] %v627
      %711 = vst [vmem:[%s177 + $0xe0] sm:$0xff] %v470
      %712 = vst [vmem:[%s177 + $0xe8] sm:$0xff] %v472
      %713 = vst [vmem:[%s177 + $0xf0] sm:$0xff] %v631
      %714 = vst [vmem:[%s177 + $0xf8] sm:$0xff] %v633
      %715 = vst [vmem:[%s177 + $0x100] sm:$0xff] %v476
      %716 = vst [vmem:[%s177 + $0x108] sm:$0xff] %v478
      %717 = vst [vmem:[%s177 + $0x110] sm:$0xff] %v637
      %718 = vst [vmem:[%s177 + $0x118] sm:$0xff] %v639
      %719 = vst [vmem:[%s177 + $0x120] sm:$0xff] %v482
      %720 = vst [vmem:[%s177 + $0x128] sm:$0xff] %v484
      %721 = vst [vmem:[%s177 + $0x130] sm:$0xff] %v643
      %722 = vst [vmem:[%s177 + $0x138] sm:$0xff] %v645
      %723 = vst [vmem:[%s177 + $0x140] sm:$0xff] %v488
      %724 = vst [vmem:[%s177 + $0x148] sm:$0xff] %v490
      %725 = vst [vmem:[%s177 + $0x150] sm:$0xff] %v649
      %726 = vst [vmem:[%s177 + $0x158] sm:$0xff] %v651
      %727 = vst [vmem:[%s177 + $0x160] sm:$0xff] %v494
      %728 = vst [vmem:[%s177 + $0x168] sm:$0xff] %v496
      %729 = vst [vmem:[%s177 + $0x170] sm:$0xff] %v655
      %730 = vst [vmem:[%s177 + $0x178] sm:$0xff] %v657
      %731 = vst [vmem:[%s177 + $0x180] sm:$0xff] %v500
      %732 = vst [vmem:[%s177 + $0x188] sm:$0xff] %v502
      %733 = vst [vmem:[%s177 + $0x190] sm:$0xff] %v661
      %734 = vst [vmem:[%s177 + $0x198] sm:$0xff] %v663
      %735 = vst [vmem:[%s177 + $0x1a0] sm:$0xff] %v506
      %736 = vst [vmem:[%s177 + $0x1a8] sm:$0xff] %v508
      %737 = vst [vmem:[%s177 + $0x1b0] sm:$0xff] %v667
      %738 = vst [vmem:[%s177 + $0x1b8] sm:$0xff] %v669
      %739 = vst [vmem:[%s177 + $0x1c0] sm:$0xff] %v512
      %740 = vst [vmem:[%s177 + $0x1c8] sm:$0xff] %v514
      %741 = vst [vmem:[%s177 + $0x1d0] sm:$0xff] %v673
      %742 = vst [vmem:[%s177 + $0x1d8] sm:$0xff] %v675
      %743 = vst [vmem:[%s177 + $0x1e0] sm:$0xff] %v518
      %744 = vst [vmem:[%s177 + $0x1e8] sm:$0xff] %v520
      %745 = vst [vmem:[%s177 + $0x1f0] sm:$0xff] %v679
      %746 = vst [vmem:[%s177 + $0x1f8] sm:$0xff] %v681
      %s747 = smul.u32 16, %s14
      %p748 = scmp.lt.s32.totalorder %s747, 31
      %s749 = scalar_select %p748, %s747, 31
      %s750 = smul.addr %s749, 4
      %s751 = smul.addr %s750, 8
      %s752 = scalar_lea.vmem %s3, %s751
      // Predicated region
      $region33: #{_lambda_.14} parent=31 // pred_check
        %p753 = pneg %p100
      $region34: #{_lambda_.14} parent=31 // pred_check_branch
        %755 = sbr.rel (%p753) target = $region36
      $region35: #{_lambda_.14} parent=31 // pred_region
        %s756 = smul.u32 16, %s14
      $region36: #{_lambda_.14} parent=31 // pred_fallthru
        _
    $region32: #{_lambda_.14} parent=5 // pred_fallthru
      _
    %p757 = scmp.le.s32.totalorder 2, %s9
    // Predicated region
    $region37: #{_lambda_.14} parent=5 // pred_check
      %p758 = pneg %p757
    $region38: #{_lambda_.14} parent=5 // pred_check_branch
      %760 = sbr.rel (%p758) target = $region40
    $region39: #{_lambda_.14} parent=5 // pred_region
      %s761 = ssub.s32 %s9, 2
      // Predicated region
      $region41: #{_lambda_.14} parent=39 // pred_check
        %p762 = pneg %p106
      $region42: #{_lambda_.14} parent=39 // pred_check_branch
        %764 = sbr.rel (%p762) target = $region44
      $region43: #{_lambda_.14} parent=39 // pred_region
        %s765 = smul.u32 16, %s15
        %p766 = scmp.lt.s32.totalorder %s765, 31
        %s767 = scalar_select %p766, %s765, 31
        %s768 = smul.addr %s767, 4
        %s769 = smul.addr %s768, 8
        %s770 = scalar_lea.vmem %s3, %s769
      $region44: #{_lambda_.14} parent=39 // pred_fallthru
        _
    $region40: #{_lambda_.14} parent=5 // pred_fallthru
      _
  $region6: #{_lambda_.14} parent=0 // loop_footer
    %s13 = sadd.s32 1, %s9
  $region7: #{_lambda_.14} parent=0 // loop_footer_branch
    %8 = sbr.rel target = $region3
  $region8: #{_lambda_.14} parent=0 // loop_exit
    _

// kernel: _lambda_.13
$region0: #{_lambda_.13}
  #allocation0 [shape = 'u32[]', space=smem, size = 0x4, offset = 0x4, fixed_abs, tag = 'smem constant byte address 0x4 - core index']
  #allocation1 [shape = 'u32[144,128]{1,0:T(1,128)}', space=vmem, size = 0x12000, scoped, tag = 'internal scratch']
  #allocation2 [shape = 'f32[128,128]{1,0:T(8,128)}', space=vmem, size = 0x10000, scoped, tag = 'scratch operand']
  #allocation3 [shape = 'f32[128,128]{1,0:T(8,128)}', space=vmem, size = 0x10000, scoped, tag = 'scratch operand']
  #allocation4 [shape = 's32[2]{0}', space=sflag, size = 0x8, scoped, tag = 'scratch operand']
  #allocation5 [shape = 's32[1]{0}', space=sflag, size = 0x4, scoped, tag = 'scoped memory for _lambda_.13']
  #allocation6 [shape = 'u8[1024]{0}', space=smem, size = 0x400, scoped, tag = 'prefetched SMEM operand 0']
  #allocation7 [shape = 'u8[1024]{0}', space=smem, size = 0x400, scoped, tag = 'prefetched SMEM operand 1']
  #allocation10 [shape = 's32[]', space=sflag, size = 0x4, offset = 0, fixed_abs, tag = 'sflag constant byte address 0x0 - dummy sync flag']
  #allocation11 [shape = 's32[]', space=sflag, size = 0x4, offset = 0, fixed_abs, tag = 'sflag constant byte address 0x0 - dummy sync flag']
  #allocation12 [shape = 'u32[]', space=smem, size = 0x4, offset = 0x44, fixed_abs, tag = 'smem constant byte address 0x44 - assertion arg 0']
  #allocation13 [shape = 'u32[]', space=smem, size = 0x4, offset = 0x48, fixed_abs, tag = 'smem constant byte address 0x48 - assertion arg 1']
  #allocation14 [shape = 's32[]', space=sflag, size = 0x4, offset = 0, fixed_abs, tag = 'sflag constant byte address 0x0 - dummy sync flag']
  #allocation15 [shape = 's32[]', space=sflag, size = 0x4, offset = 0, fixed_abs, tag = 'sflag constant byte address 0x0 - dummy sync flag']
  %s0 = inlined_call_operand.vmem [shape: s32[256], index: 0, kind: input, shape index: {}]
  %s1 = inlined_call_operand.vmem [shape: s32[256], index: 1, kind: input, shape index: {}]
  %s2 = inlined_call_operand.hbm [shape: f32[512,128], index: 2, kind: input, shape index: {}]
  %s3 = inlined_call_operand.hbm [shape: f32[128,128], index: 3, kind: input, shape index: {}]
  %s4 = inlined_call_operand.hbm [shape: f32[128,256], index: 4, kind: input, shape index: {}]
  %s5 = inlined_call_operand.vmem [shape: f32[1,256], index: 5, kind: input, shape index: {}]
  %s6 = inlined_call_operand.vmem [shape: f32[1,256], index: 6, kind: input, shape index: {}]
  %s7 = inlined_call_operand.vmem [shape: f32[1,256], index: 7, kind: input, shape index: {}]
  %s8 = inlined_call_operand.vmem [shape: f32[256,256], index: 8, kind: output, shape index: {}]
  %s9 = sld [smem:[#allocation0]]
  $region75: #{_lambda_.13} parent=0
    _
  %s11 = ssub.s32 1, %s9
  %s12 = scalar_select 0, %s11, %s9
  %s13 = sshll.u32 %s0, 4
  %s14 = int_to_ptr.vmem [resolvable:$true] %s13
  %16 = dma.vmem_to_smem %s14, 32, [#allocation6], [#allocation5]
  %s17 = sshll.u32 %s1, 4
  %s18 = int_to_ptr.vmem [resolvable:$true] %s17
  %20 = dma.vmem_to_smem %s18, 32, [#allocation7], [#allocation5]
  %21 = dma.done [#allocation5], 64
  %22 = sfence
  $region1: #{_lambda_.13} parent=0
    #allocation8 [shape = 'u8[131072]{0}', space=vmem, size = 0x20000, scoped, tag = 'input window, operand 4, single buffered']
    #allocation9 [shape = 's32[2]{0}', space=sflag, size = 0x8, scoped, tag = 'scoped memory for _lambda_.13']
    %23 = vsyncpa [#allocation9], 0
    loop: start=0, step=1, limit=4
    $region2: #{_lambda_.13} parent=1 // loop_pre_header
      _
    $region3: #{_lambda_.13} parent=1 // loop_header
      %s25 = sphi 0, %s29
      %p26 = scmp.ge.s32.totalorder %s25, 4
      %s33 = sphi 0, %s33
      %s35 = sphi 0, %s33
      %s36 = sphi 0, %s35
      %s50 = sphi 0, %s36
      %s54 = sphi 0, %s54
      %s56 = sphi 0, %s54
      %s57 = sphi 0, %s56
      %s71 = sphi 0, %s57
      %s75 = sphi 0, %s75
      %s77 = sphi 0, %s75
      %s78 = sphi 0, %s77
      %s92 = sphi 0, %s78
      %s96 = sphi 0, %s96
      %s98 = sphi 0, %s96
      %s99 = sphi 0, %s98
      %s113 = sphi 0, %s99
      %s119 = sphi 0, %s121
      %s122 = sphi 0, %s119
      %s123 = sphi 0, %s122
      %s139 = sphi 0, %s123
    $region4: #{_lambda_.13} parent=1 // loop_header_branch
      %28 = sbr.rel (%p26) target = $region8
    $region5: #{_lambda_.13} parent=1 // loop_body
      %s30 = ssub.s32 %s25, 1
      %s31 = ssub.s32 %s25, 2
      %s32 = sadd.s32 %s25, 1
      %s34 = sadd.s32 %s33, 1
      %p37 = scmp.eq.s32.totalorder %s25, 1
      %p38 = scmp.ne.s32.totalorder %s33, %s35
      %p39 = scmp.eq.s32.totalorder %s25, 0
      %p40 = por %p38, %p39
      %p41 = scmp.ne.s32.totalorder %s33, %s35
      %p42 = scmp.eq.s32.totalorder %s30, 1
      %p43 = por %p41, %p42
      %p44 = scmp.ne.s32.totalorder %s35, %s36
      %p45 = scmp.eq.s32.totalorder %s30, 0
      %p46 = por %p44, %p45
      %p47 = scmp.ne.s32.totalorder %s35, %s36
      %p48 = scmp.eq.s32.totalorder %s31, 1
      %p49 = por %p47, %p48
      %p51 = scmp.ne.s32.totalorder %s36, %s50
      %p52 = scmp.eq.s32.totalorder %s31, 0
      %p53 = por %p51, %p52
      %s55 = sadd.s32 %s54, 1
      %p58 = scmp.eq.s32.totalorder %s25, 1
      %p59 = scmp.ne.s32.totalorder %s54, %s56
      %p60 = scmp.eq.s32.totalorder %s25, 0
      %p61 = por %p59, %p60
      %p62 = scmp.ne.s32.totalorder %s54, %s56
      %p63 = scmp.eq.s32.totalorder %s30, 1
      %p64 = por %p62, %p63
      %p65 = scmp.ne.s32.totalorder %s56, %s57
      %p66 = scmp.eq.s32.totalorder %s30, 0
      %p67 = por %p65, %p66
      %p68 = scmp.ne.s32.totalorder %s56, %s57
      %p69 = scmp.eq.s32.totalorder %s31, 1
      %p70 = por %p68, %p69
      %p72 = scmp.ne.s32.totalorder %s57, %s71
      %p73 = scmp.eq.s32.totalorder %s31, 0
      %p74 = por %p72, %p73
      %s76 = sadd.s32 %s75, 1
      %p79 = scmp.eq.s32.totalorder %s25, 1
      %p80 = scmp.ne.s32.totalorder %s75, %s77
      %p81 = scmp.eq.s32.totalorder %s25, 0
      %p82 = por %p80, %p81
      %p83 = scmp.ne.s32.totalorder %s75, %s77
      %p84 = scmp.eq.s32.totalorder %s30, 1
      %p85 = por %p83, %p84
      %p86 = scmp.ne.s32.totalorder %s77, %s78
      %p87 = scmp.eq.s32.totalorder %s30, 0
      %p88 = por %p86, %p87
      %p89 = scmp.ne.s32.totalorder %s77, %s78
      %p90 = scmp.eq.s32.totalorder %s31, 1
      %p91 = por %p89, %p90
      %p93 = scmp.ne.s32.totalorder %s78, %s92
      %p94 = scmp.eq.s32.totalorder %s31, 0
      %p95 = por %p93, %p94
      %s97 = sadd.s32 %s96, 1
      %p100 = scmp.eq.s32.totalorder %s25, 1
      %p101 = scmp.ne.s32.totalorder %s96, %s98
      %p102 = scmp.eq.s32.totalorder %s25, 0
      %p103 = por %p101, %p102
      %p104 = scmp.ne.s32.totalorder %s96, %s98
      %p105 = scmp.eq.s32.totalorder %s30, 1
      %p106 = por %p104, %p105
      %p107 = scmp.ne.s32.totalorder %s98, %s99
      %p108 = scmp.eq.s32.totalorder %s30, 0
      %p109 = por %p107, %p108
      %p110 = scmp.ne.s32.totalorder %s98, %s99
      %p111 = scmp.eq.s32.totalorder %s31, 1
      %p112 = por %p110, %p111
      %p114 = scmp.ne.s32.totalorder %s99, %s113
      %p115 = scmp.eq.s32.totalorder %s31, 0
      %p116 = por %p114, %p115
      %s117 = ssub.s32 %s25, %s32
      %p118 = scmp.eq.s32.totalorder %s117, 0
      %s120 = sadd.s32 %s119, 1
      %s121 = scalar_select %p118, %s119, %s120
      %p124 = pneg %p118
      %p125 = scmp.eq.s32.totalorder %s25, 1
      %p126 = por %p124, %p125
      %p127 = scmp.ne.s32.totalorder %s119, %s122
      %p128 = scmp.eq.s32.totalorder %s25, 0
      %p129 = por %p127, %p128
      %p130 = scmp.ne.s32.totalorder %s119, %s122
      %p131 = scmp.eq.s32.totalorder %s30, 1
      %p132 = por %p130, %p131
      %p133 = scmp.ne.s32.totalorder %s122, %s123
      %p134 = scmp.eq.s32.totalorder %s30, 0
      %p135 = por %p133, %p134
      %p136 = scmp.ne.s32.totalorder %s122, %s123
      %p137 = scmp.eq.s32.totalorder %s31, 1
      %p138 = por %p136, %p137
      %p140 = scmp.ne.s32.totalorder %s123, %s139
      %p141 = scmp.eq.s32.totalorder %s31, 0
      %p142 = por %p140, %p141
      %p143 = scmp.le.s32.totalorder 1, %s25
      %p144 = scmp.lt.s32.totalorder %s25, 3
      %p145 = pnand %p143, %p144
      %p146 = pneg %p145
      // Predicated region
      $region9: #{_lambda_.13} parent=5 // pred_check
        _
      $region10: #{_lambda_.13} parent=5 // pred_check_branch
        %148 = sbr.rel (%p145) target = $region12
      $region11: #{_lambda_.13} parent=5 // pred_region
        %s149 = ssub.s32 %s25, 1
        // Predicated region
        $region13: #{_lambda_.13} parent=11 // pred_check
          %p150 = pneg %p46
        $region14: #{_lambda_.13} parent=11 // pred_check_branch
          %152 = sbr.rel (%p150) target = $region16
        $region15: #{_lambda_.13} parent=11 // pred_region
          %s154 = ssub.s32 4096, 4096
          %155 = vsyncadd [#allocation9], %s154
          %s156 = sshll.u32 [#allocation8], 4
          %s157 = int_to_ptr.vmem [resolvable:$true] %s156
          %162 = dma.hbm_to_vmem [thread:$0]  %s4, 4096, %s157, [#allocation9], 256, 256, 16
        $region16: #{_lambda_.13} parent=11 // pred_fallthru
          _
        // Predicated region
        $region17: #{_lambda_.13} parent=11 // pred_check
          %p163 = pneg %p67
        $region18: #{_lambda_.13} parent=11 // pred_check_branch
          %165 = sbr.rel (%p163) target = $region20
        $region19: #{_lambda_.13} parent=11 // pred_region
          _
        $region20: #{_lambda_.13} parent=11 // pred_fallthru
          _
        // Predicated region
        $region21: #{_lambda_.13} parent=11 // pred_check
          %p166 = pneg %p88
        $region22: #{_lambda_.13} parent=11 // pred_check_branch
          %168 = sbr.rel (%p166) target = $region24
        $region23: #{_lambda_.13} parent=11 // pred_region
          _
        $region24: #{_lambda_.13} parent=11 // pred_fallthru
          _
        // Predicated region
        $region25: #{_lambda_.13} parent=11 // pred_check
          %p169 = pneg %p109
        $region26: #{_lambda_.13} parent=11 // pred_check_branch
          %171 = sbr.rel (%p169) target = $region28
        $region27: #{_lambda_.13} parent=11 // pred_region
          _
        $region28: #{_lambda_.13} parent=11 // pred_fallthru
          _
      $region12: #{_lambda_.13} parent=5 // pred_fallthru
        _
      %p172 = scmp.lt.s32.totalorder %s25, 2
      // Predicated region
      $region29: #{_lambda_.13} parent=5 // pred_check
        %p173 = pneg %p172
      $region30: #{_lambda_.13} parent=5 // pred_check_branch
        %175 = sbr.rel (%p173) target = $region32
      $region31: #{_lambda_.13} parent=5 // pred_region
        _
      $region32: #{_lambda_.13} parent=5 // pred_fallthru
        _
      %p176 = scmp.le.s32.totalorder 1, %s25
      %p177 = scmp.lt.s32.totalorder %s25, 3
      %p178 = pnand %p176, %p177
      %p179 = pneg %p178
      // Predicated region
      $region33: #{_lambda_.13} parent=5 // pred_check
        _
      $region34: #{_lambda_.13} parent=5 // pred_check_branch
        %181 = sbr.rel (%p178) target = $region36
      $region35: #{_lambda_.13} parent=5 // pred_region
        %s182 = ssub.s32 %s25, 1
        // Predicated region
        $region37: #{_lambda_.13} parent=35 // pred_check
          %p183 = pneg %p46
        $region38: #{_lambda_.13} parent=35 // pred_check_branch
          %185 = sbr.rel (%p183) target = $region40
        $region39: #{_lambda_.13} parent=35 // pred_region
          %186 = dma.done [#allocation9], 4096
        $region40: #{_lambda_.13} parent=35 // pred_fallthru
          _
        %p187 = pneg %p46
        %p188 = pneg %p43
        %p189 = pneg %p67
        %p190 = pneg %p64
        %p191 = pneg %p88
        %p192 = pneg %p85
        %p193 = pneg %p109
        %p194 = pneg %p106
        %p195 = pneg %p135
        %p196 = pneg %p132
        %s197 = smul.u32 16, %s30
        %p198 = scmp.lt.s32.totalorder %s197, 31
        %s199 = scalar_select %p198, %s197, 31
        %s200 = smul.addr %s199, 2
        %s201 = smul.addr %s200, 8
        %s202 = scalar_lea.vmem %s8, %s201
        %s203 = smul.u32 16, %s30
        %p204 = scmp.lt.s32.totalorder %s203, 31
        %s205 = scalar_select %p204, %s203, 31
        %s206 = smul.addr %s205, 2
        %s207 = smul.addr %s206, 8
        %s208 = scalar_lea.vmem %s8, %s207
        %s209 = smul.u32 16, %s30
        %s210 = smul.u32 %s30, 128
        loop: start=0, step=1, limit=128
        $region41: #{_lambda_.13} parent=35 // loop_pre_header
          _
        $region42: #{_lambda_.13} parent=35 // loop_header
          %s212 = sphi 0, %s216
          %p213 = scmp.ge.s32.totalorder %s212, 128
        $region43: #{_lambda_.13} parent=35 // loop_header_branch
          %215 = sbr.rel (%p213) target = $region47
        $region44: #{_lambda_.13} parent=35 // loop_body
          %s217 = sadd.s32 %s210, %s212
          %s218 = sld [smem:[#allocation6 + %s217]]
          %s219 = sld [smem:[#allocation7 + %s217]]
          %s220 = smul.addr %s218, 16
          %s221 = scalar_lea.hbm %s2, %s220
          %s222 = scalar_lea.vmem [#allocation2], %s212
          // Predicated region
          $region48: #{_lambda_.13} parent=44 // pred_check
            _
          $region49: #{_lambda_.13} parent=44 // pred_check_branch
            %224 = sbr.rel target = $region51
          $region50: #{_lambda_.13} parent=44 // pred_region
            %225 = sst [smem:[#allocation12]] [#allocation11]
            %226 = sst [smem:[#allocation13]] [#allocation10]
          $region51: #{_lambda_.13} parent=44 // pred_fallthru
            _
          %228 = shalt.err (0)
          %s230 = sshll.u32 %s222, 4
          %s231 = int_to_ptr.vmem [resolvable:$true] %s230
          %233 = dma.hbm_to_vmem [thread:$0]  %s221, 16, %s231, [#allocation4]
          %s234 = smul.addr %s219, 16
          %s235 = scalar_lea.hbm %s3, %s234
          %s236 = scalar_lea.vmem [#allocation3], %s212
          %s237 = scalar_lea.sflag [#allocation4], 1
          // Predicated region
          $region52: #{_lambda_.13} parent=44 // pred_check
            _
          $region53: #{_lambda_.13} parent=44 // pred_check_branch
            %239 = sbr.rel target = $region55
          $region54: #{_lambda_.13} parent=44 // pred_region
            %240 = sst [smem:[#allocation12]] [#allocation15]
            %241 = sst [smem:[#allocation13]] [#allocation14]
          $region55: #{_lambda_.13} parent=44 // pred_fallthru
            _
          %243 = shalt.err (0)
          %s245 = sshll.u32 %s236, 4
          %s246 = int_to_ptr.vmem [resolvable:$true] %s245
          %248 = dma.hbm_to_vmem [thread:$0]  %s235, 16, %s246, %s237
        $region45: #{_lambda_.13} parent=35 // loop_footer
          %s216 = sadd.s32 1, %s212
        $region46: #{_lambda_.13} parent=35 // loop_footer_branch
          %211 = sbr.rel target = $region42
        $region47: #{_lambda_.13} parent=35 // loop_exit
          _
        loop: start=0, step=1, limit=128
        $region56: #{_lambda_.13} parent=35 // loop_pre_header
          _
        $region57: #{_lambda_.13} parent=35 // loop_header
          %s250 = sphi 0, %s254
          %p251 = scmp.ge.s32.totalorder %s250, 128
        $region58: #{_lambda_.13} parent=35 // loop_header_branch
          %253 = sbr.rel (%p251) target = $region62
        $region59: #{_lambda_.13} parent=35 // loop_body
          %s255 = smul.u32 1, 1
          %s256 = sshll.u32 %s255, 4
          %257 = dma.done [#allocation4], %s256
          %s258 = scalar_lea.sflag [#allocation4], 1
          %s259 = sshll.u32 %s255, 4
          %260 = dma.done %s258, %s259
        $region60: #{_lambda_.13} parent=35 // loop_footer
          %s254 = sadd.s32 1, %s250
        $region61: #{_lambda_.13} parent=35 // loop_footer_branch
          %249 = sbr.rel target = $region57
        $region62: #{_lambda_.13} parent=35 // loop_exit
          _
        %v261 = vld [vmem:[#allocation2] sm:$0xff]
        %v262 = vld [vmem:[#allocation2 + $0x8] sm:$0xff]
        %v263 = vld [vmem:[#allocation2 + $0x10] sm:$0xff]
        %v264 = vld [vmem:[#allocation2 + $0x18] sm:$0xff]
        %v265 = vld [vmem:[#allocation2 + $0x20] sm:$0xff]
        %v266 = vld [vmem:[#allocation2 + $0x28] sm:$0xff]
        %v267 = vld [vmem:[#allocation2 + $0x30] sm:$0xff]
        %v268 = vld [vmem:[#allocation2 + $0x38] sm:$0xff]
        %v269 = vld [vmem:[#allocation2 + $0x40] sm:$0xff]
        %v270 = vld [vmem:[#allocation2 + $0x48] sm:$0xff]
        %v271 = vld [vmem:[#allocation2 + $0x50] sm:$0xff]
        %v272 = vld [vmem:[#allocation2 + $0x58] sm:$0xff]
        %v273 = vld [vmem:[#allocation2 + $0x60] sm:$0xff]
        %v274 = vld [vmem:[#allocation2 + $0x68] sm:$0xff]
        %v275 = vld [vmem:[#allocation2 + $0x70] sm:$0xff]
        %v276 = vld [vmem:[#allocation2 + $0x78] sm:$0xff]
        %v277 = vld [vmem:[#allocation3] sm:$0xff]
        %v278 = vld [vmem:[#allocation3 + $0x8] sm:$0xff]
        %v279 = vld [vmem:[#allocation3 + $0x10] sm:$0xff]
        %v280 = vld [vmem:[#allocation3 + $0x18] sm:$0xff]
        %v281 = vld [vmem:[#allocation3 + $0x20] sm:$0xff]
        %v282 = vld [vmem:[#allocation3 + $0x28] sm:$0xff]
        %v283 = vld [vmem:[#allocation3 + $0x30] sm:$0xff]
        %v284 = vld [vmem:[#allocation3 + $0x38] sm:$0xff]
        %v285 = vld [vmem:[#allocation3 + $0x40] sm:$0xff]
        %v286 = vld [vmem:[#allocation3 + $0x48] sm:$0xff]
        %v287 = vld [vmem:[#allocation3 + $0x50] sm:$0xff]
        %v288 = vld [vmem:[#allocation3 + $0x58] sm:$0xff]
        %v289 = vld [vmem:[#allocation3 + $0x60] sm:$0xff]
        %v290 = vld [vmem:[#allocation3 + $0x68] sm:$0xff]
        %v291 = vld [vmem:[#allocation3 + $0x70] sm:$0xff]
        %v292 = vld [vmem:[#allocation3 + $0x78] sm:$0xff]
        %v293 = vadd.f32 %v261, %v277
        %v294 = vadd.f32 %v262, %v278
        %v295 = vadd.f32 %v263, %v279
        %v296 = vadd.f32 %v264, %v280
        %v297 = vadd.f32 %v265, %v281
        %v298 = vadd.f32 %v266, %v282
        %v299 = vadd.f32 %v267, %v283
        %v300 = vadd.f32 %v268, %v284
        %v301 = vadd.f32 %v269, %v285
        %v302 = vadd.f32 %v270, %v286
        %v303 = vadd.f32 %v271, %v287
        %v304 = vadd.f32 %v272, %v288
        %v305 = vadd.f32 %v273, %v289
        %v306 = vadd.f32 %v274, %v290
        %v307 = vadd.f32 %v275, %v291
        %v308 = vadd.f32 %v276, %v292
        %v309 = vld [vmem:[#allocation8] sm:$0xff]
        %v310 = vld [vmem:[#allocation8 + $0x8] sm:$0xff]
        %v311 = vld [vmem:[#allocation8 + $0x10] sm:$0xff]
        %v312 = vld [vmem:[#allocation8 + $0x18] sm:$0xff]
        %v313 = vld [vmem:[#allocation8 + $0x20] sm:$0xff]
        %v314 = vld [vmem:[#allocation8 + $0x28] sm:$0xff]
        %v315 = vld [vmem:[#allocation8 + $0x30] sm:$0xff]
        %v316 = vld [vmem:[#allocation8 + $0x38] sm:$0xff]
        %v317 = vld [vmem:[#allocation8 + $0x40] sm:$0xff]
        %v318 = vld [vmem:[#allocation8 + $0x48] sm:$0xff]
        %v319 = vld [vmem:[#allocation8 + $0x50] sm:$0xff]
        %v320 = vld [vmem:[#allocation8 + $0x58] sm:$0xff]
        %v321 = vld [vmem:[#allocation8 + $0x60] sm:$0xff]
        %v322 = vld [vmem:[#allocation8 + $0x68] sm:$0xff]
        %v323 = vld [vmem:[#allocation8 + $0x70] sm:$0xff]
        %v324 = vld [vmem:[#allocation8 + $0x78] sm:$0xff]
        %v325 = vld [vmem:[#allocation8 + $0x80] sm:$0xff]
        %v326 = vld [vmem:[#allocation8 + $0x88] sm:$0xff]
        %v327 = vld [vmem:[#allocation8 + $0x90] sm:$0xff]
        %v328 = vld [vmem:[#allocation8 + $0x98] sm:$0xff]
        %v329 = vld [vmem:[#allocation8 + $0xa0] sm:$0xff]
        %v330 = vld [vmem:[#allocation8 + $0xa8] sm:$0xff]
        %v331 = vld [vmem:[#allocation8 + $0xb0] sm:$0xff]
        %v332 = vld [vmem:[#allocation8 + $0xb8] sm:$0xff]
        %v333 = vld [vmem:[#allocation8 + $0xc0] sm:$0xff]
        %v334 = vld [vmem:[#allocation8 + $0xc8] sm:$0xff]
        %v335 = vld [vmem:[#allocation8 + $0xd0] sm:$0xff]
        %v336 = vld [vmem:[#allocation8 + $0xd8] sm:$0xff]
        %v337 = vld [vmem:[#allocation8 + $0xe0] sm:$0xff]
        %v338 = vld [vmem:[#allocation8 + $0xe8] sm:$0xff]
        %v339 = vld [vmem:[#allocation8 + $0xf0] sm:$0xff]
        %v340 = vld [vmem:[#allocation8 + $0xf8] sm:$0xff]
        %v341 = vld [vmem:[%s5] sm:$0x3]
        %v343 = vlaneseq
        %v344 = vshrl.u32 %v343, 7
        %v345 = vsub.s32 0, %v344
        %v346 = vrot.slane %v341, %v345
        %v347 = vlaneseq
        %v348 = vshrl.u32 %v347, 7
        %v349 = vsub.s32 1, %v348
        %v350 = vrot.slane %v341, %v349
        %353 = vmatprep.subr.mxu0 %v310
        %354 = vmatpush1.msra.mxu0 %v309
        %355 = vmatprep.subr.mxu0 %v312
        %356 = vmatpush1.msra.mxu0 %v311
        %357 = vmatprep.subr.mxu0 %v314
        %358 = vmatpush1.msra.mxu0 %v313
        %359 = vmatprep.subr.mxu0 %v316
        %360 = vmatpush1.msra.mxu0 %v315
        %361 = vmatprep.subr.mxu0 %v318
        %362 = vmatpush1.msra.mxu0 %v317
        %363 = vmatprep.subr.mxu0 %v320
        %364 = vmatpush1.msra.mxu0 %v319
        %365 = vmatprep.subr.mxu0 %v322
        %366 = vmatpush1.msra.mxu0 %v321
        %367 = vmatprep.subr.mxu0 %v324
        %368 = vmatpush1.msra.mxu0 %v323
        %369 = vmatprep.subr.mxu0 %v326
        %370 = vmatpush1.msra.mxu0 %v325
        %371 = vmatprep.subr.mxu0 %v328
        %372 = vmatpush1.msra.mxu0 %v327
        %373 = vmatprep.subr.mxu0 %v330
        %374 = vmatpush1.msra.mxu0 %v329
        %375 = vmatprep.subr.mxu0 %v332
        %376 = vmatpush1.msra.mxu0 %v331
        %377 = vmatprep.subr.mxu0 %v334
        %378 = vmatpush1.msra.mxu0 %v333
        %379 = vmatprep.subr.mxu0 %v336
        %380 = vmatpush1.msra.mxu0 %v335
        %381 = vmatprep.subr.mxu0 %v338
        %382 = vmatpush1.msra.mxu0 %v337
        %383 = vmatprep.subr.mxu0 %v340
        %384 = vmatpush1.msra.mxu0 %v339
        %385 = vmatprep.subr.mxu0 0.0
        %386 = vmatpush1.msra.mxu0 0.0
        %387 = vmatprep.subr.mxu0 0.0
        %388 = vmatpush1.msra.mxu0 0.0
        %389 = vmatprep.subr.mxu0 0.0
        %390 = vmatpush1.msra.mxu0 0.0
        %391 = vmatprep.subr.mxu0 0.0
        %392 = vmatpush1.msra.mxu0 0.0
        %393 = vmatprep.subr.mxu0 0.0
        %394 = vmatpush1.msra.mxu0 0.0
        %395 = vmatprep.subr.mxu0 0.0
        %396 = vmatpush1.msra.mxu0 0.0
        %397 = vmatprep.subr.mxu0 0.0
        %398 = vmatpush1.msra.mxu0 0.0
        %399 = vmatprep.subr.mxu0 0.0
        %400 = vmatpush1.msra.mxu0 0.0
        %401 = vmatprep.subr.mxu0 0.0
        %402 = vmatpush1.msra.mxu0 0.0
        %403 = vmatprep.subr.mxu0 0.0
        %404 = vmatpush1.msra.mxu0 0.0
        %405 = vmatprep.subr.mxu0 0.0
        %406 = vmatpush1.msra.mxu0 0.0
        %407 = vmatprep.subr.mxu0 0.0
        %408 = vmatpush1.msra.mxu0 0.0
        %409 = vmatprep.subr.mxu0 0.0
        %410 = vmatpush1.msra.mxu0 0.0
        %411 = vmatprep.subr.mxu0 0.0
        %412 = vmatpush1.msra.mxu0 0.0
        %413 = vmatprep.subr.mxu0 0.0
        %414 = vmatpush1.msra.mxu0 0.0
        %415 = vmatprep.subr.mxu0 0.0
        %416 = vmatpush1.msra.mxu0 0.0
        %417 = vmatprep.mubr.f32.mxu0 0.0
        %418 = vmatmul.mubr.f32.gmra.mrb[0].mxu0 %v293
        %v419 = vpop.f32.mrb[0].mxu0
        %v420 = vadd.f32 %v346, %v419
        %v421 = vpop.f32.mrb[0].mxu0
        %v422 = vadd.f32 %v350, %v421
        %423 = vmatprep.mubr.f32.mxu0 0.0
        %424 = vmatmul.mubr.f32.gmra.mrb[0].mxu0 %v294
        %v425 = vpop.f32.mrb[0].mxu0
        %v426 = vadd.f32 %v346, %v425
        %v427 = vpop.f32.mrb[0].mxu0
        %v428 = vadd.f32 %v350, %v427
        %429 = vmatprep.mubr.f32.mxu0 0.0
        %430 = vmatmul.mubr.f32.gmra.mrb[0].mxu0 %v295
        %v431 = vpop.f32.mrb[0].mxu0
        %v432 = vadd.f32 %v346, %v431
        %v433 = vpop.f32.mrb[0].mxu0
        %v434 = vadd.f32 %v350, %v433
        %435 = vmatprep.mubr.f32.mxu0 0.0
        %436 = vmatmul.mubr.f32.gmra.mrb[0].mxu0 %v296
        %v437 = vpop.f32.mrb[0].mxu0
        %v438 = vadd.f32 %v346, %v437
        %v439 = vpop.f32.mrb[0].mxu0
        %v440 = vadd.f32 %v350, %v439
        %441 = vmatprep.mubr.f32.mxu0 0.0
        %442 = vmatmul.mubr.f32.gmra.mrb[0].mxu0 %v297
        %v443 = vpop.f32.mrb[0].mxu0
        %v444 = vadd.f32 %v346, %v443
        %v445 = vpop.f32.mrb[0].mxu0
        %v446 = vadd.f32 %v350, %v445
        %447 = vmatprep.mubr.f32.mxu0 0.0
        %448 = vmatmul.mubr.f32.gmra.mrb[0].mxu0 %v298
        %v449 = vpop.f32.mrb[0].mxu0
        %v450 = vadd.f32 %v346, %v449
        %v451 = vpop.f32.mrb[0].mxu0
        %v452 = vadd.f32 %v350, %v451
        %453 = vmatprep.mubr.f32.mxu0 0.0
        %454 = vmatmul.mubr.f32.gmra.mrb[0].mxu0 %v299
        %v455 = vpop.f32.mrb[0].mxu0
        %v456 = vadd.f32 %v346, %v455
        %v457 = vpop.f32.mrb[0].mxu0
        %v458 = vadd.f32 %v350, %v457
        %459 = vmatprep.mubr.f32.mxu0 0.0
        %460 = vmatmul.mubr.f32.gmra.mrb[0].mxu0 %v300
        %v461 = vpop.f32.mrb[0].mxu0
        %v462 = vadd.f32 %v346, %v461
        %v463 = vpop.f32.mrb[0].mxu0
        %v464 = vadd.f32 %v350, %v463
        %465 = vmatprep.mubr.f32.mxu0 0.0
        %466 = vmatmul.mubr.f32.gmra.mrb[0].mxu0 %v301
        %v467 = vpop.f32.mrb[0].mxu0
        %v468 = vadd.f32 %v346, %v467
        %v469 = vpop.f32.mrb[0].mxu0
        %v470 = vadd.f32 %v350, %v469
        %471 = vmatprep.mubr.f32.mxu0 0.0
        %472 = vmatmul.mubr.f32.gmra.mrb[0].mxu0 %v302
        %v473 = vpop.f32.mrb[0].mxu0
        %v474 = vadd.f32 %v346, %v473
        %v475 = vpop.f32.mrb[0].mxu0
        %v476 = vadd.f32 %v350, %v475
        %477 = vmatprep.mubr.f32.mxu0 0.0
        %478 = vmatmul.mubr.f32.gmra.mrb[0].mxu0 %v303
        %v479 = vpop.f32.mrb[0].mxu0
        %v480 = vadd.f32 %v346, %v479
        %v481 = vpop.f32.mrb[0].mxu0
        %v482 = vadd.f32 %v350, %v481
        %483 = vmatprep.mubr.f32.mxu0 0.0
        %484 = vmatmul.mubr.f32.gmra.mrb[0].mxu0 %v304
        %v485 = vpop.f32.mrb[0].mxu0
        %v486 = vadd.f32 %v346, %v485
        %v487 = vpop.f32.mrb[0].mxu0
        %v488 = vadd.f32 %v350, %v487
        %489 = vmatprep.mubr.f32.mxu0 0.0
        %490 = vmatmul.mubr.f32.gmra.mrb[0].mxu0 %v305
        %v491 = vpop.f32.mrb[0].mxu0
        %v492 = vadd.f32 %v346, %v491
        %v493 = vpop.f32.mrb[0].mxu0
        %v494 = vadd.f32 %v350, %v493
        %495 = vmatprep.mubr.f32.mxu0 0.0
        %496 = vmatmul.mubr.f32.gmra.mrb[0].mxu0 %v306
        %v497 = vpop.f32.mrb[0].mxu0
        %v498 = vadd.f32 %v346, %v497
        %v499 = vpop.f32.mrb[0].mxu0
        %v500 = vadd.f32 %v350, %v499
        %501 = vmatprep.mubr.f32.mxu0 0.0
        %502 = vmatmul.mubr.f32.gmra.mrb[0].mxu0 %v307
        %v503 = vpop.f32.mrb[0].mxu0
        %v504 = vadd.f32 %v346, %v503
        %v505 = vpop.f32.mrb[0].mxu0
        %v506 = vadd.f32 %v350, %v505
        %507 = vmatprep.mubr.f32.mxu0 0.0
        %508 = vmatmul.mubr.f32.gmra.mrb[0].mxu0 %v308
        %v509 = vpop.f32.mrb[0].mxu0
        %v510 = vadd.f32 %v346, %v509
        %v511 = vpop.f32.mrb[0].mxu0
        %v512 = vadd.f32 %v350, %v511
        %513 = vdwg.mxu0
        %v514 = vadd.f32 %v420, %v422
        %515 = vadd.xlane.f32.xlu0 %v514
        %v516 = vpop.xlane.xlu0 %515
        %v517 = vadd.f32 %v426, %v428
        %518 = vadd.xlane.f32.xlu0 %v517
        %v519 = vpop.xlane.xlu0 %518
        %v520 = vadd.f32 %v432, %v434
        %521 = vadd.xlane.f32.xlu0 %v520
        %v522 = vpop.xlane.xlu0 %521
        %v523 = vadd.f32 %v438, %v440
        %524 = vadd.xlane.f32.xlu0 %v523
        %v525 = vpop.xlane.xlu0 %524
        %v526 = vadd.f32 %v444, %v446
        %527 = vadd.xlane.f32.xlu0 %v526
        %v528 = vpop.xlane.xlu0 %527
        %v529 = vadd.f32 %v450, %v452
        %530 = vadd.xlane.f32.xlu0 %v529
        %v531 = vpop.xlane.xlu0 %530
        %v532 = vadd.f32 %v456, %v458
        %533 = vadd.xlane.f32.xlu0 %v532
        %v534 = vpop.xlane.xlu0 %533
        %v535 = vadd.f32 %v462, %v464
        %536 = vadd.xlane.f32.xlu0 %v535
        %v537 = vpop.xlane.xlu0 %536
        %v538 = vadd.f32 %v468, %v470
        %539 = vadd.xlane.f32.xlu0 %v538
        %v540 = vpop.xlane.xlu0 %539
        %v541 = vadd.f32 %v474, %v476
        %542 = vadd.xlane.f32.xlu0 %v541
        %v543 = vpop.xlane.xlu0 %542
        %v544 = vadd.f32 %v480, %v482
        %545 = vadd.xlane.f32.xlu0 %v544
        %v546 = vpop.xlane.xlu0 %545
        %v547 = vadd.f32 %v486, %v488
        %548 = vadd.xlane.f32.xlu0 %v547
        %v549 = vpop.xlane.xlu0 %548
        %v550 = vadd.f32 %v492, %v494
        %551 = vadd.xlane.f32.xlu0 %v550
        %v552 = vpop.xlane.xlu0 %551
        %v553 = vadd.f32 %v498, %v500
        %554 = vadd.xlane.f32.xlu0 %v553
        %v555 = vpop.xlane.xlu0 %554
        %v556 = vadd.f32 %v504, %v506
        %557 = vadd.xlane.f32.xlu0 %v556
        %v558 = vpop.xlane.xlu0 %557
        %v559 = vadd.f32 %v510, %v512
        %560 = vadd.xlane.f32.xlu0 %v559
        %v561 = vpop.xlane.xlu0 %560
        %v562 = vrcp.pop 256.0
        %v563 = vmul.f32 %v516, %v562
        %v564 = vmul.f32 %v519, %v562
        %v565 = vmul.f32 %v522, %v562
        %v566 = vmul.f32 %v525, %v562
        %v567 = vmul.f32 %v528, %v562
        %v568 = vmul.f32 %v531, %v562
        %v569 = vmul.f32 %v534, %v562
        %v570 = vmul.f32 %v537, %v562
        %v571 = vmul.f32 %v540, %v562
        %v572 = vmul.f32 %v543, %v562
        %v573 = vmul.f32 %v546, %v562
        %v574 = vmul.f32 %v549, %v562
        %v575 = vmul.f32 %v552, %v562
        %v576 = vmul.f32 %v555, %v562
        %v577 = vmul.f32 %v558, %v562
        %v578 = vmul.f32 %v561, %v562
        %v579 = vsub.f32 %v420, %v563
        %v580 = vsub.f32 %v422, %v563
        %v581 = vsub.f32 %v426, %v564
        %v582 = vsub.f32 %v428, %v564
        %v583 = vsub.f32 %v432, %v565
        %v584 = vsub.f32 %v434, %v565
        %v585 = vsub.f32 %v438, %v566
        %v586 = vsub.f32 %v440, %v566
        %v587 = vsub.f32 %v444, %v567
        %v588 = vsub.f32 %v446, %v567
        %v589 = vsub.f32 %v450, %v568
        %v590 = vsub.f32 %v452, %v568
        %v591 = vsub.f32 %v456, %v569
        %v592 = vsub.f32 %v458, %v569
        %v593 = vsub.f32 %v462, %v570
        %v594 = vsub.f32 %v464, %v570
        %v595 = vsub.f32 %v468, %v571
        %v596 = vsub.f32 %v470, %v571
        %v597 = vsub.f32 %v474, %v572
        %v598 = vsub.f32 %v476, %v572
        %v599 = vsub.f32 %v480, %v573
        %v600 = vsub.f32 %v482, %v573
        %v601 = vsub.f32 %v486, %v574
        %v602 = vsub.f32 %v488, %v574
        %v603 = vsub.f32 %v492, %v575
        %v604 = vsub.f32 %v494, %v575
        %v605 = vsub.f32 %v498, %v576
        %v606 = vsub.f32 %v500, %v576
        %v607 = vsub.f32 %v504, %v577
        %v608 = vsub.f32 %v506, %v577
        %v609 = vsub.f32 %v510, %v578
        %v610 = vsub.f32 %v512, %v578
        %v611 = vmul.f32 %v579, %v579
        %v612 = vmul.f32 %v580, %v580
        %v613 = vmul.f32 %v581, %v581
        %v614 = vmul.f32 %v582, %v582
        %v615 = vmul.f32 %v583, %v583
        %v616 = vmul.f32 %v584, %v584
        %v617 = vmul.f32 %v585, %v585
        %v618 = vmul.f32 %v586, %v586
        %v619 = vmul.f32 %v587, %v587
        %v620 = vmul.f32 %v588, %v588
        %v621 = vmul.f32 %v589, %v589
        %v622 = vmul.f32 %v590, %v590
        %v623 = vmul.f32 %v591, %v591
        %v624 = vmul.f32 %v592, %v592
        %v625 = vmul.f32 %v593, %v593
        %v626 = vmul.f32 %v594, %v594
        %v627 = vmul.f32 %v595, %v595
        %v628 = vmul.f32 %v596, %v596
        %v629 = vmul.f32 %v597, %v597
        %v630 = vmul.f32 %v598, %v598
        %v631 = vmul.f32 %v599, %v599
        %v632 = vmul.f32 %v600, %v600
        %v633 = vmul.f32 %v601, %v601
        %v634 = vmul.f32 %v602, %v602
        %v635 = vmul.f32 %v603, %v603
        %v636 = vmul.f32 %v604, %v604
        %v637 = vmul.f32 %v605, %v605
        %v638 = vmul.f32 %v606, %v606
        %v639 = vmul.f32 %v607, %v607
        %v640 = vmul.f32 %v608, %v608
        %v641 = vmul.f32 %v609, %v609
        %v642 = vmul.f32 %v610, %v610
        %v643 = vadd.f32 %v611, %v612
        %644 = vadd.xlane.f32.xlu0 %v643
        %v645 = vpop.xlane.xlu0 %644
        %v646 = vadd.f32 %v613, %v614
        %647 = vadd.xlane.f32.xlu0 %v646
        %v648 = vpop.xlane.xlu0 %647
        %v649 = vadd.f32 %v615, %v616
        %650 = vadd.xlane.f32.xlu0 %v649
        %v651 = vpop.xlane.xlu0 %650
        %v652 = vadd.f32 %v617, %v618
        %653 = vadd.xlane.f32.xlu0 %v652
        %v654 = vpop.xlane.xlu0 %653
        %v655 = vadd.f32 %v619, %v620
        %656 = vadd.xlane.f32.xlu0 %v655
        %v657 = vpop.xlane.xlu0 %656
        %v658 = vadd.f32 %v621, %v622
        %659 = vadd.xlane.f32.xlu0 %v658
        %v660 = vpop.xlane.xlu0 %659
        %v661 = vadd.f32 %v623, %v624
        %662 = vadd.xlane.f32.xlu0 %v661
        %v663 = vpop.xlane.xlu0 %662
        %v664 = vadd.f32 %v625, %v626
        %665 = vadd.xlane.f32.xlu0 %v664
        %v666 = vpop.xlane.xlu0 %665
        %v667 = vadd.f32 %v627, %v628
        %668 = vadd.xlane.f32.xlu0 %v667
        %v669 = vpop.xlane.xlu0 %668
        %v670 = vadd.f32 %v629, %v630
        %671 = vadd.xlane.f32.xlu0 %v670
        %v672 = vpop.xlane.xlu0 %671
        %v673 = vadd.f32 %v631, %v632
        %674 = vadd.xlane.f32.xlu0 %v673
        %v675 = vpop.xlane.xlu0 %674
        %v676 = vadd.f32 %v633, %v634
        %677 = vadd.xlane.f32.xlu0 %v676
        %v678 = vpop.xlane.xlu0 %677
        %v679 = vadd.f32 %v635, %v636
        %680 = vadd.xlane.f32.xlu0 %v679
        %v681 = vpop.xlane.xlu0 %680
        %v682 = vadd.f32 %v637, %v638
        %683 = vadd.xlane.f32.xlu0 %v682
        %v684 = vpop.xlane.xlu0 %683
        %v685 = vadd.f32 %v639, %v640
        %686 = vadd.xlane.f32.xlu0 %v685
        %v687 = vpop.xlane.xlu0 %686
        %v688 = vadd.f32 %v641, %v642
        %689 = vadd.xlane.f32.xlu0 %v688
        %v690 = vpop.xlane.xlu0 %689
        %v691 = vmul.f32 %v645, %v562
        %v692 = vmul.f32 %v648, %v562
        %v693 = vmul.f32 %v651, %v562
        %v694 = vmul.f32 %v654, %v562
        %v695 = vmul.f32 %v657, %v562
        %v696 = vmul.f32 %v660, %v562
        %v697 = vmul.f32 %v663, %v562
        %v698 = vmul.f32 %v666, %v562
        %v699 = vmul.f32 %v669, %v562
        %v700 = vmul.f32 %v672, %v562
        %v701 = vmul.f32 %v675, %v562
        %v702 = vmul.f32 %v678, %v562
        %v703 = vmul.f32 %v681, %v562
        %v704 = vmul.f32 %v684, %v562
        %v705 = vmul.f32 %v687, %v562
        %v706 = vmul.f32 %v690, %v562
        %v707 = vadd.f32 %v691, 1e-12
        %v708 = vadd.f32 %v692, 1e-12
        %v709 = vadd.f32 %v693, 1e-12
        %v710 = vadd.f32 %v694, 1e-12
        %v711 = vadd.f32 %v695, 1e-12
        %v712 = vadd.f32 %v696, 1e-12
        %v713 = vadd.f32 %v697, 1e-12
        %v714 = vadd.f32 %v698, 1e-12
        %v715 = vadd.f32 %v699, 1e-12
        %v716 = vadd.f32 %v700, 1e-12
        %v717 = vadd.f32 %v701, 1e-12
        %v718 = vadd.f32 %v702, 1e-12
        %v719 = vadd.f32 %v703, 1e-12
        %v720 = vadd.f32 %v704, 1e-12
        %v721 = vadd.f32 %v705, 1e-12
        %v722 = vadd.f32 %v706, 1e-12
        %v723 = vrsqrt.pop %v707
        %v724 = vrsqrt.pop %v708
        %v725 = vrsqrt.pop %v709
        %v726 = vrsqrt.pop %v710
        %v727 = vrsqrt.pop %v711
        %v728 = vrsqrt.pop %v712
        %v729 = vrsqrt.pop %v713
        %v730 = vrsqrt.pop %v714
        %v731 = vrsqrt.pop %v715
        %v732 = vrsqrt.pop %v716
        %v733 = vrsqrt.pop %v717
        %v734 = vrsqrt.pop %v718
        %v735 = vrsqrt.pop %v719
        %v736 = vrsqrt.pop %v720
        %v737 = vrsqrt.pop %v721
        %v738 = vrsqrt.pop %v722
        %v739 = vmul.f32 %v579, %v723
        %v740 = vmul.f32 %v580, %v723
        %v741 = vmul.f32 %v581, %v724
        %v742 = vmul.f32 %v582, %v724
        %v743 = vmul.f32 %v583, %v725
        %v744 = vmul.f32 %v584, %v725
        %v745 = vmul.f32 %v585, %v726
        %v746 = vmul.f32 %v586, %v726
        %v747 = vmul.f32 %v587, %v727
        %v748 = vmul.f32 %v588, %v727
        %v749 = vmul.f32 %v589, %v728
        %v750 = vmul.f32 %v590, %v728
        %v751 = vmul.f32 %v591, %v729
        %v752 = vmul.f32 %v592, %v729
        %v753 = vmul.f32 %v593, %v730
        %v754 = vmul.f32 %v594, %v730
        %v755 = vmul.f32 %v595, %v731
        %v756 = vmul.f32 %v596, %v731
        %v757 = vmul.f32 %v597, %v732
        %v758 = vmul.f32 %v598, %v732
        %v759 = vmul.f32 %v599, %v733
        %v760 = vmul.f32 %v600, %v733
        %v761 = vmul.f32 %v601, %v734
        %v762 = vmul.f32 %v602, %v734
        %v763 = vmul.f32 %v603, %v735
        %v764 = vmul.f32 %v604, %v735
        %v765 = vmul.f32 %v605, %v736
        %v766 = vmul.f32 %v606, %v736
        %v767 = vmul.f32 %v607, %v737
        %v768 = vmul.f32 %v608, %v737
        %v769 = vmul.f32 %v609, %v738
        %v770 = vmul.f32 %v610, %v738
        %v771 = vld [vmem:[%s6] sm:$0x3]
        %v773 = vlaneseq
        %v774 = vshrl.u32 %v773, 7
        %v775 = vsub.s32 0, %v774
        %v776 = vrot.slane %v771, %v775
        %v777 = vlaneseq
        %v778 = vshrl.u32 %v777, 7
        %v779 = vsub.s32 1, %v778
        %v780 = vrot.slane %v771, %v779
        %v783 = vmul.f32 %v739, %v776
        %v784 = vmul.f32 %v740, %v780
        %v785 = vmul.f32 %v741, %v776
        %v786 = vmul.f32 %v742, %v780
        %v787 = vmul.f32 %v743, %v776
        %v788 = vmul.f32 %v744, %v780
        %v789 = vmul.f32 %v745, %v776
        %v790 = vmul.f32 %v746, %v780
        %v791 = vmul.f32 %v747, %v776
        %v792 = vmul.f32 %v748, %v780
        %v793 = vmul.f32 %v749, %v776
        %v794 = vmul.f32 %v750, %v780
        %v795 = vmul.f32 %v751, %v776
        %v796 = vmul.f32 %v752, %v780
        %v797 = vmul.f32 %v753, %v776
        %v798 = vmul.f32 %v754, %v780
        %v799 = vmul.f32 %v755, %v776
        %v800 = vmul.f32 %v756, %v780
        %v801 = vmul.f32 %v757, %v776
        %v802 = vmul.f32 %v758, %v780
        %v803 = vmul.f32 %v759, %v776
        %v804 = vmul.f32 %v760, %v780
        %v805 = vmul.f32 %v761, %v776
        %v806 = vmul.f32 %v762, %v780
        %v807 = vmul.f32 %v763, %v776
        %v808 = vmul.f32 %v764, %v780
        %v809 = vmul.f32 %v765, %v776
        %v810 = vmul.f32 %v766, %v780
        %v811 = vmul.f32 %v767, %v776
        %v812 = vmul.f32 %v768, %v780
        %v813 = vmul.f32 %v769, %v776
        %v814 = vmul.f32 %v770, %v780
        %v815 = vld [vmem:[%s7] sm:$0x3]
        %v817 = vlaneseq
        %v818 = vshrl.u32 %v817, 7
        %v819 = vsub.s32 0, %v818
        %v820 = vrot.slane %v815, %v819
        %v821 = vlaneseq
        %v822 = vshrl.u32 %v821, 7
        %v823 = vsub.s32 1, %v822
        %v824 = vrot.slane %v815, %v823
        %v827 = vadd.f32 %v783, %v820
        %v828 = vadd.f32 %v784, %v824
        %v829 = vadd.f32 %v785, %v820
        %v830 = vadd.f32 %v786, %v824
        %v831 = vadd.f32 %v787, %v820
        %v832 = vadd.f32 %v788, %v824
        %v833 = vadd.f32 %v789, %v820
        %v834 = vadd.f32 %v790, %v824
        %v835 = vadd.f32 %v791, %v820
        %v836 = vadd.f32 %v792, %v824
        %v837 = vadd.f32 %v793, %v820
        %v838 = vadd.f32 %v794, %v824
        %v839 = vadd.f32 %v795, %v820
        %v840 = vadd.f32 %v796, %v824
        %v841 = vadd.f32 %v797, %v820
        %v842 = vadd.f32 %v798, %v824
        %v843 = vadd.f32 %v799, %v820
        %v844 = vadd.f32 %v800, %v824
        %v845 = vadd.f32 %v801, %v820
        %v846 = vadd.f32 %v802, %v824
        %v847 = vadd.f32 %v803, %v820
        %v848 = vadd.f32 %v804, %v824
        %v849 = vadd.f32 %v805, %v820
        %v850 = vadd.f32 %v806, %v824
        %v851 = vadd.f32 %v807, %v820
        %v852 = vadd.f32 %v808, %v824
        %v853 = vadd.f32 %v809, %v820
        %v854 = vadd.f32 %v810, %v824
        %v855 = vadd.f32 %v811, %v820
        %v856 = vadd.f32 %v812, %v824
        %v857 = vadd.f32 %v813, %v820
        %v858 = vadd.f32 %v814, %v824
        %859 = vst [vmem:[%s208] sm:$0xff] %v827
        %860 = vst [vmem:[%s208 + $0x8] sm:$0xff] %v828
        %861 = vst [vmem:[%s208 + $0x10] sm:$0xff] %v829
        %862 = vst [vmem:[%s208 + $0x18] sm:$0xff] %v830
        %863 = vst [vmem:[%s208 + $0x20] sm:$0xff] %v831
        %864 = vst [vmem:[%s208 + $0x28] sm:$0xff] %v832
        %865 = vst [vmem:[%s208 + $0x30] sm:$0xff] %v833
        %866 = vst [vmem:[%s208 + $0x38] sm:$0xff] %v834
        %867 = vst [vmem:[%s208 + $0x40] sm:$0xff] %v835
        %868 = vst [vmem:[%s208 + $0x48] sm:$0xff] %v836
        %869 = vst [vmem:[%s208 + $0x50] sm:$0xff] %v837
        %870 = vst [vmem:[%s208 + $0x58] sm:$0xff] %v838
        %871 = vst [vmem:[%s208 + $0x60] sm:$0xff] %v839
        %872 = vst [vmem:[%s208 + $0x68] sm:$0xff] %v840
        %873 = vst [vmem:[%s208 + $0x70] sm:$0xff] %v841
        %874 = vst [vmem:[%s208 + $0x78] sm:$0xff] %v842
        %875 = vst [vmem:[%s208 + $0x80] sm:$0xff] %v843
        %876 = vst [vmem:[%s208 + $0x88] sm:$0xff] %v844
        %877 = vst [vmem:[%s208 + $0x90] sm:$0xff] %v845
        %878 = vst [vmem:[%s208 + $0x98] sm:$0xff] %v846
        %879 = vst [vmem:[%s208 + $0xa0] sm:$0xff] %v847
        %880 = vst [vmem:[%s208 + $0xa8] sm:$0xff] %v848
        %881 = vst [vmem:[%s208 + $0xb0] sm:$0xff] %v849
        %882 = vst [vmem:[%s208 + $0xb8] sm:$0xff] %v850
        %883 = vst [vmem:[%s208 + $0xc0] sm:$0xff] %v851
        %884 = vst [vmem:[%s208 + $0xc8] sm:$0xff] %v852
        %885 = vst [vmem:[%s208 + $0xd0] sm:$0xff] %v853
        %886 = vst [vmem:[%s208 + $0xd8] sm:$0xff] %v854
        %887 = vst [vmem:[%s208 + $0xe0] sm:$0xff] %v855
        %888 = vst [vmem:[%s208 + $0xe8] sm:$0xff] %v856
        %889 = vst [vmem:[%s208 + $0xf0] sm:$0xff] %v857
        %890 = vst [vmem:[%s208 + $0xf8] sm:$0xff] %v858
        %s891 = smul.u32 16, %s30
        %p892 = scmp.lt.s32.totalorder %s891, 31
        %s893 = scalar_select %p892, %s891, 31
        %s894 = smul.addr %s893, 2
        %s895 = smul.addr %s894, 8
        %s896 = scalar_lea.vmem %s8, %s895
        // Predicated region
        $region63: #{_lambda_.13} parent=35 // pred_check
          %p897 = pneg %p132
        $region64: #{_lambda_.13} parent=35 // pred_check_branch
          %899 = sbr.rel (%p897) target = $region66
        $region65: #{_lambda_.13} parent=35 // pred_region
          %s900 = smul.u32 16, %s30
        $region66: #{_lambda_.13} parent=35 // pred_fallthru
          _
      $region36: #{_lambda_.13} parent=5 // pred_fallthru
        _
      %p901 = scmp.le.s32.totalorder 2, %s25
      // Predicated region
      $region67: #{_lambda_.13} parent=5 // pred_check
        %p902 = pneg %p901
      $region68: #{_lambda_.13} parent=5 // pred_check_branch
        %904 = sbr.rel (%p902) target = $region70
      $region69: #{_lambda_.13} parent=5 // pred_region
        %s905 = ssub.s32 %s25, 2
        // Predicated region
        $region71: #{_lambda_.13} parent=69 // pred_check
          %p906 = pneg %p138
        $region72: #{_lambda_.13} parent=69 // pred_check_branch
          %908 = sbr.rel (%p906) target = $region74
        $region73: #{_lambda_.13} parent=69 // pred_region
          %s909 = smul.u32 16, %s31
          %p910 = scmp.lt.s32.totalorder %s909, 31
          %s911 = scalar_select %p910, %s909, 31
          %s912 = smul.addr %s911, 2
          %s913 = smul.addr %s912, 8
          %s914 = scalar_lea.vmem %s8, %s913
        $region74: #{_lambda_.13} parent=69 // pred_fallthru
          _
      $region70: #{_lambda_.13} parent=5 // pred_fallthru
        _
    $region6: #{_lambda_.13} parent=1 // loop_footer
      %s29 = sadd.s32 1, %s25
    $region7: #{_lambda_.13} parent=1 // loop_footer_branch
      %24 = sbr.rel target = $region3
    $region8: #{_lambda_.13} parent=1 // loop_exit
      _
    %915 = vsyncpa [#allocation9], 1
    %s916 = scalar_lea.sflag [#allocation9], 1
    %917 = vsyncpa %s916, 1
  %918 = vsyncmov [#allocation4]
  %s919 = vpop.sfrf %918
  %p920 = scmp.eq.s32.totalorder %s919, 0
  %p921 = pneg %p920
  %923 = shalt.err (%p921)
  %s924 = scalar_lea.sflag [#allocation4], 1
  %925 = vsyncmov %s924
  %s926 = vpop.sfrf %925
  %p927 = scmp.eq.s32.totalorder %s926, 0
  %p928 = pneg %p927
  %930 = shalt.err (%p928)

// kernel: _lambda_.16
$region0: #{_lambda_.16}
  #allocation0 [shape = 'u32[]', space=smem, size = 0x4, offset = 0x4, fixed_abs, tag = 'smem constant byte address 0x4 - core index']
  #allocation1 [shape = 'u32[144,128]{1,0:T(1,128)}', space=vmem, size = 0x12000, scoped, tag = 'internal scratch']
  %s0 = inlined_call_operand.vmem [shape: f32[4,128,128], index: 0, kind: input, shape index: {}]
  %s1 = inlined_call_operand.vmem [shape: f32[4,128,128], index: 1, kind: input, shape index: {}]
  %s2 = inlined_call_operand.vmem [shape: f32[4,128,128], index: 2, kind: input, shape index: {}]
  %s3 = inlined_call_operand.vmem [shape: f32[4,128,128], index: 3, kind: output, shape index: {}]
  %s4 = sld [smem:[#allocation0]]
  $region45: #{_lambda_.16} parent=0
    _
  %s6 = ssub.s32 1, %s4
  %s7 = scalar_select 0, %s6, %s4
  loop: start=0, step=1, limit=6
  $region2: #{_lambda_.16} parent=0 // loop_pre_header
    _
  $region3: #{_lambda_.16} parent=0 // loop_header
    %s9 = sphi 0, %s13
    %p10 = scmp.ge.s32.totalorder %s9, 6
    %s19 = sphi 0, %s21
    %s22 = sphi 0, %s19
    %s23 = sphi 0, %s22
    %s39 = sphi 0, %s23
    %s45 = sphi 0, %s47
    %s48 = sphi 0, %s45
    %s49 = sphi 0, %s48
    %s65 = sphi 0, %s49
    %s71 = sphi 0, %s73
    %s74 = sphi 0, %s71
    %s75 = sphi 0, %s74
    %s91 = sphi 0, %s75
    %s97 = sphi 0, %s99
    %s100 = sphi 0, %s97
    %s101 = sphi 0, %s100
    %s117 = sphi 0, %s101
  $region4: #{_lambda_.16} parent=0 // loop_header_branch
    %12 = sbr.rel (%p10) target = $region8
  $region5: #{_lambda_.16} parent=0 // loop_body
    %s14 = ssub.s32 %s9, 1
    %s15 = ssub.s32 %s9, 2
    %s16 = sadd.s32 %s9, 1
    %s17 = ssub.s32 %s9, %s16
    %p18 = scmp.eq.s32.totalorder %s17, 0
    %s20 = sadd.s32 %s19, 1
    %s21 = scalar_select %p18, %s19, %s20
    %p24 = pneg %p18
    %p25 = scmp.eq.s32.totalorder %s9, 3
    %p26 = por %p24, %p25
    %p27 = scmp.ne.s32.totalorder %s19, %s22
    %p28 = scmp.eq.s32.totalorder %s9, 0
    %p29 = por %p27, %p28
    %p30 = scmp.ne.s32.totalorder %s19, %s22
    %p31 = scmp.eq.s32.totalorder %s14, 3
    %p32 = por %p30, %p31
    %p33 = scmp.ne.s32.totalorder %s22, %s23
    %p34 = scmp.eq.s32.totalorder %s14, 0
    %p35 = por %p33, %p34
    %p36 = scmp.ne.s32.totalorder %s22, %s23
    %p37 = scmp.eq.s32.totalorder %s15, 3
    %p38 = por %p36, %p37
    %p40 = scmp.ne.s32.totalorder %s23, %s39
    %p41 = scmp.eq.s32.totalorder %s15, 0
    %p42 = por %p40, %p41
    %s43 = ssub.s32 %s9, %s16
    %p44 = scmp.eq.s32.totalorder %s43, 0
    %s46 = sadd.s32 %s45, 1
    %s47 = scalar_select %p44, %s45, %s46
    %p50 = pneg %p44
    %p51 = scmp.eq.s32.totalorder %s9, 3
    %p52 = por %p50, %p51
    %p53 = scmp.ne.s32.totalorder %s45, %s48
    %p54 = scmp.eq.s32.totalorder %s9, 0
    %p55 = por %p53, %p54
    %p56 = scmp.ne.s32.totalorder %s45, %s48
    %p57 = scmp.eq.s32.totalorder %s14, 3
    %p58 = por %p56, %p57
    %p59 = scmp.ne.s32.totalorder %s48, %s49
    %p60 = scmp.eq.s32.totalorder %s14, 0
    %p61 = por %p59, %p60
    %p62 = scmp.ne.s32.totalorder %s48, %s49
    %p63 = scmp.eq.s32.totalorder %s15, 3
    %p64 = por %p62, %p63
    %p66 = scmp.ne.s32.totalorder %s49, %s65
    %p67 = scmp.eq.s32.totalorder %s15, 0
    %p68 = por %p66, %p67
    %s69 = ssub.s32 %s9, %s16
    %p70 = scmp.eq.s32.totalorder %s69, 0
    %s72 = sadd.s32 %s71, 1
    %s73 = scalar_select %p70, %s71, %s72
    %p76 = pneg %p70
    %p77 = scmp.eq.s32.totalorder %s9, 3
    %p78 = por %p76, %p77
    %p79 = scmp.ne.s32.totalorder %s71, %s74
    %p80 = scmp.eq.s32.totalorder %s9, 0
    %p81 = por %p79, %p80
    %p82 = scmp.ne.s32.totalorder %s71, %s74
    %p83 = scmp.eq.s32.totalorder %s14, 3
    %p84 = por %p82, %p83
    %p85 = scmp.ne.s32.totalorder %s74, %s75
    %p86 = scmp.eq.s32.totalorder %s14, 0
    %p87 = por %p85, %p86
    %p88 = scmp.ne.s32.totalorder %s74, %s75
    %p89 = scmp.eq.s32.totalorder %s15, 3
    %p90 = por %p88, %p89
    %p92 = scmp.ne.s32.totalorder %s75, %s91
    %p93 = scmp.eq.s32.totalorder %s15, 0
    %p94 = por %p92, %p93
    %s95 = ssub.s32 %s9, %s16
    %p96 = scmp.eq.s32.totalorder %s95, 0
    %s98 = sadd.s32 %s97, 1
    %s99 = scalar_select %p96, %s97, %s98
    %p102 = pneg %p96
    %p103 = scmp.eq.s32.totalorder %s9, 3
    %p104 = por %p102, %p103
    %p105 = scmp.ne.s32.totalorder %s97, %s100
    %p106 = scmp.eq.s32.totalorder %s9, 0
    %p107 = por %p105, %p106
    %p108 = scmp.ne.s32.totalorder %s97, %s100
    %p109 = scmp.eq.s32.totalorder %s14, 3
    %p110 = por %p108, %p109
    %p111 = scmp.ne.s32.totalorder %s100, %s101
    %p112 = scmp.eq.s32.totalorder %s14, 0
    %p113 = por %p111, %p112
    %p114 = scmp.ne.s32.totalorder %s100, %s101
    %p115 = scmp.eq.s32.totalorder %s15, 3
    %p116 = por %p114, %p115
    %p118 = scmp.ne.s32.totalorder %s101, %s117
    %p119 = scmp.eq.s32.totalorder %s15, 0
    %p120 = por %p118, %p119
    %p121 = scmp.le.s32.totalorder 1, %s9
    %p122 = scmp.lt.s32.totalorder %s9, 5
    %p123 = pnand %p121, %p122
    %p124 = pneg %p123
    // Predicated region
    $region9: #{_lambda_.16} parent=5 // pred_check
      _
    $region10: #{_lambda_.16} parent=5 // pred_check_branch
      %126 = sbr.rel (%p123) target = $region12
    $region11: #{_lambda_.16} parent=5 // pred_region
      %s127 = ssub.s32 %s9, 1
    $region12: #{_lambda_.16} parent=5 // pred_fallthru
      _
    %p128 = scmp.lt.s32.totalorder %s9, 4
    // Predicated region
    $region13: #{_lambda_.16} parent=5 // pred_check
      %p129 = pneg %p128
    $region14: #{_lambda_.16} parent=5 // pred_check_branch
      %131 = sbr.rel (%p129) target = $region16
    $region15: #{_lambda_.16} parent=5 // pred_region
      // Predicated region
      $region17: #{_lambda_.16} parent=15 // pred_check
        %p132 = pneg %p29
      $region18: #{_lambda_.16} parent=15 // pred_check_branch
        %134 = sbr.rel (%p132) target = $region20
      $region19: #{_lambda_.16} parent=15 // pred_region
        %p135 = scmp.lt.s32.totalorder %s9, 3
        %s136 = scalar_select %p135, %s9, 3
        %s137 = smul.addr %s136, 16
        %s138 = smul.addr %s137, 8
        %s139 = scalar_lea.vmem %s0, %s138
      $region20: #{_lambda_.16} parent=15 // pred_fallthru
        _
      // Predicated region
      $region21: #{_lambda_.16} parent=15 // pred_check
        %p140 = pneg %p55
      $region22: #{_lambda_.16} parent=15 // pred_check_branch
        %142 = sbr.rel (%p140) target = $region24
      $region23: #{_lambda_.16} parent=15 // pred_region
        %p143 = scmp.lt.s32.totalorder %s9, 3
        %s144 = scalar_select %p143, %s9, 3
        %s145 = smul.addr %s144, 16
        %s146 = smul.addr %s145, 8
        %s147 = scalar_lea.vmem %s1, %s146
      $region24: #{_lambda_.16} parent=15 // pred_fallthru
        _
      // Predicated region
      $region25: #{_lambda_.16} parent=15 // pred_check
        %p148 = pneg %p81
      $region26: #{_lambda_.16} parent=15 // pred_check_branch
        %150 = sbr.rel (%p148) target = $region28
      $region27: #{_lambda_.16} parent=15 // pred_region
        %p151 = scmp.lt.s32.totalorder %s9, 3
        %s152 = scalar_select %p151, %s9, 3
        %s153 = smul.addr %s152, 16
        %s154 = smul.addr %s153, 8
        %s155 = scalar_lea.vmem %s2, %s154
      $region28: #{_lambda_.16} parent=15 // pred_fallthru
        _
    $region16: #{_lambda_.16} parent=5 // pred_fallthru
      _
    %p156 = scmp.le.s32.totalorder 1, %s9
    %p157 = scmp.lt.s32.totalorder %s9, 5
    %p158 = pnand %p156, %p157
    %p159 = pneg %p158
    // Predicated region
    $region29: #{_lambda_.16} parent=5 // pred_check
      _
    $region30: #{_lambda_.16} parent=5 // pred_check_branch
      %161 = sbr.rel (%p158) target = $region32
    $region31: #{_lambda_.16} parent=5 // pred_region
      %s162 = ssub.s32 %s9, 1
      %p163 = scmp.lt.s32.totalorder %s14, 3
      %s164 = scalar_select %p163, %s14, 3
      %s165 = smul.addr %s164, 16
      %s166 = smul.addr %s165, 8
      %s167 = scalar_lea.vmem %s0, %s166
      %p168 = pneg %p35
      %p169 = pneg %p32
      %p170 = scmp.lt.s32.totalorder %s14, 3
      %s171 = scalar_select %p170, %s14, 3
      %s172 = smul.addr %s171, 16
      %s173 = smul.addr %s172, 8
      %s174 = scalar_lea.vmem %s1, %s173
      %p175 = pneg %p61
      %p176 = pneg %p58
      %p177 = scmp.lt.s32.totalorder %s14, 3
      %s178 = scalar_select %p177, %s14, 3
      %s179 = smul.addr %s178, 16
      %s180 = smul.addr %s179, 8
      %s181 = scalar_lea.vmem %s2, %s180
      %p182 = pneg %p87
      %p183 = pneg %p84
      %p184 = pneg %p113
      %p185 = pneg %p110
      %p186 = scmp.lt.s32.totalorder %s14, 3
      %s187 = scalar_select %p186, %s14, 3
      %s188 = smul.addr %s187, 16
      %s189 = smul.addr %s188, 8
      %s190 = scalar_lea.vmem %s3, %s189
      %p191 = scmp.lt.s32.totalorder %s14, 3
      %s192 = scalar_select %p191, %s14, 3
      %s193 = smul.addr %s192, 16
      %s194 = smul.addr %s193, 8
      %s195 = scalar_lea.vmem %s0, %s194
      %p196 = scmp.lt.s32.totalorder %s14, 3
      %s197 = scalar_select %p196, %s14, 3
      %s198 = smul.addr %s197, 16
      %s199 = smul.addr %s198, 8
      %s200 = scalar_lea.vmem %s1, %s199
      %p201 = scmp.lt.s32.totalorder %s14, 3
      %s202 = scalar_select %p201, %s14, 3
      %s203 = smul.addr %s202, 16
      %s204 = smul.addr %s203, 8
      %s205 = scalar_lea.vmem %s2, %s204
      %p206 = scmp.lt.s32.totalorder %s14, 3
      %s207 = scalar_select %p206, %s14, 3
      %s208 = smul.addr %s207, 16
      %s209 = smul.addr %s208, 8
      %s210 = scalar_lea.vmem %s3, %s209
      %v211 = vld [vmem:[%s195] sm:$0xff]
      %v212 = vld [vmem:[%s195 + $0x8] sm:$0xff]
      %v213 = vld [vmem:[%s195 + $0x10] sm:$0xff]
      %v214 = vld [vmem:[%s195 + $0x18] sm:$0xff]
      %v215 = vld [vmem:[%s195 + $0x20] sm:$0xff]
      %v216 = vld [vmem:[%s195 + $0x28] sm:$0xff]
      %v217 = vld [vmem:[%s195 + $0x30] sm:$0xff]
      %v218 = vld [vmem:[%s195 + $0x38] sm:$0xff]
      %v219 = vld [vmem:[%s195 + $0x40] sm:$0xff]
      %v220 = vld [vmem:[%s195 + $0x48] sm:$0xff]
      %v221 = vld [vmem:[%s195 + $0x50] sm:$0xff]
      %v222 = vld [vmem:[%s195 + $0x58] sm:$0xff]
      %v223 = vld [vmem:[%s195 + $0x60] sm:$0xff]
      %v224 = vld [vmem:[%s195 + $0x68] sm:$0xff]
      %v225 = vld [vmem:[%s195 + $0x70] sm:$0xff]
      %v226 = vld [vmem:[%s195 + $0x78] sm:$0xff]
      %v227 = vld [vmem:[%s200] sm:$0xff]
      %v228 = vld [vmem:[%s200 + $0x8] sm:$0xff]
      %v229 = vld [vmem:[%s200 + $0x10] sm:$0xff]
      %v230 = vld [vmem:[%s200 + $0x18] sm:$0xff]
      %v231 = vld [vmem:[%s200 + $0x20] sm:$0xff]
      %v232 = vld [vmem:[%s200 + $0x28] sm:$0xff]
      %v233 = vld [vmem:[%s200 + $0x30] sm:$0xff]
      %v234 = vld [vmem:[%s200 + $0x38] sm:$0xff]
      %v235 = vld [vmem:[%s200 + $0x40] sm:$0xff]
      %v236 = vld [vmem:[%s200 + $0x48] sm:$0xff]
      %v237 = vld [vmem:[%s200 + $0x50] sm:$0xff]
      %v238 = vld [vmem:[%s200 + $0x58] sm:$0xff]
      %v239 = vld [vmem:[%s200 + $0x60] sm:$0xff]
      %v240 = vld [vmem:[%s200 + $0x68] sm:$0xff]
      %v241 = vld [vmem:[%s200 + $0x70] sm:$0xff]
      %v242 = vld [vmem:[%s200 + $0x78] sm:$0xff]
      %v243 = vld [vmem:[%s205] sm:$0xff]
      %v244 = vld [vmem:[%s205 + $0x8] sm:$0xff]
      %v245 = vld [vmem:[%s205 + $0x10] sm:$0xff]
      %v246 = vld [vmem:[%s205 + $0x18] sm:$0xff]
      %v247 = vld [vmem:[%s205 + $0x20] sm:$0xff]
      %v248 = vld [vmem:[%s205 + $0x28] sm:$0xff]
      %v249 = vld [vmem:[%s205 + $0x30] sm:$0xff]
      %v250 = vld [vmem:[%s205 + $0x38] sm:$0xff]
      %v251 = vld [vmem:[%s205 + $0x40] sm:$0xff]
      %v252 = vld [vmem:[%s205 + $0x48] sm:$0xff]
      %v253 = vld [vmem:[%s205 + $0x50] sm:$0xff]
      %v254 = vld [vmem:[%s205 + $0x58] sm:$0xff]
      %v255 = vld [vmem:[%s205 + $0x60] sm:$0xff]
      %v256 = vld [vmem:[%s205 + $0x68] sm:$0xff]
      %v257 = vld [vmem:[%s205 + $0x70] sm:$0xff]
      %v258 = vld [vmem:[%s205 + $0x78] sm:$0xff]
      %259 = vmatprep.subr.mxu0 0.0
      %260 = vmatpush1.xpose.msra.mxu0 %v227
      %261 = vmatprep.subr.mxu0 0.0
      %262 = vmatpush1.xpose.msra.mxu0 %v228
      %263 = vmatprep.subr.mxu0 0.0
      %264 = vmatpush1.xpose.msra.mxu0 %v229
      %265 = vmatprep.subr.mxu0 0.0
      %266 = vmatpush1.xpose.msra.mxu0 %v230
      %267 = vmatprep.subr.mxu0 0.0
      %268 = vmatpush1.xpose.msra.mxu0 %v231
      %269 = vmatprep.subr.mxu0 0.0
      %270 = vmatpush1.xpose.msra.mxu0 %v232
      %271 = vmatprep.subr.mxu0 0.0
      %272 = vmatpush1.xpose.msra.mxu0 %v233
      %273 = vmatprep.subr.mxu0 0.0
      %274 = vmatpush1.xpose.msra.mxu0 %v234
      %275 = vmatprep.subr.mxu0 0.0
      %276 = vmatpush1.xpose.msra.mxu0 %v235
      %277 = vmatprep.subr.mxu0 0.0
      %278 = vmatpush1.xpose.msra.mxu0 %v236
      %279 = vmatprep.subr.mxu0 0.0
      %280 = vmatpush1.xpose.msra.mxu0 %v237
      %281 = vmatprep.subr.mxu0 0.0
      %282 = vmatpush1.xpose.msra.mxu0 %v238
      %283 = vmatprep.subr.mxu0 0.0
      %284 = vmatpush1.xpose.msra.mxu0 %v239
      %285 = vmatprep.subr.mxu0 0.0
      %286 = vmatpush1.xpose.msra.mxu0 %v240
      %287 = vmatprep.subr.mxu0 0.0
      %288 = vmatpush1.xpose.msra.mxu0 %v241
      %289 = vmatprep.subr.mxu0 0.0
      %290 = vmatpush1.xpose.msra.mxu0 %v242
      %291 = vmatprep.subr.mxu0 0.0
      %292 = vmatpush1.xpose.msra.mxu0 0.0
      %293 = vmatprep.subr.mxu0 0.0
      %294 = vmatpush1.xpose.msra.mxu0 0.0
      %295 = vmatprep.subr.mxu0 0.0
      %296 = vmatpush1.xpose.msra.mxu0 0.0
      %297 = vmatprep.subr.mxu0 0.0
      %298 = vmatpush1.xpose.msra.mxu0 0.0
      %299 = vmatprep.subr.mxu0 0.0
      %300 = vmatpush1.xpose.msra.mxu0 0.0
      %301 = vmatprep.subr.mxu0 0.0
      %302 = vmatpush1.xpose.msra.mxu0 0.0
      %303 = vmatprep.subr.mxu0 0.0
      %304 = vmatpush1.xpose.msra.mxu0 0.0
      %305 = vmatprep.subr.mxu0 0.0
      %306 = vmatpush1.xpose.msra.mxu0 0.0
      %307 = vmatprep.subr.mxu0 0.0
      %308 = vmatpush1.xpose.msra.mxu0 0.0
      %309 = vmatprep.subr.mxu0 0.0
      %310 = vmatpush1.xpose.msra.mxu0 0.0
      %311 = vmatprep.subr.mxu0 0.0
      %312 = vmatpush1.xpose.msra.mxu0 0.0
      %313 = vmatprep.subr.mxu0 0.0
      %314 = vmatpush1.xpose.msra.mxu0 0.0
      %315 = vmatprep.subr.mxu0 0.0
      %316 = vmatpush1.xpose.msra.mxu0 0.0
      %317 = vmatprep.subr.mxu0 0.0
      %318 = vmatpush1.xpose.msra.mxu0 0.0
      %319 = vmatprep.subr.mxu0 0.0
      %320 = vmatpush1.xpose.msra.mxu0 0.0
      %321 = vmatprep.subr.mxu0 0.0
      %322 = vmatpush1.xpose.msra.mxu0 0.0
      %323 = vmatprep.mubr.f32.mxu0 0.0
      %324 = vmatmul.mubr.f32.gmra.mrb[0].mxu0 %v211
      %v325 = vpop.f32.mrb[0].mxu0
      %v326 = vadd.f32 0.0, %v325
      %v327 = vpop.f32.mrb[0].mxu0
      %328 = vmatprep.mubr.f32.mxu0 0.0
      %329 = vmatmul.mubr.f32.gmra.mrb[0].mxu0 %v212
      %v330 = vpop.f32.mrb[0].mxu0
      %v331 = vadd.f32 0.0, %v330
      %v332 = vpop.f32.mrb[0].mxu0
      %333 = vmatprep.mubr.f32.mxu0 0.0
      %334 = vmatmul.mubr.f32.gmra.mrb[0].mxu0 %v213
      %v335 = vpop.f32.mrb[0].mxu0
      %v336 = vadd.f32 0.0, %v335
      %v337 = vpop.f32.mrb[0].mxu0
      %338 = vmatprep.mubr.f32.mxu0 0.0
      %339 = vmatmul.mubr.f32.gmra.mrb[0].mxu0 %v214
      %v340 = vpop.f32.mrb[0].mxu0
      %v341 = vadd.f32 0.0, %v340
      %v342 = vpop.f32.mrb[0].mxu0
      %343 = vmatprep.mubr.f32.mxu0 0.0
      %344 = vmatmul.mubr.f32.gmra.mrb[0].mxu0 %v215
      %v345 = vpop.f32.mrb[0].mxu0
      %v346 = vadd.f32 0.0, %v345
      %v347 = vpop.f32.mrb[0].mxu0
      %348 = vmatprep.mubr.f32.mxu0 0.0
      %349 = vmatmul.mubr.f32.gmra.mrb[0].mxu0 %v216
      %v350 = vpop.f32.mrb[0].mxu0
      %v351 = vadd.f32 0.0, %v350
      %v352 = vpop.f32.mrb[0].mxu0
      %353 = vmatprep.mubr.f32.mxu0 0.0
      %354 = vmatmul.mubr.f32.gmra.mrb[0].mxu0 %v217
      %v355 = vpop.f32.mrb[0].mxu0
      %v356 = vadd.f32 0.0, %v355
      %v357 = vpop.f32.mrb[0].mxu0
      %358 = vmatprep.mubr.f32.mxu0 0.0
      %359 = vmatmul.mubr.f32.gmra.mrb[0].mxu0 %v218
      %v360 = vpop.f32.mrb[0].mxu0
      %v361 = vadd.f32 0.0, %v360
      %v362 = vpop.f32.mrb[0].mxu0
      %363 = vmatprep.mubr.f32.mxu0 0.0
      %364 = vmatmul.mubr.f32.gmra.mrb[0].mxu0 %v219
      %v365 = vpop.f32.mrb[0].mxu0
      %v366 = vadd.f32 0.0, %v365
      %v367 = vpop.f32.mrb[0].mxu0
      %368 = vmatprep.mubr.f32.mxu0 0.0
      %369 = vmatmul.mubr.f32.gmra.mrb[0].mxu0 %v220
      %v370 = vpop.f32.mrb[0].mxu0
      %v371 = vadd.f32 0.0, %v370
      %v372 = vpop.f32.mrb[0].mxu0
      %373 = vmatprep.mubr.f32.mxu0 0.0
      %374 = vmatmul.mubr.f32.gmra.mrb[0].mxu0 %v221
      %v375 = vpop.f32.mrb[0].mxu0
      %v376 = vadd.f32 0.0, %v375
      %v377 = vpop.f32.mrb[0].mxu0
      %378 = vmatprep.mubr.f32.mxu0 0.0
      %379 = vmatmul.mubr.f32.gmra.mrb[0].mxu0 %v222
      %v380 = vpop.f32.mrb[0].mxu0
      %v381 = vadd.f32 0.0, %v380
      %v382 = vpop.f32.mrb[0].mxu0
      %383 = vmatprep.mubr.f32.mxu0 0.0
      %384 = vmatmul.mubr.f32.gmra.mrb[0].mxu0 %v223
      %v385 = vpop.f32.mrb[0].mxu0
      %v386 = vadd.f32 0.0, %v385
      %v387 = vpop.f32.mrb[0].mxu0
      %388 = vmatprep.mubr.f32.mxu0 0.0
      %389 = vmatmul.mubr.f32.gmra.mrb[0].mxu0 %v224
      %v390 = vpop.f32.mrb[0].mxu0
      %v391 = vadd.f32 0.0, %v390
      %v392 = vpop.f32.mrb[0].mxu0
      %393 = vmatprep.mubr.f32.mxu0 0.0
      %394 = vmatmul.mubr.f32.gmra.mrb[0].mxu0 %v225
      %v395 = vpop.f32.mrb[0].mxu0
      %v396 = vadd.f32 0.0, %v395
      %v397 = vpop.f32.mrb[0].mxu0
      %398 = vmatprep.mubr.f32.mxu0 0.0
      %399 = vmatmul.mubr.f32.gmra.mrb[0].mxu0 %v226
      %v400 = vpop.f32.mrb[0].mxu0
      %v401 = vadd.f32 0.0, %v400
      %v402 = vpop.f32.mrb[0].mxu0
      %403 = vdwg.mxu0
      %v404 = vmul.f32 %v326, 0.088388346
      %v405 = vmul.f32 %v331, 0.088388346
      %v406 = vmul.f32 %v336, 0.088388346
      %v407 = vmul.f32 %v341, 0.088388346
      %v408 = vmul.f32 %v346, 0.088388346
      %v409 = vmul.f32 %v351, 0.088388346
      %v410 = vmul.f32 %v356, 0.088388346
      %v411 = vmul.f32 %v361, 0.088388346
      %v412 = vmul.f32 %v366, 0.088388346
      %v413 = vmul.f32 %v371, 0.088388346
      %v414 = vmul.f32 %v376, 0.088388346
      %v415 = vmul.f32 %v381, 0.088388346
      %v416 = vmul.f32 %v386, 0.088388346
      %v417 = vmul.f32 %v391, 0.088388346
      %v418 = vmul.f32 %v396, 0.088388346
      %v419 = vmul.f32 %v401, 0.088388346
      %420 = vmax.xlane.f32.xlu0 %v404
      %v421 = vpop.xlane.xlu0 %420
      %422 = vmax.xlane.f32.xlu0 %v405
      %v423 = vpop.xlane.xlu0 %422
      %424 = vmax.xlane.f32.xlu0 %v406
      %v425 = vpop.xlane.xlu0 %424
      %426 = vmax.xlane.f32.xlu0 %v407
      %v427 = vpop.xlane.xlu0 %426
      %428 = vmax.xlane.f32.xlu0 %v408
      %v429 = vpop.xlane.xlu0 %428
      %430 = vmax.xlane.f32.xlu0 %v409
      %v431 = vpop.xlane.xlu0 %430
      %432 = vmax.xlane.f32.xlu0 %v410
      %v433 = vpop.xlane.xlu0 %432
      %434 = vmax.xlane.f32.xlu0 %v411
      %v435 = vpop.xlane.xlu0 %434
      %436 = vmax.xlane.f32.xlu0 %v412
      %v437 = vpop.xlane.xlu0 %436
      %438 = vmax.xlane.f32.xlu0 %v413
      %v439 = vpop.xlane.xlu0 %438
      %440 = vmax.xlane.f32.xlu0 %v414
      %v441 = vpop.xlane.xlu0 %440
      %442 = vmax.xlane.f32.xlu0 %v415
      %v443 = vpop.xlane.xlu0 %442
      %444 = vmax.xlane.f32.xlu0 %v416
      %v445 = vpop.xlane.xlu0 %444
      %446 = vmax.xlane.f32.xlu0 %v417
      %v447 = vpop.xlane.xlu0 %446
      %448 = vmax.xlane.f32.xlu0 %v418
      %v449 = vpop.xlane.xlu0 %448
      %450 = vmax.xlane.f32.xlu0 %v419
      %v451 = vpop.xlane.xlu0 %450
      %v452 = vsub.f32 %v404, %v421
      %v453 = vsub.f32 %v405, %v423
      %v454 = vsub.f32 %v406, %v425
      %v455 = vsub.f32 %v407, %v427
      %v456 = vsub.f32 %v408, %v429
      %v457 = vsub.f32 %v409, %v431
      %v458 = vsub.f32 %v410, %v433
      %v459 = vsub.f32 %v411, %v435
      %v460 = vsub.f32 %v412, %v437
      %v461 = vsub.f32 %v413, %v439
      %v462 = vsub.f32 %v414, %v441
      %v463 = vsub.f32 %v415, %v443
      %v464 = vsub.f32 %v416, %v445
      %v465 = vsub.f32 %v417, %v447
      %v466 = vsub.f32 %v418, %v449
      %v467 = vsub.f32 %v419, %v451
      %v468 = vmul.f32 %v452, 1.442695
      %v469 = vpow.pop %v468
      %v470 = vmul.f32 %v453, 1.442695
      %v471 = vpow.pop %v470
      %v472 = vmul.f32 %v454, 1.442695
      %v473 = vpow.pop %v472
      %v474 = vmul.f32 %v455, 1.442695
      %v475 = vpow.pop %v474
      %v476 = vmul.f32 %v456, 1.442695
      %v477 = vpow.pop %v476
      %v478 = vmul.f32 %v457, 1.442695
      %v479 = vpow.pop %v478
      %v480 = vmul.f32 %v458, 1.442695
      %v481 = vpow.pop %v480
      %v482 = vmul.f32 %v459, 1.442695
      %v483 = vpow.pop %v482
      %v484 = vmul.f32 %v460, 1.442695
      %v485 = vpow.pop %v484
      %v486 = vmul.f32 %v461, 1.442695
      %v487 = vpow.pop %v486
      %v488 = vmul.f32 %v462, 1.442695
      %v489 = vpow.pop %v488
      %v490 = vmul.f32 %v463, 1.442695
      %v491 = vpow.pop %v490
      %v492 = vmul.f32 %v464, 1.442695
      %v493 = vpow.pop %v492
      %v494 = vmul.f32 %v465, 1.442695
      %v495 = vpow.pop %v494
      %v496 = vmul.f32 %v466, 1.442695
      %v497 = vpow.pop %v496
      %v498 = vmul.f32 %v467, 1.442695
      %v499 = vpow.pop %v498
      %500 = vadd.xlane.f32.xlu0 %v469
      %v501 = vpop.xlane.xlu0 %500
      %502 = vadd.xlane.f32.xlu0 %v471
      %v503 = vpop.xlane.xlu0 %502
      %504 = vadd.xlane.f32.xlu0 %v473
      %v505 = vpop.xlane.xlu0 %504
      %506 = vadd.xlane.f32.xlu0 %v475
      %v507 = vpop.xlane.xlu0 %506
      %508 = vadd.xlane.f32.xlu0 %v477
      %v509 = vpop.xlane.xlu0 %508
      %510 = vadd.xlane.f32.xlu0 %v479
      %v511 = vpop.xlane.xlu0 %510
      %512 = vadd.xlane.f32.xlu0 %v481
      %v513 = vpop.xlane.xlu0 %512
      %514 = vadd.xlane.f32.xlu0 %v483
      %v515 = vpop.xlane.xlu0 %514
      %516 = vadd.xlane.f32.xlu0 %v485
      %v517 = vpop.xlane.xlu0 %516
      %518 = vadd.xlane.f32.xlu0 %v487
      %v519 = vpop.xlane.xlu0 %518
      %520 = vadd.xlane.f32.xlu0 %v489
      %v521 = vpop.xlane.xlu0 %520
      %522 = vadd.xlane.f32.xlu0 %v491
      %v523 = vpop.xlane.xlu0 %522
      %524 = vadd.xlane.f32.xlu0 %v493
      %v525 = vpop.xlane.xlu0 %524
      %526 = vadd.xlane.f32.xlu0 %v495
      %v527 = vpop.xlane.xlu0 %526
      %528 = vadd.xlane.f32.xlu0 %v497
      %v529 = vpop.xlane.xlu0 %528
      %530 = vadd.xlane.f32.xlu0 %v499
      %v531 = vpop.xlane.xlu0 %530
      %v532 = vrcp.pop %v501
      %v533 = vmul.f32 %v469, %v532
      %v534 = vrcp.pop %v503
      %v535 = vmul.f32 %v471, %v534
      %v536 = vrcp.pop %v505
      %v537 = vmul.f32 %v473, %v536
      %v538 = vrcp.pop %v507
      %v539 = vmul.f32 %v475, %v538
      %v540 = vrcp.pop %v509
      %v541 = vmul.f32 %v477, %v540
      %v542 = vrcp.pop %v511
      %v543 = vmul.f32 %v479, %v542
      %v544 = vrcp.pop %v513
      %v545 = vmul.f32 %v481, %v544
      %v546 = vrcp.pop %v515
      %v547 = vmul.f32 %v483, %v546
      %v548 = vrcp.pop %v517
      %v549 = vmul.f32 %v485, %v548
      %v550 = vrcp.pop %v519
      %v551 = vmul.f32 %v487, %v550
      %v552 = vrcp.pop %v521
      %v553 = vmul.f32 %v489, %v552
      %v554 = vrcp.pop %v523
      %v555 = vmul.f32 %v491, %v554
      %v556 = vrcp.pop %v525
      %v557 = vmul.f32 %v493, %v556
      %v558 = vrcp.pop %v527
      %v559 = vmul.f32 %v495, %v558
      %v560 = vrcp.pop %v529
      %v561 = vmul.f32 %v497, %v560
      %v562 = vrcp.pop %v531
      %v563 = vmul.f32 %v499, %v562
      %564 = vmatprep.subr.mxu0 0.0
      %565 = vmatpush1.msra.mxu0 %v243
      %566 = vmatprep.subr.mxu0 0.0
      %567 = vmatpush1.msra.mxu0 %v244
      %568 = vmatprep.subr.mxu0 0.0
      %569 = vmatpush1.msra.mxu0 %v245
      %570 = vmatprep.subr.mxu0 0.0
      %571 = vmatpush1.msra.mxu0 %v246
      %572 = vmatprep.subr.mxu0 0.0
      %573 = vmatpush1.msra.mxu0 %v247
      %574 = vmatprep.subr.mxu0 0.0
      %575 = vmatpush1.msra.mxu0 %v248
      %576 = vmatprep.subr.mxu0 0.0
      %577 = vmatpush1.msra.mxu0 %v249
      %578 = vmatprep.subr.mxu0 0.0
      %579 = vmatpush1.msra.mxu0 %v250
      %580 = vmatprep.subr.mxu0 0.0
      %581 = vmatpush1.msra.mxu0 %v251
      %582 = vmatprep.subr.mxu0 0.0
      %583 = vmatpush1.msra.mxu0 %v252
      %584 = vmatprep.subr.mxu0 0.0
      %585 = vmatpush1.msra.mxu0 %v253
      %586 = vmatprep.subr.mxu0 0.0
      %587 = vmatpush1.msra.mxu0 %v254
      %588 = vmatprep.subr.mxu0 0.0
      %589 = vmatpush1.msra.mxu0 %v255
      %590 = vmatprep.subr.mxu0 0.0
      %591 = vmatpush1.msra.mxu0 %v256
      %592 = vmatprep.subr.mxu0 0.0
      %593 = vmatpush1.msra.mxu0 %v257
      %594 = vmatprep.subr.mxu0 0.0
      %595 = vmatpush1.msra.mxu0 %v258
      %596 = vmatprep.subr.mxu0 0.0
      %597 = vmatpush1.msra.mxu0 0.0
      %598 = vmatprep.subr.mxu0 0.0
      %599 = vmatpush1.msra.mxu0 0.0
      %600 = vmatprep.subr.mxu0 0.0
      %601 = vmatpush1.msra.mxu0 0.0
      %602 = vmatprep.subr.mxu0 0.0
      %603 = vmatpush1.msra.mxu0 0.0
      %604 = vmatprep.subr.mxu0 0.0
      %605 = vmatpush1.msra.mxu0 0.0
      %606 = vmatprep.subr.mxu0 0.0
      %607 = vmatpush1.msra.mxu0 0.0
      %608 = vmatprep.subr.mxu0 0.0
      %609 = vmatpush1.msra.mxu0 0.0
      %610 = vmatprep.subr.mxu0 0.0
      %611 = vmatpush1.msra.mxu0 0.0
      %612 = vmatprep.subr.mxu0 0.0
      %613 = vmatpush1.msra.mxu0 0.0
      %614 = vmatprep.subr.mxu0 0.0
      %615 = vmatpush1.msra.mxu0 0.0
      %616 = vmatprep.subr.mxu0 0.0
      %617 = vmatpush1.msra.mxu0 0.0
      %618 = vmatprep.subr.mxu0 0.0
      %619 = vmatpush1.msra.mxu0 0.0
      %620 = vmatprep.subr.mxu0 0.0
      %621 = vmatpush1.msra.mxu0 0.0
      %622 = vmatprep.subr.mxu0 0.0
      %623 = vmatpush1.msra.mxu0 0.0
      %624 = vmatprep.subr.mxu0 0.0
      %625 = vmatpush1.msra.mxu0 0.0
      %626 = vmatprep.subr.mxu0 0.0
      %627 = vmatpush1.msra.mxu0 0.0
      %628 = vmatprep.mubr.f32.mxu0 0.0
      %629 = vmatmul.mubr.f32.gmra.mrb[0].mxu0 %v533
      %v630 = vpop.f32.mrb[0].mxu0
      %v631 = vadd.f32 0.0, %v630
      %v632 = vpop.f32.mrb[0].mxu0
      %633 = vmatprep.mubr.f32.mxu0 0.0
      %634 = vmatmul.mubr.f32.gmra.mrb[0].mxu0 %v535
      %v635 = vpop.f32.mrb[0].mxu0
      %v636 = vadd.f32 0.0, %v635
      %v637 = vpop.f32.mrb[0].mxu0
      %638 = vmatprep.mubr.f32.mxu0 0.0
      %639 = vmatmul.mubr.f32.gmra.mrb[0].mxu0 %v537
      %v640 = vpop.f32.mrb[0].mxu0
      %v641 = vadd.f32 0.0, %v640
      %v642 = vpop.f32.mrb[0].mxu0
      %643 = vmatprep.mubr.f32.mxu0 0.0
      %644 = vmatmul.mubr.f32.gmra.mrb[0].mxu0 %v539
      %v645 = vpop.f32.mrb[0].mxu0
      %v646 = vadd.f32 0.0, %v645
      %v647 = vpop.f32.mrb[0].mxu0
      %648 = vmatprep.mubr.f32.mxu0 0.0
      %649 = vmatmul.mubr.f32.gmra.mrb[0].mxu0 %v541
      %v650 = vpop.f32.mrb[0].mxu0
      %v651 = vadd.f32 0.0, %v650
      %v652 = vpop.f32.mrb[0].mxu0
      %653 = vmatprep.mubr.f32.mxu0 0.0
      %654 = vmatmul.mubr.f32.gmra.mrb[0].mxu0 %v543
      %v655 = vpop.f32.mrb[0].mxu0
      %v656 = vadd.f32 0.0, %v655
      %v657 = vpop.f32.mrb[0].mxu0
      %658 = vmatprep.mubr.f32.mxu0 0.0
      %659 = vmatmul.mubr.f32.gmra.mrb[0].mxu0 %v545
      %v660 = vpop.f32.mrb[0].mxu0
      %v661 = vadd.f32 0.0, %v660
      %v662 = vpop.f32.mrb[0].mxu0
      %663 = vmatprep.mubr.f32.mxu0 0.0
      %664 = vmatmul.mubr.f32.gmra.mrb[0].mxu0 %v547
      %v665 = vpop.f32.mrb[0].mxu0
      %v666 = vadd.f32 0.0, %v665
      %v667 = vpop.f32.mrb[0].mxu0
      %668 = vmatprep.mubr.f32.mxu0 0.0
      %669 = vmatmul.mubr.f32.gmra.mrb[0].mxu0 %v549
      %v670 = vpop.f32.mrb[0].mxu0
      %v671 = vadd.f32 0.0, %v670
      %v672 = vpop.f32.mrb[0].mxu0
      %673 = vmatprep.mubr.f32.mxu0 0.0
      %674 = vmatmul.mubr.f32.gmra.mrb[0].mxu0 %v551
      %v675 = vpop.f32.mrb[0].mxu0
      %v676 = vadd.f32 0.0, %v675
      %v677 = vpop.f32.mrb[0].mxu0
      %678 = vmatprep.mubr.f32.mxu0 0.0
      %679 = vmatmul.mubr.f32.gmra.mrb[0].mxu0 %v553
      %v680 = vpop.f32.mrb[0].mxu0
      %v681 = vadd.f32 0.0, %v680
      %v682 = vpop.f32.mrb[0].mxu0
      %683 = vmatprep.mubr.f32.mxu0 0.0
      %684 = vmatmul.mubr.f32.gmra.mrb[0].mxu0 %v555
      %v685 = vpop.f32.mrb[0].mxu0
      %v686 = vadd.f32 0.0, %v685
      %v687 = vpop.f32.mrb[0].mxu0
      %688 = vmatprep.mubr.f32.mxu0 0.0
      %689 = vmatmul.mubr.f32.gmra.mrb[0].mxu0 %v557
      %v690 = vpop.f32.mrb[0].mxu0
      %v691 = vadd.f32 0.0, %v690
      %v692 = vpop.f32.mrb[0].mxu0
      %693 = vmatprep.mubr.f32.mxu0 0.0
      %694 = vmatmul.mubr.f32.gmra.mrb[0].mxu0 %v559
      %v695 = vpop.f32.mrb[0].mxu0
      %v696 = vadd.f32 0.0, %v695
      %v697 = vpop.f32.mrb[0].mxu0
      %698 = vmatprep.mubr.f32.mxu0 0.0
      %699 = vmatmul.mubr.f32.gmra.mrb[0].mxu0 %v561
      %v700 = vpop.f32.mrb[0].mxu0
      %v701 = vadd.f32 0.0, %v700
      %v702 = vpop.f32.mrb[0].mxu0
      %703 = vmatprep.mubr.f32.mxu0 0.0
      %704 = vmatmul.mubr.f32.gmra.mrb[0].mxu0 %v563
      %v705 = vpop.f32.mrb[0].mxu0
      %v706 = vadd.f32 0.0, %v705
      %v707 = vpop.f32.mrb[0].mxu0
      %708 = vdwg.mxu0
      %709 = vst [vmem:[%s210] sm:$0xff] %v631
      %710 = vst [vmem:[%s210 + $0x8] sm:$0xff] %v636
      %711 = vst [vmem:[%s210 + $0x10] sm:$0xff] %v641
      %712 = vst [vmem:[%s210 + $0x18] sm:$0xff] %v646
      %713 = vst [vmem:[%s210 + $0x20] sm:$0xff] %v651
      %714 = vst [vmem:[%s210 + $0x28] sm:$0xff] %v656
      %715 = vst [vmem:[%s210 + $0x30] sm:$0xff] %v661
      %716 = vst [vmem:[%s210 + $0x38] sm:$0xff] %v666
      %717 = vst [vmem:[%s210 + $0x40] sm:$0xff] %v671
      %718 = vst [vmem:[%s210 + $0x48] sm:$0xff] %v676
      %719 = vst [vmem:[%s210 + $0x50] sm:$0xff] %v681
      %720 = vst [vmem:[%s210 + $0x58] sm:$0xff] %v686
      %721 = vst [vmem:[%s210 + $0x60] sm:$0xff] %v691
      %722 = vst [vmem:[%s210 + $0x68] sm:$0xff] %v696
      %723 = vst [vmem:[%s210 + $0x70] sm:$0xff] %v701
      %724 = vst [vmem:[%s210 + $0x78] sm:$0xff] %v706
      %p725 = scmp.lt.s32.totalorder %s14, 3
      %s726 = scalar_select %p725, %s14, 3
      %s727 = smul.addr %s726, 16
      %s728 = smul.addr %s727, 8
      %s729 = scalar_lea.vmem %s3, %s728
      // Predicated region
      $region33: #{_lambda_.16} parent=31 // pred_check
        %p730 = pneg %p110
      $region34: #{_lambda_.16} parent=31 // pred_check_branch
        %732 = sbr.rel (%p730) target = $region36
      $region35: #{_lambda_.16} parent=31 // pred_region
        _
      $region36: #{_lambda_.16} parent=31 // pred_fallthru
        _
    $region32: #{_lambda_.16} parent=5 // pred_fallthru
      _
    %p733 = scmp.le.s32.totalorder 2, %s9
    // Predicated region
    $region37: #{_lambda_.16} parent=5 // pred_check
      %p734 = pneg %p733
    $region38: #{_lambda_.16} parent=5 // pred_check_branch
      %736 = sbr.rel (%p734) target = $region40
    $region39: #{_lambda_.16} parent=5 // pred_region
      %s737 = ssub.s32 %s9, 2
      // Predicated region
      $region41: #{_lambda_.16} parent=39 // pred_check
        %p738 = pneg %p116
      $region42: #{_lambda_.16} parent=39 // pred_check_branch
        %740 = sbr.rel (%p738) target = $region44
      $region43: #{_lambda_.16} parent=39 // pred_region
        %p741 = scmp.lt.s32.totalorder %s15, 3
        %s742 = scalar_select %p741, %s15, 3
        %s743 = smul.addr %s742, 16
        %s744 = smul.addr %s743, 8
        %s745 = scalar_lea.vmem %s3, %s744
      $region44: #{_lambda_.16} parent=39 // pred_fallthru
        _
    $region40: #{_lambda_.16} parent=5 // pred_fallthru
      _
  $region6: #{_lambda_.16} parent=0 // loop_footer
    %s13 = sadd.s32 1, %s9
  $region7: #{_lambda_.16} parent=0 // loop_footer_branch
    %8 = sbr.rel target = $region3
  $region8: #{_lambda_.16} parent=0 // loop_exit
    _

// kernel: _lambda_.18
$region0: #{_lambda_.18}
  #allocation0 [shape = 'u32[]', space=smem, size = 0x4, offset = 0x4, fixed_abs, tag = 'smem constant byte address 0x4 - core index']
  #allocation1 [shape = 'u32[144,128]{1,0:T(1,128)}', space=vmem, size = 0x12000, scoped, tag = 'internal scratch']
  %s0 = inlined_call_operand.vmem [shape: f32[256,512], index: 0, kind: input, shape index: {}]
  %s1 = inlined_call_operand.vmem [shape: f32[512,256], index: 1, kind: input, shape index: {}]
  %s2 = inlined_call_operand.vmem [shape: f32[1,256], index: 2, kind: input, shape index: {}]
  %s3 = inlined_call_operand.vmem [shape: f32[256,256], index: 3, kind: output, shape index: {}]
  %s4 = sld [smem:[#allocation0]]
  $region45: #{_lambda_.18} parent=0
    _
  %s6 = ssub.s32 1, %s4
  %s7 = scalar_select 0, %s6, %s4
  loop: start=0, step=1, limit=4
  $region2: #{_lambda_.18} parent=0 // loop_pre_header
    _
  $region3: #{_lambda_.18} parent=0 // loop_header
    %s9 = sphi 0, %s13
    %p10 = scmp.ge.s32.totalorder %s9, 4
    %s19 = sphi 0, %s21
    %s22 = sphi 0, %s19
    %s23 = sphi 0, %s22
    %s39 = sphi 0, %s23
    %s43 = sphi 0, %s43
    %s45 = sphi 0, %s43
    %s46 = sphi 0, %s45
    %s60 = sphi 0, %s46
    %s64 = sphi 0, %s64
    %s66 = sphi 0, %s64
    %s67 = sphi 0, %s66
    %s81 = sphi 0, %s67
    %s87 = sphi 0, %s89
    %s90 = sphi 0, %s87
    %s91 = sphi 0, %s90
    %s107 = sphi 0, %s91
  $region4: #{_lambda_.18} parent=0 // loop_header_branch
    %12 = sbr.rel (%p10) target = $region8
  $region5: #{_lambda_.18} parent=0 // loop_body
    %s14 = ssub.s32 %s9, 1
    %s15 = ssub.s32 %s9, 2
    %s16 = sadd.s32 %s9, 1
    %s17 = ssub.s32 %s9, %s16
    %p18 = scmp.eq.s32.totalorder %s17, 0
    %s20 = sadd.s32 %s19, 1
    %s21 = scalar_select %p18, %s19, %s20
    %p24 = pneg %p18
    %p25 = scmp.eq.s32.totalorder %s9, 1
    %p26 = por %p24, %p25
    %p27 = scmp.ne.s32.totalorder %s19, %s22
    %p28 = scmp.eq.s32.totalorder %s9, 0
    %p29 = por %p27, %p28
    %p30 = scmp.ne.s32.totalorder %s19, %s22
    %p31 = scmp.eq.s32.totalorder %s14, 1
    %p32 = por %p30, %p31
    %p33 = scmp.ne.s32.totalorder %s22, %s23
    %p34 = scmp.eq.s32.totalorder %s14, 0
    %p35 = por %p33, %p34
    %p36 = scmp.ne.s32.totalorder %s22, %s23
    %p37 = scmp.eq.s32.totalorder %s15, 1
    %p38 = por %p36, %p37
    %p40 = scmp.ne.s32.totalorder %s23, %s39
    %p41 = scmp.eq.s32.totalorder %s15, 0
    %p42 = por %p40, %p41
    %s44 = sadd.s32 %s43, 1
    %p47 = scmp.eq.s32.totalorder %s9, 1
    %p48 = scmp.ne.s32.totalorder %s43, %s45
    %p49 = scmp.eq.s32.totalorder %s9, 0
    %p50 = por %p48, %p49
    %p51 = scmp.ne.s32.totalorder %s43, %s45
    %p52 = scmp.eq.s32.totalorder %s14, 1
    %p53 = por %p51, %p52
    %p54 = scmp.ne.s32.totalorder %s45, %s46
    %p55 = scmp.eq.s32.totalorder %s14, 0
    %p56 = por %p54, %p55
    %p57 = scmp.ne.s32.totalorder %s45, %s46
    %p58 = scmp.eq.s32.totalorder %s15, 1
    %p59 = por %p57, %p58
    %p61 = scmp.ne.s32.totalorder %s46, %s60
    %p62 = scmp.eq.s32.totalorder %s15, 0
    %p63 = por %p61, %p62
    %s65 = sadd.s32 %s64, 1
    %p68 = scmp.eq.s32.totalorder %s9, 1
    %p69 = scmp.ne.s32.totalorder %s64, %s66
    %p70 = scmp.eq.s32.totalorder %s9, 0
    %p71 = por %p69, %p70
    %p72 = scmp.ne.s32.totalorder %s64, %s66
    %p73 = scmp.eq.s32.totalorder %s14, 1
    %p74 = por %p72, %p73
    %p75 = scmp.ne.s32.totalorder %s66, %s67
    %p76 = scmp.eq.s32.totalorder %s14, 0
    %p77 = por %p75, %p76
    %p78 = scmp.ne.s32.totalorder %s66, %s67
    %p79 = scmp.eq.s32.totalorder %s15, 1
    %p80 = por %p78, %p79
    %p82 = scmp.ne.s32.totalorder %s67, %s81
    %p83 = scmp.eq.s32.totalorder %s15, 0
    %p84 = por %p82, %p83
    %s85 = ssub.s32 %s9, %s16
    %p86 = scmp.eq.s32.totalorder %s85, 0
    %s88 = sadd.s32 %s87, 1
    %s89 = scalar_select %p86, %s87, %s88
    %p92 = pneg %p86
    %p93 = scmp.eq.s32.totalorder %s9, 1
    %p94 = por %p92, %p93
    %p95 = scmp.ne.s32.totalorder %s87, %s90
    %p96 = scmp.eq.s32.totalorder %s9, 0
    %p97 = por %p95, %p96
    %p98 = scmp.ne.s32.totalorder %s87, %s90
    %p99 = scmp.eq.s32.totalorder %s14, 1
    %p100 = por %p98, %p99
    %p101 = scmp.ne.s32.totalorder %s90, %s91
    %p102 = scmp.eq.s32.totalorder %s14, 0
    %p103 = por %p101, %p102
    %p104 = scmp.ne.s32.totalorder %s90, %s91
    %p105 = scmp.eq.s32.totalorder %s15, 1
    %p106 = por %p104, %p105
    %p108 = scmp.ne.s32.totalorder %s91, %s107
    %p109 = scmp.eq.s32.totalorder %s15, 0
    %p110 = por %p108, %p109
    %p111 = scmp.le.s32.totalorder 1, %s9
    %p112 = scmp.lt.s32.totalorder %s9, 3
    %p113 = pnand %p111, %p112
    %p114 = pneg %p113
    // Predicated region
    $region9: #{_lambda_.18} parent=5 // pred_check
      _
    $region10: #{_lambda_.18} parent=5 // pred_check_branch
      %116 = sbr.rel (%p113) target = $region12
    $region11: #{_lambda_.18} parent=5 // pred_region
      %s117 = ssub.s32 %s9, 1
      // Predicated region
      $region13: #{_lambda_.18} parent=11 // pred_check
        %p118 = pneg %p56
      $region14: #{_lambda_.18} parent=11 // pred_check_branch
        %120 = sbr.rel (%p118) target = $region16
      $region15: #{_lambda_.18} parent=11 // pred_region
        _
      $region16: #{_lambda_.18} parent=11 // pred_fallthru
        _
      // Predicated region
      $region17: #{_lambda_.18} parent=11 // pred_check
        %p121 = pneg %p77
      $region18: #{_lambda_.18} parent=11 // pred_check_branch
        %123 = sbr.rel (%p121) target = $region20
      $region19: #{_lambda_.18} parent=11 // pred_region
        _
      $region20: #{_lambda_.18} parent=11 // pred_fallthru
        _
    $region12: #{_lambda_.18} parent=5 // pred_fallthru
      _
    %p124 = scmp.lt.s32.totalorder %s9, 2
    // Predicated region
    $region21: #{_lambda_.18} parent=5 // pred_check
      %p125 = pneg %p124
    $region22: #{_lambda_.18} parent=5 // pred_check_branch
      %127 = sbr.rel (%p125) target = $region24
    $region23: #{_lambda_.18} parent=5 // pred_region
      // Predicated region
      $region25: #{_lambda_.18} parent=23 // pred_check
        %p128 = pneg %p29
      $region26: #{_lambda_.18} parent=23 // pred_check_branch
        %130 = sbr.rel (%p128) target = $region28
      $region27: #{_lambda_.18} parent=23 // pred_region
        %s131 = smul.u32 16, %s9
        %p132 = scmp.lt.s32.totalorder %s131, 31
        %s133 = scalar_select %p132, %s131, 31
        %s134 = smul.addr %s133, 4
        %s135 = smul.addr %s134, 8
        %s136 = scalar_lea.vmem %s0, %s135
        %s137 = smul.u32 16, %s9
      $region28: #{_lambda_.18} parent=23 // pred_fallthru
        _
    $region24: #{_lambda_.18} parent=5 // pred_fallthru
      _
    %p138 = scmp.le.s32.totalorder 1, %s9
    %p139 = scmp.lt.s32.totalorder %s9, 3
    %p140 = pnand %p138, %p139
    %p141 = pneg %p140
    // Predicated region
    $region29: #{_lambda_.18} parent=5 // pred_check
      _
    $region30: #{_lambda_.18} parent=5 // pred_check_branch
      %143 = sbr.rel (%p140) target = $region32
    $region31: #{_lambda_.18} parent=5 // pred_region
      %s144 = ssub.s32 %s9, 1
      %s145 = smul.u32 16, %s14
      %p146 = scmp.lt.s32.totalorder %s145, 31
      %s147 = scalar_select %p146, %s145, 31
      %s148 = smul.addr %s147, 4
      %s149 = smul.addr %s148, 8
      %s150 = scalar_lea.vmem %s0, %s149
      %p151 = pneg %p35
      %p152 = pneg %p32
      %p153 = pneg %p56
      %p154 = pneg %p53
      %p155 = pneg %p77
      %p156 = pneg %p74
      %p157 = pneg %p103
      %p158 = pneg %p100
      %s159 = smul.u32 16, %s14
      %p160 = scmp.lt.s32.totalorder %s159, 31
      %s161 = scalar_select %p160, %s159, 31
      %s162 = smul.addr %s161, 2
      %s163 = smul.addr %s162, 8
      %s164 = scalar_lea.vmem %s3, %s163
      %s165 = smul.u32 16, %s14
      %p166 = scmp.lt.s32.totalorder %s165, 31
      %s167 = scalar_select %p166, %s165, 31
      %s168 = smul.addr %s167, 4
      %s169 = smul.addr %s168, 8
      %s170 = scalar_lea.vmem %s0, %s169
      %s171 = smul.u32 16, %s14
      %s172 = smul.u32 16, %s14
      %p173 = scmp.lt.s32.totalorder %s172, 31
      %s174 = scalar_select %p173, %s172, 31
      %s175 = smul.addr %s174, 2
      %s176 = smul.addr %s175, 8
      %s177 = scalar_lea.vmem %s3, %s176
      %s178 = smul.u32 16, %s14
      %v179 = vld [vmem:[%s170] sm:$0xff]
      %v180 = vld [vmem:[%s170 + $0x8] sm:$0xff]
      %v181 = vld [vmem:[%s170 + $0x10] sm:$0xff]
      %v182 = vld [vmem:[%s170 + $0x18] sm:$0xff]
      %v183 = vld [vmem:[%s170 + $0x20] sm:$0xff]
      %v184 = vld [vmem:[%s170 + $0x28] sm:$0xff]
      %v185 = vld [vmem:[%s170 + $0x30] sm:$0xff]
      %v186 = vld [vmem:[%s170 + $0x38] sm:$0xff]
      %v187 = vld [vmem:[%s170 + $0x40] sm:$0xff]
      %v188 = vld [vmem:[%s170 + $0x48] sm:$0xff]
      %v189 = vld [vmem:[%s170 + $0x50] sm:$0xff]
      %v190 = vld [vmem:[%s170 + $0x58] sm:$0xff]
      %v191 = vld [vmem:[%s170 + $0x60] sm:$0xff]
      %v192 = vld [vmem:[%s170 + $0x68] sm:$0xff]
      %v193 = vld [vmem:[%s170 + $0x70] sm:$0xff]
      %v194 = vld [vmem:[%s170 + $0x78] sm:$0xff]
      %v195 = vld [vmem:[%s170 + $0x80] sm:$0xff]
      %v196 = vld [vmem:[%s170 + $0x88] sm:$0xff]
      %v197 = vld [vmem:[%s170 + $0x90] sm:$0xff]
      %v198 = vld [vmem:[%s170 + $0x98] sm:$0xff]
      %v199 = vld [vmem:[%s170 + $0xa0] sm:$0xff]
      %v200 = vld [vmem:[%s170 + $0xa8] sm:$0xff]
      %v201 = vld [vmem:[%s170 + $0xb0] sm:$0xff]
      %v202 = vld [vmem:[%s170 + $0xb8] sm:$0xff]
      %v203 = vld [vmem:[%s170 + $0xc0] sm:$0xff]
      %v204 = vld [vmem:[%s170 + $0xc8] sm:$0xff]
      %v205 = vld [vmem:[%s170 + $0xd0] sm:$0xff]
      %v206 = vld [vmem:[%s170 + $0xd8] sm:$0xff]
      %v207 = vld [vmem:[%s170 + $0xe0] sm:$0xff]
      %v208 = vld [vmem:[%s170 + $0xe8] sm:$0xff]
      %v209 = vld [vmem:[%s170 + $0xf0] sm:$0xff]
      %v210 = vld [vmem:[%s170 + $0xf8] sm:$0xff]
      %v211 = vld [vmem:[%s170 + $0x100] sm:$0xff]
      %v212 = vld [vmem:[%s170 + $0x108] sm:$0xff]
      %v213 = vld [vmem:[%s170 + $0x110] sm:$0xff]
      %v214 = vld [vmem:[%s170 + $0x118] sm:$0xff]
      %v215 = vld [vmem:[%s170 + $0x120] sm:$0xff]
      %v216 = vld [vmem:[%s170 + $0x128] sm:$0xff]
      %v217 = vld [vmem:[%s170 + $0x130] sm:$0xff]
      %v218 = vld [vmem:[%s170 + $0x138] sm:$0xff]
      %v219 = vld [vmem:[%s170 + $0x140] sm:$0xff]
      %v220 = vld [vmem:[%s170 + $0x148] sm:$0xff]
      %v221 = vld [vmem:[%s170 + $0x150] sm:$0xff]
      %v222 = vld [vmem:[%s170 + $0x158] sm:$0xff]
      %v223 = vld [vmem:[%s170 + $0x160] sm:$0xff]
      %v224 = vld [vmem:[%s170 + $0x168] sm:$0xff]
      %v225 = vld [vmem:[%s170 + $0x170] sm:$0xff]
      %v226 = vld [vmem:[%s170 + $0x178] sm:$0xff]
      %v227 = vld [vmem:[%s170 + $0x180] sm:$0xff]
      %v228 = vld [vmem:[%s170 + $0x188] sm:$0xff]
      %v229 = vld [vmem:[%s170 + $0x190] sm:$0xff]
      %v230 = vld [vmem:[%s170 + $0x198] sm:$0xff]
      %v231 = vld [vmem:[%s170 + $0x1a0] sm:$0xff]
      %v232 = vld [vmem:[%s170 + $0x1a8] sm:$0xff]
      %v233 = vld [vmem:[%s170 + $0x1b0] sm:$0xff]
      %v234 = vld [vmem:[%s170 + $0x1b8] sm:$0xff]
      %v235 = vld [vmem:[%s170 + $0x1c0] sm:$0xff]
      %v236 = vld [vmem:[%s170 + $0x1c8] sm:$0xff]
      %v237 = vld [vmem:[%s170 + $0x1d0] sm:$0xff]
      %v238 = vld [vmem:[%s170 + $0x1d8] sm:$0xff]
      %v239 = vld [vmem:[%s170 + $0x1e0] sm:$0xff]
      %v240 = vld [vmem:[%s170 + $0x1e8] sm:$0xff]
      %v241 = vld [vmem:[%s170 + $0x1f0] sm:$0xff]
      %v242 = vld [vmem:[%s170 + $0x1f8] sm:$0xff]
      %v243 = vld [vmem:[%s1] sm:$0xff]
      %v244 = vld [vmem:[%s1 + $0x8] sm:$0xff]
      %v245 = vld [vmem:[%s1 + $0x10] sm:$0xff]
      %v246 = vld [vmem:[%s1 + $0x18] sm:$0xff]
      %v247 = vld [vmem:[%s1 + $0x20] sm:$0xff]
      %v248 = vld [vmem:[%s1 + $0x28] sm:$0xff]
      %v249 = vld [vmem:[%s1 + $0x30] sm:$0xff]
      %v250 = vld [vmem:[%s1 + $0x38] sm:$0xff]
      %v251 = vld [vmem:[%s1 + $0x40] sm:$0xff]
      %v252 = vld [vmem:[%s1 + $0x48] sm:$0xff]
      %v253 = vld [vmem:[%s1 + $0x50] sm:$0xff]
      %v254 = vld [vmem:[%s1 + $0x58] sm:$0xff]
      %v255 = vld [vmem:[%s1 + $0x60] sm:$0xff]
      %v256 = vld [vmem:[%s1 + $0x68] sm:$0xff]
      %v257 = vld [vmem:[%s1 + $0x70] sm:$0xff]
      %v258 = vld [vmem:[%s1 + $0x78] sm:$0xff]
      %v259 = vld [vmem:[%s1 + $0x80] sm:$0xff]
      %v260 = vld [vmem:[%s1 + $0x88] sm:$0xff]
      %v261 = vld [vmem:[%s1 + $0x90] sm:$0xff]
      %v262 = vld [vmem:[%s1 + $0x98] sm:$0xff]
      %v263 = vld [vmem:[%s1 + $0xa0] sm:$0xff]
      %v264 = vld [vmem:[%s1 + $0xa8] sm:$0xff]
      %v265 = vld [vmem:[%s1 + $0xb0] sm:$0xff]
      %v266 = vld [vmem:[%s1 + $0xb8] sm:$0xff]
      %v267 = vld [vmem:[%s1 + $0xc0] sm:$0xff]
      %v268 = vld [vmem:[%s1 + $0xc8] sm:$0xff]
      %v269 = vld [vmem:[%s1 + $0xd0] sm:$0xff]
      %v270 = vld [vmem:[%s1 + $0xd8] sm:$0xff]
      %v271 = vld [vmem:[%s1 + $0xe0] sm:$0xff]
      %v272 = vld [vmem:[%s1 + $0xe8] sm:$0xff]
      %v273 = vld [vmem:[%s1 + $0xf0] sm:$0xff]
      %v274 = vld [vmem:[%s1 + $0xf8] sm:$0xff]
      %v275 = vld [vmem:[%s1 + $0x100] sm:$0xff]
      %v276 = vld [vmem:[%s1 + $0x108] sm:$0xff]
      %v277 = vld [vmem:[%s1 + $0x110] sm:$0xff]
      %v278 = vld [vmem:[%s1 + $0x118] sm:$0xff]
      %v279 = vld [vmem:[%s1 + $0x120] sm:$0xff]
      %v280 = vld [vmem:[%s1 + $0x128] sm:$0xff]
      %v281 = vld [vmem:[%s1 + $0x130] sm:$0xff]
      %v282 = vld [vmem:[%s1 + $0x138] sm:$0xff]
      %v283 = vld [vmem:[%s1 + $0x140] sm:$0xff]
      %v284 = vld [vmem:[%s1 + $0x148] sm:$0xff]
      %v285 = vld [vmem:[%s1 + $0x150] sm:$0xff]
      %v286 = vld [vmem:[%s1 + $0x158] sm:$0xff]
      %v287 = vld [vmem:[%s1 + $0x160] sm:$0xff]
      %v288 = vld [vmem:[%s1 + $0x168] sm:$0xff]
      %v289 = vld [vmem:[%s1 + $0x170] sm:$0xff]
      %v290 = vld [vmem:[%s1 + $0x178] sm:$0xff]
      %v291 = vld [vmem:[%s1 + $0x180] sm:$0xff]
      %v292 = vld [vmem:[%s1 + $0x188] sm:$0xff]
      %v293 = vld [vmem:[%s1 + $0x190] sm:$0xff]
      %v294 = vld [vmem:[%s1 + $0x198] sm:$0xff]
      %v295 = vld [vmem:[%s1 + $0x1a0] sm:$0xff]
      %v296 = vld [vmem:[%s1 + $0x1a8] sm:$0xff]
      %v297 = vld [vmem:[%s1 + $0x1b0] sm:$0xff]
      %v298 = vld [vmem:[%s1 + $0x1b8] sm:$0xff]
      %v299 = vld [vmem:[%s1 + $0x1c0] sm:$0xff]
      %v300 = vld [vmem:[%s1 + $0x1c8] sm:$0xff]
      %v301 = vld [vmem:[%s1 + $0x1d0] sm:$0xff]
      %v302 = vld [vmem:[%s1 + $0x1d8] sm:$0xff]
      %v303 = vld [vmem:[%s1 + $0x1e0] sm:$0xff]
      %v304 = vld [vmem:[%s1 + $0x1e8] sm:$0xff]
      %v305 = vld [vmem:[%s1 + $0x1f0] sm:$0xff]
      %v306 = vld [vmem:[%s1 + $0x1f8] sm:$0xff]
      %v307 = vld [vmem:[%s1 + $0x200] sm:$0xff]
      %v308 = vld [vmem:[%s1 + $0x208] sm:$0xff]
      %v309 = vld [vmem:[%s1 + $0x210] sm:$0xff]
      %v310 = vld [vmem:[%s1 + $0x218] sm:$0xff]
      %v311 = vld [vmem:[%s1 + $0x220] sm:$0xff]
      %v312 = vld [vmem:[%s1 + $0x228] sm:$0xff]
      %v313 = vld [vmem:[%s1 + $0x230] sm:$0xff]
      %v314 = vld [vmem:[%s1 + $0x238] sm:$0xff]
      %v315 = vld [vmem:[%s1 + $0x240] sm:$0xff]
      %v316 = vld [vmem:[%s1 + $0x248] sm:$0xff]
      %v317 = vld [vmem:[%s1 + $0x250] sm:$0xff]
      %v318 = vld [vmem:[%s1 + $0x258] sm:$0xff]
      %v319 = vld [vmem:[%s1 + $0x260] sm:$0xff]
      %v320 = vld [vmem:[%s1 + $0x268] sm:$0xff]
      %v321 = vld [vmem:[%s1 + $0x270] sm:$0xff]
      %v322 = vld [vmem:[%s1 + $0x278] sm:$0xff]
      %v323 = vld [vmem:[%s1 + $0x280] sm:$0xff]
      %v324 = vld [vmem:[%s1 + $0x288] sm:$0xff]
      %v325 = vld [vmem:[%s1 + $0x290] sm:$0xff]
      %v326 = vld [vmem:[%s1 + $0x298] sm:$0xff]
      %v327 = vld [vmem:[%s1 + $0x2a0] sm:$0xff]
      %v328 = vld [vmem:[%s1 + $0x2a8] sm:$0xff]
      %v329 = vld [vmem:[%s1 + $0x2b0] sm:$0xff]
      %v330 = vld [vmem:[%s1 + $0x2b8] sm:$0xff]
      %v331 = vld [vmem:[%s1 + $0x2c0] sm:$0xff]
      %v332 = vld [vmem:[%s1 + $0x2c8] sm:$0xff]
      %v333 = vld [vmem:[%s1 + $0x2d0] sm:$0xff]
      %v334 = vld [vmem:[%s1 + $0x2d8] sm:$0xff]
      %v335 = vld [vmem:[%s1 + $0x2e0] sm:$0xff]
      %v336 = vld [vmem:[%s1 + $0x2e8] sm:$0xff]
      %v337 = vld [vmem:[%s1 + $0x2f0] sm:$0xff]
      %v338 = vld [vmem:[%s1 + $0x2f8] sm:$0xff]
      %v339 = vld [vmem:[%s1 + $0x300] sm:$0xff]
      %v340 = vld [vmem:[%s1 + $0x308] sm:$0xff]
      %v341 = vld [vmem:[%s1 + $0x310] sm:$0xff]
      %v342 = vld [vmem:[%s1 + $0x318] sm:$0xff]
      %v343 = vld [vmem:[%s1 + $0x320] sm:$0xff]
      %v344 = vld [vmem:[%s1 + $0x328] sm:$0xff]
      %v345 = vld [vmem:[%s1 + $0x330] sm:$0xff]
      %v346 = vld [vmem:[%s1 + $0x338] sm:$0xff]
      %v347 = vld [vmem:[%s1 + $0x340] sm:$0xff]
      %v348 = vld [vmem:[%s1 + $0x348] sm:$0xff]
      %v349 = vld [vmem:[%s1 + $0x350] sm:$0xff]
      %v350 = vld [vmem:[%s1 + $0x358] sm:$0xff]
      %v351 = vld [vmem:[%s1 + $0x360] sm:$0xff]
      %v352 = vld [vmem:[%s1 + $0x368] sm:$0xff]
      %v353 = vld [vmem:[%s1 + $0x370] sm:$0xff]
      %v354 = vld [vmem:[%s1 + $0x378] sm:$0xff]
      %v355 = vld [vmem:[%s1 + $0x380] sm:$0xff]
      %v356 = vld [vmem:[%s1 + $0x388] sm:$0xff]
      %v357 = vld [vmem:[%s1 + $0x390] sm:$0xff]
      %v358 = vld [vmem:[%s1 + $0x398] sm:$0xff]
      %v359 = vld [vmem:[%s1 + $0x3a0] sm:$0xff]
      %v360 = vld [vmem:[%s1 + $0x3a8] sm:$0xff]
      %v361 = vld [vmem:[%s1 + $0x3b0] sm:$0xff]
      %v362 = vld [vmem:[%s1 + $0x3b8] sm:$0xff]
      %v363 = vld [vmem:[%s1 + $0x3c0] sm:$0xff]
      %v364 = vld [vmem:[%s1 + $0x3c8] sm:$0xff]
      %v365 = vld [vmem:[%s1 + $0x3d0] sm:$0xff]
      %v366 = vld [vmem:[%s1 + $0x3d8] sm:$0xff]
      %v367 = vld [vmem:[%s1 + $0x3e0] sm:$0xff]
      %v368 = vld [vmem:[%s1 + $0x3e8] sm:$0xff]
      %v369 = vld [vmem:[%s1 + $0x3f0] sm:$0xff]
      %v370 = vld [vmem:[%s1 + $0x3f8] sm:$0xff]
      %v371 = vld [vmem:[%s2] sm:$0x3]
      %v373 = vlaneseq
      %v374 = vshrl.u32 %v373, 7
      %v375 = vsub.s32 0, %v374
      %v376 = vrot.slane %v371, %v375
      %v377 = vlaneseq
      %v378 = vshrl.u32 %v377, 7
      %v379 = vsub.s32 1, %v378
      %v380 = vrot.slane %v371, %v379
      %383 = vmatprep.subr.mxu0 %v244
      %384 = vmatpush1.msra.mxu0 %v243
      %385 = vmatprep.subr.mxu0 %v246
      %386 = vmatpush1.msra.mxu0 %v245
      %387 = vmatprep.subr.mxu0 %v248
      %388 = vmatpush1.msra.mxu0 %v247
      %389 = vmatprep.subr.mxu0 %v250
      %390 = vmatpush1.msra.mxu0 %v249
      %391 = vmatprep.subr.mxu0 %v252
      %392 = vmatpush1.msra.mxu0 %v251
      %393 = vmatprep.subr.mxu0 %v254
      %394 = vmatpush1.msra.mxu0 %v253
      %395 = vmatprep.subr.mxu0 %v256
      %396 = vmatpush1.msra.mxu0 %v255
      %397 = vmatprep.subr.mxu0 %v258
      %398 = vmatpush1.msra.mxu0 %v257
      %399 = vmatprep.subr.mxu0 %v260
      %400 = vmatpush1.msra.mxu0 %v259
      %401 = vmatprep.subr.mxu0 %v262
      %402 = vmatpush1.msra.mxu0 %v261
      %403 = vmatprep.subr.mxu0 %v264
      %404 = vmatpush1.msra.mxu0 %v263
      %405 = vmatprep.subr.mxu0 %v266
      %406 = vmatpush1.msra.mxu0 %v265
      %407 = vmatprep.subr.mxu0 %v268
      %408 = vmatpush1.msra.mxu0 %v267
      %409 = vmatprep.subr.mxu0 %v270
      %410 = vmatpush1.msra.mxu0 %v269
      %411 = vmatprep.subr.mxu0 %v272
      %412 = vmatpush1.msra.mxu0 %v271
      %413 = vmatprep.subr.mxu0 %v274
      %414 = vmatpush1.msra.mxu0 %v273
      %415 = vmatprep.subr.mxu0 %v276
      %416 = vmatpush1.msra.mxu0 %v275
      %417 = vmatprep.subr.mxu0 %v278
      %418 = vmatpush1.msra.mxu0 %v277
      %419 = vmatprep.subr.mxu0 %v280
      %420 = vmatpush1.msra.mxu0 %v279
      %421 = vmatprep.subr.mxu0 %v282
      %422 = vmatpush1.msra.mxu0 %v281
      %423 = vmatprep.subr.mxu0 %v284
      %424 = vmatpush1.msra.mxu0 %v283
      %425 = vmatprep.subr.mxu0 %v286
      %426 = vmatpush1.msra.mxu0 %v285
      %427 = vmatprep.subr.mxu0 %v288
      %428 = vmatpush1.msra.mxu0 %v287
      %429 = vmatprep.subr.mxu0 %v290
      %430 = vmatpush1.msra.mxu0 %v289
      %431 = vmatprep.subr.mxu0 %v292
      %432 = vmatpush1.msra.mxu0 %v291
      %433 = vmatprep.subr.mxu0 %v294
      %434 = vmatpush1.msra.mxu0 %v293
      %435 = vmatprep.subr.mxu0 %v296
      %436 = vmatpush1.msra.mxu0 %v295
      %437 = vmatprep.subr.mxu0 %v298
      %438 = vmatpush1.msra.mxu0 %v297
      %439 = vmatprep.subr.mxu0 %v300
      %440 = vmatpush1.msra.mxu0 %v299
      %441 = vmatprep.subr.mxu0 %v302
      %442 = vmatpush1.msra.mxu0 %v301
      %443 = vmatprep.subr.mxu0 %v304
      %444 = vmatpush1.msra.mxu0 %v303
      %445 = vmatprep.subr.mxu0 %v306
      %446 = vmatpush1.msra.mxu0 %v305
      %447 = vmatprep.mubr.f32.mxu0 %v180
      %448 = vmatmul.mubr.f32.gmra.mrb[0].mxu0 %v179
      %v449 = vpop.f32.mrb[0].mxu0
      %v450 = vadd.f32 %v376, %v449
      %v451 = vpop.f32.mrb[0].mxu0
      %v452 = vadd.f32 %v380, %v451
      %453 = vmatprep.mubr.f32.mxu0 %v184
      %454 = vmatmul.mubr.f32.gmra.mrb[0].mxu0 %v183
      %v455 = vpop.f32.mrb[0].mxu0
      %v456 = vadd.f32 %v376, %v455
      %v457 = vpop.f32.mrb[0].mxu0
      %v458 = vadd.f32 %v380, %v457
      %459 = vmatprep.mubr.f32.mxu0 %v188
      %460 = vmatmul.mubr.f32.gmra.mrb[0].mxu0 %v187
      %v461 = vpop.f32.mrb[0].mxu0
      %v462 = vadd.f32 %v376, %v461
      %v463 = vpop.f32.mrb[0].mxu0
      %v464 = vadd.f32 %v380, %v463
      %465 = vmatprep.mubr.f32.mxu0 %v192
      %466 = vmatmul.mubr.f32.gmra.mrb[0].mxu0 %v191
      %v467 = vpop.f32.mrb[0].mxu0
      %v468 = vadd.f32 %v376, %v467
      %v469 = vpop.f32.mrb[0].mxu0
      %v470 = vadd.f32 %v380, %v469
      %471 = vmatprep.mubr.f32.mxu0 %v196
      %472 = vmatmul.mubr.f32.gmra.mrb[0].mxu0 %v195
      %v473 = vpop.f32.mrb[0].mxu0
      %v474 = vadd.f32 %v376, %v473
      %v475 = vpop.f32.mrb[0].mxu0
      %v476 = vadd.f32 %v380, %v475
      %477 = vmatprep.mubr.f32.mxu0 %v200
      %478 = vmatmul.mubr.f32.gmra.mrb[0].mxu0 %v199
      %v479 = vpop.f32.mrb[0].mxu0
      %v480 = vadd.f32 %v376, %v479
      %v481 = vpop.f32.mrb[0].mxu0
      %v482 = vadd.f32 %v380, %v481
      %483 = vmatprep.mubr.f32.mxu0 %v204
      %484 = vmatmul.mubr.f32.gmra.mrb[0].mxu0 %v203
      %v485 = vpop.f32.mrb[0].mxu0
      %v486 = vadd.f32 %v376, %v485
      %v487 = vpop.f32.mrb[0].mxu0
      %v488 = vadd.f32 %v380, %v487
      %489 = vmatprep.mubr.f32.mxu0 %v208
      %490 = vmatmul.mubr.f32.gmra.mrb[0].mxu0 %v207
      %v491 = vpop.f32.mrb[0].mxu0
      %v492 = vadd.f32 %v376, %v491
      %v493 = vpop.f32.mrb[0].mxu0
      %v494 = vadd.f32 %v380, %v493
      %495 = vmatprep.mubr.f32.mxu0 %v212
      %496 = vmatmul.mubr.f32.gmra.mrb[0].mxu0 %v211
      %v497 = vpop.f32.mrb[0].mxu0
      %v498 = vadd.f32 %v376, %v497
      %v499 = vpop.f32.mrb[0].mxu0
      %v500 = vadd.f32 %v380, %v499
      %501 = vmatprep.mubr.f32.mxu0 %v216
      %502 = vmatmul.mubr.f32.gmra.mrb[0].mxu0 %v215
      %v503 = vpop.f32.mrb[0].mxu0
      %v504 = vadd.f32 %v376, %v503
      %v505 = vpop.f32.mrb[0].mxu0
      %v506 = vadd.f32 %v380, %v505
      %507 = vmatprep.mubr.f32.mxu0 %v220
      %508 = vmatmul.mubr.f32.gmra.mrb[0].mxu0 %v219
      %v509 = vpop.f32.mrb[0].mxu0
      %v510 = vadd.f32 %v376, %v509
      %v511 = vpop.f32.mrb[0].mxu0
      %v512 = vadd.f32 %v380, %v511
      %513 = vmatprep.mubr.f32.mxu0 %v224
      %514 = vmatmul.mubr.f32.gmra.mrb[0].mxu0 %v223
      %v515 = vpop.f32.mrb[0].mxu0
      %v516 = vadd.f32 %v376, %v515
      %v517 = vpop.f32.mrb[0].mxu0
      %v518 = vadd.f32 %v380, %v517
      %519 = vmatprep.mubr.f32.mxu0 %v228
      %520 = vmatmul.mubr.f32.gmra.mrb[0].mxu0 %v227
      %v521 = vpop.f32.mrb[0].mxu0
      %v522 = vadd.f32 %v376, %v521
      %v523 = vpop.f32.mrb[0].mxu0
      %v524 = vadd.f32 %v380, %v523
      %525 = vmatprep.mubr.f32.mxu0 %v232
      %526 = vmatmul.mubr.f32.gmra.mrb[0].mxu0 %v231
      %v527 = vpop.f32.mrb[0].mxu0
      %v528 = vadd.f32 %v376, %v527
      %v529 = vpop.f32.mrb[0].mxu0
      %v530 = vadd.f32 %v380, %v529
      %531 = vmatprep.mubr.f32.mxu0 %v236
      %532 = vmatmul.mubr.f32.gmra.mrb[0].mxu0 %v235
      %v533 = vpop.f32.mrb[0].mxu0
      %v534 = vadd.f32 %v376, %v533
      %v535 = vpop.f32.mrb[0].mxu0
      %v536 = vadd.f32 %v380, %v535
      %537 = vmatprep.mubr.f32.mxu0 %v240
      %538 = vmatmul.mubr.f32.gmra.mrb[0].mxu0 %v239
      %v539 = vpop.f32.mrb[0].mxu0
      %v540 = vadd.f32 %v376, %v539
      %v541 = vpop.f32.mrb[0].mxu0
      %v542 = vadd.f32 %v380, %v541
      %543 = vdwg.mxu0
      %544 = vmatprep.subr.mxu0 %v308
      %545 = vmatpush1.msra.mxu0 %v307
      %546 = vmatprep.subr.mxu0 %v310
      %547 = vmatpush1.msra.mxu0 %v309
      %548 = vmatprep.subr.mxu0 %v312
      %549 = vmatpush1.msra.mxu0 %v311
      %550 = vmatprep.subr.mxu0 %v314
      %551 = vmatpush1.msra.mxu0 %v313
      %552 = vmatprep.subr.mxu0 %v316
      %553 = vmatpush1.msra.mxu0 %v315
      %554 = vmatprep.subr.mxu0 %v318
      %555 = vmatpush1.msra.mxu0 %v317
      %556 = vmatprep.subr.mxu0 %v320
      %557 = vmatpush1.msra.mxu0 %v319
      %558 = vmatprep.subr.mxu0 %v322
      %559 = vmatpush1.msra.mxu0 %v321
      %560 = vmatprep.subr.mxu0 %v324
      %561 = vmatpush1.msra.mxu0 %v323
      %562 = vmatprep.subr.mxu0 %v326
      %563 = vmatpush1.msra.mxu0 %v325
      %564 = vmatprep.subr.mxu0 %v328
      %565 = vmatpush1.msra.mxu0 %v327
      %566 = vmatprep.subr.mxu0 %v330
      %567 = vmatpush1.msra.mxu0 %v329
      %568 = vmatprep.subr.mxu0 %v332
      %569 = vmatpush1.msra.mxu0 %v331
      %570 = vmatprep.subr.mxu0 %v334
      %571 = vmatpush1.msra.mxu0 %v333
      %572 = vmatprep.subr.mxu0 %v336
      %573 = vmatpush1.msra.mxu0 %v335
      %574 = vmatprep.subr.mxu0 %v338
      %575 = vmatpush1.msra.mxu0 %v337
      %576 = vmatprep.subr.mxu0 %v340
      %577 = vmatpush1.msra.mxu0 %v339
      %578 = vmatprep.subr.mxu0 %v342
      %579 = vmatpush1.msra.mxu0 %v341
      %580 = vmatprep.subr.mxu0 %v344
      %581 = vmatpush1.msra.mxu0 %v343
      %582 = vmatprep.subr.mxu0 %v346
      %583 = vmatpush1.msra.mxu0 %v345
      %584 = vmatprep.subr.mxu0 %v348
      %585 = vmatpush1.msra.mxu0 %v347
      %586 = vmatprep.subr.mxu0 %v350
      %587 = vmatpush1.msra.mxu0 %v349
      %588 = vmatprep.subr.mxu0 %v352
      %589 = vmatpush1.msra.mxu0 %v351
      %590 = vmatprep.subr.mxu0 %v354
      %591 = vmatpush1.msra.mxu0 %v353
      %592 = vmatprep.subr.mxu0 %v356
      %593 = vmatpush1.msra.mxu0 %v355
      %594 = vmatprep.subr.mxu0 %v358
      %595 = vmatpush1.msra.mxu0 %v357
      %596 = vmatprep.subr.mxu0 %v360
      %597 = vmatpush1.msra.mxu0 %v359
      %598 = vmatprep.subr.mxu0 %v362
      %599 = vmatpush1.msra.mxu0 %v361
      %600 = vmatprep.subr.mxu0 %v364
      %601 = vmatpush1.msra.mxu0 %v363
      %602 = vmatprep.subr.mxu0 %v366
      %603 = vmatpush1.msra.mxu0 %v365
      %604 = vmatprep.subr.mxu0 %v368
      %605 = vmatpush1.msra.mxu0 %v367
      %606 = vmatprep.subr.mxu0 %v370
      %607 = vmatpush1.msra.mxu0 %v369
      %608 = vmatprep.mubr.f32.mxu0 %v182
      %609 = vmatmul.mubr.f32.gmra.mrb[0].mxu0 %v181
      %v610 = vpop.f32.mrb[0].mxu0
      %v611 = vadd.f32 %v450, %v610
      %v612 = vpop.f32.mrb[0].mxu0
      %v613 = vadd.f32 %v452, %v612
      %614 = vmatprep.mubr.f32.mxu0 %v186
      %615 = vmatmul.mubr.f32.gmra.mrb[0].mxu0 %v185
      %v616 = vpop.f32.mrb[0].mxu0
      %v617 = vadd.f32 %v456, %v616
      %v618 = vpop.f32.mrb[0].mxu0
      %v619 = vadd.f32 %v458, %v618
      %620 = vmatprep.mubr.f32.mxu0 %v190
      %621 = vmatmul.mubr.f32.gmra.mrb[0].mxu0 %v189
      %v622 = vpop.f32.mrb[0].mxu0
      %v623 = vadd.f32 %v462, %v622
      %v624 = vpop.f32.mrb[0].mxu0
      %v625 = vadd.f32 %v464, %v624
      %626 = vmatprep.mubr.f32.mxu0 %v194
      %627 = vmatmul.mubr.f32.gmra.mrb[0].mxu0 %v193
      %v628 = vpop.f32.mrb[0].mxu0
      %v629 = vadd.f32 %v468, %v628
      %v630 = vpop.f32.mrb[0].mxu0
      %v631 = vadd.f32 %v470, %v630
      %632 = vmatprep.mubr.f32.mxu0 %v198
      %633 = vmatmul.mubr.f32.gmra.mrb[0].mxu0 %v197
      %v634 = vpop.f32.mrb[0].mxu0
      %v635 = vadd.f32 %v474, %v634
      %v636 = vpop.f32.mrb[0].mxu0
      %v637 = vadd.f32 %v476, %v636
      %638 = vmatprep.mubr.f32.mxu0 %v202
      %639 = vmatmul.mubr.f32.gmra.mrb[0].mxu0 %v201
      %v640 = vpop.f32.mrb[0].mxu0
      %v641 = vadd.f32 %v480, %v640
      %v642 = vpop.f32.mrb[0].mxu0
      %v643 = vadd.f32 %v482, %v642
      %644 = vmatprep.mubr.f32.mxu0 %v206
      %645 = vmatmul.mubr.f32.gmra.mrb[0].mxu0 %v205
      %v646 = vpop.f32.mrb[0].mxu0
      %v647 = vadd.f32 %v486, %v646
      %v648 = vpop.f32.mrb[0].mxu0
      %v649 = vadd.f32 %v488, %v648
      %650 = vmatprep.mubr.f32.mxu0 %v210
      %651 = vmatmul.mubr.f32.gmra.mrb[0].mxu0 %v209
      %v652 = vpop.f32.mrb[0].mxu0
      %v653 = vadd.f32 %v492, %v652
      %v654 = vpop.f32.mrb[0].mxu0
      %v655 = vadd.f32 %v494, %v654
      %656 = vmatprep.mubr.f32.mxu0 %v214
      %657 = vmatmul.mubr.f32.gmra.mrb[0].mxu0 %v213
      %v658 = vpop.f32.mrb[0].mxu0
      %v659 = vadd.f32 %v498, %v658
      %v660 = vpop.f32.mrb[0].mxu0
      %v661 = vadd.f32 %v500, %v660
      %662 = vmatprep.mubr.f32.mxu0 %v218
      %663 = vmatmul.mubr.f32.gmra.mrb[0].mxu0 %v217
      %v664 = vpop.f32.mrb[0].mxu0
      %v665 = vadd.f32 %v504, %v664
      %v666 = vpop.f32.mrb[0].mxu0
      %v667 = vadd.f32 %v506, %v666
      %668 = vmatprep.mubr.f32.mxu0 %v222
      %669 = vmatmul.mubr.f32.gmra.mrb[0].mxu0 %v221
      %v670 = vpop.f32.mrb[0].mxu0
      %v671 = vadd.f32 %v510, %v670
      %v672 = vpop.f32.mrb[0].mxu0
      %v673 = vadd.f32 %v512, %v672
      %674 = vmatprep.mubr.f32.mxu0 %v226
      %675 = vmatmul.mubr.f32.gmra.mrb[0].mxu0 %v225
      %v676 = vpop.f32.mrb[0].mxu0
      %v677 = vadd.f32 %v516, %v676
      %v678 = vpop.f32.mrb[0].mxu0
      %v679 = vadd.f32 %v518, %v678
      %680 = vmatprep.mubr.f32.mxu0 %v230
      %681 = vmatmul.mubr.f32.gmra.mrb[0].mxu0 %v229
      %v682 = vpop.f32.mrb[0].mxu0
      %v683 = vadd.f32 %v522, %v682
      %v684 = vpop.f32.mrb[0].mxu0
      %v685 = vadd.f32 %v524, %v684
      %686 = vmatprep.mubr.f32.mxu0 %v234
      %687 = vmatmul.mubr.f32.gmra.mrb[0].mxu0 %v233
      %v688 = vpop.f32.mrb[0].mxu0
      %v689 = vadd.f32 %v528, %v688
      %v690 = vpop.f32.mrb[0].mxu0
      %v691 = vadd.f32 %v530, %v690
      %692 = vmatprep.mubr.f32.mxu0 %v238
      %693 = vmatmul.mubr.f32.gmra.mrb[0].mxu0 %v237
      %v694 = vpop.f32.mrb[0].mxu0
      %v695 = vadd.f32 %v534, %v694
      %v696 = vpop.f32.mrb[0].mxu0
      %v697 = vadd.f32 %v536, %v696
      %698 = vmatprep.mubr.f32.mxu0 %v242
      %699 = vmatmul.mubr.f32.gmra.mrb[0].mxu0 %v241
      %v700 = vpop.f32.mrb[0].mxu0
      %v701 = vadd.f32 %v540, %v700
      %v702 = vpop.f32.mrb[0].mxu0
      %v703 = vadd.f32 %v542, %v702
      %704 = vdwg.mxu0
      %705 = vst [vmem:[%s177] sm:$0xff] %v611
      %706 = vst [vmem:[%s177 + $0x8] sm:$0xff] %v613
      %707 = vst [vmem:[%s177 + $0x10] sm:$0xff] %v617
      %708 = vst [vmem:[%s177 + $0x18] sm:$0xff] %v619
      %709 = vst [vmem:[%s177 + $0x20] sm:$0xff] %v623
      %710 = vst [vmem:[%s177 + $0x28] sm:$0xff] %v625
      %711 = vst [vmem:[%s177 + $0x30] sm:$0xff] %v629
      %712 = vst [vmem:[%s177 + $0x38] sm:$0xff] %v631
      %713 = vst [vmem:[%s177 + $0x40] sm:$0xff] %v635
      %714 = vst [vmem:[%s177 + $0x48] sm:$0xff] %v637
      %715 = vst [vmem:[%s177 + $0x50] sm:$0xff] %v641
      %716 = vst [vmem:[%s177 + $0x58] sm:$0xff] %v643
      %717 = vst [vmem:[%s177 + $0x60] sm:$0xff] %v647
      %718 = vst [vmem:[%s177 + $0x68] sm:$0xff] %v649
      %719 = vst [vmem:[%s177 + $0x70] sm:$0xff] %v653
      %720 = vst [vmem:[%s177 + $0x78] sm:$0xff] %v655
      %721 = vst [vmem:[%s177 + $0x80] sm:$0xff] %v659
      %722 = vst [vmem:[%s177 + $0x88] sm:$0xff] %v661
      %723 = vst [vmem:[%s177 + $0x90] sm:$0xff] %v665
      %724 = vst [vmem:[%s177 + $0x98] sm:$0xff] %v667
      %725 = vst [vmem:[%s177 + $0xa0] sm:$0xff] %v671
      %726 = vst [vmem:[%s177 + $0xa8] sm:$0xff] %v673
      %727 = vst [vmem:[%s177 + $0xb0] sm:$0xff] %v677
      %728 = vst [vmem:[%s177 + $0xb8] sm:$0xff] %v679
      %729 = vst [vmem:[%s177 + $0xc0] sm:$0xff] %v683
      %730 = vst [vmem:[%s177 + $0xc8] sm:$0xff] %v685
      %731 = vst [vmem:[%s177 + $0xd0] sm:$0xff] %v689
      %732 = vst [vmem:[%s177 + $0xd8] sm:$0xff] %v691
      %733 = vst [vmem:[%s177 + $0xe0] sm:$0xff] %v695
      %734 = vst [vmem:[%s177 + $0xe8] sm:$0xff] %v697
      %735 = vst [vmem:[%s177 + $0xf0] sm:$0xff] %v701
      %736 = vst [vmem:[%s177 + $0xf8] sm:$0xff] %v703
      %s737 = smul.u32 16, %s14
      %p738 = scmp.lt.s32.totalorder %s737, 31
      %s739 = scalar_select %p738, %s737, 31
      %s740 = smul.addr %s739, 2
      %s741 = smul.addr %s740, 8
      %s742 = scalar_lea.vmem %s3, %s741
      // Predicated region
      $region33: #{_lambda_.18} parent=31 // pred_check
        %p743 = pneg %p100
      $region34: #{_lambda_.18} parent=31 // pred_check_branch
        %745 = sbr.rel (%p743) target = $region36
      $region35: #{_lambda_.18} parent=31 // pred_region
        %s746 = smul.u32 16, %s14
      $region36: #{_lambda_.18} parent=31 // pred_fallthru
        _
    $region32: #{_lambda_.18} parent=5 // pred_fallthru
      _
    %p747 = scmp.le.s32.totalorder 2, %s9
    // Predicated region
    $region37: #{_lambda_.18} parent=5 // pred_check
      %p748 = pneg %p747
    $region38: #{_lambda_.18} parent=5 // pred_check_branch
      %750 = sbr.rel (%p748) target = $region40
    $region39: #{_lambda_.18} parent=5 // pred_region
      %s751 = ssub.s32 %s9, 2
      // Predicated region
      $region41: #{_lambda_.18} parent=39 // pred_check
        %p752 = pneg %p106
      $region42: #{_lambda_.18} parent=39 // pred_check_branch
        %754 = sbr.rel (%p752) target = $region44
      $region43: #{_lambda_.18} parent=39 // pred_region
        %s755 = smul.u32 16, %s15
        %p756 = scmp.lt.s32.totalorder %s755, 31
        %s757 = scalar_select %p756, %s755, 31
        %s758 = smul.addr %s757, 2
        %s759 = smul.addr %s758, 8
        %s760 = scalar_lea.vmem %s3, %s759
      $region44: #{_lambda_.18} parent=39 // pred_fallthru
        _
    $region40: #{_lambda_.18} parent=5 // pred_fallthru
      _
  $region6: #{_lambda_.18} parent=0 // loop_footer
    %s13 = sadd.s32 1, %s9
  $region7: #{_lambda_.18} parent=0 // loop_footer_branch
    %8 = sbr.rel target = $region3
  $region8: #{_lambda_.18} parent=0 // loop_exit
    _

// kernel: _lambda_.17
$region0: #{_lambda_.17}
  #allocation0 [shape = 'u32[]', space=smem, size = 0x4, offset = 0x4, fixed_abs, tag = 'smem constant byte address 0x4 - core index']
  #allocation1 [shape = 'u32[144,128]{1,0:T(1,128)}', space=vmem, size = 0x12000, scoped, tag = 'internal scratch']
  %s0 = inlined_call_operand.vmem [shape: f32[256,256], index: 0, kind: input, shape index: {}]
  %s1 = inlined_call_operand.vmem [shape: f32[256,1024], index: 1, kind: input, shape index: {}]
  %s2 = inlined_call_operand.vmem [shape: f32[1,1024], index: 2, kind: input, shape index: {}]
  %s3 = inlined_call_operand.vmem [shape: f32[256,512], index: 3, kind: output, shape index: {}]
  %s4 = sld [smem:[#allocation0]]
  $region45: #{_lambda_.17} parent=0
    _
  %s6 = ssub.s32 1, %s4
  %s7 = scalar_select 0, %s6, %s4
  loop: start=0, step=1, limit=4
  $region2: #{_lambda_.17} parent=0 // loop_pre_header
    _
  $region3: #{_lambda_.17} parent=0 // loop_header
    %s9 = sphi 0, %s13
    %p10 = scmp.ge.s32.totalorder %s9, 4
    %s19 = sphi 0, %s21
    %s22 = sphi 0, %s19
    %s23 = sphi 0, %s22
    %s39 = sphi 0, %s23
    %s43 = sphi 0, %s43
    %s45 = sphi 0, %s43
    %s46 = sphi 0, %s45
    %s60 = sphi 0, %s46
    %s64 = sphi 0, %s64
    %s66 = sphi 0, %s64
    %s67 = sphi 0, %s66
    %s81 = sphi 0, %s67
    %s87 = sphi 0, %s89
    %s90 = sphi 0, %s87
    %s91 = sphi 0, %s90
    %s107 = sphi 0, %s91
  $region4: #{_lambda_.17} parent=0 // loop_header_branch
    %12 = sbr.rel (%p10) target = $region8
  $region5: #{_lambda_.17} parent=0 // loop_body
    %s14 = ssub.s32 %s9, 1
    %s15 = ssub.s32 %s9, 2
    %s16 = sadd.s32 %s9, 1
    %s17 = ssub.s32 %s9, %s16
    %p18 = scmp.eq.s32.totalorder %s17, 0
    %s20 = sadd.s32 %s19, 1
    %s21 = scalar_select %p18, %s19, %s20
    %p24 = pneg %p18
    %p25 = scmp.eq.s32.totalorder %s9, 1
    %p26 = por %p24, %p25
    %p27 = scmp.ne.s32.totalorder %s19, %s22
    %p28 = scmp.eq.s32.totalorder %s9, 0
    %p29 = por %p27, %p28
    %p30 = scmp.ne.s32.totalorder %s19, %s22
    %p31 = scmp.eq.s32.totalorder %s14, 1
    %p32 = por %p30, %p31
    %p33 = scmp.ne.s32.totalorder %s22, %s23
    %p34 = scmp.eq.s32.totalorder %s14, 0
    %p35 = por %p33, %p34
    %p36 = scmp.ne.s32.totalorder %s22, %s23
    %p37 = scmp.eq.s32.totalorder %s15, 1
    %p38 = por %p36, %p37
    %p40 = scmp.ne.s32.totalorder %s23, %s39
    %p41 = scmp.eq.s32.totalorder %s15, 0
    %p42 = por %p40, %p41
    %s44 = sadd.s32 %s43, 1
    %p47 = scmp.eq.s32.totalorder %s9, 1
    %p48 = scmp.ne.s32.totalorder %s43, %s45
    %p49 = scmp.eq.s32.totalorder %s9, 0
    %p50 = por %p48, %p49
    %p51 = scmp.ne.s32.totalorder %s43, %s45
    %p52 = scmp.eq.s32.totalorder %s14, 1
    %p53 = por %p51, %p52
    %p54 = scmp.ne.s32.totalorder %s45, %s46
    %p55 = scmp.eq.s32.totalorder %s14, 0
    %p56 = por %p54, %p55
    %p57 = scmp.ne.s32.totalorder %s45, %s46
    %p58 = scmp.eq.s32.totalorder %s15, 1
    %p59 = por %p57, %p58
    %p61 = scmp.ne.s32.totalorder %s46, %s60
    %p62 = scmp.eq.s32.totalorder %s15, 0
    %p63 = por %p61, %p62
    %s65 = sadd.s32 %s64, 1
    %p68 = scmp.eq.s32.totalorder %s9, 1
    %p69 = scmp.ne.s32.totalorder %s64, %s66
    %p70 = scmp.eq.s32.totalorder %s9, 0
    %p71 = por %p69, %p70
    %p72 = scmp.ne.s32.totalorder %s64, %s66
    %p73 = scmp.eq.s32.totalorder %s14, 1
    %p74 = por %p72, %p73
    %p75 = scmp.ne.s32.totalorder %s66, %s67
    %p76 = scmp.eq.s32.totalorder %s14, 0
    %p77 = por %p75, %p76
    %p78 = scmp.ne.s32.totalorder %s66, %s67
    %p79 = scmp.eq.s32.totalorder %s15, 1
    %p80 = por %p78, %p79
    %p82 = scmp.ne.s32.totalorder %s67, %s81
    %p83 = scmp.eq.s32.totalorder %s15, 0
    %p84 = por %p82, %p83
    %s85 = ssub.s32 %s9, %s16
    %p86 = scmp.eq.s32.totalorder %s85, 0
    %s88 = sadd.s32 %s87, 1
    %s89 = scalar_select %p86, %s87, %s88
    %p92 = pneg %p86
    %p93 = scmp.eq.s32.totalorder %s9, 1
    %p94 = por %p92, %p93
    %p95 = scmp.ne.s32.totalorder %s87, %s90
    %p96 = scmp.eq.s32.totalorder %s9, 0
    %p97 = por %p95, %p96
    %p98 = scmp.ne.s32.totalorder %s87, %s90
    %p99 = scmp.eq.s32.totalorder %s14, 1
    %p100 = por %p98, %p99
    %p101 = scmp.ne.s32.totalorder %s90, %s91
    %p102 = scmp.eq.s32.totalorder %s14, 0
    %p103 = por %p101, %p102
    %p104 = scmp.ne.s32.totalorder %s90, %s91
    %p105 = scmp.eq.s32.totalorder %s15, 1
    %p106 = por %p104, %p105
    %p108 = scmp.ne.s32.totalorder %s91, %s107
    %p109 = scmp.eq.s32.totalorder %s15, 0
    %p110 = por %p108, %p109
    %p111 = scmp.le.s32.totalorder 1, %s9
    %p112 = scmp.lt.s32.totalorder %s9, 3
    %p113 = pnand %p111, %p112
    %p114 = pneg %p113
    // Predicated region
    $region9: #{_lambda_.17} parent=5 // pred_check
      _
    $region10: #{_lambda_.17} parent=5 // pred_check_branch
      %116 = sbr.rel (%p113) target = $region12
    $region11: #{_lambda_.17} parent=5 // pred_region
      %s117 = ssub.s32 %s9, 1
      // Predicated region
      $region13: #{_lambda_.17} parent=11 // pred_check
        %p118 = pneg %p56
      $region14: #{_lambda_.17} parent=11 // pred_check_branch
        %120 = sbr.rel (%p118) target = $region16
      $region15: #{_lambda_.17} parent=11 // pred_region
        _
      $region16: #{_lambda_.17} parent=11 // pred_fallthru
        _
      // Predicated region
      $region17: #{_lambda_.17} parent=11 // pred_check
        %p121 = pneg %p77
      $region18: #{_lambda_.17} parent=11 // pred_check_branch
        %123 = sbr.rel (%p121) target = $region20
      $region19: #{_lambda_.17} parent=11 // pred_region
        _
      $region20: #{_lambda_.17} parent=11 // pred_fallthru
        _
    $region12: #{_lambda_.17} parent=5 // pred_fallthru
      _
    %p124 = scmp.lt.s32.totalorder %s9, 2
    // Predicated region
    $region21: #{_lambda_.17} parent=5 // pred_check
      %p125 = pneg %p124
    $region22: #{_lambda_.17} parent=5 // pred_check_branch
      %127 = sbr.rel (%p125) target = $region24
    $region23: #{_lambda_.17} parent=5 // pred_region
      // Predicated region
      $region25: #{_lambda_.17} parent=23 // pred_check
        %p128 = pneg %p29
      $region26: #{_lambda_.17} parent=23 // pred_check_branch
        %130 = sbr.rel (%p128) target = $region28
      $region27: #{_lambda_.17} parent=23 // pred_region
        %s131 = smul.u32 16, %s9
        %p132 = scmp.lt.s32.totalorder %s131, 31
        %s133 = scalar_select %p132, %s131, 31
        %s134 = smul.addr %s133, 2
        %s135 = smul.addr %s134, 8
        %s136 = scalar_lea.vmem %s0, %s135
        %s137 = smul.u32 16, %s9
      $region28: #{_lambda_.17} parent=23 // pred_fallthru
        _
    $region24: #{_lambda_.17} parent=5 // pred_fallthru
      _
    %p138 = scmp.le.s32.totalorder 1, %s9
    %p139 = scmp.lt.s32.totalorder %s9, 3
    %p140 = pnand %p138, %p139
    %p141 = pneg %p140
    // Predicated region
    $region29: #{_lambda_.17} parent=5 // pred_check
      _
    $region30: #{_lambda_.17} parent=5 // pred_check_branch
      %143 = sbr.rel (%p140) target = $region32
    $region31: #{_lambda_.17} parent=5 // pred_region
      %s144 = ssub.s32 %s9, 1
      %s145 = smul.u32 16, %s14
      %p146 = scmp.lt.s32.totalorder %s145, 31
      %s147 = scalar_select %p146, %s145, 31
      %s148 = smul.addr %s147, 2
      %s149 = smul.addr %s148, 8
      %s150 = scalar_lea.vmem %s0, %s149
      %p151 = pneg %p35
      %p152 = pneg %p32
      %p153 = pneg %p56
      %p154 = pneg %p53
      %p155 = pneg %p77
      %p156 = pneg %p74
      %p157 = pneg %p103
      %p158 = pneg %p100
      %s159 = smul.u32 16, %s14
      %p160 = scmp.lt.s32.totalorder %s159, 31
      %s161 = scalar_select %p160, %s159, 31
      %s162 = smul.addr %s161, 4
      %s163 = smul.addr %s162, 8
      %s164 = scalar_lea.vmem %s3, %s163
      %s165 = smul.u32 16, %s14
      %p166 = scmp.lt.s32.totalorder %s165, 31
      %s167 = scalar_select %p166, %s165, 31
      %s168 = smul.addr %s167, 2
      %s169 = smul.addr %s168, 8
      %s170 = scalar_lea.vmem %s0, %s169
      %s171 = smul.u32 16, %s14
      %s172 = smul.u32 16, %s14
      %p173 = scmp.lt.s32.totalorder %s172, 31
      %s174 = scalar_select %p173, %s172, 31
      %s175 = smul.addr %s174, 4
      %s176 = smul.addr %s175, 8
      %s177 = scalar_lea.vmem %s3, %s176
      %s178 = smul.u32 16, %s14
      %v179 = vld [vmem:[%s170] sm:$0xff]
      %v180 = vld [vmem:[%s170 + $0x8] sm:$0xff]
      %v181 = vld [vmem:[%s170 + $0x10] sm:$0xff]
      %v182 = vld [vmem:[%s170 + $0x18] sm:$0xff]
      %v183 = vld [vmem:[%s170 + $0x20] sm:$0xff]
      %v184 = vld [vmem:[%s170 + $0x28] sm:$0xff]
      %v185 = vld [vmem:[%s170 + $0x30] sm:$0xff]
      %v186 = vld [vmem:[%s170 + $0x38] sm:$0xff]
      %v187 = vld [vmem:[%s170 + $0x40] sm:$0xff]
      %v188 = vld [vmem:[%s170 + $0x48] sm:$0xff]
      %v189 = vld [vmem:[%s170 + $0x50] sm:$0xff]
      %v190 = vld [vmem:[%s170 + $0x58] sm:$0xff]
      %v191 = vld [vmem:[%s170 + $0x60] sm:$0xff]
      %v192 = vld [vmem:[%s170 + $0x68] sm:$0xff]
      %v193 = vld [vmem:[%s170 + $0x70] sm:$0xff]
      %v194 = vld [vmem:[%s170 + $0x78] sm:$0xff]
      %v195 = vld [vmem:[%s170 + $0x80] sm:$0xff]
      %v196 = vld [vmem:[%s170 + $0x88] sm:$0xff]
      %v197 = vld [vmem:[%s170 + $0x90] sm:$0xff]
      %v198 = vld [vmem:[%s170 + $0x98] sm:$0xff]
      %v199 = vld [vmem:[%s170 + $0xa0] sm:$0xff]
      %v200 = vld [vmem:[%s170 + $0xa8] sm:$0xff]
      %v201 = vld [vmem:[%s170 + $0xb0] sm:$0xff]
      %v202 = vld [vmem:[%s170 + $0xb8] sm:$0xff]
      %v203 = vld [vmem:[%s170 + $0xc0] sm:$0xff]
      %v204 = vld [vmem:[%s170 + $0xc8] sm:$0xff]
      %v205 = vld [vmem:[%s170 + $0xd0] sm:$0xff]
      %v206 = vld [vmem:[%s170 + $0xd8] sm:$0xff]
      %v207 = vld [vmem:[%s170 + $0xe0] sm:$0xff]
      %v208 = vld [vmem:[%s170 + $0xe8] sm:$0xff]
      %v209 = vld [vmem:[%s170 + $0xf0] sm:$0xff]
      %v210 = vld [vmem:[%s170 + $0xf8] sm:$0xff]
      %v211 = vld [vmem:[%s1] sm:$0xff]
      %v212 = vld [vmem:[%s1 + $0x8] sm:$0xff]
      %v213 = vld [vmem:[%s1 + $0x10] sm:$0xff]
      %v214 = vld [vmem:[%s1 + $0x18] sm:$0xff]
      %v215 = vld [vmem:[%s1 + $0x20] sm:$0xff]
      %v216 = vld [vmem:[%s1 + $0x28] sm:$0xff]
      %v217 = vld [vmem:[%s1 + $0x30] sm:$0xff]
      %v218 = vld [vmem:[%s1 + $0x38] sm:$0xff]
      %v219 = vld [vmem:[%s1 + $0x40] sm:$0xff]
      %v220 = vld [vmem:[%s1 + $0x48] sm:$0xff]
      %v221 = vld [vmem:[%s1 + $0x50] sm:$0xff]
      %v222 = vld [vmem:[%s1 + $0x58] sm:$0xff]
      %v223 = vld [vmem:[%s1 + $0x60] sm:$0xff]
      %v224 = vld [vmem:[%s1 + $0x68] sm:$0xff]
      %v225 = vld [vmem:[%s1 + $0x70] sm:$0xff]
      %v226 = vld [vmem:[%s1 + $0x78] sm:$0xff]
      %v227 = vld [vmem:[%s1 + $0x80] sm:$0xff]
      %v228 = vld [vmem:[%s1 + $0x88] sm:$0xff]
      %v229 = vld [vmem:[%s1 + $0x90] sm:$0xff]
      %v230 = vld [vmem:[%s1 + $0x98] sm:$0xff]
      %v231 = vld [vmem:[%s1 + $0xa0] sm:$0xff]
      %v232 = vld [vmem:[%s1 + $0xa8] sm:$0xff]
      %v233 = vld [vmem:[%s1 + $0xb0] sm:$0xff]
      %v234 = vld [vmem:[%s1 + $0xb8] sm:$0xff]
      %v235 = vld [vmem:[%s1 + $0xc0] sm:$0xff]
      %v236 = vld [vmem:[%s1 + $0xc8] sm:$0xff]
      %v237 = vld [vmem:[%s1 + $0xd0] sm:$0xff]
      %v238 = vld [vmem:[%s1 + $0xd8] sm:$0xff]
      %v239 = vld [vmem:[%s1 + $0xe0] sm:$0xff]
      %v240 = vld [vmem:[%s1 + $0xe8] sm:$0xff]
      %v241 = vld [vmem:[%s1 + $0xf0] sm:$0xff]
      %v242 = vld [vmem:[%s1 + $0xf8] sm:$0xff]
      %v243 = vld [vmem:[%s1 + $0x100] sm:$0xff]
      %v244 = vld [vmem:[%s1 + $0x108] sm:$0xff]
      %v245 = vld [vmem:[%s1 + $0x110] sm:$0xff]
      %v246 = vld [vmem:[%s1 + $0x118] sm:$0xff]
      %v247 = vld [vmem:[%s1 + $0x120] sm:$0xff]
      %v248 = vld [vmem:[%s1 + $0x128] sm:$0xff]
      %v249 = vld [vmem:[%s1 + $0x130] sm:$0xff]
      %v250 = vld [vmem:[%s1 + $0x138] sm:$0xff]
      %v251 = vld [vmem:[%s1 + $0x140] sm:$0xff]
      %v252 = vld [vmem:[%s1 + $0x148] sm:$0xff]
      %v253 = vld [vmem:[%s1 + $0x150] sm:$0xff]
      %v254 = vld [vmem:[%s1 + $0x158] sm:$0xff]
      %v255 = vld [vmem:[%s1 + $0x160] sm:$0xff]
      %v256 = vld [vmem:[%s1 + $0x168] sm:$0xff]
      %v257 = vld [vmem:[%s1 + $0x170] sm:$0xff]
      %v258 = vld [vmem:[%s1 + $0x178] sm:$0xff]
      %v259 = vld [vmem:[%s1 + $0x180] sm:$0xff]
      %v260 = vld [vmem:[%s1 + $0x188] sm:$0xff]
      %v261 = vld [vmem:[%s1 + $0x190] sm:$0xff]
      %v262 = vld [vmem:[%s1 + $0x198] sm:$0xff]
      %v263 = vld [vmem:[%s1 + $0x1a0] sm:$0xff]
      %v264 = vld [vmem:[%s1 + $0x1a8] sm:$0xff]
      %v265 = vld [vmem:[%s1 + $0x1b0] sm:$0xff]
      %v266 = vld [vmem:[%s1 + $0x1b8] sm:$0xff]
      %v267 = vld [vmem:[%s1 + $0x1c0] sm:$0xff]
      %v268 = vld [vmem:[%s1 + $0x1c8] sm:$0xff]
      %v269 = vld [vmem:[%s1 + $0x1d0] sm:$0xff]
      %v270 = vld [vmem:[%s1 + $0x1d8] sm:$0xff]
      %v271 = vld [vmem:[%s1 + $0x1e0] sm:$0xff]
      %v272 = vld [vmem:[%s1 + $0x1e8] sm:$0xff]
      %v273 = vld [vmem:[%s1 + $0x1f0] sm:$0xff]
      %v274 = vld [vmem:[%s1 + $0x1f8] sm:$0xff]
      %v275 = vld [vmem:[%s1 + $0x200] sm:$0xff]
      %v276 = vld [vmem:[%s1 + $0x208] sm:$0xff]
      %v277 = vld [vmem:[%s1 + $0x210] sm:$0xff]
      %v278 = vld [vmem:[%s1 + $0x218] sm:$0xff]
      %v279 = vld [vmem:[%s1 + $0x220] sm:$0xff]
      %v280 = vld [vmem:[%s1 + $0x228] sm:$0xff]
      %v281 = vld [vmem:[%s1 + $0x230] sm:$0xff]
      %v282 = vld [vmem:[%s1 + $0x238] sm:$0xff]
      %v283 = vld [vmem:[%s1 + $0x240] sm:$0xff]
      %v284 = vld [vmem:[%s1 + $0x248] sm:$0xff]
      %v285 = vld [vmem:[%s1 + $0x250] sm:$0xff]
      %v286 = vld [vmem:[%s1 + $0x258] sm:$0xff]
      %v287 = vld [vmem:[%s1 + $0x260] sm:$0xff]
      %v288 = vld [vmem:[%s1 + $0x268] sm:$0xff]
      %v289 = vld [vmem:[%s1 + $0x270] sm:$0xff]
      %v290 = vld [vmem:[%s1 + $0x278] sm:$0xff]
      %v291 = vld [vmem:[%s1 + $0x280] sm:$0xff]
      %v292 = vld [vmem:[%s1 + $0x288] sm:$0xff]
      %v293 = vld [vmem:[%s1 + $0x290] sm:$0xff]
      %v294 = vld [vmem:[%s1 + $0x298] sm:$0xff]
      %v295 = vld [vmem:[%s1 + $0x2a0] sm:$0xff]
      %v296 = vld [vmem:[%s1 + $0x2a8] sm:$0xff]
      %v297 = vld [vmem:[%s1 + $0x2b0] sm:$0xff]
      %v298 = vld [vmem:[%s1 + $0x2b8] sm:$0xff]
      %v299 = vld [vmem:[%s1 + $0x2c0] sm:$0xff]
      %v300 = vld [vmem:[%s1 + $0x2c8] sm:$0xff]
      %v301 = vld [vmem:[%s1 + $0x2d0] sm:$0xff]
      %v302 = vld [vmem:[%s1 + $0x2d8] sm:$0xff]
      %v303 = vld [vmem:[%s1 + $0x2e0] sm:$0xff]
      %v304 = vld [vmem:[%s1 + $0x2e8] sm:$0xff]
      %v305 = vld [vmem:[%s1 + $0x2f0] sm:$0xff]
      %v306 = vld [vmem:[%s1 + $0x2f8] sm:$0xff]
      %v307 = vld [vmem:[%s1 + $0x300] sm:$0xff]
      %v308 = vld [vmem:[%s1 + $0x308] sm:$0xff]
      %v309 = vld [vmem:[%s1 + $0x310] sm:$0xff]
      %v310 = vld [vmem:[%s1 + $0x318] sm:$0xff]
      %v311 = vld [vmem:[%s1 + $0x320] sm:$0xff]
      %v312 = vld [vmem:[%s1 + $0x328] sm:$0xff]
      %v313 = vld [vmem:[%s1 + $0x330] sm:$0xff]
      %v314 = vld [vmem:[%s1 + $0x338] sm:$0xff]
      %v315 = vld [vmem:[%s1 + $0x340] sm:$0xff]
      %v316 = vld [vmem:[%s1 + $0x348] sm:$0xff]
      %v317 = vld [vmem:[%s1 + $0x350] sm:$0xff]
      %v318 = vld [vmem:[%s1 + $0x358] sm:$0xff]
      %v319 = vld [vmem:[%s1 + $0x360] sm:$0xff]
      %v320 = vld [vmem:[%s1 + $0x368] sm:$0xff]
      %v321 = vld [vmem:[%s1 + $0x370] sm:$0xff]
      %v322 = vld [vmem:[%s1 + $0x378] sm:$0xff]
      %v323 = vld [vmem:[%s1 + $0x380] sm:$0xff]
      %v324 = vld [vmem:[%s1 + $0x388] sm:$0xff]
      %v325 = vld [vmem:[%s1 + $0x390] sm:$0xff]
      %v326 = vld [vmem:[%s1 + $0x398] sm:$0xff]
      %v327 = vld [vmem:[%s1 + $0x3a0] sm:$0xff]
      %v328 = vld [vmem:[%s1 + $0x3a8] sm:$0xff]
      %v329 = vld [vmem:[%s1 + $0x3b0] sm:$0xff]
      %v330 = vld [vmem:[%s1 + $0x3b8] sm:$0xff]
      %v331 = vld [vmem:[%s1 + $0x3c0] sm:$0xff]
      %v332 = vld [vmem:[%s1 + $0x3c8] sm:$0xff]
      %v333 = vld [vmem:[%s1 + $0x3d0] sm:$0xff]
      %v334 = vld [vmem:[%s1 + $0x3d8] sm:$0xff]
      %v335 = vld [vmem:[%s1 + $0x3e0] sm:$0xff]
      %v336 = vld [vmem:[%s1 + $0x3e8] sm:$0xff]
      %v337 = vld [vmem:[%s1 + $0x3f0] sm:$0xff]
      %v338 = vld [vmem:[%s1 + $0x3f8] sm:$0xff]
      %v339 = vld [vmem:[%s1 + $0x400] sm:$0xff]
      %v340 = vld [vmem:[%s1 + $0x408] sm:$0xff]
      %v341 = vld [vmem:[%s1 + $0x410] sm:$0xff]
      %v342 = vld [vmem:[%s1 + $0x418] sm:$0xff]
      %v343 = vld [vmem:[%s1 + $0x420] sm:$0xff]
      %v344 = vld [vmem:[%s1 + $0x428] sm:$0xff]
      %v345 = vld [vmem:[%s1 + $0x430] sm:$0xff]
      %v346 = vld [vmem:[%s1 + $0x438] sm:$0xff]
      %v347 = vld [vmem:[%s1 + $0x440] sm:$0xff]
      %v348 = vld [vmem:[%s1 + $0x448] sm:$0xff]
      %v349 = vld [vmem:[%s1 + $0x450] sm:$0xff]
      %v350 = vld [vmem:[%s1 + $0x458] sm:$0xff]
      %v351 = vld [vmem:[%s1 + $0x460] sm:$0xff]
      %v352 = vld [vmem:[%s1 + $0x468] sm:$0xff]
      %v353 = vld [vmem:[%s1 + $0x470] sm:$0xff]
      %v354 = vld [vmem:[%s1 + $0x478] sm:$0xff]
      %v355 = vld [vmem:[%s1 + $0x480] sm:$0xff]
      %v356 = vld [vmem:[%s1 + $0x488] sm:$0xff]
      %v357 = vld [vmem:[%s1 + $0x490] sm:$0xff]
      %v358 = vld [vmem:[%s1 + $0x498] sm:$0xff]
      %v359 = vld [vmem:[%s1 + $0x4a0] sm:$0xff]
      %v360 = vld [vmem:[%s1 + $0x4a8] sm:$0xff]
      %v361 = vld [vmem:[%s1 + $0x4b0] sm:$0xff]
      %v362 = vld [vmem:[%s1 + $0x4b8] sm:$0xff]
      %v363 = vld [vmem:[%s1 + $0x4c0] sm:$0xff]
      %v364 = vld [vmem:[%s1 + $0x4c8] sm:$0xff]
      %v365 = vld [vmem:[%s1 + $0x4d0] sm:$0xff]
      %v366 = vld [vmem:[%s1 + $0x4d8] sm:$0xff]
      %v367 = vld [vmem:[%s1 + $0x4e0] sm:$0xff]
      %v368 = vld [vmem:[%s1 + $0x4e8] sm:$0xff]
      %v369 = vld [vmem:[%s1 + $0x4f0] sm:$0xff]
      %v370 = vld [vmem:[%s1 + $0x4f8] sm:$0xff]
      %v371 = vld [vmem:[%s1 + $0x500] sm:$0xff]
      %v372 = vld [vmem:[%s1 + $0x508] sm:$0xff]
      %v373 = vld [vmem:[%s1 + $0x510] sm:$0xff]
      %v374 = vld [vmem:[%s1 + $0x518] sm:$0xff]
      %v375 = vld [vmem:[%s1 + $0x520] sm:$0xff]
      %v376 = vld [vmem:[%s1 + $0x528] sm:$0xff]
      %v377 = vld [vmem:[%s1 + $0x530] sm:$0xff]
      %v378 = vld [vmem:[%s1 + $0x538] sm:$0xff]
      %v379 = vld [vmem:[%s1 + $0x540] sm:$0xff]
      %v380 = vld [vmem:[%s1 + $0x548] sm:$0xff]
      %v381 = vld [vmem:[%s1 + $0x550] sm:$0xff]
      %v382 = vld [vmem:[%s1 + $0x558] sm:$0xff]
      %v383 = vld [vmem:[%s1 + $0x560] sm:$0xff]
      %v384 = vld [vmem:[%s1 + $0x568] sm:$0xff]
      %v385 = vld [vmem:[%s1 + $0x570] sm:$0xff]
      %v386 = vld [vmem:[%s1 + $0x578] sm:$0xff]
      %v387 = vld [vmem:[%s1 + $0x580] sm:$0xff]
      %v388 = vld [vmem:[%s1 + $0x588] sm:$0xff]
      %v389 = vld [vmem:[%s1 + $0x590] sm:$0xff]
      %v390 = vld [vmem:[%s1 + $0x598] sm:$0xff]
      %v391 = vld [vmem:[%s1 + $0x5a0] sm:$0xff]
      %v392 = vld [vmem:[%s1 + $0x5a8] sm:$0xff]
      %v393 = vld [vmem:[%s1 + $0x5b0] sm:$0xff]
      %v394 = vld [vmem:[%s1 + $0x5b8] sm:$0xff]
      %v395 = vld [vmem:[%s1 + $0x5c0] sm:$0xff]
      %v396 = vld [vmem:[%s1 + $0x5c8] sm:$0xff]
      %v397 = vld [vmem:[%s1 + $0x5d0] sm:$0xff]
      %v398 = vld [vmem:[%s1 + $0x5d8] sm:$0xff]
      %v399 = vld [vmem:[%s1 + $0x5e0] sm:$0xff]
      %v400 = vld [vmem:[%s1 + $0x5e8] sm:$0xff]
      %v401 = vld [vmem:[%s1 + $0x5f0] sm:$0xff]
      %v402 = vld [vmem:[%s1 + $0x5f8] sm:$0xff]
      %v403 = vld [vmem:[%s1 + $0x600] sm:$0xff]
      %v404 = vld [vmem:[%s1 + $0x608] sm:$0xff]
      %v405 = vld [vmem:[%s1 + $0x610] sm:$0xff]
      %v406 = vld [vmem:[%s1 + $0x618] sm:$0xff]
      %v407 = vld [vmem:[%s1 + $0x620] sm:$0xff]
      %v408 = vld [vmem:[%s1 + $0x628] sm:$0xff]
      %v409 = vld [vmem:[%s1 + $0x630] sm:$0xff]
      %v410 = vld [vmem:[%s1 + $0x638] sm:$0xff]
      %v411 = vld [vmem:[%s1 + $0x640] sm:$0xff]
      %v412 = vld [vmem:[%s1 + $0x648] sm:$0xff]
      %v413 = vld [vmem:[%s1 + $0x650] sm:$0xff]
      %v414 = vld [vmem:[%s1 + $0x658] sm:$0xff]
      %v415 = vld [vmem:[%s1 + $0x660] sm:$0xff]
      %v416 = vld [vmem:[%s1 + $0x668] sm:$0xff]
      %v417 = vld [vmem:[%s1 + $0x670] sm:$0xff]
      %v418 = vld [vmem:[%s1 + $0x678] sm:$0xff]
      %v419 = vld [vmem:[%s1 + $0x680] sm:$0xff]
      %v420 = vld [vmem:[%s1 + $0x688] sm:$0xff]
      %v421 = vld [vmem:[%s1 + $0x690] sm:$0xff]
      %v422 = vld [vmem:[%s1 + $0x698] sm:$0xff]
      %v423 = vld [vmem:[%s1 + $0x6a0] sm:$0xff]
      %v424 = vld [vmem:[%s1 + $0x6a8] sm:$0xff]
      %v425 = vld [vmem:[%s1 + $0x6b0] sm:$0xff]
      %v426 = vld [vmem:[%s1 + $0x6b8] sm:$0xff]
      %v427 = vld [vmem:[%s1 + $0x6c0] sm:$0xff]
      %v428 = vld [vmem:[%s1 + $0x6c8] sm:$0xff]
      %v429 = vld [vmem:[%s1 + $0x6d0] sm:$0xff]
      %v430 = vld [vmem:[%s1 + $0x6d8] sm:$0xff]
      %v431 = vld [vmem:[%s1 + $0x6e0] sm:$0xff]
      %v432 = vld [vmem:[%s1 + $0x6e8] sm:$0xff]
      %v433 = vld [vmem:[%s1 + $0x6f0] sm:$0xff]
      %v434 = vld [vmem:[%s1 + $0x6f8] sm:$0xff]
      %v435 = vld [vmem:[%s1 + $0x700] sm:$0xff]
      %v436 = vld [vmem:[%s1 + $0x708] sm:$0xff]
      %v437 = vld [vmem:[%s1 + $0x710] sm:$0xff]
      %v438 = vld [vmem:[%s1 + $0x718] sm:$0xff]
      %v439 = vld [vmem:[%s1 + $0x720] sm:$0xff]
      %v440 = vld [vmem:[%s1 + $0x728] sm:$0xff]
      %v441 = vld [vmem:[%s1 + $0x730] sm:$0xff]
      %v442 = vld [vmem:[%s1 + $0x738] sm:$0xff]
      %v443 = vld [vmem:[%s1 + $0x740] sm:$0xff]
      %v444 = vld [vmem:[%s1 + $0x748] sm:$0xff]
      %v445 = vld [vmem:[%s1 + $0x750] sm:$0xff]
      %v446 = vld [vmem:[%s1 + $0x758] sm:$0xff]
      %v447 = vld [vmem:[%s1 + $0x760] sm:$0xff]
      %v448 = vld [vmem:[%s1 + $0x768] sm:$0xff]
      %v449 = vld [vmem:[%s1 + $0x770] sm:$0xff]
      %v450 = vld [vmem:[%s1 + $0x778] sm:$0xff]
      %v451 = vld [vmem:[%s1 + $0x780] sm:$0xff]
      %v452 = vld [vmem:[%s1 + $0x788] sm:$0xff]
      %v453 = vld [vmem:[%s1 + $0x790] sm:$0xff]
      %v454 = vld [vmem:[%s1 + $0x798] sm:$0xff]
      %v455 = vld [vmem:[%s1 + $0x7a0] sm:$0xff]
      %v456 = vld [vmem:[%s1 + $0x7a8] sm:$0xff]
      %v457 = vld [vmem:[%s1 + $0x7b0] sm:$0xff]
      %v458 = vld [vmem:[%s1 + $0x7b8] sm:$0xff]
      %v459 = vld [vmem:[%s1 + $0x7c0] sm:$0xff]
      %v460 = vld [vmem:[%s1 + $0x7c8] sm:$0xff]
      %v461 = vld [vmem:[%s1 + $0x7d0] sm:$0xff]
      %v462 = vld [vmem:[%s1 + $0x7d8] sm:$0xff]
      %v463 = vld [vmem:[%s1 + $0x7e0] sm:$0xff]
      %v464 = vld [vmem:[%s1 + $0x7e8] sm:$0xff]
      %v465 = vld [vmem:[%s1 + $0x7f0] sm:$0xff]
      %v466 = vld [vmem:[%s1 + $0x7f8] sm:$0xff]
      %v467 = vld [vmem:[%s2] sm:$0xff]
      %v469 = vlaneseq
      %v470 = vshrl.u32 %v469, 7
      %v471 = vsub.s32 0, %v470
      %v472 = vrot.slane %v467, %v471
      %v473 = vlaneseq
      %v474 = vshrl.u32 %v473, 7
      %v475 = vsub.s32 1, %v474
      %v476 = vrot.slane %v467, %v475
      %v477 = vlaneseq
      %v478 = vshrl.u32 %v477, 7
      %v479 = vsub.s32 2, %v478
      %v480 = vrot.slane %v467, %v479
      %v481 = vlaneseq
      %v482 = vshrl.u32 %v481, 7
      %v483 = vsub.s32 3, %v482
      %v484 = vrot.slane %v467, %v483
      %v485 = vlaneseq
      %v486 = vshrl.u32 %v485, 7
      %v487 = vsub.s32 4, %v486
      %v488 = vrot.slane %v467, %v487
      %v489 = vlaneseq
      %v490 = vshrl.u32 %v489, 7
      %v491 = vsub.s32 5, %v490
      %v492 = vrot.slane %v467, %v491
      %v493 = vlaneseq
      %v494 = vshrl.u32 %v493, 7
      %v495 = vsub.s32 6, %v494
      %v496 = vrot.slane %v467, %v495
      %v497 = vlaneseq
      %v498 = vshrl.u32 %v497, 7
      %v499 = vsub.s32 7, %v498
      %v500 = vrot.slane %v467, %v499
      %509 = vmatprep.subr.mxu0 %v212
      %510 = vmatpush1.msra.mxu0 %v211
      %511 = vmatprep.subr.mxu0 %v220
      %512 = vmatpush1.msra.mxu0 %v219
      %513 = vmatprep.subr.mxu0 %v228
      %514 = vmatpush1.msra.mxu0 %v227
      %515 = vmatprep.subr.mxu0 %v236
      %516 = vmatpush1.msra.mxu0 %v235
      %517 = vmatprep.subr.mxu0 %v244
      %518 = vmatpush1.msra.mxu0 %v243
      %519 = vmatprep.subr.mxu0 %v252
      %520 = vmatpush1.msra.mxu0 %v251
      %521 = vmatprep.subr.mxu0 %v260
      %522 = vmatpush1.msra.mxu0 %v259
      %523 = vmatprep.subr.mxu0 %v268
      %524 = vmatpush1.msra.mxu0 %v267
      %525 = vmatprep.subr.mxu0 %v276
      %526 = vmatpush1.msra.mxu0 %v275
      %527 = vmatprep.subr.mxu0 %v284
      %528 = vmatpush1.msra.mxu0 %v283
      %529 = vmatprep.subr.mxu0 %v292
      %530 = vmatpush1.msra.mxu0 %v291
      %531 = vmatprep.subr.mxu0 %v300
      %532 = vmatpush1.msra.mxu0 %v299
      %533 = vmatprep.subr.mxu0 %v308
      %534 = vmatpush1.msra.mxu0 %v307
      %535 = vmatprep.subr.mxu0 %v316
      %536 = vmatpush1.msra.mxu0 %v315
      %537 = vmatprep.subr.mxu0 %v324
      %538 = vmatpush1.msra.mxu0 %v323
      %539 = vmatprep.subr.mxu0 %v332
      %540 = vmatpush1.msra.mxu0 %v331
      %541 = vmatprep.subr.mxu0 %v340
      %542 = vmatpush1.msra.mxu0 %v339
      %543 = vmatprep.subr.mxu0 %v348
      %544 = vmatpush1.msra.mxu0 %v347
      %545 = vmatprep.subr.mxu0 %v356
      %546 = vmatpush1.msra.mxu0 %v355
      %547 = vmatprep.subr.mxu0 %v364
      %548 = vmatpush1.msra.mxu0 %v363
      %549 = vmatprep.subr.mxu0 %v372
      %550 = vmatpush1.msra.mxu0 %v371
      %551 = vmatprep.subr.mxu0 %v380
      %552 = vmatpush1.msra.mxu0 %v379
      %553 = vmatprep.subr.mxu0 %v388
      %554 = vmatpush1.msra.mxu0 %v387
      %555 = vmatprep.subr.mxu0 %v396
      %556 = vmatpush1.msra.mxu0 %v395
      %557 = vmatprep.subr.mxu0 %v404
      %558 = vmatpush1.msra.mxu0 %v403
      %559 = vmatprep.subr.mxu0 %v412
      %560 = vmatpush1.msra.mxu0 %v411
      %561 = vmatprep.subr.mxu0 %v420
      %562 = vmatpush1.msra.mxu0 %v419
      %563 = vmatprep.subr.mxu0 %v428
      %564 = vmatpush1.msra.mxu0 %v427
      %565 = vmatprep.subr.mxu0 %v436
      %566 = vmatpush1.msra.mxu0 %v435
      %567 = vmatprep.subr.mxu0 %v444
      %568 = vmatpush1.msra.mxu0 %v443
      %569 = vmatprep.subr.mxu0 %v452
      %570 = vmatpush1.msra.mxu0 %v451
      %571 = vmatprep.subr.mxu0 %v460
      %572 = vmatpush1.msra.mxu0 %v459
      %573 = vmatprep.mubr.f32.mxu0 %v180
      %574 = vmatmul.mubr.f32.gmra.mrb[0].mxu0 %v179
      %v575 = vpop.f32.mrb[0].mxu0
      %v576 = vadd.f32 %v472, %v575
      %v577 = vpop.f32.mrb[0].mxu0
      %v578 = vadd.f32 %v476, %v577
      %579 = vmatprep.mubr.f32.mxu0 %v182
      %580 = vmatmul.mubr.f32.gmra.mrb[0].mxu0 %v181
      %v581 = vpop.f32.mrb[0].mxu0
      %v582 = vadd.f32 %v472, %v581
      %v583 = vpop.f32.mrb[0].mxu0
      %v584 = vadd.f32 %v476, %v583
      %585 = vmatprep.mubr.f32.mxu0 %v184
      %586 = vmatmul.mubr.f32.gmra.mrb[0].mxu0 %v183
      %v587 = vpop.f32.mrb[0].mxu0
      %v588 = vadd.f32 %v472, %v587
      %v589 = vpop.f32.mrb[0].mxu0
      %v590 = vadd.f32 %v476, %v589
      %591 = vmatprep.mubr.f32.mxu0 %v186
      %592 = vmatmul.mubr.f32.gmra.mrb[0].mxu0 %v185
      %v593 = vpop.f32.mrb[0].mxu0
      %v594 = vadd.f32 %v472, %v593
      %v595 = vpop.f32.mrb[0].mxu0
      %v596 = vadd.f32 %v476, %v595
      %597 = vmatprep.mubr.f32.mxu0 %v188
      %598 = vmatmul.mubr.f32.gmra.mrb[0].mxu0 %v187
      %v599 = vpop.f32.mrb[0].mxu0
      %v600 = vadd.f32 %v472, %v599
      %v601 = vpop.f32.mrb[0].mxu0
      %v602 = vadd.f32 %v476, %v601
      %603 = vmatprep.mubr.f32.mxu0 %v190
      %604 = vmatmul.mubr.f32.gmra.mrb[0].mxu0 %v189
      %v605 = vpop.f32.mrb[0].mxu0
      %v606 = vadd.f32 %v472, %v605
      %v607 = vpop.f32.mrb[0].mxu0
      %v608 = vadd.f32 %v476, %v607
      %609 = vmatprep.mubr.f32.mxu0 %v192
      %610 = vmatmul.mubr.f32.gmra.mrb[0].mxu0 %v191
      %v611 = vpop.f32.mrb[0].mxu0
      %v612 = vadd.f32 %v472, %v611
      %v613 = vpop.f32.mrb[0].mxu0
      %v614 = vadd.f32 %v476, %v613
      %615 = vmatprep.mubr.f32.mxu0 %v194
      %616 = vmatmul.mubr.f32.gmra.mrb[0].mxu0 %v193
      %v617 = vpop.f32.mrb[0].mxu0
      %v618 = vadd.f32 %v472, %v617
      %v619 = vpop.f32.mrb[0].mxu0
      %v620 = vadd.f32 %v476, %v619
      %621 = vmatprep.mubr.f32.mxu0 %v196
      %622 = vmatmul.mubr.f32.gmra.mrb[0].mxu0 %v195
      %v623 = vpop.f32.mrb[0].mxu0
      %v624 = vadd.f32 %v472, %v623
      %v625 = vpop.f32.mrb[0].mxu0
      %v626 = vadd.f32 %v476, %v625
      %627 = vmatprep.mubr.f32.mxu0 %v198
      %628 = vmatmul.mubr.f32.gmra.mrb[0].mxu0 %v197
      %v629 = vpop.f32.mrb[0].mxu0
      %v630 = vadd.f32 %v472, %v629
      %v631 = vpop.f32.mrb[0].mxu0
      %v632 = vadd.f32 %v476, %v631
      %633 = vmatprep.mubr.f32.mxu0 %v200
      %634 = vmatmul.mubr.f32.gmra.mrb[0].mxu0 %v199
      %v635 = vpop.f32.mrb[0].mxu0
      %v636 = vadd.f32 %v472, %v635
      %v637 = vpop.f32.mrb[0].mxu0
      %v638 = vadd.f32 %v476, %v637
      %639 = vmatprep.mubr.f32.mxu0 %v202
      %640 = vmatmul.mubr.f32.gmra.mrb[0].mxu0 %v201
      %v641 = vpop.f32.mrb[0].mxu0
      %v642 = vadd.f32 %v472, %v641
      %v643 = vpop.f32.mrb[0].mxu0
      %v644 = vadd.f32 %v476, %v643
      %645 = vmatprep.mubr.f32.mxu0 %v204
      %646 = vmatmul.mubr.f32.gmra.mrb[0].mxu0 %v203
      %v647 = vpop.f32.mrb[0].mxu0
      %v648 = vadd.f32 %v472, %v647
      %v649 = vpop.f32.mrb[0].mxu0
      %v650 = vadd.f32 %v476, %v649
      %651 = vmatprep.mubr.f32.mxu0 %v206
      %652 = vmatmul.mubr.f32.gmra.mrb[0].mxu0 %v205
      %v653 = vpop.f32.mrb[0].mxu0
      %v654 = vadd.f32 %v472, %v653
      %v655 = vpop.f32.mrb[0].mxu0
      %v656 = vadd.f32 %v476, %v655
      %657 = vmatprep.mubr.f32.mxu0 %v208
      %658 = vmatmul.mubr.f32.gmra.mrb[0].mxu0 %v207
      %v659 = vpop.f32.mrb[0].mxu0
      %v660 = vadd.f32 %v472, %v659
      %v661 = vpop.f32.mrb[0].mxu0
      %v662 = vadd.f32 %v476, %v661
      %663 = vmatprep.mubr.f32.mxu0 %v210
      %664 = vmatmul.mubr.f32.gmra.mrb[0].mxu0 %v209
      %v665 = vpop.f32.mrb[0].mxu0
      %v666 = vadd.f32 %v472, %v665
      %v667 = vpop.f32.mrb[0].mxu0
      %v668 = vadd.f32 %v476, %v667
      %669 = vdwg.mxu0
      %670 = vmatprep.subr.mxu0 %v214
      %671 = vmatpush1.msra.mxu0 %v213
      %672 = vmatprep.subr.mxu0 %v222
      %673 = vmatpush1.msra.mxu0 %v221
      %674 = vmatprep.subr.mxu0 %v230
      %675 = vmatpush1.msra.mxu0 %v229
      %676 = vmatprep.subr.mxu0 %v238
      %677 = vmatpush1.msra.mxu0 %v237
      %678 = vmatprep.subr.mxu0 %v246
      %679 = vmatpush1.msra.mxu0 %v245
      %680 = vmatprep.subr.mxu0 %v254
      %681 = vmatpush1.msra.mxu0 %v253
      %682 = vmatprep.subr.mxu0 %v262
      %683 = vmatpush1.msra.mxu0 %v261
      %684 = vmatprep.subr.mxu0 %v270
      %685 = vmatpush1.msra.mxu0 %v269
      %686 = vmatprep.subr.mxu0 %v278
      %687 = vmatpush1.msra.mxu0 %v277
      %688 = vmatprep.subr.mxu0 %v286
      %689 = vmatpush1.msra.mxu0 %v285
      %690 = vmatprep.subr.mxu0 %v294
      %691 = vmatpush1.msra.mxu0 %v293
      %692 = vmatprep.subr.mxu0 %v302
      %693 = vmatpush1.msra.mxu0 %v301
      %694 = vmatprep.subr.mxu0 %v310
      %695 = vmatpush1.msra.mxu0 %v309
      %696 = vmatprep.subr.mxu0 %v318
      %697 = vmatpush1.msra.mxu0 %v317
      %698 = vmatprep.subr.mxu0 %v326
      %699 = vmatpush1.msra.mxu0 %v325
      %700 = vmatprep.subr.mxu0 %v334
      %701 = vmatpush1.msra.mxu0 %v333
      %702 = vmatprep.subr.mxu0 %v342
      %703 = vmatpush1.msra.mxu0 %v341
      %704 = vmatprep.subr.mxu0 %v350
      %705 = vmatpush1.msra.mxu0 %v349
      %706 = vmatprep.subr.mxu0 %v358
      %707 = vmatpush1.msra.mxu0 %v357
      %708 = vmatprep.subr.mxu0 %v366
      %709 = vmatpush1.msra.mxu0 %v365
      %710 = vmatprep.subr.mxu0 %v374
      %711 = vmatpush1.msra.mxu0 %v373
      %712 = vmatprep.subr.mxu0 %v382
      %713 = vmatpush1.msra.mxu0 %v381
      %714 = vmatprep.subr.mxu0 %v390
      %715 = vmatpush1.msra.mxu0 %v389
      %716 = vmatprep.subr.mxu0 %v398
      %717 = vmatpush1.msra.mxu0 %v397
      %718 = vmatprep.subr.mxu0 %v406
      %719 = vmatpush1.msra.mxu0 %v405
      %720 = vmatprep.subr.mxu0 %v414
      %721 = vmatpush1.msra.mxu0 %v413
      %722 = vmatprep.subr.mxu0 %v422
      %723 = vmatpush1.msra.mxu0 %v421
      %724 = vmatprep.subr.mxu0 %v430
      %725 = vmatpush1.msra.mxu0 %v429
      %726 = vmatprep.subr.mxu0 %v438
      %727 = vmatpush1.msra.mxu0 %v437
      %728 = vmatprep.subr.mxu0 %v446
      %729 = vmatpush1.msra.mxu0 %v445
      %730 = vmatprep.subr.mxu0 %v454
      %731 = vmatpush1.msra.mxu0 %v453
      %732 = vmatprep.subr.mxu0 %v462
      %733 = vmatpush1.msra.mxu0 %v461
      %734 = vmatprep.mubr.f32.mxu0 %v180
      %735 = vmatmul.mubr.f32.gmra.mrb[0].mxu0 %v179
      %v736 = vpop.f32.mrb[0].mxu0
      %v737 = vadd.f32 %v480, %v736
      %v738 = vpop.f32.mrb[0].mxu0
      %v739 = vadd.f32 %v484, %v738
      %740 = vmatprep.mubr.f32.mxu0 %v182
      %741 = vmatmul.mubr.f32.gmra.mrb[0].mxu0 %v181
      %v742 = vpop.f32.mrb[0].mxu0
      %v743 = vadd.f32 %v480, %v742
      %v744 = vpop.f32.mrb[0].mxu0
      %v745 = vadd.f32 %v484, %v744
      %746 = vmatprep.mubr.f32.mxu0 %v184
      %747 = vmatmul.mubr.f32.gmra.mrb[0].mxu0 %v183
      %v748 = vpop.f32.mrb[0].mxu0
      %v749 = vadd.f32 %v480, %v748
      %v750 = vpop.f32.mrb[0].mxu0
      %v751 = vadd.f32 %v484, %v750
      %752 = vmatprep.mubr.f32.mxu0 %v186
      %753 = vmatmul.mubr.f32.gmra.mrb[0].mxu0 %v185
      %v754 = vpop.f32.mrb[0].mxu0
      %v755 = vadd.f32 %v480, %v754
      %v756 = vpop.f32.mrb[0].mxu0
      %v757 = vadd.f32 %v484, %v756
      %758 = vmatprep.mubr.f32.mxu0 %v188
      %759 = vmatmul.mubr.f32.gmra.mrb[0].mxu0 %v187
      %v760 = vpop.f32.mrb[0].mxu0
      %v761 = vadd.f32 %v480, %v760
      %v762 = vpop.f32.mrb[0].mxu0
      %v763 = vadd.f32 %v484, %v762
      %764 = vmatprep.mubr.f32.mxu0 %v190
      %765 = vmatmul.mubr.f32.gmra.mrb[0].mxu0 %v189
      %v766 = vpop.f32.mrb[0].mxu0
      %v767 = vadd.f32 %v480, %v766
      %v768 = vpop.f32.mrb[0].mxu0
      %v769 = vadd.f32 %v484, %v768
      %770 = vmatprep.mubr.f32.mxu0 %v192
      %771 = vmatmul.mubr.f32.gmra.mrb[0].mxu0 %v191
      %v772 = vpop.f32.mrb[0].mxu0
      %v773 = vadd.f32 %v480, %v772
      %v774 = vpop.f32.mrb[0].mxu0
      %v775 = vadd.f32 %v484, %v774
      %776 = vmatprep.mubr.f32.mxu0 %v194
      %777 = vmatmul.mubr.f32.gmra.mrb[0].mxu0 %v193
      %v778 = vpop.f32.mrb[0].mxu0
      %v779 = vadd.f32 %v480, %v778
      %v780 = vpop.f32.mrb[0].mxu0
      %v781 = vadd.f32 %v484, %v780
      %782 = vmatprep.mubr.f32.mxu0 %v196
      %783 = vmatmul.mubr.f32.gmra.mrb[0].mxu0 %v195
      %v784 = vpop.f32.mrb[0].mxu0
      %v785 = vadd.f32 %v480, %v784
      %v786 = vpop.f32.mrb[0].mxu0
      %v787 = vadd.f32 %v484, %v786
      %788 = vmatprep.mubr.f32.mxu0 %v198
      %789 = vmatmul.mubr.f32.gmra.mrb[0].mxu0 %v197
      %v790 = vpop.f32.mrb[0].mxu0
      %v791 = vadd.f32 %v480, %v790
      %v792 = vpop.f32.mrb[0].mxu0
      %v793 = vadd.f32 %v484, %v792
      %794 = vmatprep.mubr.f32.mxu0 %v200
      %795 = vmatmul.mubr.f32.gmra.mrb[0].mxu0 %v199
      %v796 = vpop.f32.mrb[0].mxu0
      %v797 = vadd.f32 %v480, %v796
      %v798 = vpop.f32.mrb[0].mxu0
      %v799 = vadd.f32 %v484, %v798
      %800 = vmatprep.mubr.f32.mxu0 %v202
      %801 = vmatmul.mubr.f32.gmra.mrb[0].mxu0 %v201
      %v802 = vpop.f32.mrb[0].mxu0
      %v803 = vadd.f32 %v480, %v802
      %v804 = vpop.f32.mrb[0].mxu0
      %v805 = vadd.f32 %v484, %v804
      %806 = vmatprep.mubr.f32.mxu0 %v204
      %807 = vmatmul.mubr.f32.gmra.mrb[0].mxu0 %v203
      %v808 = vpop.f32.mrb[0].mxu0
      %v809 = vadd.f32 %v480, %v808
      %v810 = vpop.f32.mrb[0].mxu0
      %v811 = vadd.f32 %v484, %v810
      %812 = vmatprep.mubr.f32.mxu0 %v206
      %813 = vmatmul.mubr.f32.gmra.mrb[0].mxu0 %v205
      %v814 = vpop.f32.mrb[0].mxu0
      %v815 = vadd.f32 %v480, %v814
      %v816 = vpop.f32.mrb[0].mxu0
      %v817 = vadd.f32 %v484, %v816
      %818 = vmatprep.mubr.f32.mxu0 %v208
      %819 = vmatmul.mubr.f32.gmra.mrb[0].mxu0 %v207
      %v820 = vpop.f32.mrb[0].mxu0
      %v821 = vadd.f32 %v480, %v820
      %v822 = vpop.f32.mrb[0].mxu0
      %v823 = vadd.f32 %v484, %v822
      %824 = vmatprep.mubr.f32.mxu0 %v210
      %825 = vmatmul.mubr.f32.gmra.mrb[0].mxu0 %v209
      %v826 = vpop.f32.mrb[0].mxu0
      %v827 = vadd.f32 %v480, %v826
      %v828 = vpop.f32.mrb[0].mxu0
      %v829 = vadd.f32 %v484, %v828
      %830 = vdwg.mxu0
      %831 = vmatprep.subr.mxu0 %v216
      %832 = vmatpush1.msra.mxu0 %v215
      %833 = vmatprep.subr.mxu0 %v224
      %834 = vmatpush1.msra.mxu0 %v223
      %835 = vmatprep.subr.mxu0 %v232
      %836 = vmatpush1.msra.mxu0 %v231
      %837 = vmatprep.subr.mxu0 %v240
      %838 = vmatpush1.msra.mxu0 %v239
      %839 = vmatprep.subr.mxu0 %v248
      %840 = vmatpush1.msra.mxu0 %v247
      %841 = vmatprep.subr.mxu0 %v256
      %842 = vmatpush1.msra.mxu0 %v255
      %843 = vmatprep.subr.mxu0 %v264
      %844 = vmatpush1.msra.mxu0 %v263
      %845 = vmatprep.subr.mxu0 %v272
      %846 = vmatpush1.msra.mxu0 %v271
      %847 = vmatprep.subr.mxu0 %v280
      %848 = vmatpush1.msra.mxu0 %v279
      %849 = vmatprep.subr.mxu0 %v288
      %850 = vmatpush1.msra.mxu0 %v287
      %851 = vmatprep.subr.mxu0 %v296
      %852 = vmatpush1.msra.mxu0 %v295
      %853 = vmatprep.subr.mxu0 %v304
      %854 = vmatpush1.msra.mxu0 %v303
      %855 = vmatprep.subr.mxu0 %v312
      %856 = vmatpush1.msra.mxu0 %v311
      %857 = vmatprep.subr.mxu0 %v320
      %858 = vmatpush1.msra.mxu0 %v319
      %859 = vmatprep.subr.mxu0 %v328
      %860 = vmatpush1.msra.mxu0 %v327
      %861 = vmatprep.subr.mxu0 %v336
      %862 = vmatpush1.msra.mxu0 %v335
      %863 = vmatprep.subr.mxu0 %v344
      %864 = vmatpush1.msra.mxu0 %v343
      %865 = vmatprep.subr.mxu0 %v352
      %866 = vmatpush1.msra.mxu0 %v351
      %867 = vmatprep.subr.mxu0 %v360
      %868 = vmatpush1.msra.mxu0 %v359
      %869 = vmatprep.subr.mxu0 %v368
      %870 = vmatpush1.msra.mxu0 %v367
      %871 = vmatprep.subr.mxu0 %v376
      %872 = vmatpush1.msra.mxu0 %v375
      %873 = vmatprep.subr.mxu0 %v384
      %874 = vmatpush1.msra.mxu0 %v383
      %875 = vmatprep.subr.mxu0 %v392
      %876 = vmatpush1.msra.mxu0 %v391
      %877 = vmatprep.subr.mxu0 %v400
      %878 = vmatpush1.msra.mxu0 %v399
      %879 = vmatprep.subr.mxu0 %v408
      %880 = vmatpush1.msra.mxu0 %v407
      %881 = vmatprep.subr.mxu0 %v416
      %882 = vmatpush1.msra.mxu0 %v415
      %883 = vmatprep.subr.mxu0 %v424
      %884 = vmatpush1.msra.mxu0 %v423
      %885 = vmatprep.subr.mxu0 %v432
      %886 = vmatpush1.msra.mxu0 %v431
      %887 = vmatprep.subr.mxu0 %v440
      %888 = vmatpush1.msra.mxu0 %v439
      %889 = vmatprep.subr.mxu0 %v448
      %890 = vmatpush1.msra.mxu0 %v447
      %891 = vmatprep.subr.mxu0 %v456
      %892 = vmatpush1.msra.mxu0 %v455
      %893 = vmatprep.subr.mxu0 %v464
      %894 = vmatpush1.msra.mxu0 %v463
      %895 = vmatprep.mubr.f32.mxu0 %v180
      %896 = vmatmul.mubr.f32.gmra.mrb[0].mxu0 %v179
      %v897 = vpop.f32.mrb[0].mxu0
      %v898 = vadd.f32 %v488, %v897
      %v899 = vpop.f32.mrb[0].mxu0
      %v900 = vadd.f32 %v492, %v899
      %901 = vmatprep.mubr.f32.mxu0 %v182
      %902 = vmatmul.mubr.f32.gmra.mrb[0].mxu0 %v181
      %v903 = vpop.f32.mrb[0].mxu0
      %v904 = vadd.f32 %v488, %v903
      %v905 = vpop.f32.mrb[0].mxu0
      %v906 = vadd.f32 %v492, %v905
      %907 = vmatprep.mubr.f32.mxu0 %v184
      %908 = vmatmul.mubr.f32.gmra.mrb[0].mxu0 %v183
      %v909 = vpop.f32.mrb[0].mxu0
      %v910 = vadd.f32 %v488, %v909
      %v911 = vpop.f32.mrb[0].mxu0
      %v912 = vadd.f32 %v492, %v911
      %913 = vmatprep.mubr.f32.mxu0 %v186
      %914 = vmatmul.mubr.f32.gmra.mrb[0].mxu0 %v185
      %v915 = vpop.f32.mrb[0].mxu0
      %v916 = vadd.f32 %v488, %v915
      %v917 = vpop.f32.mrb[0].mxu0
      %v918 = vadd.f32 %v492, %v917
      %919 = vmatprep.mubr.f32.mxu0 %v188
      %920 = vmatmul.mubr.f32.gmra.mrb[0].mxu0 %v187
      %v921 = vpop.f32.mrb[0].mxu0
      %v922 = vadd.f32 %v488, %v921
      %v923 = vpop.f32.mrb[0].mxu0
      %v924 = vadd.f32 %v492, %v923
      %925 = vmatprep.mubr.f32.mxu0 %v190
      %926 = vmatmul.mubr.f32.gmra.mrb[0].mxu0 %v189
      %v927 = vpop.f32.mrb[0].mxu0
      %v928 = vadd.f32 %v488, %v927
      %v929 = vpop.f32.mrb[0].mxu0
      %v930 = vadd.f32 %v492, %v929
      %931 = vmatprep.mubr.f32.mxu0 %v192
      %932 = vmatmul.mubr.f32.gmra.mrb[0].mxu0 %v191
      %v933 = vpop.f32.mrb[0].mxu0
      %v934 = vadd.f32 %v488, %v933
      %v935 = vpop.f32.mrb[0].mxu0
      %v936 = vadd.f32 %v492, %v935
      %937 = vmatprep.mubr.f32.mxu0 %v194
      %938 = vmatmul.mubr.f32.gmra.mrb[0].mxu0 %v193
      %v939 = vpop.f32.mrb[0].mxu0
      %v940 = vadd.f32 %v488, %v939
      %v941 = vpop.f32.mrb[0].mxu0
      %v942 = vadd.f32 %v492, %v941
      %943 = vmatprep.mubr.f32.mxu0 %v196
      %944 = vmatmul.mubr.f32.gmra.mrb[0].mxu0 %v195
      %v945 = vpop.f32.mrb[0].mxu0
      %v946 = vadd.f32 %v488, %v945
      %v947 = vpop.f32.mrb[0].mxu0
      %v948 = vadd.f32 %v492, %v947
      %949 = vmatprep.mubr.f32.mxu0 %v198
      %950 = vmatmul.mubr.f32.gmra.mrb[0].mxu0 %v197
      %v951 = vpop.f32.mrb[0].mxu0
      %v952 = vadd.f32 %v488, %v951
      %v953 = vpop.f32.mrb[0].mxu0
      %v954 = vadd.f32 %v492, %v953
      %955 = vmatprep.mubr.f32.mxu0 %v200
      %956 = vmatmul.mubr.f32.gmra.mrb[0].mxu0 %v199
      %v957 = vpop.f32.mrb[0].mxu0
      %v958 = vadd.f32 %v488, %v957
      %v959 = vpop.f32.mrb[0].mxu0
      %v960 = vadd.f32 %v492, %v959
      %961 = vmatprep.mubr.f32.mxu0 %v202
      %962 = vmatmul.mubr.f32.gmra.mrb[0].mxu0 %v201
      %v963 = vpop.f32.mrb[0].mxu0
      %v964 = vadd.f32 %v488, %v963
      %v965 = vpop.f32.mrb[0].mxu0
      %v966 = vadd.f32 %v492, %v965
      %967 = vmatprep.mubr.f32.mxu0 %v204
      %968 = vmatmul.mubr.f32.gmra.mrb[0].mxu0 %v203
      %v969 = vpop.f32.mrb[0].mxu0
      %v970 = vadd.f32 %v488, %v969
      %v971 = vpop.f32.mrb[0].mxu0
      %v972 = vadd.f32 %v492, %v971
      %973 = vmatprep.mubr.f32.mxu0 %v206
      %974 = vmatmul.mubr.f32.gmra.mrb[0].mxu0 %v205
      %v975 = vpop.f32.mrb[0].mxu0
      %v976 = vadd.f32 %v488, %v975
      %v977 = vpop.f32.mrb[0].mxu0
      %v978 = vadd.f32 %v492, %v977
      %979 = vmatprep.mubr.f32.mxu0 %v208
      %980 = vmatmul.mubr.f32.gmra.mrb[0].mxu0 %v207
      %v981 = vpop.f32.mrb[0].mxu0
      %v982 = vadd.f32 %v488, %v981
      %v983 = vpop.f32.mrb[0].mxu0
      %v984 = vadd.f32 %v492, %v983
      %985 = vmatprep.mubr.f32.mxu0 %v210
      %986 = vmatmul.mubr.f32.gmra.mrb[0].mxu0 %v209
      %v987 = vpop.f32.mrb[0].mxu0
      %v988 = vadd.f32 %v488, %v987
      %v989 = vpop.f32.mrb[0].mxu0
      %v990 = vadd.f32 %v492, %v989
      %991 = vdwg.mxu0
      %992 = vmatprep.subr.mxu0 %v218
      %993 = vmatpush1.msra.mxu0 %v217
      %994 = vmatprep.subr.mxu0 %v226
      %995 = vmatpush1.msra.mxu0 %v225
      %996 = vmatprep.subr.mxu0 %v234
      %997 = vmatpush1.msra.mxu0 %v233
      %998 = vmatprep.subr.mxu0 %v242
      %999 = vmatpush1.msra.mxu0 %v241
      %1000 = vmatprep.subr.mxu0 %v250
      %1001 = vmatpush1.msra.mxu0 %v249
      %1002 = vmatprep.subr.mxu0 %v258
      %1003 = vmatpush1.msra.mxu0 %v257
      %1004 = vmatprep.subr.mxu0 %v266
      %1005 = vmatpush1.msra.mxu0 %v265
      %1006 = vmatprep.subr.mxu0 %v274
      %1007 = vmatpush1.msra.mxu0 %v273
      %1008 = vmatprep.subr.mxu0 %v282
      %1009 = vmatpush1.msra.mxu0 %v281
      %1010 = vmatprep.subr.mxu0 %v290
      %1011 = vmatpush1.msra.mxu0 %v289
      %1012 = vmatprep.subr.mxu0 %v298
      %1013 = vmatpush1.msra.mxu0 %v297
      %1014 = vmatprep.subr.mxu0 %v306
      %1015 = vmatpush1.msra.mxu0 %v305
      %1016 = vmatprep.subr.mxu0 %v314
      %1017 = vmatpush1.msra.mxu0 %v313
      %1018 = vmatprep.subr.mxu0 %v322
      %1019 = vmatpush1.msra.mxu0 %v321
      %1020 = vmatprep.subr.mxu0 %v330
      %1021 = vmatpush1.msra.mxu0 %v329
      %1022 = vmatprep.subr.mxu0 %v338
      %1023 = vmatpush1.msra.mxu0 %v337
      %1024 = vmatprep.subr.mxu0 %v346
      %1025 = vmatpush1.msra.mxu0 %v345
      %1026 = vmatprep.subr.mxu0 %v354
      %1027 = vmatpush1.msra.mxu0 %v353
      %1028 = vmatprep.subr.mxu0 %v362
      %1029 = vmatpush1.msra.mxu0 %v361
      %1030 = vmatprep.subr.mxu0 %v370
      %1031 = vmatpush1.msra.mxu0 %v369
      %1032 = vmatprep.subr.mxu0 %v378
      %1033 = vmatpush1.msra.mxu0 %v377
      %1034 = vmatprep.subr.mxu0 %v386
      %1035 = vmatpush1.msra.mxu0 %v385
      %1036 = vmatprep.subr.mxu0 %v394
      %1037 = vmatpush1.msra.mxu0 %v393
      %1038 = vmatprep.subr.mxu0 %v402
      %1039 = vmatpush1.msra.mxu0 %v401
      %1040 = vmatprep.subr.mxu0 %v410
      %1041 = vmatpush1.msra.mxu0 %v409
      %1042 = vmatprep.subr.mxu0 %v418
      %1043 = vmatpush1.msra.mxu0 %v417
      %1044 = vmatprep.subr.mxu0 %v426
      %1045 = vmatpush1.msra.mxu0 %v425
      %1046 = vmatprep.subr.mxu0 %v434
      %1047 = vmatpush1.msra.mxu0 %v433
      %1048 = vmatprep.subr.mxu0 %v442
      %1049 = vmatpush1.msra.mxu0 %v441
      %1050 = vmatprep.subr.mxu0 %v450
      %1051 = vmatpush1.msra.mxu0 %v449
      %1052 = vmatprep.subr.mxu0 %v458
      %1053 = vmatpush1.msra.mxu0 %v457
      %1054 = vmatprep.subr.mxu0 %v466
      %1055 = vmatpush1.msra.mxu0 %v465
      %1056 = vmatprep.mubr.f32.mxu0 %v180
      %1057 = vmatmul.mubr.f32.gmra.mrb[0].mxu0 %v179
      %v1058 = vpop.f32.mrb[0].mxu0
      %v1059 = vadd.f32 %v496, %v1058
      %v1060 = vpop.f32.mrb[0].mxu0
      %v1061 = vadd.f32 %v500, %v1060
      %1062 = vmatprep.mubr.f32.mxu0 %v182
      %1063 = vmatmul.mubr.f32.gmra.mrb[0].mxu0 %v181
      %v1064 = vpop.f32.mrb[0].mxu0
      %v1065 = vadd.f32 %v496, %v1064
      %v1066 = vpop.f32.mrb[0].mxu0
      %v1067 = vadd.f32 %v500, %v1066
      %1068 = vmatprep.mubr.f32.mxu0 %v184
      %1069 = vmatmul.mubr.f32.gmra.mrb[0].mxu0 %v183
      %v1070 = vpop.f32.mrb[0].mxu0
      %v1071 = vadd.f32 %v496, %v1070
      %v1072 = vpop.f32.mrb[0].mxu0
      %v1073 = vadd.f32 %v500, %v1072
      %1074 = vmatprep.mubr.f32.mxu0 %v186
      %1075 = vmatmul.mubr.f32.gmra.mrb[0].mxu0 %v185
      %v1076 = vpop.f32.mrb[0].mxu0
      %v1077 = vadd.f32 %v496, %v1076
      %v1078 = vpop.f32.mrb[0].mxu0
      %v1079 = vadd.f32 %v500, %v1078
      %1080 = vmatprep.mubr.f32.mxu0 %v188
      %1081 = vmatmul.mubr.f32.gmra.mrb[0].mxu0 %v187
      %v1082 = vpop.f32.mrb[0].mxu0
      %v1083 = vadd.f32 %v496, %v1082
      %v1084 = vpop.f32.mrb[0].mxu0
      %v1085 = vadd.f32 %v500, %v1084
      %1086 = vmatprep.mubr.f32.mxu0 %v190
      %1087 = vmatmul.mubr.f32.gmra.mrb[0].mxu0 %v189
      %v1088 = vpop.f32.mrb[0].mxu0
      %v1089 = vadd.f32 %v496, %v1088
      %v1090 = vpop.f32.mrb[0].mxu0
      %v1091 = vadd.f32 %v500, %v1090
      %1092 = vmatprep.mubr.f32.mxu0 %v192
      %1093 = vmatmul.mubr.f32.gmra.mrb[0].mxu0 %v191
      %v1094 = vpop.f32.mrb[0].mxu0
      %v1095 = vadd.f32 %v496, %v1094
      %v1096 = vpop.f32.mrb[0].mxu0
      %v1097 = vadd.f32 %v500, %v1096
      %1098 = vmatprep.mubr.f32.mxu0 %v194
      %1099 = vmatmul.mubr.f32.gmra.mrb[0].mxu0 %v193
      %v1100 = vpop.f32.mrb[0].mxu0
      %v1101 = vadd.f32 %v496, %v1100
      %v1102 = vpop.f32.mrb[0].mxu0
      %v1103 = vadd.f32 %v500, %v1102
      %1104 = vmatprep.mubr.f32.mxu0 %v196
      %1105 = vmatmul.mubr.f32.gmra.mrb[0].mxu0 %v195
      %v1106 = vpop.f32.mrb[0].mxu0
      %v1107 = vadd.f32 %v496, %v1106
      %v1108 = vpop.f32.mrb[0].mxu0
      %v1109 = vadd.f32 %v500, %v1108
      %1110 = vmatprep.mubr.f32.mxu0 %v198
      %1111 = vmatmul.mubr.f32.gmra.mrb[0].mxu0 %v197
      %v1112 = vpop.f32.mrb[0].mxu0
      %v1113 = vadd.f32 %v496, %v1112
      %v1114 = vpop.f32.mrb[0].mxu0
      %v1115 = vadd.f32 %v500, %v1114
      %1116 = vmatprep.mubr.f32.mxu0 %v200
      %1117 = vmatmul.mubr.f32.gmra.mrb[0].mxu0 %v199
      %v1118 = vpop.f32.mrb[0].mxu0
      %v1119 = vadd.f32 %v496, %v1118
      %v1120 = vpop.f32.mrb[0].mxu0
      %v1121 = vadd.f32 %v500, %v1120
      %1122 = vmatprep.mubr.f32.mxu0 %v202
      %1123 = vmatmul.mubr.f32.gmra.mrb[0].mxu0 %v201
      %v1124 = vpop.f32.mrb[0].mxu0
      %v1125 = vadd.f32 %v496, %v1124
      %v1126 = vpop.f32.mrb[0].mxu0
      %v1127 = vadd.f32 %v500, %v1126
      %1128 = vmatprep.mubr.f32.mxu0 %v204
      %1129 = vmatmul.mubr.f32.gmra.mrb[0].mxu0 %v203
      %v1130 = vpop.f32.mrb[0].mxu0
      %v1131 = vadd.f32 %v496, %v1130
      %v1132 = vpop.f32.mrb[0].mxu0
      %v1133 = vadd.f32 %v500, %v1132
      %1134 = vmatprep.mubr.f32.mxu0 %v206
      %1135 = vmatmul.mubr.f32.gmra.mrb[0].mxu0 %v205
      %v1136 = vpop.f32.mrb[0].mxu0
      %v1137 = vadd.f32 %v496, %v1136
      %v1138 = vpop.f32.mrb[0].mxu0
      %v1139 = vadd.f32 %v500, %v1138
      %1140 = vmatprep.mubr.f32.mxu0 %v208
      %1141 = vmatmul.mubr.f32.gmra.mrb[0].mxu0 %v207
      %v1142 = vpop.f32.mrb[0].mxu0
      %v1143 = vadd.f32 %v496, %v1142
      %v1144 = vpop.f32.mrb[0].mxu0
      %v1145 = vadd.f32 %v500, %v1144
      %1146 = vmatprep.mubr.f32.mxu0 %v210
      %1147 = vmatmul.mubr.f32.gmra.mrb[0].mxu0 %v209
      %v1148 = vpop.f32.mrb[0].mxu0
      %v1149 = vadd.f32 %v496, %v1148
      %v1150 = vpop.f32.mrb[0].mxu0
      %v1151 = vadd.f32 %v500, %v1150
      %1152 = vdwg.mxu0
      %v1153 = vmul.f32 %v576, 0.5
      %v1154 = vmul.f32 %v578, 0.5
      %v1155 = vmul.f32 %v737, 0.5
      %v1156 = vmul.f32 %v739, 0.5
      %v1157 = vmul.f32 %v582, 0.5
      %v1158 = vmul.f32 %v584, 0.5
      %v1159 = vmul.f32 %v743, 0.5
      %v1160 = vmul.f32 %v745, 0.5
      %v1161 = vmul.f32 %v588, 0.5
      %v1162 = vmul.f32 %v590, 0.5
      %v1163 = vmul.f32 %v749, 0.5
      %v1164 = vmul.f32 %v751, 0.5
      %v1165 = vmul.f32 %v594, 0.5
      %v1166 = vmul.f32 %v596, 0.5
      %v1167 = vmul.f32 %v755, 0.5
      %v1168 = vmul.f32 %v757, 0.5
      %v1169 = vmul.f32 %v600, 0.5
      %v1170 = vmul.f32 %v602, 0.5
      %v1171 = vmul.f32 %v761, 0.5
      %v1172 = vmul.f32 %v763, 0.5
      %v1173 = vmul.f32 %v606, 0.5
      %v1174 = vmul.f32 %v608, 0.5
      %v1175 = vmul.f32 %v767, 0.5
      %v1176 = vmul.f32 %v769, 0.5
      %v1177 = vmul.f32 %v612, 0.5
      %v1178 = vmul.f32 %v614, 0.5
      %v1179 = vmul.f32 %v773, 0.5
      %v1180 = vmul.f32 %v775, 0.5
      %v1181 = vmul.f32 %v618, 0.5
      %v1182 = vmul.f32 %v620, 0.5
      %v1183 = vmul.f32 %v779, 0.5
      %v1184 = vmul.f32 %v781, 0.5
      %v1185 = vmul.f32 %v624, 0.5
      %v1186 = vmul.f32 %v626, 0.5
      %v1187 = vmul.f32 %v785, 0.5
      %v1188 = vmul.f32 %v787, 0.5
      %v1189 = vmul.f32 %v630, 0.5
      %v1190 = vmul.f32 %v632, 0.5
      %v1191 = vmul.f32 %v791, 0.5
      %v1192 = vmul.f32 %v793, 0.5
      %v1193 = vmul.f32 %v636, 0.5
      %v1194 = vmul.f32 %v638, 0.5
      %v1195 = vmul.f32 %v797, 0.5
      %v1196 = vmul.f32 %v799, 0.5
      %v1197 = vmul.f32 %v642, 0.5
      %v1198 = vmul.f32 %v644, 0.5
      %v1199 = vmul.f32 %v803, 0.5
      %v1200 = vmul.f32 %v805, 0.5
      %v1201 = vmul.f32 %v648, 0.5
      %v1202 = vmul.f32 %v650, 0.5
      %v1203 = vmul.f32 %v809, 0.5
      %v1204 = vmul.f32 %v811, 0.5
      %v1205 = vmul.f32 %v654, 0.5
      %v1206 = vmul.f32 %v656, 0.5
      %v1207 = vmul.f32 %v815, 0.5
      %v1208 = vmul.f32 %v817, 0.5
      %v1209 = vmul.f32 %v660, 0.5
      %v1210 = vmul.f32 %v662, 0.5
      %v1211 = vmul.f32 %v821, 0.5
      %v1212 = vmul.f32 %v823, 0.5
      %v1213 = vmul.f32 %v666, 0.5
      %v1214 = vmul.f32 %v668, 0.5
      %v1215 = vmul.f32 %v827, 0.5
      %v1216 = vmul.f32 %v829, 0.5
      %v1217 = vmul.f32 %v576, 0.044715
      %v1218 = vmul.f32 %v578, 0.044715
      %v1219 = vmul.f32 %v737, 0.044715
      %v1220 = vmul.f32 %v739, 0.044715
      %v1221 = vmul.f32 %v582, 0.044715
      %v1222 = vmul.f32 %v584, 0.044715
      %v1223 = vmul.f32 %v743, 0.044715
      %v1224 = vmul.f32 %v745, 0.044715
      %v1225 = vmul.f32 %v588, 0.044715
      %v1226 = vmul.f32 %v590, 0.044715
      %v1227 = vmul.f32 %v749, 0.044715
      %v1228 = vmul.f32 %v751, 0.044715
      %v1229 = vmul.f32 %v594, 0.044715
      %v1230 = vmul.f32 %v596, 0.044715
      %v1231 = vmul.f32 %v755, 0.044715
      %v1232 = vmul.f32 %v757, 0.044715
      %v1233 = vmul.f32 %v600, 0.044715
      %v1234 = vmul.f32 %v602, 0.044715
      %v1235 = vmul.f32 %v761, 0.044715
      %v1236 = vmul.f32 %v763, 0.044715
      %v1237 = vmul.f32 %v606, 0.044715
      %v1238 = vmul.f32 %v608, 0.044715
      %v1239 = vmul.f32 %v767, 0.044715
      %v1240 = vmul.f32 %v769, 0.044715
      %v1241 = vmul.f32 %v612, 0.044715
      %v1242 = vmul.f32 %v614, 0.044715
      %v1243 = vmul.f32 %v773, 0.044715
      %v1244 = vmul.f32 %v775, 0.044715
      %v1245 = vmul.f32 %v618, 0.044715
      %v1246 = vmul.f32 %v620, 0.044715
      %v1247 = vmul.f32 %v779, 0.044715
      %v1248 = vmul.f32 %v781, 0.044715
      %v1249 = vmul.f32 %v624, 0.044715
      %v1250 = vmul.f32 %v626, 0.044715
      %v1251 = vmul.f32 %v785, 0.044715
      %v1252 = vmul.f32 %v787, 0.044715
      %v1253 = vmul.f32 %v630, 0.044715
      %v1254 = vmul.f32 %v632, 0.044715
      %v1255 = vmul.f32 %v791, 0.044715
      %v1256 = vmul.f32 %v793, 0.044715
      %v1257 = vmul.f32 %v636, 0.044715
      %v1258 = vmul.f32 %v638, 0.044715
      %v1259 = vmul.f32 %v797, 0.044715
      %v1260 = vmul.f32 %v799, 0.044715
      %v1261 = vmul.f32 %v642, 0.044715
      %v1262 = vmul.f32 %v644, 0.044715
      %v1263 = vmul.f32 %v803, 0.044715
      %v1264 = vmul.f32 %v805, 0.044715
      %v1265 = vmul.f32 %v648, 0.044715
      %v1266 = vmul.f32 %v650, 0.044715
      %v1267 = vmul.f32 %v809, 0.044715
      %v1268 = vmul.f32 %v811, 0.044715
      %v1269 = vmul.f32 %v654, 0.044715
      %v1270 = vmul.f32 %v656, 0.044715
      %v1271 = vmul.f32 %v815, 0.044715
      %v1272 = vmul.f32 %v817, 0.044715
      %v1273 = vmul.f32 %v660, 0.044715
      %v1274 = vmul.f32 %v662, 0.044715
      %v1275 = vmul.f32 %v821, 0.044715
      %v1276 = vmul.f32 %v823, 0.044715
      %v1277 = vmul.f32 %v666, 0.044715
      %v1278 = vmul.f32 %v668, 0.044715
      %v1279 = vmul.f32 %v827, 0.044715
      %v1280 = vmul.f32 %v829, 0.044715
      %v1281 = vmul.f32 %v1217, %v576
      %v1282 = vmul.f32 %v1218, %v578
      %v1283 = vmul.f32 %v1219, %v737
      %v1284 = vmul.f32 %v1220, %v739
      %v1285 = vmul.f32 %v1221, %v582
      %v1286 = vmul.f32 %v1222, %v584
      %v1287 = vmul.f32 %v1223, %v743
      %v1288 = vmul.f32 %v1224, %v745
      %v1289 = vmul.f32 %v1225, %v588
      %v1290 = vmul.f32 %v1226, %v590
      %v1291 = vmul.f32 %v1227, %v749
      %v1292 = vmul.f32 %v1228, %v751
      %v1293 = vmul.f32 %v1229, %v594
      %v1294 = vmul.f32 %v1230, %v596
      %v1295 = vmul.f32 %v1231, %v755
      %v1296 = vmul.f32 %v1232, %v757
      %v1297 = vmul.f32 %v1233, %v600
      %v1298 = vmul.f32 %v1234, %v602
      %v1299 = vmul.f32 %v1235, %v761
      %v1300 = vmul.f32 %v1236, %v763
      %v1301 = vmul.f32 %v1237, %v606
      %v1302 = vmul.f32 %v1238, %v608
      %v1303 = vmul.f32 %v1239, %v767
      %v1304 = vmul.f32 %v1240, %v769
      %v1305 = vmul.f32 %v1241, %v612
      %v1306 = vmul.f32 %v1242, %v614
      %v1307 = vmul.f32 %v1243, %v773
      %v1308 = vmul.f32 %v1244, %v775
      %v1309 = vmul.f32 %v1245, %v618
      %v1310 = vmul.f32 %v1246, %v620
      %v1311 = vmul.f32 %v1247, %v779
      %v1312 = vmul.f32 %v1248, %v781
      %v1313 = vmul.f32 %v1249, %v624
      %v1314 = vmul.f32 %v1250, %v626
      %v1315 = vmul.f32 %v1251, %v785
      %v1316 = vmul.f32 %v1252, %v787
      %v1317 = vmul.f32 %v1253, %v630
      %v1318 = vmul.f32 %v1254, %v632
      %v1319 = vmul.f32 %v1255, %v791
      %v1320 = vmul.f32 %v1256, %v793
      %v1321 = vmul.f32 %v1257, %v636
      %v1322 = vmul.f32 %v1258, %v638
      %v1323 = vmul.f32 %v1259, %v797
      %v1324 = vmul.f32 %v1260, %v799
      %v1325 = vmul.f32 %v1261, %v642
      %v1326 = vmul.f32 %v1262, %v644
      %v1327 = vmul.f32 %v1263, %v803
      %v1328 = vmul.f32 %v1264, %v805
      %v1329 = vmul.f32 %v1265, %v648
      %v1330 = vmul.f32 %v1266, %v650
      %v1331 = vmul.f32 %v1267, %v809
      %v1332 = vmul.f32 %v1268, %v811
      %v1333 = vmul.f32 %v1269, %v654
      %v1334 = vmul.f32 %v1270, %v656
      %v1335 = vmul.f32 %v1271, %v815
      %v1336 = vmul.f32 %v1272, %v817
      %v1337 = vmul.f32 %v1273, %v660
      %v1338 = vmul.f32 %v1274, %v662
      %v1339 = vmul.f32 %v1275, %v821
      %v1340 = vmul.f32 %v1276, %v823
      %v1341 = vmul.f32 %v1277, %v666
      %v1342 = vmul.f32 %v1278, %v668
      %v1343 = vmul.f32 %v1279, %v827
      %v1344 = vmul.f32 %v1280, %v829
      %v1345 = vmul.f32 %v1281, %v576
      %v1346 = vmul.f32 %v1282, %v578
      %v1347 = vmul.f32 %v1283, %v737
      %v1348 = vmul.f32 %v1284, %v739
      %v1349 = vmul.f32 %v1285, %v582
      %v1350 = vmul.f32 %v1286, %v584
      %v1351 = vmul.f32 %v1287, %v743
      %v1352 = vmul.f32 %v1288, %v745
      %v1353 = vmul.f32 %v1289, %v588
      %v1354 = vmul.f32 %v1290, %v590
      %v1355 = vmul.f32 %v1291, %v749
      %v1356 = vmul.f32 %v1292, %v751
      %v1357 = vmul.f32 %v1293, %v594
      %v1358 = vmul.f32 %v1294, %v596
      %v1359 = vmul.f32 %v1295, %v755
      %v1360 = vmul.f32 %v1296, %v757
      %v1361 = vmul.f32 %v1297, %v600
      %v1362 = vmul.f32 %v1298, %v602
      %v1363 = vmul.f32 %v1299, %v761
      %v1364 = vmul.f32 %v1300, %v763
      %v1365 = vmul.f32 %v1301, %v606
      %v1366 = vmul.f32 %v1302, %v608
      %v1367 = vmul.f32 %v1303, %v767
      %v1368 = vmul.f32 %v1304, %v769
      %v1369 = vmul.f32 %v1305, %v612
      %v1370 = vmul.f32 %v1306, %v614
      %v1371 = vmul.f32 %v1307, %v773
      %v1372 = vmul.f32 %v1308, %v775
      %v1373 = vmul.f32 %v1309, %v618
      %v1374 = vmul.f32 %v1310, %v620
      %v1375 = vmul.f32 %v1311, %v779
      %v1376 = vmul.f32 %v1312, %v781
      %v1377 = vmul.f32 %v1313, %v624
      %v1378 = vmul.f32 %v1314, %v626
      %v1379 = vmul.f32 %v1315, %v785
      %v1380 = vmul.f32 %v1316, %v787
      %v1381 = vmul.f32 %v1317, %v630
      %v1382 = vmul.f32 %v1318, %v632
      %v1383 = vmul.f32 %v1319, %v791
      %v1384 = vmul.f32 %v1320, %v793
      %v1385 = vmul.f32 %v1321, %v636
      %v1386 = vmul.f32 %v1322, %v638
      %v1387 = vmul.f32 %v1323, %v797
      %v1388 = vmul.f32 %v1324, %v799
      %v1389 = vmul.f32 %v1325, %v642
      %v1390 = vmul.f32 %v1326, %v644
      %v1391 = vmul.f32 %v1327, %v803
      %v1392 = vmul.f32 %v1328, %v805
      %v1393 = vmul.f32 %v1329, %v648
      %v1394 = vmul.f32 %v1330, %v650
      %v1395 = vmul.f32 %v1331, %v809
      %v1396 = vmul.f32 %v1332, %v811
      %v1397 = vmul.f32 %v1333, %v654
      %v1398 = vmul.f32 %v1334, %v656
      %v1399 = vmul.f32 %v1335, %v815
      %v1400 = vmul.f32 %v1336, %v817
      %v1401 = vmul.f32 %v1337, %v660
      %v1402 = vmul.f32 %v1338, %v662
      %v1403 = vmul.f32 %v1339, %v821
      %v1404 = vmul.f32 %v1340, %v823
      %v1405 = vmul.f32 %v1341, %v666
      %v1406 = vmul.f32 %v1342, %v668
      %v1407 = vmul.f32 %v1343, %v827
      %v1408 = vmul.f32 %v1344, %v829
      %v1409 = vadd.f32 %v576, %v1345
      %v1410 = vadd.f32 %v578, %v1346
      %v1411 = vadd.f32 %v737, %v1347
      %v1412 = vadd.f32 %v739, %v1348
      %v1413 = vadd.f32 %v582, %v1349
      %v1414 = vadd.f32 %v584, %v1350
      %v1415 = vadd.f32 %v743, %v1351
      %v1416 = vadd.f32 %v745, %v1352
      %v1417 = vadd.f32 %v588, %v1353
      %v1418 = vadd.f32 %v590, %v1354
      %v1419 = vadd.f32 %v749, %v1355
      %v1420 = vadd.f32 %v751, %v1356
      %v1421 = vadd.f32 %v594, %v1357
      %v1422 = vadd.f32 %v596, %v1358
      %v1423 = vadd.f32 %v755, %v1359
      %v1424 = vadd.f32 %v757, %v1360
      %v1425 = vadd.f32 %v600, %v1361
      %v1426 = vadd.f32 %v602, %v1362
      %v1427 = vadd.f32 %v761, %v1363
      %v1428 = vadd.f32 %v763, %v1364
      %v1429 = vadd.f32 %v606, %v1365
      %v1430 = vadd.f32 %v608, %v1366
      %v1431 = vadd.f32 %v767, %v1367
      %v1432 = vadd.f32 %v769, %v1368
      %v1433 = vadd.f32 %v612, %v1369
      %v1434 = vadd.f32 %v614, %v1370
      %v1435 = vadd.f32 %v773, %v1371
      %v1436 = vadd.f32 %v775, %v1372
      %v1437 = vadd.f32 %v618, %v1373
      %v1438 = vadd.f32 %v620, %v1374
      %v1439 = vadd.f32 %v779, %v1375
      %v1440 = vadd.f32 %v781, %v1376
      %v1441 = vadd.f32 %v624, %v1377
      %v1442 = vadd.f32 %v626, %v1378
      %v1443 = vadd.f32 %v785, %v1379
      %v1444 = vadd.f32 %v787, %v1380
      %v1445 = vadd.f32 %v630, %v1381
      %v1446 = vadd.f32 %v632, %v1382
      %v1447 = vadd.f32 %v791, %v1383
      %v1448 = vadd.f32 %v793, %v1384
      %v1449 = vadd.f32 %v636, %v1385
      %v1450 = vadd.f32 %v638, %v1386
      %v1451 = vadd.f32 %v797, %v1387
      %v1452 = vadd.f32 %v799, %v1388
      %v1453 = vadd.f32 %v642, %v1389
      %v1454 = vadd.f32 %v644, %v1390
      %v1455 = vadd.f32 %v803, %v1391
      %v1456 = vadd.f32 %v805, %v1392
      %v1457 = vadd.f32 %v648, %v1393
      %v1458 = vadd.f32 %v650, %v1394
      %v1459 = vadd.f32 %v809, %v1395
      %v1460 = vadd.f32 %v811, %v1396
      %v1461 = vadd.f32 %v654, %v1397
      %v1462 = vadd.f32 %v656, %v1398
      %v1463 = vadd.f32 %v815, %v1399
      %v1464 = vadd.f32 %v817, %v1400
      %v1465 = vadd.f32 %v660, %v1401
      %v1466 = vadd.f32 %v662, %v1402
      %v1467 = vadd.f32 %v821, %v1403
      %v1468 = vadd.f32 %v823, %v1404
      %v1469 = vadd.f32 %v666, %v1405
      %v1470 = vadd.f32 %v668, %v1406
      %v1471 = vadd.f32 %v827, %v1407
      %v1472 = vadd.f32 %v829, %v1408
      %v1473 = vmul.f32 %v1409, 0.7978846
      %v1474 = vmul.f32 %v1410, 0.7978846
      %v1475 = vmul.f32 %v1411, 0.7978846
      %v1476 = vmul.f32 %v1412, 0.7978846
      %v1477 = vmul.f32 %v1413, 0.7978846
      %v1478 = vmul.f32 %v1414, 0.7978846
      %v1479 = vmul.f32 %v1415, 0.7978846
      %v1480 = vmul.f32 %v1416, 0.7978846
      %v1481 = vmul.f32 %v1417, 0.7978846
      %v1482 = vmul.f32 %v1418, 0.7978846
      %v1483 = vmul.f32 %v1419, 0.7978846
      %v1484 = vmul.f32 %v1420, 0.7978846
      %v1485 = vmul.f32 %v1421, 0.7978846
      %v1486 = vmul.f32 %v1422, 0.7978846
      %v1487 = vmul.f32 %v1423, 0.7978846
      %v1488 = vmul.f32 %v1424, 0.7978846
      %v1489 = vmul.f32 %v1425, 0.7978846
      %v1490 = vmul.f32 %v1426, 0.7978846
      %v1491 = vmul.f32 %v1427, 0.7978846
      %v1492 = vmul.f32 %v1428, 0.7978846
      %v1493 = vmul.f32 %v1429, 0.7978846
      %v1494 = vmul.f32 %v1430, 0.7978846
      %v1495 = vmul.f32 %v1431, 0.7978846
      %v1496 = vmul.f32 %v1432, 0.7978846
      %v1497 = vmul.f32 %v1433, 0.7978846
      %v1498 = vmul.f32 %v1434, 0.7978846
      %v1499 = vmul.f32 %v1435, 0.7978846
      %v1500 = vmul.f32 %v1436, 0.7978846
      %v1501 = vmul.f32 %v1437, 0.7978846
      %v1502 = vmul.f32 %v1438, 0.7978846
      %v1503 = vmul.f32 %v1439, 0.7978846
      %v1504 = vmul.f32 %v1440, 0.7978846
      %v1505 = vmul.f32 %v1441, 0.7978846
      %v1506 = vmul.f32 %v1442, 0.7978846
      %v1507 = vmul.f32 %v1443, 0.7978846
      %v1508 = vmul.f32 %v1444, 0.7978846
      %v1509 = vmul.f32 %v1445, 0.7978846
      %v1510 = vmul.f32 %v1446, 0.7978846
      %v1511 = vmul.f32 %v1447, 0.7978846
      %v1512 = vmul.f32 %v1448, 0.7978846
      %v1513 = vmul.f32 %v1449, 0.7978846
      %v1514 = vmul.f32 %v1450, 0.7978846
      %v1515 = vmul.f32 %v1451, 0.7978846
      %v1516 = vmul.f32 %v1452, 0.7978846
      %v1517 = vmul.f32 %v1453, 0.7978846
      %v1518 = vmul.f32 %v1454, 0.7978846
      %v1519 = vmul.f32 %v1455, 0.7978846
      %v1520 = vmul.f32 %v1456, 0.7978846
      %v1521 = vmul.f32 %v1457, 0.7978846
      %v1522 = vmul.f32 %v1458, 0.7978846
      %v1523 = vmul.f32 %v1459, 0.7978846
      %v1524 = vmul.f32 %v1460, 0.7978846
      %v1525 = vmul.f32 %v1461, 0.7978846
      %v1526 = vmul.f32 %v1462, 0.7978846
      %v1527 = vmul.f32 %v1463, 0.7978846
      %v1528 = vmul.f32 %v1464, 0.7978846
      %v1529 = vmul.f32 %v1465, 0.7978846
      %v1530 = vmul.f32 %v1466, 0.7978846
      %v1531 = vmul.f32 %v1467, 0.7978846
      %v1532 = vmul.f32 %v1468, 0.7978846
      %v1533 = vmul.f32 %v1469, 0.7978846
      %v1534 = vmul.f32 %v1470, 0.7978846
      %v1535 = vmul.f32 %v1471, 0.7978846
      %v1536 = vmul.f32 %v1472, 0.7978846
      %v1537 = vtanh.pop %v1473
      %v1538 = vtanh.pop %v1474
      %v1539 = vtanh.pop %v1475
      %v1540 = vtanh.pop %v1476
      %v1541 = vtanh.pop %v1477
      %v1542 = vtanh.pop %v1478
      %v1543 = vtanh.pop %v1479
      %v1544 = vtanh.pop %v1480
      %v1545 = vtanh.pop %v1481
      %v1546 = vtanh.pop %v1482
      %v1547 = vtanh.pop %v1483
      %v1548 = vtanh.pop %v1484
      %v1549 = vtanh.pop %v1485
      %v1550 = vtanh.pop %v1486
      %v1551 = vtanh.pop %v1487
      %v1552 = vtanh.pop %v1488
      %v1553 = vtanh.pop %v1489
      %v1554 = vtanh.pop %v1490
      %v1555 = vtanh.pop %v1491
      %v1556 = vtanh.pop %v1492
      %v1557 = vtanh.pop %v1493
      %v1558 = vtanh.pop %v1494
      %v1559 = vtanh.pop %v1495
      %v1560 = vtanh.pop %v1496
      %v1561 = vtanh.pop %v1497
      %v1562 = vtanh.pop %v1498
      %v1563 = vtanh.pop %v1499
      %v1564 = vtanh.pop %v1500
      %v1565 = vtanh.pop %v1501
      %v1566 = vtanh.pop %v1502
      %v1567 = vtanh.pop %v1503
      %v1568 = vtanh.pop %v1504
      %v1569 = vtanh.pop %v1505
      %v1570 = vtanh.pop %v1506
      %v1571 = vtanh.pop %v1507
      %v1572 = vtanh.pop %v1508
      %v1573 = vtanh.pop %v1509
      %v1574 = vtanh.pop %v1510
      %v1575 = vtanh.pop %v1511
      %v1576 = vtanh.pop %v1512
      %v1577 = vtanh.pop %v1513
      %v1578 = vtanh.pop %v1514
      %v1579 = vtanh.pop %v1515
      %v1580 = vtanh.pop %v1516
      %v1581 = vtanh.pop %v1517
      %v1582 = vtanh.pop %v1518
      %v1583 = vtanh.pop %v1519
      %v1584 = vtanh.pop %v1520
      %v1585 = vtanh.pop %v1521
      %v1586 = vtanh.pop %v1522
      %v1587 = vtanh.pop %v1523
      %v1588 = vtanh.pop %v1524
      %v1589 = vtanh.pop %v1525
      %v1590 = vtanh.pop %v1526
      %v1591 = vtanh.pop %v1527
      %v1592 = vtanh.pop %v1528
      %v1593 = vtanh.pop %v1529
      %v1594 = vtanh.pop %v1530
      %v1595 = vtanh.pop %v1531
      %v1596 = vtanh.pop %v1532
      %v1597 = vtanh.pop %v1533
      %v1598 = vtanh.pop %v1534
      %v1599 = vtanh.pop %v1535
      %v1600 = vtanh.pop %v1536
      %v1601 = vadd.f32 %v1537, 1.0
      %v1602 = vadd.f32 %v1538, 1.0
      %v1603 = vadd.f32 %v1539, 1.0
      %v1604 = vadd.f32 %v1540, 1.0
      %v1605 = vadd.f32 %v1541, 1.0
      %v1606 = vadd.f32 %v1542, 1.0
      %v1607 = vadd.f32 %v1543, 1.0
      %v1608 = vadd.f32 %v1544, 1.0
      %v1609 = vadd.f32 %v1545, 1.0
      %v1610 = vadd.f32 %v1546, 1.0
      %v1611 = vadd.f32 %v1547, 1.0
      %v1612 = vadd.f32 %v1548, 1.0
      %v1613 = vadd.f32 %v1549, 1.0
      %v1614 = vadd.f32 %v1550, 1.0
      %v1615 = vadd.f32 %v1551, 1.0
      %v1616 = vadd.f32 %v1552, 1.0
      %v1617 = vadd.f32 %v1553, 1.0
      %v1618 = vadd.f32 %v1554, 1.0
      %v1619 = vadd.f32 %v1555, 1.0
      %v1620 = vadd.f32 %v1556, 1.0
      %v1621 = vadd.f32 %v1557, 1.0
      %v1622 = vadd.f32 %v1558, 1.0
      %v1623 = vadd.f32 %v1559, 1.0
      %v1624 = vadd.f32 %v1560, 1.0
      %v1625 = vadd.f32 %v1561, 1.0
      %v1626 = vadd.f32 %v1562, 1.0
      %v1627 = vadd.f32 %v1563, 1.0
      %v1628 = vadd.f32 %v1564, 1.0
      %v1629 = vadd.f32 %v1565, 1.0
      %v1630 = vadd.f32 %v1566, 1.0
      %v1631 = vadd.f32 %v1567, 1.0
      %v1632 = vadd.f32 %v1568, 1.0
      %v1633 = vadd.f32 %v1569, 1.0
      %v1634 = vadd.f32 %v1570, 1.0
      %v1635 = vadd.f32 %v1571, 1.0
      %v1636 = vadd.f32 %v1572, 1.0
      %v1637 = vadd.f32 %v1573, 1.0
      %v1638 = vadd.f32 %v1574, 1.0
      %v1639 = vadd.f32 %v1575, 1.0
      %v1640 = vadd.f32 %v1576, 1.0
      %v1641 = vadd.f32 %v1577, 1.0
      %v1642 = vadd.f32 %v1578, 1.0
      %v1643 = vadd.f32 %v1579, 1.0
      %v1644 = vadd.f32 %v1580, 1.0
      %v1645 = vadd.f32 %v1581, 1.0
      %v1646 = vadd.f32 %v1582, 1.0
      %v1647 = vadd.f32 %v1583, 1.0
      %v1648 = vadd.f32 %v1584, 1.0
      %v1649 = vadd.f32 %v1585, 1.0
      %v1650 = vadd.f32 %v1586, 1.0
      %v1651 = vadd.f32 %v1587, 1.0
      %v1652 = vadd.f32 %v1588, 1.0
      %v1653 = vadd.f32 %v1589, 1.0
      %v1654 = vadd.f32 %v1590, 1.0
      %v1655 = vadd.f32 %v1591, 1.0
      %v1656 = vadd.f32 %v1592, 1.0
      %v1657 = vadd.f32 %v1593, 1.0
      %v1658 = vadd.f32 %v1594, 1.0
      %v1659 = vadd.f32 %v1595, 1.0
      %v1660 = vadd.f32 %v1596, 1.0
      %v1661 = vadd.f32 %v1597, 1.0
      %v1662 = vadd.f32 %v1598, 1.0
      %v1663 = vadd.f32 %v1599, 1.0
      %v1664 = vadd.f32 %v1600, 1.0
      %v1665 = vmul.f32 %v1153, %v1601
      %v1666 = vmul.f32 %v1154, %v1602
      %v1667 = vmul.f32 %v1155, %v1603
      %v1668 = vmul.f32 %v1156, %v1604
      %v1669 = vmul.f32 %v1157, %v1605
      %v1670 = vmul.f32 %v1158, %v1606
      %v1671 = vmul.f32 %v1159, %v1607
      %v1672 = vmul.f32 %v1160, %v1608
      %v1673 = vmul.f32 %v1161, %v1609
      %v1674 = vmul.f32 %v1162, %v1610
      %v1675 = vmul.f32 %v1163, %v1611
      %v1676 = vmul.f32 %v1164, %v1612
      %v1677 = vmul.f32 %v1165, %v1613
      %v1678 = vmul.f32 %v1166, %v1614
      %v1679 = vmul.f32 %v1167, %v1615
      %v1680 = vmul.f32 %v1168, %v1616
      %v1681 = vmul.f32 %v1169, %v1617
      %v1682 = vmul.f32 %v1170, %v1618
      %v1683 = vmul.f32 %v1171, %v1619
      %v1684 = vmul.f32 %v1172, %v1620
      %v1685 = vmul.f32 %v1173, %v1621
      %v1686 = vmul.f32 %v1174, %v1622
      %v1687 = vmul.f32 %v1175, %v1623
      %v1688 = vmul.f32 %v1176, %v1624
      %v1689 = vmul.f32 %v1177, %v1625
      %v1690 = vmul.f32 %v1178, %v1626
      %v1691 = vmul.f32 %v1179, %v1627
      %v1692 = vmul.f32 %v1180, %v1628
      %v1693 = vmul.f32 %v1181, %v1629
      %v1694 = vmul.f32 %v1182, %v1630
      %v1695 = vmul.f32 %v1183, %v1631
      %v1696 = vmul.f32 %v1184, %v1632
      %v1697 = vmul.f32 %v1185, %v1633
      %v1698 = vmul.f32 %v1186, %v1634
      %v1699 = vmul.f32 %v1187, %v1635
      %v1700 = vmul.f32 %v1188, %v1636
      %v1701 = vmul.f32 %v1189, %v1637
      %v1702 = vmul.f32 %v1190, %v1638
      %v1703 = vmul.f32 %v1191, %v1639
      %v1704 = vmul.f32 %v1192, %v1640
      %v1705 = vmul.f32 %v1193, %v1641
      %v1706 = vmul.f32 %v1194, %v1642
      %v1707 = vmul.f32 %v1195, %v1643
      %v1708 = vmul.f32 %v1196, %v1644
      %v1709 = vmul.f32 %v1197, %v1645
      %v1710 = vmul.f32 %v1198, %v1646
      %v1711 = vmul.f32 %v1199, %v1647
      %v1712 = vmul.f32 %v1200, %v1648
      %v1713 = vmul.f32 %v1201, %v1649
      %v1714 = vmul.f32 %v1202, %v1650
      %v1715 = vmul.f32 %v1203, %v1651
      %v1716 = vmul.f32 %v1204, %v1652
      %v1717 = vmul.f32 %v1205, %v1653
      %v1718 = vmul.f32 %v1206, %v1654
      %v1719 = vmul.f32 %v1207, %v1655
      %v1720 = vmul.f32 %v1208, %v1656
      %v1721 = vmul.f32 %v1209, %v1657
      %v1722 = vmul.f32 %v1210, %v1658
      %v1723 = vmul.f32 %v1211, %v1659
      %v1724 = vmul.f32 %v1212, %v1660
      %v1725 = vmul.f32 %v1213, %v1661
      %v1726 = vmul.f32 %v1214, %v1662
      %v1727 = vmul.f32 %v1215, %v1663
      %v1728 = vmul.f32 %v1216, %v1664
      %v1729 = vmul.f32 %v1665, %v898
      %v1730 = vmul.f32 %v1666, %v900
      %v1731 = vmul.f32 %v1667, %v1059
      %v1732 = vmul.f32 %v1668, %v1061
      %v1733 = vmul.f32 %v1669, %v904
      %v1734 = vmul.f32 %v1670, %v906
      %v1735 = vmul.f32 %v1671, %v1065
      %v1736 = vmul.f32 %v1672, %v1067
      %v1737 = vmul.f32 %v1673, %v910
      %v1738 = vmul.f32 %v1674, %v912
      %v1739 = vmul.f32 %v1675, %v1071
      %v1740 = vmul.f32 %v1676, %v1073
      %v1741 = vmul.f32 %v1677, %v916
      %v1742 = vmul.f32 %v1678, %v918
      %v1743 = vmul.f32 %v1679, %v1077
      %v1744 = vmul.f32 %v1680, %v1079
      %v1745 = vmul.f32 %v1681, %v922
      %v1746 = vmul.f32 %v1682, %v924
      %v1747 = vmul.f32 %v1683, %v1083
      %v1748 = vmul.f32 %v1684, %v1085
      %v1749 = vmul.f32 %v1685, %v928
      %v1750 = vmul.f32 %v1686, %v930
      %v1751 = vmul.f32 %v1687, %v1089
      %v1752 = vmul.f32 %v1688, %v1091
      %v1753 = vmul.f32 %v1689, %v934
      %v1754 = vmul.f32 %v1690, %v936
      %v1755 = vmul.f32 %v1691, %v1095
      %v1756 = vmul.f32 %v1692, %v1097
      %v1757 = vmul.f32 %v1693, %v940
      %v1758 = vmul.f32 %v1694, %v942
      %v1759 = vmul.f32 %v1695, %v1101
      %v1760 = vmul.f32 %v1696, %v1103
      %v1761 = vmul.f32 %v1697, %v946
      %v1762 = vmul.f32 %v1698, %v948
      %v1763 = vmul.f32 %v1699, %v1107
      %v1764 = vmul.f32 %v1700, %v1109
      %v1765 = vmul.f32 %v1701, %v952
      %v1766 = vmul.f32 %v1702, %v954
      %v1767 = vmul.f32 %v1703, %v1113
      %v1768 = vmul.f32 %v1704, %v1115
      %v1769 = vmul.f32 %v1705, %v958
      %v1770 = vmul.f32 %v1706, %v960
      %v1771 = vmul.f32 %v1707, %v1119
      %v1772 = vmul.f32 %v1708, %v1121
      %v1773 = vmul.f32 %v1709, %v964
      %v1774 = vmul.f32 %v1710, %v966
      %v1775 = vmul.f32 %v1711, %v1125
      %v1776 = vmul.f32 %v1712, %v1127
      %v1777 = vmul.f32 %v1713, %v970
      %v1778 = vmul.f32 %v1714, %v972
      %v1779 = vmul.f32 %v1715, %v1131
      %v1780 = vmul.f32 %v1716, %v1133
      %v1781 = vmul.f32 %v1717, %v976
      %v1782 = vmul.f32 %v1718, %v978
      %v1783 = vmul.f32 %v1719, %v1137
      %v1784 = vmul.f32 %v1720, %v1139
      %v1785 = vmul.f32 %v1721, %v982
      %v1786 = vmul.f32 %v1722, %v984
      %v1787 = vmul.f32 %v1723, %v1143
      %v1788 = vmul.f32 %v1724, %v1145
      %v1789 = vmul.f32 %v1725, %v988
      %v1790 = vmul.f32 %v1726, %v990
      %v1791 = vmul.f32 %v1727, %v1149
      %v1792 = vmul.f32 %v1728, %v1151
      %1793 = vst [vmem:[%s177] sm:$0xff] %v1729
      %1794 = vst [vmem:[%s177 + $0x8] sm:$0xff] %v1730
      %1795 = vst [vmem:[%s177 + $0x10] sm:$0xff] %v1731
      %1796 = vst [vmem:[%s177 + $0x18] sm:$0xff] %v1732
      %1797 = vst [vmem:[%s177 + $0x20] sm:$0xff] %v1733
      %1798 = vst [vmem:[%s177 + $0x28] sm:$0xff] %v1734
      %1799 = vst [vmem:[%s177 + $0x30] sm:$0xff] %v1735
      %1800 = vst [vmem:[%s177 + $0x38] sm:$0xff] %v1736
      %1801 = vst [vmem:[%s177 + $0x40] sm:$0xff] %v1737
      %1802 = vst [vmem:[%s177 + $0x48] sm:$0xff] %v1738
      %1803 = vst [vmem:[%s177 + $0x50] sm:$0xff] %v1739
      %1804 = vst [vmem:[%s177 + $0x58] sm:$0xff] %v1740
      %1805 = vst [vmem:[%s177 + $0x60] sm:$0xff] %v1741
      %1806 = vst [vmem:[%s177 + $0x68] sm:$0xff] %v1742
      %1807 = vst [vmem:[%s177 + $0x70] sm:$0xff] %v1743
      %1808 = vst [vmem:[%s177 + $0x78] sm:$0xff] %v1744
      %1809 = vst [vmem:[%s177 + $0x80] sm:$0xff] %v1745
      %1810 = vst [vmem:[%s177 + $0x88] sm:$0xff] %v1746
      %1811 = vst [vmem:[%s177 + $0x90] sm:$0xff] %v1747
      %1812 = vst [vmem:[%s177 + $0x98] sm:$0xff] %v1748
      %1813 = vst [vmem:[%s177 + $0xa0] sm:$0xff] %v1749
      %1814 = vst [vmem:[%s177 + $0xa8] sm:$0xff] %v1750
      %1815 = vst [vmem:[%s177 + $0xb0] sm:$0xff] %v1751
      %1816 = vst [vmem:[%s177 + $0xb8] sm:$0xff] %v1752
      %1817 = vst [vmem:[%s177 + $0xc0] sm:$0xff] %v1753
      %1818 = vst [vmem:[%s177 + $0xc8] sm:$0xff] %v1754
      %1819 = vst [vmem:[%s177 + $0xd0] sm:$0xff] %v1755
      %1820 = vst [vmem:[%s177 + $0xd8] sm:$0xff] %v1756
      %1821 = vst [vmem:[%s177 + $0xe0] sm:$0xff] %v1757
      %1822 = vst [vmem:[%s177 + $0xe8] sm:$0xff] %v1758
      %1823 = vst [vmem:[%s177 + $0xf0] sm:$0xff] %v1759
      %1824 = vst [vmem:[%s177 + $0xf8] sm:$0xff] %v1760
      %1825 = vst [vmem:[%s177 + $0x100] sm:$0xff] %v1761
      %1826 = vst [vmem:[%s177 + $0x108] sm:$0xff] %v1762
      %1827 = vst [vmem:[%s177 + $0x110] sm:$0xff] %v1763
      %1828 = vst [vmem:[%s177 + $0x118] sm:$0xff] %v1764
      %1829 = vst [vmem:[%s177 + $0x120] sm:$0xff] %v1765
      %1830 = vst [vmem:[%s177 + $0x128] sm:$0xff] %v1766
      %1831 = vst [vmem:[%s177 + $0x130] sm:$0xff] %v1767
      %1832 = vst [vmem:[%s177 + $0x138] sm:$0xff] %v1768
      %1833 = vst [vmem:[%s177 + $0x140] sm:$0xff] %v1769
      %1834 = vst [vmem:[%s177 + $0x148] sm:$0xff] %v1770
      %1835 = vst [vmem:[%s177 + $0x150] sm:$0xff] %v1771
      %1836 = vst [vmem:[%s177 + $0x158] sm:$0xff] %v1772
      %1837 = vst [vmem:[%s177 + $0x160] sm:$0xff] %v1773
      %1838 = vst [vmem:[%s177 + $0x168] sm:$0xff] %v1774
      %1839 = vst [vmem:[%s177 + $0x170] sm:$0xff] %v1775
      %1840 = vst [vmem:[%s177 + $0x178] sm:$0xff] %v1776
      %1841 = vst [vmem:[%s177 + $0x180] sm:$0xff] %v1777
      %1842 = vst [vmem:[%s177 + $0x188] sm:$0xff] %v1778
      %1843 = vst [vmem:[%s177 + $0x190] sm:$0xff] %v1779
      %1844 = vst [vmem:[%s177 + $0x198] sm:$0xff] %v1780
      %1845 = vst [vmem:[%s177 + $0x1a0] sm:$0xff] %v1781
      %1846 = vst [vmem:[%s177 + $0x1a8] sm:$0xff] %v1782
      %1847 = vst [vmem:[%s177 + $0x1b0] sm:$0xff] %v1783
      %1848 = vst [vmem:[%s177 + $0x1b8] sm:$0xff] %v1784
      %1849 = vst [vmem:[%s177 + $0x1c0] sm:$0xff] %v1785
      %1850 = vst [vmem:[%s177 + $0x1c8] sm:$0xff] %v1786
      %1851 = vst [vmem:[%s177 + $0x1d0] sm:$0xff] %v1787
      %1852 = vst [vmem:[%s177 + $0x1d8] sm:$0xff] %v1788
      %1853 = vst [vmem:[%s177 + $0x1e0] sm:$0xff] %v1789
      %1854 = vst [vmem:[%s177 + $0x1e8] sm:$0xff] %v1790
      %1855 = vst [vmem:[%s177 + $0x1f0] sm:$0xff] %v1791
      %1856 = vst [vmem:[%s177 + $0x1f8] sm:$0xff] %v1792
      %s1857 = smul.u32 16, %s14
      %p1858 = scmp.lt.s32.totalorder %s1857, 31
      %s1859 = scalar_select %p1858, %s1857, 31
      %s1860 = smul.addr %s1859, 4
      %s1861 = smul.addr %s1860, 8
      %s1862 = scalar_lea.vmem %s3, %s1861
      // Predicated region
      $region33: #{_lambda_.17} parent=31 // pred_check
        %p1863 = pneg %p100
      $region34: #{_lambda_.17} parent=31 // pred_check_branch
        %1865 = sbr.rel (%p1863) target = $region36
      $region35: #{_lambda_.17} parent=31 // pred_region
        %s1866 = smul.u32 16, %s14
      $region36: #{_lambda_.17} parent=31 // pred_fallthru
        _
    $region32: #{_lambda_.17} parent=5 // pred_fallthru
      _
    %p1867 = scmp.le.s32.totalorder 2, %s9
    // Predicated region
    $region37: #{_lambda_.17} parent=5 // pred_check
      %p1868 = pneg %p1867
    $region38: #{_lambda_.17} parent=5 // pred_check_branch
      %1870 = sbr.rel (%p1868) target = $region40
    $region39: #{_lambda_.17} parent=5 // pred_region
      %s1871 = ssub.s32 %s9, 2
      // Predicated region
      $region41: #{_lambda_.17} parent=39 // pred_check
        %p1872 = pneg %p106
      $region42: #{_lambda_.17} parent=39 // pred_check_branch
        %1874 = sbr.rel (%p1872) target = $region44
      $region43: #{_lambda_.17} parent=39 // pred_region
        %s1875 = smul.u32 16, %s15
        %p1876 = scmp.lt.s32.totalorder %s1875, 31
        %s1877 = scalar_select %p1876, %s1875, 31
        %s1878 = smul.addr %s1877, 4
        %s1879 = smul.addr %s1878, 8
        %s1880 = scalar_lea.vmem %s3, %s1879
      $region44: #{_lambda_.17} parent=39 // pred_fallthru
        _
    $region40: #{_lambda_.17} parent=5 // pred_fallthru
      _
  $region6: #{_lambda_.17} parent=0 // loop_footer
    %s13 = sadd.s32 1, %s9
  $region7: #{_lambda_.17} parent=0 // loop_footer_branch
    %8 = sbr.rel target = $region3
  $region8: #{_lambda_.17} parent=0 // loop_exit
    _

// kernel: _lambda_.24
$region0: #{_lambda_.24}
  #allocation0 [shape = 'u32[]', space=smem, size = 0x4, offset = 0x4, fixed_abs, tag = 'smem constant byte address 0x4 - core index']
  #allocation1 [shape = 'u32[144,128]{1,0:T(1,128)}', space=vmem, size = 0x12000, scoped, tag = 'internal scratch']
  %s0 = inlined_call_operand.vmem [shape: f32[256,256], index: 0, kind: input, shape index: {}]
  %s1 = inlined_call_operand.vmem [shape: f32[256,256], index: 1, kind: input, shape index: {}]
  %s2 = inlined_call_operand.vmem [shape: f32[1,256], index: 2, kind: input, shape index: {}]
  %s3 = inlined_call_operand.vmem [shape: f32[256,256], index: 3, kind: output, shape index: {}]
  %s4 = sld [smem:[#allocation0]]
  $region45: #{_lambda_.24} parent=0
    _
  %s6 = ssub.s32 1, %s4
  %s7 = scalar_select 0, %s6, %s4
  loop: start=0, step=1, limit=4
  $region2: #{_lambda_.24} parent=0 // loop_pre_header
    _
  $region3: #{_lambda_.24} parent=0 // loop_header
    %s9 = sphi 0, %s13
    %p10 = scmp.ge.s32.totalorder %s9, 4
    %s19 = sphi 0, %s21
    %s22 = sphi 0, %s19
    %s23 = sphi 0, %s22
    %s39 = sphi 0, %s23
    %s43 = sphi 0, %s43
    %s45 = sphi 0, %s43
    %s46 = sphi 0, %s45
    %s60 = sphi 0, %s46
    %s64 = sphi 0, %s64
    %s66 = sphi 0, %s64
    %s67 = sphi 0, %s66
    %s81 = sphi 0, %s67
    %s87 = sphi 0, %s89
    %s90 = sphi 0, %s87
    %s91 = sphi 0, %s90
    %s107 = sphi 0, %s91
  $region4: #{_lambda_.24} parent=0 // loop_header_branch
    %12 = sbr.rel (%p10) target = $region8
  $region5: #{_lambda_.24} parent=0 // loop_body
    %s14 = ssub.s32 %s9, 1
    %s15 = ssub.s32 %s9, 2
    %s16 = sadd.s32 %s9, 1
    %s17 = ssub.s32 %s9, %s16
    %p18 = scmp.eq.s32.totalorder %s17, 0
    %s20 = sadd.s32 %s19, 1
    %s21 = scalar_select %p18, %s19, %s20
    %p24 = pneg %p18
    %p25 = scmp.eq.s32.totalorder %s9, 1
    %p26 = por %p24, %p25
    %p27 = scmp.ne.s32.totalorder %s19, %s22
    %p28 = scmp.eq.s32.totalorder %s9, 0
    %p29 = por %p27, %p28
    %p30 = scmp.ne.s32.totalorder %s19, %s22
    %p31 = scmp.eq.s32.totalorder %s14, 1
    %p32 = por %p30, %p31
    %p33 = scmp.ne.s32.totalorder %s22, %s23
    %p34 = scmp.eq.s32.totalorder %s14, 0
    %p35 = por %p33, %p34
    %p36 = scmp.ne.s32.totalorder %s22, %s23
    %p37 = scmp.eq.s32.totalorder %s15, 1
    %p38 = por %p36, %p37
    %p40 = scmp.ne.s32.totalorder %s23, %s39
    %p41 = scmp.eq.s32.totalorder %s15, 0
    %p42 = por %p40, %p41
    %s44 = sadd.s32 %s43, 1
    %p47 = scmp.eq.s32.totalorder %s9, 1
    %p48 = scmp.ne.s32.totalorder %s43, %s45
    %p49 = scmp.eq.s32.totalorder %s9, 0
    %p50 = por %p48, %p49
    %p51 = scmp.ne.s32.totalorder %s43, %s45
    %p52 = scmp.eq.s32.totalorder %s14, 1
    %p53 = por %p51, %p52
    %p54 = scmp.ne.s32.totalorder %s45, %s46
    %p55 = scmp.eq.s32.totalorder %s14, 0
    %p56 = por %p54, %p55
    %p57 = scmp.ne.s32.totalorder %s45, %s46
    %p58 = scmp.eq.s32.totalorder %s15, 1
    %p59 = por %p57, %p58
    %p61 = scmp.ne.s32.totalorder %s46, %s60
    %p62 = scmp.eq.s32.totalorder %s15, 0
    %p63 = por %p61, %p62
    %s65 = sadd.s32 %s64, 1
    %p68 = scmp.eq.s32.totalorder %s9, 1
    %p69 = scmp.ne.s32.totalorder %s64, %s66
    %p70 = scmp.eq.s32.totalorder %s9, 0
    %p71 = por %p69, %p70
    %p72 = scmp.ne.s32.totalorder %s64, %s66
    %p73 = scmp.eq.s32.totalorder %s14, 1
    %p74 = por %p72, %p73
    %p75 = scmp.ne.s32.totalorder %s66, %s67
    %p76 = scmp.eq.s32.totalorder %s14, 0
    %p77 = por %p75, %p76
    %p78 = scmp.ne.s32.totalorder %s66, %s67
    %p79 = scmp.eq.s32.totalorder %s15, 1
    %p80 = por %p78, %p79
    %p82 = scmp.ne.s32.totalorder %s67, %s81
    %p83 = scmp.eq.s32.totalorder %s15, 0
    %p84 = por %p82, %p83
    %s85 = ssub.s32 %s9, %s16
    %p86 = scmp.eq.s32.totalorder %s85, 0
    %s88 = sadd.s32 %s87, 1
    %s89 = scalar_select %p86, %s87, %s88
    %p92 = pneg %p86
    %p93 = scmp.eq.s32.totalorder %s9, 1
    %p94 = por %p92, %p93
    %p95 = scmp.ne.s32.totalorder %s87, %s90
    %p96 = scmp.eq.s32.totalorder %s9, 0
    %p97 = por %p95, %p96
    %p98 = scmp.ne.s32.totalorder %s87, %s90
    %p99 = scmp.eq.s32.totalorder %s14, 1
    %p100 = por %p98, %p99
    %p101 = scmp.ne.s32.totalorder %s90, %s91
    %p102 = scmp.eq.s32.totalorder %s14, 0
    %p103 = por %p101, %p102
    %p104 = scmp.ne.s32.totalorder %s90, %s91
    %p105 = scmp.eq.s32.totalorder %s15, 1
    %p106 = por %p104, %p105
    %p108 = scmp.ne.s32.totalorder %s91, %s107
    %p109 = scmp.eq.s32.totalorder %s15, 0
    %p110 = por %p108, %p109
    %p111 = scmp.le.s32.totalorder 1, %s9
    %p112 = scmp.lt.s32.totalorder %s9, 3
    %p113 = pnand %p111, %p112
    %p114 = pneg %p113
    // Predicated region
    $region9: #{_lambda_.24} parent=5 // pred_check
      _
    $region10: #{_lambda_.24} parent=5 // pred_check_branch
      %116 = sbr.rel (%p113) target = $region12
    $region11: #{_lambda_.24} parent=5 // pred_region
      %s117 = ssub.s32 %s9, 1
      // Predicated region
      $region13: #{_lambda_.24} parent=11 // pred_check
        %p118 = pneg %p56
      $region14: #{_lambda_.24} parent=11 // pred_check_branch
        %120 = sbr.rel (%p118) target = $region16
      $region15: #{_lambda_.24} parent=11 // pred_region
        _
      $region16: #{_lambda_.24} parent=11 // pred_fallthru
        _
      // Predicated region
      $region17: #{_lambda_.24} parent=11 // pred_check
        %p121 = pneg %p77
      $region18: #{_lambda_.24} parent=11 // pred_check_branch
        %123 = sbr.rel (%p121) target = $region20
      $region19: #{_lambda_.24} parent=11 // pred_region
        _
      $region20: #{_lambda_.24} parent=11 // pred_fallthru
        _
    $region12: #{_lambda_.24} parent=5 // pred_fallthru
      _
    %p124 = scmp.lt.s32.totalorder %s9, 2
    // Predicated region
    $region21: #{_lambda_.24} parent=5 // pred_check
      %p125 = pneg %p124
    $region22: #{_lambda_.24} parent=5 // pred_check_branch
      %127 = sbr.rel (%p125) target = $region24
    $region23: #{_lambda_.24} parent=5 // pred_region
      // Predicated region
      $region25: #{_lambda_.24} parent=23 // pred_check
        %p128 = pneg %p29
      $region26: #{_lambda_.24} parent=23 // pred_check_branch
        %130 = sbr.rel (%p128) target = $region28
      $region27: #{_lambda_.24} parent=23 // pred_region
        %s131 = smul.u32 16, %s9
        %p132 = scmp.lt.s32.totalorder %s131, 31
        %s133 = scalar_select %p132, %s131, 31
        %s134 = smul.addr %s133, 2
        %s135 = smul.addr %s134, 8
        %s136 = scalar_lea.vmem %s0, %s135
        %s137 = smul.u32 16, %s9
      $region28: #{_lambda_.24} parent=23 // pred_fallthru
        _
    $region24: #{_lambda_.24} parent=5 // pred_fallthru
      _
    %p138 = scmp.le.s32.totalorder 1, %s9
    %p139 = scmp.lt.s32.totalorder %s9, 3
    %p140 = pnand %p138, %p139
    %p141 = pneg %p140
    // Predicated region
    $region29: #{_lambda_.24} parent=5 // pred_check
      _
    $region30: #{_lambda_.24} parent=5 // pred_check_branch
      %143 = sbr.rel (%p140) target = $region32
    $region31: #{_lambda_.24} parent=5 // pred_region
      %s144 = ssub.s32 %s9, 1
      %s145 = smul.u32 16, %s14
      %p146 = scmp.lt.s32.totalorder %s145, 31
      %s147 = scalar_select %p146, %s145, 31
      %s148 = smul.addr %s147, 2
      %s149 = smul.addr %s148, 8
      %s150 = scalar_lea.vmem %s0, %s149
      %p151 = pneg %p35
      %p152 = pneg %p32
      %p153 = pneg %p56
      %p154 = pneg %p53
      %p155 = pneg %p77
      %p156 = pneg %p74
      %p157 = pneg %p103
      %p158 = pneg %p100
      %s159 = smul.u32 16, %s14
      %p160 = scmp.lt.s32.totalorder %s159, 31
      %s161 = scalar_select %p160, %s159, 31
      %s162 = smul.addr %s161, 2
      %s163 = smul.addr %s162, 8
      %s164 = scalar_lea.vmem %s3, %s163
      %s165 = smul.u32 16, %s14
      %p166 = scmp.lt.s32.totalorder %s165, 31
      %s167 = scalar_select %p166, %s165, 31
      %s168 = smul.addr %s167, 2
      %s169 = smul.addr %s168, 8
      %s170 = scalar_lea.vmem %s0, %s169
      %s171 = smul.u32 16, %s14
      %s172 = smul.u32 16, %s14
      %p173 = scmp.lt.s32.totalorder %s172, 31
      %s174 = scalar_select %p173, %s172, 31
      %s175 = smul.addr %s174, 2
      %s176 = smul.addr %s175, 8
      %s177 = scalar_lea.vmem %s3, %s176
      %s178 = smul.u32 16, %s14
      %v179 = vld [vmem:[%s170] sm:$0xff]
      %v180 = vld [vmem:[%s170 + $0x8] sm:$0xff]
      %v181 = vld [vmem:[%s170 + $0x10] sm:$0xff]
      %v182 = vld [vmem:[%s170 + $0x18] sm:$0xff]
      %v183 = vld [vmem:[%s170 + $0x20] sm:$0xff]
      %v184 = vld [vmem:[%s170 + $0x28] sm:$0xff]
      %v185 = vld [vmem:[%s170 + $0x30] sm:$0xff]
      %v186 = vld [vmem:[%s170 + $0x38] sm:$0xff]
      %v187 = vld [vmem:[%s170 + $0x40] sm:$0xff]
      %v188 = vld [vmem:[%s170 + $0x48] sm:$0xff]
      %v189 = vld [vmem:[%s170 + $0x50] sm:$0xff]
      %v190 = vld [vmem:[%s170 + $0x58] sm:$0xff]
      %v191 = vld [vmem:[%s170 + $0x60] sm:$0xff]
      %v192 = vld [vmem:[%s170 + $0x68] sm:$0xff]
      %v193 = vld [vmem:[%s170 + $0x70] sm:$0xff]
      %v194 = vld [vmem:[%s170 + $0x78] sm:$0xff]
      %v195 = vld [vmem:[%s170 + $0x80] sm:$0xff]
      %v196 = vld [vmem:[%s170 + $0x88] sm:$0xff]
      %v197 = vld [vmem:[%s170 + $0x90] sm:$0xff]
      %v198 = vld [vmem:[%s170 + $0x98] sm:$0xff]
      %v199 = vld [vmem:[%s170 + $0xa0] sm:$0xff]
      %v200 = vld [vmem:[%s170 + $0xa8] sm:$0xff]
      %v201 = vld [vmem:[%s170 + $0xb0] sm:$0xff]
      %v202 = vld [vmem:[%s170 + $0xb8] sm:$0xff]
      %v203 = vld [vmem:[%s170 + $0xc0] sm:$0xff]
      %v204 = vld [vmem:[%s170 + $0xc8] sm:$0xff]
      %v205 = vld [vmem:[%s170 + $0xd0] sm:$0xff]
      %v206 = vld [vmem:[%s170 + $0xd8] sm:$0xff]
      %v207 = vld [vmem:[%s170 + $0xe0] sm:$0xff]
      %v208 = vld [vmem:[%s170 + $0xe8] sm:$0xff]
      %v209 = vld [vmem:[%s170 + $0xf0] sm:$0xff]
      %v210 = vld [vmem:[%s170 + $0xf8] sm:$0xff]
      %v211 = vld [vmem:[%s1] sm:$0xff]
      %v212 = vld [vmem:[%s1 + $0x8] sm:$0xff]
      %v213 = vld [vmem:[%s1 + $0x10] sm:$0xff]
      %v214 = vld [vmem:[%s1 + $0x18] sm:$0xff]
      %v215 = vld [vmem:[%s1 + $0x20] sm:$0xff]
      %v216 = vld [vmem:[%s1 + $0x28] sm:$0xff]
      %v217 = vld [vmem:[%s1 + $0x30] sm:$0xff]
      %v218 = vld [vmem:[%s1 + $0x38] sm:$0xff]
      %v219 = vld [vmem:[%s1 + $0x40] sm:$0xff]
      %v220 = vld [vmem:[%s1 + $0x48] sm:$0xff]
      %v221 = vld [vmem:[%s1 + $0x50] sm:$0xff]
      %v222 = vld [vmem:[%s1 + $0x58] sm:$0xff]
      %v223 = vld [vmem:[%s1 + $0x60] sm:$0xff]
      %v224 = vld [vmem:[%s1 + $0x68] sm:$0xff]
      %v225 = vld [vmem:[%s1 + $0x70] sm:$0xff]
      %v226 = vld [vmem:[%s1 + $0x78] sm:$0xff]
      %v227 = vld [vmem:[%s1 + $0x80] sm:$0xff]
      %v228 = vld [vmem:[%s1 + $0x88] sm:$0xff]
      %v229 = vld [vmem:[%s1 + $0x90] sm:$0xff]
      %v230 = vld [vmem:[%s1 + $0x98] sm:$0xff]
      %v231 = vld [vmem:[%s1 + $0xa0] sm:$0xff]
      %v232 = vld [vmem:[%s1 + $0xa8] sm:$0xff]
      %v233 = vld [vmem:[%s1 + $0xb0] sm:$0xff]
      %v234 = vld [vmem:[%s1 + $0xb8] sm:$0xff]
      %v235 = vld [vmem:[%s1 + $0xc0] sm:$0xff]
      %v236 = vld [vmem:[%s1 + $0xc8] sm:$0xff]
      %v237 = vld [vmem:[%s1 + $0xd0] sm:$0xff]
      %v238 = vld [vmem:[%s1 + $0xd8] sm:$0xff]
      %v239 = vld [vmem:[%s1 + $0xe0] sm:$0xff]
      %v240 = vld [vmem:[%s1 + $0xe8] sm:$0xff]
      %v241 = vld [vmem:[%s1 + $0xf0] sm:$0xff]
      %v242 = vld [vmem:[%s1 + $0xf8] sm:$0xff]
      %v243 = vld [vmem:[%s1 + $0x100] sm:$0xff]
      %v244 = vld [vmem:[%s1 + $0x108] sm:$0xff]
      %v245 = vld [vmem:[%s1 + $0x110] sm:$0xff]
      %v246 = vld [vmem:[%s1 + $0x118] sm:$0xff]
      %v247 = vld [vmem:[%s1 + $0x120] sm:$0xff]
      %v248 = vld [vmem:[%s1 + $0x128] sm:$0xff]
      %v249 = vld [vmem:[%s1 + $0x130] sm:$0xff]
      %v250 = vld [vmem:[%s1 + $0x138] sm:$0xff]
      %v251 = vld [vmem:[%s1 + $0x140] sm:$0xff]
      %v252 = vld [vmem:[%s1 + $0x148] sm:$0xff]
      %v253 = vld [vmem:[%s1 + $0x150] sm:$0xff]
      %v254 = vld [vmem:[%s1 + $0x158] sm:$0xff]
      %v255 = vld [vmem:[%s1 + $0x160] sm:$0xff]
      %v256 = vld [vmem:[%s1 + $0x168] sm:$0xff]
      %v257 = vld [vmem:[%s1 + $0x170] sm:$0xff]
      %v258 = vld [vmem:[%s1 + $0x178] sm:$0xff]
      %v259 = vld [vmem:[%s1 + $0x180] sm:$0xff]
      %v260 = vld [vmem:[%s1 + $0x188] sm:$0xff]
      %v261 = vld [vmem:[%s1 + $0x190] sm:$0xff]
      %v262 = vld [vmem:[%s1 + $0x198] sm:$0xff]
      %v263 = vld [vmem:[%s1 + $0x1a0] sm:$0xff]
      %v264 = vld [vmem:[%s1 + $0x1a8] sm:$0xff]
      %v265 = vld [vmem:[%s1 + $0x1b0] sm:$0xff]
      %v266 = vld [vmem:[%s1 + $0x1b8] sm:$0xff]
      %v267 = vld [vmem:[%s1 + $0x1c0] sm:$0xff]
      %v268 = vld [vmem:[%s1 + $0x1c8] sm:$0xff]
      %v269 = vld [vmem:[%s1 + $0x1d0] sm:$0xff]
      %v270 = vld [vmem:[%s1 + $0x1d8] sm:$0xff]
      %v271 = vld [vmem:[%s1 + $0x1e0] sm:$0xff]
      %v272 = vld [vmem:[%s1 + $0x1e8] sm:$0xff]
      %v273 = vld [vmem:[%s1 + $0x1f0] sm:$0xff]
      %v274 = vld [vmem:[%s1 + $0x1f8] sm:$0xff]
      %v275 = vld [vmem:[%s2] sm:$0x3]
      %v277 = vlaneseq
      %v278 = vshrl.u32 %v277, 7
      %v279 = vsub.s32 0, %v278
      %v280 = vrot.slane %v275, %v279
      %v281 = vlaneseq
      %v282 = vshrl.u32 %v281, 7
      %v283 = vsub.s32 1, %v282
      %v284 = vrot.slane %v275, %v283
      %287 = vmatprep.subr.mxu0 %v212
      %288 = vmatpush1.msra.mxu0 %v211
      %289 = vmatprep.subr.mxu0 %v214
      %290 = vmatpush1.msra.mxu0 %v213
      %291 = vmatprep.subr.mxu0 %v216
      %292 = vmatpush1.msra.mxu0 %v215
      %293 = vmatprep.subr.mxu0 %v218
      %294 = vmatpush1.msra.mxu0 %v217
      %295 = vmatprep.subr.mxu0 %v220
      %296 = vmatpush1.msra.mxu0 %v219
      %297 = vmatprep.subr.mxu0 %v222
      %298 = vmatpush1.msra.mxu0 %v221
      %299 = vmatprep.subr.mxu0 %v224
      %300 = vmatpush1.msra.mxu0 %v223
      %301 = vmatprep.subr.mxu0 %v226
      %302 = vmatpush1.msra.mxu0 %v225
      %303 = vmatprep.subr.mxu0 %v228
      %304 = vmatpush1.msra.mxu0 %v227
      %305 = vmatprep.subr.mxu0 %v230
      %306 = vmatpush1.msra.mxu0 %v229
      %307 = vmatprep.subr.mxu0 %v232
      %308 = vmatpush1.msra.mxu0 %v231
      %309 = vmatprep.subr.mxu0 %v234
      %310 = vmatpush1.msra.mxu0 %v233
      %311 = vmatprep.subr.mxu0 %v236
      %312 = vmatpush1.msra.mxu0 %v235
      %313 = vmatprep.subr.mxu0 %v238
      %314 = vmatpush1.msra.mxu0 %v237
      %315 = vmatprep.subr.mxu0 %v240
      %316 = vmatpush1.msra.mxu0 %v239
      %317 = vmatprep.subr.mxu0 %v242
      %318 = vmatpush1.msra.mxu0 %v241
      %319 = vmatprep.subr.mxu0 %v244
      %320 = vmatpush1.msra.mxu0 %v243
      %321 = vmatprep.subr.mxu0 %v246
      %322 = vmatpush1.msra.mxu0 %v245
      %323 = vmatprep.subr.mxu0 %v248
      %324 = vmatpush1.msra.mxu0 %v247
      %325 = vmatprep.subr.mxu0 %v250
      %326 = vmatpush1.msra.mxu0 %v249
      %327 = vmatprep.subr.mxu0 %v252
      %328 = vmatpush1.msra.mxu0 %v251
      %329 = vmatprep.subr.mxu0 %v254
      %330 = vmatpush1.msra.mxu0 %v253
      %331 = vmatprep.subr.mxu0 %v256
      %332 = vmatpush1.msra.mxu0 %v255
      %333 = vmatprep.subr.mxu0 %v258
      %334 = vmatpush1.msra.mxu0 %v257
      %335 = vmatprep.subr.mxu0 %v260
      %336 = vmatpush1.msra.mxu0 %v259
      %337 = vmatprep.subr.mxu0 %v262
      %338 = vmatpush1.msra.mxu0 %v261
      %339 = vmatprep.subr.mxu0 %v264
      %340 = vmatpush1.msra.mxu0 %v263
      %341 = vmatprep.subr.mxu0 %v266
      %342 = vmatpush1.msra.mxu0 %v265
      %343 = vmatprep.subr.mxu0 %v268
      %344 = vmatpush1.msra.mxu0 %v267
      %345 = vmatprep.subr.mxu0 %v270
      %346 = vmatpush1.msra.mxu0 %v269
      %347 = vmatprep.subr.mxu0 %v272
      %348 = vmatpush1.msra.mxu0 %v271
      %349 = vmatprep.subr.mxu0 %v274
      %350 = vmatpush1.msra.mxu0 %v273
      %351 = vmatprep.mubr.f32.mxu0 %v180
      %352 = vmatmul.mubr.f32.gmra.mrb[0].mxu0 %v179
      %v353 = vpop.f32.mrb[0].mxu0
      %v354 = vadd.f32 %v280, %v353
      %v355 = vpop.f32.mrb[0].mxu0
      %v356 = vadd.f32 %v284, %v355
      %357 = vmatprep.mubr.f32.mxu0 %v182
      %358 = vmatmul.mubr.f32.gmra.mrb[0].mxu0 %v181
      %v359 = vpop.f32.mrb[0].mxu0
      %v360 = vadd.f32 %v280, %v359
      %v361 = vpop.f32.mrb[0].mxu0
      %v362 = vadd.f32 %v284, %v361
      %363 = vmatprep.mubr.f32.mxu0 %v184
      %364 = vmatmul.mubr.f32.gmra.mrb[0].mxu0 %v183
      %v365 = vpop.f32.mrb[0].mxu0
      %v366 = vadd.f32 %v280, %v365
      %v367 = vpop.f32.mrb[0].mxu0
      %v368 = vadd.f32 %v284, %v367
      %369 = vmatprep.mubr.f32.mxu0 %v186
      %370 = vmatmul.mubr.f32.gmra.mrb[0].mxu0 %v185
      %v371 = vpop.f32.mrb[0].mxu0
      %v372 = vadd.f32 %v280, %v371
      %v373 = vpop.f32.mrb[0].mxu0
      %v374 = vadd.f32 %v284, %v373
      %375 = vmatprep.mubr.f32.mxu0 %v188
      %376 = vmatmul.mubr.f32.gmra.mrb[0].mxu0 %v187
      %v377 = vpop.f32.mrb[0].mxu0
      %v378 = vadd.f32 %v280, %v377
      %v379 = vpop.f32.mrb[0].mxu0
      %v380 = vadd.f32 %v284, %v379
      %381 = vmatprep.mubr.f32.mxu0 %v190
      %382 = vmatmul.mubr.f32.gmra.mrb[0].mxu0 %v189
      %v383 = vpop.f32.mrb[0].mxu0
      %v384 = vadd.f32 %v280, %v383
      %v385 = vpop.f32.mrb[0].mxu0
      %v386 = vadd.f32 %v284, %v385
      %387 = vmatprep.mubr.f32.mxu0 %v192
      %388 = vmatmul.mubr.f32.gmra.mrb[0].mxu0 %v191
      %v389 = vpop.f32.mrb[0].mxu0
      %v390 = vadd.f32 %v280, %v389
      %v391 = vpop.f32.mrb[0].mxu0
      %v392 = vadd.f32 %v284, %v391
      %393 = vmatprep.mubr.f32.mxu0 %v194
      %394 = vmatmul.mubr.f32.gmra.mrb[0].mxu0 %v193
      %v395 = vpop.f32.mrb[0].mxu0
      %v396 = vadd.f32 %v280, %v395
      %v397 = vpop.f32.mrb[0].mxu0
      %v398 = vadd.f32 %v284, %v397
      %399 = vmatprep.mubr.f32.mxu0 %v196
      %400 = vmatmul.mubr.f32.gmra.mrb[0].mxu0 %v195
      %v401 = vpop.f32.mrb[0].mxu0
      %v402 = vadd.f32 %v280, %v401
      %v403 = vpop.f32.mrb[0].mxu0
      %v404 = vadd.f32 %v284, %v403
      %405 = vmatprep.mubr.f32.mxu0 %v198
      %406 = vmatmul.mubr.f32.gmra.mrb[0].mxu0 %v197
      %v407 = vpop.f32.mrb[0].mxu0
      %v408 = vadd.f32 %v280, %v407
      %v409 = vpop.f32.mrb[0].mxu0
      %v410 = vadd.f32 %v284, %v409
      %411 = vmatprep.mubr.f32.mxu0 %v200
      %412 = vmatmul.mubr.f32.gmra.mrb[0].mxu0 %v199
      %v413 = vpop.f32.mrb[0].mxu0
      %v414 = vadd.f32 %v280, %v413
      %v415 = vpop.f32.mrb[0].mxu0
      %v416 = vadd.f32 %v284, %v415
      %417 = vmatprep.mubr.f32.mxu0 %v202
      %418 = vmatmul.mubr.f32.gmra.mrb[0].mxu0 %v201
      %v419 = vpop.f32.mrb[0].mxu0
      %v420 = vadd.f32 %v280, %v419
      %v421 = vpop.f32.mrb[0].mxu0
      %v422 = vadd.f32 %v284, %v421
      %423 = vmatprep.mubr.f32.mxu0 %v204
      %424 = vmatmul.mubr.f32.gmra.mrb[0].mxu0 %v203
      %v425 = vpop.f32.mrb[0].mxu0
      %v426 = vadd.f32 %v280, %v425
      %v427 = vpop.f32.mrb[0].mxu0
      %v428 = vadd.f32 %v284, %v427
      %429 = vmatprep.mubr.f32.mxu0 %v206
      %430 = vmatmul.mubr.f32.gmra.mrb[0].mxu0 %v205
      %v431 = vpop.f32.mrb[0].mxu0
      %v432 = vadd.f32 %v280, %v431
      %v433 = vpop.f32.mrb[0].mxu0
      %v434 = vadd.f32 %v284, %v433
      %435 = vmatprep.mubr.f32.mxu0 %v208
      %436 = vmatmul.mubr.f32.gmra.mrb[0].mxu0 %v207
      %v437 = vpop.f32.mrb[0].mxu0
      %v438 = vadd.f32 %v280, %v437
      %v439 = vpop.f32.mrb[0].mxu0
      %v440 = vadd.f32 %v284, %v439
      %441 = vmatprep.mubr.f32.mxu0 %v210
      %442 = vmatmul.mubr.f32.gmra.mrb[0].mxu0 %v209
      %v443 = vpop.f32.mrb[0].mxu0
      %v444 = vadd.f32 %v280, %v443
      %v445 = vpop.f32.mrb[0].mxu0
      %v446 = vadd.f32 %v284, %v445
      %447 = vdwg.mxu0
      %v448 = vmul.f32 %v354, 0.5
      %v449 = vmul.f32 %v356, 0.5
      %v450 = vmul.f32 %v360, 0.5
      %v451 = vmul.f32 %v362, 0.5
      %v452 = vmul.f32 %v366, 0.5
      %v453 = vmul.f32 %v368, 0.5
      %v454 = vmul.f32 %v372, 0.5
      %v455 = vmul.f32 %v374, 0.5
      %v456 = vmul.f32 %v378, 0.5
      %v457 = vmul.f32 %v380, 0.5
      %v458 = vmul.f32 %v384, 0.5
      %v459 = vmul.f32 %v386, 0.5
      %v460 = vmul.f32 %v390, 0.5
      %v461 = vmul.f32 %v392, 0.5
      %v462 = vmul.f32 %v396, 0.5
      %v463 = vmul.f32 %v398, 0.5
      %v464 = vmul.f32 %v402, 0.5
      %v465 = vmul.f32 %v404, 0.5
      %v466 = vmul.f32 %v408, 0.5
      %v467 = vmul.f32 %v410, 0.5
      %v468 = vmul.f32 %v414, 0.5
      %v469 = vmul.f32 %v416, 0.5
      %v470 = vmul.f32 %v420, 0.5
      %v471 = vmul.f32 %v422, 0.5
      %v472 = vmul.f32 %v426, 0.5
      %v473 = vmul.f32 %v428, 0.5
      %v474 = vmul.f32 %v432, 0.5
      %v475 = vmul.f32 %v434, 0.5
      %v476 = vmul.f32 %v438, 0.5
      %v477 = vmul.f32 %v440, 0.5
      %v478 = vmul.f32 %v444, 0.5
      %v479 = vmul.f32 %v446, 0.5
      %v480 = vmul.f32 %v354, 0.044715
      %v481 = vmul.f32 %v356, 0.044715
      %v482 = vmul.f32 %v360, 0.044715
      %v483 = vmul.f32 %v362, 0.044715
      %v484 = vmul.f32 %v366, 0.044715
      %v485 = vmul.f32 %v368, 0.044715
      %v486 = vmul.f32 %v372, 0.044715
      %v487 = vmul.f32 %v374, 0.044715
      %v488 = vmul.f32 %v378, 0.044715
      %v489 = vmul.f32 %v380, 0.044715
      %v490 = vmul.f32 %v384, 0.044715
      %v491 = vmul.f32 %v386, 0.044715
      %v492 = vmul.f32 %v390, 0.044715
      %v493 = vmul.f32 %v392, 0.044715
      %v494 = vmul.f32 %v396, 0.044715
      %v495 = vmul.f32 %v398, 0.044715
      %v496 = vmul.f32 %v402, 0.044715
      %v497 = vmul.f32 %v404, 0.044715
      %v498 = vmul.f32 %v408, 0.044715
      %v499 = vmul.f32 %v410, 0.044715
      %v500 = vmul.f32 %v414, 0.044715
      %v501 = vmul.f32 %v416, 0.044715
      %v502 = vmul.f32 %v420, 0.044715
      %v503 = vmul.f32 %v422, 0.044715
      %v504 = vmul.f32 %v426, 0.044715
      %v505 = vmul.f32 %v428, 0.044715
      %v506 = vmul.f32 %v432, 0.044715
      %v507 = vmul.f32 %v434, 0.044715
      %v508 = vmul.f32 %v438, 0.044715
      %v509 = vmul.f32 %v440, 0.044715
      %v510 = vmul.f32 %v444, 0.044715
      %v511 = vmul.f32 %v446, 0.044715
      %v512 = vmul.f32 %v480, %v354
      %v513 = vmul.f32 %v481, %v356
      %v514 = vmul.f32 %v482, %v360
      %v515 = vmul.f32 %v483, %v362
      %v516 = vmul.f32 %v484, %v366
      %v517 = vmul.f32 %v485, %v368
      %v518 = vmul.f32 %v486, %v372
      %v519 = vmul.f32 %v487, %v374
      %v520 = vmul.f32 %v488, %v378
      %v521 = vmul.f32 %v489, %v380
      %v522 = vmul.f32 %v490, %v384
      %v523 = vmul.f32 %v491, %v386
      %v524 = vmul.f32 %v492, %v390
      %v525 = vmul.f32 %v493, %v392
      %v526 = vmul.f32 %v494, %v396
      %v527 = vmul.f32 %v495, %v398
      %v528 = vmul.f32 %v496, %v402
      %v529 = vmul.f32 %v497, %v404
      %v530 = vmul.f32 %v498, %v408
      %v531 = vmul.f32 %v499, %v410
      %v532 = vmul.f32 %v500, %v414
      %v533 = vmul.f32 %v501, %v416
      %v534 = vmul.f32 %v502, %v420
      %v535 = vmul.f32 %v503, %v422
      %v536 = vmul.f32 %v504, %v426
      %v537 = vmul.f32 %v505, %v428
      %v538 = vmul.f32 %v506, %v432
      %v539 = vmul.f32 %v507, %v434
      %v540 = vmul.f32 %v508, %v438
      %v541 = vmul.f32 %v509, %v440
      %v542 = vmul.f32 %v510, %v444
      %v543 = vmul.f32 %v511, %v446
      %v544 = vmul.f32 %v512, %v354
      %v545 = vmul.f32 %v513, %v356
      %v546 = vmul.f32 %v514, %v360
      %v547 = vmul.f32 %v515, %v362
      %v548 = vmul.f32 %v516, %v366
      %v549 = vmul.f32 %v517, %v368
      %v550 = vmul.f32 %v518, %v372
      %v551 = vmul.f32 %v519, %v374
      %v552 = vmul.f32 %v520, %v378
      %v553 = vmul.f32 %v521, %v380
      %v554 = vmul.f32 %v522, %v384
      %v555 = vmul.f32 %v523, %v386
      %v556 = vmul.f32 %v524, %v390
      %v557 = vmul.f32 %v525, %v392
      %v558 = vmul.f32 %v526, %v396
      %v559 = vmul.f32 %v527, %v398
      %v560 = vmul.f32 %v528, %v402
      %v561 = vmul.f32 %v529, %v404
      %v562 = vmul.f32 %v530, %v408
      %v563 = vmul.f32 %v531, %v410
      %v564 = vmul.f32 %v532, %v414
      %v565 = vmul.f32 %v533, %v416
      %v566 = vmul.f32 %v534, %v420
      %v567 = vmul.f32 %v535, %v422
      %v568 = vmul.f32 %v536, %v426
      %v569 = vmul.f32 %v537, %v428
      %v570 = vmul.f32 %v538, %v432
      %v571 = vmul.f32 %v539, %v434
      %v572 = vmul.f32 %v540, %v438
      %v573 = vmul.f32 %v541, %v440
      %v574 = vmul.f32 %v542, %v444
      %v575 = vmul.f32 %v543, %v446
      %v576 = vadd.f32 %v354, %v544
      %v577 = vadd.f32 %v356, %v545
      %v578 = vadd.f32 %v360, %v546
      %v579 = vadd.f32 %v362, %v547
      %v580 = vadd.f32 %v366, %v548
      %v581 = vadd.f32 %v368, %v549
      %v582 = vadd.f32 %v372, %v550
      %v583 = vadd.f32 %v374, %v551
      %v584 = vadd.f32 %v378, %v552
      %v585 = vadd.f32 %v380, %v553
      %v586 = vadd.f32 %v384, %v554
      %v587 = vadd.f32 %v386, %v555
      %v588 = vadd.f32 %v390, %v556
      %v589 = vadd.f32 %v392, %v557
      %v590 = vadd.f32 %v396, %v558
      %v591 = vadd.f32 %v398, %v559
      %v592 = vadd.f32 %v402, %v560
      %v593 = vadd.f32 %v404, %v561
      %v594 = vadd.f32 %v408, %v562
      %v595 = vadd.f32 %v410, %v563
      %v596 = vadd.f32 %v414, %v564
      %v597 = vadd.f32 %v416, %v565
      %v598 = vadd.f32 %v420, %v566
      %v599 = vadd.f32 %v422, %v567
      %v600 = vadd.f32 %v426, %v568
      %v601 = vadd.f32 %v428, %v569
      %v602 = vadd.f32 %v432, %v570
      %v603 = vadd.f32 %v434, %v571
      %v604 = vadd.f32 %v438, %v572
      %v605 = vadd.f32 %v440, %v573
      %v606 = vadd.f32 %v444, %v574
      %v607 = vadd.f32 %v446, %v575
      %v608 = vmul.f32 %v576, 0.7978846
      %v609 = vmul.f32 %v577, 0.7978846
      %v610 = vmul.f32 %v578, 0.7978846
      %v611 = vmul.f32 %v579, 0.7978846
      %v612 = vmul.f32 %v580, 0.7978846
      %v613 = vmul.f32 %v581, 0.7978846
      %v614 = vmul.f32 %v582, 0.7978846
      %v615 = vmul.f32 %v583, 0.7978846
      %v616 = vmul.f32 %v584, 0.7978846
      %v617 = vmul.f32 %v585, 0.7978846
      %v618 = vmul.f32 %v586, 0.7978846
      %v619 = vmul.f32 %v587, 0.7978846
      %v620 = vmul.f32 %v588, 0.7978846
      %v621 = vmul.f32 %v589, 0.7978846
      %v622 = vmul.f32 %v590, 0.7978846
      %v623 = vmul.f32 %v591, 0.7978846
      %v624 = vmul.f32 %v592, 0.7978846
      %v625 = vmul.f32 %v593, 0.7978846
      %v626 = vmul.f32 %v594, 0.7978846
      %v627 = vmul.f32 %v595, 0.7978846
      %v628 = vmul.f32 %v596, 0.7978846
      %v629 = vmul.f32 %v597, 0.7978846
      %v630 = vmul.f32 %v598, 0.7978846
      %v631 = vmul.f32 %v599, 0.7978846
      %v632 = vmul.f32 %v600, 0.7978846
      %v633 = vmul.f32 %v601, 0.7978846
      %v634 = vmul.f32 %v602, 0.7978846
      %v635 = vmul.f32 %v603, 0.7978846
      %v636 = vmul.f32 %v604, 0.7978846
      %v637 = vmul.f32 %v605, 0.7978846
      %v638 = vmul.f32 %v606, 0.7978846
      %v639 = vmul.f32 %v607, 0.7978846
      %v640 = vtanh.pop %v608
      %v641 = vtanh.pop %v609
      %v642 = vtanh.pop %v610
      %v643 = vtanh.pop %v611
      %v644 = vtanh.pop %v612
      %v645 = vtanh.pop %v613
      %v646 = vtanh.pop %v614
      %v647 = vtanh.pop %v615
      %v648 = vtanh.pop %v616
      %v649 = vtanh.pop %v617
      %v650 = vtanh.pop %v618
      %v651 = vtanh.pop %v619
      %v652 = vtanh.pop %v620
      %v653 = vtanh.pop %v621
      %v654 = vtanh.pop %v622
      %v655 = vtanh.pop %v623
      %v656 = vtanh.pop %v624
      %v657 = vtanh.pop %v625
      %v658 = vtanh.pop %v626
      %v659 = vtanh.pop %v627
      %v660 = vtanh.pop %v628
      %v661 = vtanh.pop %v629
      %v662 = vtanh.pop %v630
      %v663 = vtanh.pop %v631
      %v664 = vtanh.pop %v632
      %v665 = vtanh.pop %v633
      %v666 = vtanh.pop %v634
      %v667 = vtanh.pop %v635
      %v668 = vtanh.pop %v636
      %v669 = vtanh.pop %v637
      %v670 = vtanh.pop %v638
      %v671 = vtanh.pop %v639
      %v672 = vadd.f32 %v640, 1.0
      %v673 = vadd.f32 %v641, 1.0
      %v674 = vadd.f32 %v642, 1.0
      %v675 = vadd.f32 %v643, 1.0
      %v676 = vadd.f32 %v644, 1.0
      %v677 = vadd.f32 %v645, 1.0
      %v678 = vadd.f32 %v646, 1.0
      %v679 = vadd.f32 %v647, 1.0
      %v680 = vadd.f32 %v648, 1.0
      %v681 = vadd.f32 %v649, 1.0
      %v682 = vadd.f32 %v650, 1.0
      %v683 = vadd.f32 %v651, 1.0
      %v684 = vadd.f32 %v652, 1.0
      %v685 = vadd.f32 %v653, 1.0
      %v686 = vadd.f32 %v654, 1.0
      %v687 = vadd.f32 %v655, 1.0
      %v688 = vadd.f32 %v656, 1.0
      %v689 = vadd.f32 %v657, 1.0
      %v690 = vadd.f32 %v658, 1.0
      %v691 = vadd.f32 %v659, 1.0
      %v692 = vadd.f32 %v660, 1.0
      %v693 = vadd.f32 %v661, 1.0
      %v694 = vadd.f32 %v662, 1.0
      %v695 = vadd.f32 %v663, 1.0
      %v696 = vadd.f32 %v664, 1.0
      %v697 = vadd.f32 %v665, 1.0
      %v698 = vadd.f32 %v666, 1.0
      %v699 = vadd.f32 %v667, 1.0
      %v700 = vadd.f32 %v668, 1.0
      %v701 = vadd.f32 %v669, 1.0
      %v702 = vadd.f32 %v670, 1.0
      %v703 = vadd.f32 %v671, 1.0
      %v704 = vmul.f32 %v448, %v672
      %v705 = vmul.f32 %v449, %v673
      %v706 = vmul.f32 %v450, %v674
      %v707 = vmul.f32 %v451, %v675
      %v708 = vmul.f32 %v452, %v676
      %v709 = vmul.f32 %v453, %v677
      %v710 = vmul.f32 %v454, %v678
      %v711 = vmul.f32 %v455, %v679
      %v712 = vmul.f32 %v456, %v680
      %v713 = vmul.f32 %v457, %v681
      %v714 = vmul.f32 %v458, %v682
      %v715 = vmul.f32 %v459, %v683
      %v716 = vmul.f32 %v460, %v684
      %v717 = vmul.f32 %v461, %v685
      %v718 = vmul.f32 %v462, %v686
      %v719 = vmul.f32 %v463, %v687
      %v720 = vmul.f32 %v464, %v688
      %v721 = vmul.f32 %v465, %v689
      %v722 = vmul.f32 %v466, %v690
      %v723 = vmul.f32 %v467, %v691
      %v724 = vmul.f32 %v468, %v692
      %v725 = vmul.f32 %v469, %v693
      %v726 = vmul.f32 %v470, %v694
      %v727 = vmul.f32 %v471, %v695
      %v728 = vmul.f32 %v472, %v696
      %v729 = vmul.f32 %v473, %v697
      %v730 = vmul.f32 %v474, %v698
      %v731 = vmul.f32 %v475, %v699
      %v732 = vmul.f32 %v476, %v700
      %v733 = vmul.f32 %v477, %v701
      %v734 = vmul.f32 %v478, %v702
      %v735 = vmul.f32 %v479, %v703
      %736 = vst [vmem:[%s177] sm:$0xff] %v704
      %737 = vst [vmem:[%s177 + $0x8] sm:$0xff] %v705
      %738 = vst [vmem:[%s177 + $0x10] sm:$0xff] %v706
      %739 = vst [vmem:[%s177 + $0x18] sm:$0xff] %v707
      %740 = vst [vmem:[%s177 + $0x20] sm:$0xff] %v708
      %741 = vst [vmem:[%s177 + $0x28] sm:$0xff] %v709
      %742 = vst [vmem:[%s177 + $0x30] sm:$0xff] %v710
      %743 = vst [vmem:[%s177 + $0x38] sm:$0xff] %v711
      %744 = vst [vmem:[%s177 + $0x40] sm:$0xff] %v712
      %745 = vst [vmem:[%s177 + $0x48] sm:$0xff] %v713
      %746 = vst [vmem:[%s177 + $0x50] sm:$0xff] %v714
      %747 = vst [vmem:[%s177 + $0x58] sm:$0xff] %v715
      %748 = vst [vmem:[%s177 + $0x60] sm:$0xff] %v716
      %749 = vst [vmem:[%s177 + $0x68] sm:$0xff] %v717
      %750 = vst [vmem:[%s177 + $0x70] sm:$0xff] %v718
      %751 = vst [vmem:[%s177 + $0x78] sm:$0xff] %v719
      %752 = vst [vmem:[%s177 + $0x80] sm:$0xff] %v720
      %753 = vst [vmem:[%s177 + $0x88] sm:$0xff] %v721
      %754 = vst [vmem:[%s177 + $0x90] sm:$0xff] %v722
      %755 = vst [vmem:[%s177 + $0x98] sm:$0xff] %v723
      %756 = vst [vmem:[%s177 + $0xa0] sm:$0xff] %v724
      %757 = vst [vmem:[%s177 + $0xa8] sm:$0xff] %v725
      %758 = vst [vmem:[%s177 + $0xb0] sm:$0xff] %v726
      %759 = vst [vmem:[%s177 + $0xb8] sm:$0xff] %v727
      %760 = vst [vmem:[%s177 + $0xc0] sm:$0xff] %v728
      %761 = vst [vmem:[%s177 + $0xc8] sm:$0xff] %v729
      %762 = vst [vmem:[%s177 + $0xd0] sm:$0xff] %v730
      %763 = vst [vmem:[%s177 + $0xd8] sm:$0xff] %v731
      %764 = vst [vmem:[%s177 + $0xe0] sm:$0xff] %v732
      %765 = vst [vmem:[%s177 + $0xe8] sm:$0xff] %v733
      %766 = vst [vmem:[%s177 + $0xf0] sm:$0xff] %v734
      %767 = vst [vmem:[%s177 + $0xf8] sm:$0xff] %v735
      %s768 = smul.u32 16, %s14
      %p769 = scmp.lt.s32.totalorder %s768, 31
      %s770 = scalar_select %p769, %s768, 31
      %s771 = smul.addr %s770, 2
      %s772 = smul.addr %s771, 8
      %s773 = scalar_lea.vmem %s3, %s772
      // Predicated region
      $region33: #{_lambda_.24} parent=31 // pred_check
        %p774 = pneg %p100
      $region34: #{_lambda_.24} parent=31 // pred_check_branch
        %776 = sbr.rel (%p774) target = $region36
      $region35: #{_lambda_.24} parent=31 // pred_region
        %s777 = smul.u32 16, %s14
      $region36: #{_lambda_.24} parent=31 // pred_fallthru
        _
    $region32: #{_lambda_.24} parent=5 // pred_fallthru
      _
    %p778 = scmp.le.s32.totalorder 2, %s9
    // Predicated region
    $region37: #{_lambda_.24} parent=5 // pred_check
      %p779 = pneg %p778
    $region38: #{_lambda_.24} parent=5 // pred_check_branch
      %781 = sbr.rel (%p779) target = $region40
    $region39: #{_lambda_.24} parent=5 // pred_region
      %s782 = ssub.s32 %s9, 2
      // Predicated region
      $region41: #{_lambda_.24} parent=39 // pred_check
        %p783 = pneg %p106
      $region42: #{_lambda_.24} parent=39 // pred_check_branch
        %785 = sbr.rel (%p783) target = $region44
      $region43: #{_lambda_.24} parent=39 // pred_region
        %s786 = smul.u32 16, %s15
        %p787 = scmp.lt.s32.totalorder %s786, 31
        %s788 = scalar_select %p787, %s786, 31
        %s789 = smul.addr %s788, 2
        %s790 = smul.addr %s789, 8
        %s791 = scalar_lea.vmem %s3, %s790
      $region44: #{_lambda_.24} parent=39 // pred_fallthru
        _
    $region40: #{_lambda_.24} parent=5 // pred_fallthru
      _
  $region6: #{_lambda_.24} parent=0 // loop_footer
    %s13 = sadd.s32 1, %s9
  $region7: #{_lambda_.24} parent=0 // loop_footer_branch
    %8 = sbr.rel target = $region3
  $region8: #{_lambda_.24} parent=0 // loop_exit
    _

// kernel: _lambda_.25
$region0: #{_lambda_.25}
  #allocation0 [shape = 'u32[]', space=smem, size = 0x4, offset = 0x4, fixed_abs, tag = 'smem constant byte address 0x4 - core index']
  #allocation1 [shape = 'u32[144,128]{1,0:T(1,128)}', space=vmem, size = 0x12000, scoped, tag = 'internal scratch']
  %s0 = inlined_call_operand.vmem [shape: f32[256,256], index: 0, kind: input, shape index: {}]
  %s1 = inlined_call_operand.vmem [shape: f32[256,2], index: 1, kind: input, shape index: {}]
  %s2 = inlined_call_operand.vmem [shape: f32[1,2], index: 2, kind: input, shape index: {}]
  %s3 = inlined_call_operand.vmem [shape: f32[256,2], index: 3, kind: output, shape index: {}]
  %s4 = sld [smem:[#allocation0]]
  $region45: #{_lambda_.25} parent=0
    _
  %s6 = ssub.s32 1, %s4
  %s7 = scalar_select 0, %s6, %s4
  loop: start=0, step=1, limit=4
  $region2: #{_lambda_.25} parent=0 // loop_pre_header
    _
  $region3: #{_lambda_.25} parent=0 // loop_header
    %s9 = sphi 0, %s13
    %p10 = scmp.ge.s32.totalorder %s9, 4
    %s19 = sphi 0, %s21
    %s22 = sphi 0, %s19
    %s23 = sphi 0, %s22
    %s39 = sphi 0, %s23
    %s43 = sphi 0, %s43
    %s45 = sphi 0, %s43
    %s46 = sphi 0, %s45
    %s60 = sphi 0, %s46
    %s64 = sphi 0, %s64
    %s66 = sphi 0, %s64
    %s67 = sphi 0, %s66
    %s81 = sphi 0, %s67
    %s87 = sphi 0, %s89
    %s90 = sphi 0, %s87
    %s91 = sphi 0, %s90
    %s107 = sphi 0, %s91
  $region4: #{_lambda_.25} parent=0 // loop_header_branch
    %12 = sbr.rel (%p10) target = $region8
  $region5: #{_lambda_.25} parent=0 // loop_body
    %s14 = ssub.s32 %s9, 1
    %s15 = ssub.s32 %s9, 2
    %s16 = sadd.s32 %s9, 1
    %s17 = ssub.s32 %s9, %s16
    %p18 = scmp.eq.s32.totalorder %s17, 0
    %s20 = sadd.s32 %s19, 1
    %s21 = scalar_select %p18, %s19, %s20
    %p24 = pneg %p18
    %p25 = scmp.eq.s32.totalorder %s9, 1
    %p26 = por %p24, %p25
    %p27 = scmp.ne.s32.totalorder %s19, %s22
    %p28 = scmp.eq.s32.totalorder %s9, 0
    %p29 = por %p27, %p28
    %p30 = scmp.ne.s32.totalorder %s19, %s22
    %p31 = scmp.eq.s32.totalorder %s14, 1
    %p32 = por %p30, %p31
    %p33 = scmp.ne.s32.totalorder %s22, %s23
    %p34 = scmp.eq.s32.totalorder %s14, 0
    %p35 = por %p33, %p34
    %p36 = scmp.ne.s32.totalorder %s22, %s23
    %p37 = scmp.eq.s32.totalorder %s15, 1
    %p38 = por %p36, %p37
    %p40 = scmp.ne.s32.totalorder %s23, %s39
    %p41 = scmp.eq.s32.totalorder %s15, 0
    %p42 = por %p40, %p41
    %s44 = sadd.s32 %s43, 1
    %p47 = scmp.eq.s32.totalorder %s9, 1
    %p48 = scmp.ne.s32.totalorder %s43, %s45
    %p49 = scmp.eq.s32.totalorder %s9, 0
    %p50 = por %p48, %p49
    %p51 = scmp.ne.s32.totalorder %s43, %s45
    %p52 = scmp.eq.s32.totalorder %s14, 1
    %p53 = por %p51, %p52
    %p54 = scmp.ne.s32.totalorder %s45, %s46
    %p55 = scmp.eq.s32.totalorder %s14, 0
    %p56 = por %p54, %p55
    %p57 = scmp.ne.s32.totalorder %s45, %s46
    %p58 = scmp.eq.s32.totalorder %s15, 1
    %p59 = por %p57, %p58
    %p61 = scmp.ne.s32.totalorder %s46, %s60
    %p62 = scmp.eq.s32.totalorder %s15, 0
    %p63 = por %p61, %p62
    %s65 = sadd.s32 %s64, 1
    %p68 = scmp.eq.s32.totalorder %s9, 1
    %p69 = scmp.ne.s32.totalorder %s64, %s66
    %p70 = scmp.eq.s32.totalorder %s9, 0
    %p71 = por %p69, %p70
    %p72 = scmp.ne.s32.totalorder %s64, %s66
    %p73 = scmp.eq.s32.totalorder %s14, 1
    %p74 = por %p72, %p73
    %p75 = scmp.ne.s32.totalorder %s66, %s67
    %p76 = scmp.eq.s32.totalorder %s14, 0
    %p77 = por %p75, %p76
    %p78 = scmp.ne.s32.totalorder %s66, %s67
    %p79 = scmp.eq.s32.totalorder %s15, 1
    %p80 = por %p78, %p79
    %p82 = scmp.ne.s32.totalorder %s67, %s81
    %p83 = scmp.eq.s32.totalorder %s15, 0
    %p84 = por %p82, %p83
    %s85 = ssub.s32 %s9, %s16
    %p86 = scmp.eq.s32.totalorder %s85, 0
    %s88 = sadd.s32 %s87, 1
    %s89 = scalar_select %p86, %s87, %s88
    %p92 = pneg %p86
    %p93 = scmp.eq.s32.totalorder %s9, 1
    %p94 = por %p92, %p93
    %p95 = scmp.ne.s32.totalorder %s87, %s90
    %p96 = scmp.eq.s32.totalorder %s9, 0
    %p97 = por %p95, %p96
    %p98 = scmp.ne.s32.totalorder %s87, %s90
    %p99 = scmp.eq.s32.totalorder %s14, 1
    %p100 = por %p98, %p99
    %p101 = scmp.ne.s32.totalorder %s90, %s91
    %p102 = scmp.eq.s32.totalorder %s14, 0
    %p103 = por %p101, %p102
    %p104 = scmp.ne.s32.totalorder %s90, %s91
    %p105 = scmp.eq.s32.totalorder %s15, 1
    %p106 = por %p104, %p105
    %p108 = scmp.ne.s32.totalorder %s91, %s107
    %p109 = scmp.eq.s32.totalorder %s15, 0
    %p110 = por %p108, %p109
    %p111 = scmp.le.s32.totalorder 1, %s9
    %p112 = scmp.lt.s32.totalorder %s9, 3
    %p113 = pnand %p111, %p112
    %p114 = pneg %p113
    // Predicated region
    $region9: #{_lambda_.25} parent=5 // pred_check
      _
    $region10: #{_lambda_.25} parent=5 // pred_check_branch
      %116 = sbr.rel (%p113) target = $region12
    $region11: #{_lambda_.25} parent=5 // pred_region
      %s117 = ssub.s32 %s9, 1
      // Predicated region
      $region13: #{_lambda_.25} parent=11 // pred_check
        %p118 = pneg %p56
      $region14: #{_lambda_.25} parent=11 // pred_check_branch
        %120 = sbr.rel (%p118) target = $region16
      $region15: #{_lambda_.25} parent=11 // pred_region
        _
      $region16: #{_lambda_.25} parent=11 // pred_fallthru
        _
      // Predicated region
      $region17: #{_lambda_.25} parent=11 // pred_check
        %p121 = pneg %p77
      $region18: #{_lambda_.25} parent=11 // pred_check_branch
        %123 = sbr.rel (%p121) target = $region20
      $region19: #{_lambda_.25} parent=11 // pred_region
        _
      $region20: #{_lambda_.25} parent=11 // pred_fallthru
        _
    $region12: #{_lambda_.25} parent=5 // pred_fallthru
      _
    %p124 = scmp.lt.s32.totalorder %s9, 2
    // Predicated region
    $region21: #{_lambda_.25} parent=5 // pred_check
      %p125 = pneg %p124
    $region22: #{_lambda_.25} parent=5 // pred_check_branch
      %127 = sbr.rel (%p125) target = $region24
    $region23: #{_lambda_.25} parent=5 // pred_region
      // Predicated region
      $region25: #{_lambda_.25} parent=23 // pred_check
        %p128 = pneg %p29
      $region26: #{_lambda_.25} parent=23 // pred_check_branch
        %130 = sbr.rel (%p128) target = $region28
      $region27: #{_lambda_.25} parent=23 // pred_region
        %s131 = smul.u32 16, %s9
        %p132 = scmp.lt.s32.totalorder %s131, 31
        %s133 = scalar_select %p132, %s131, 31
        %s134 = smul.addr %s133, 2
        %s135 = smul.addr %s134, 8
        %s136 = scalar_lea.vmem %s0, %s135
        %s137 = smul.u32 16, %s9
      $region28: #{_lambda_.25} parent=23 // pred_fallthru
        _
    $region24: #{_lambda_.25} parent=5 // pred_fallthru
      _
    %p138 = scmp.le.s32.totalorder 1, %s9
    %p139 = scmp.lt.s32.totalorder %s9, 3
    %p140 = pnand %p138, %p139
    %p141 = pneg %p140
    // Predicated region
    $region29: #{_lambda_.25} parent=5 // pred_check
      _
    $region30: #{_lambda_.25} parent=5 // pred_check_branch
      %143 = sbr.rel (%p140) target = $region32
    $region31: #{_lambda_.25} parent=5 // pred_region
      %s144 = ssub.s32 %s9, 1
      %s145 = smul.u32 16, %s14
      %p146 = scmp.lt.s32.totalorder %s145, 31
      %s147 = scalar_select %p146, %s145, 31
      %s148 = smul.addr %s147, 2
      %s149 = smul.addr %s148, 8
      %s150 = scalar_lea.vmem %s0, %s149
      %p151 = pneg %p35
      %p152 = pneg %p32
      %p153 = pneg %p56
      %p154 = pneg %p53
      %p155 = pneg %p77
      %p156 = pneg %p74
      %p157 = pneg %p103
      %p158 = pneg %p100
      %s159 = smul.u32 16, %s14
      %p160 = scmp.lt.s32.totalorder %s159, 31
      %s161 = scalar_select %p160, %s159, 31
      %s162 = smul.addr %s161, 8
      %s163 = scalar_lea.vmem %s3, %s162
      %s164 = smul.u32 16, %s14
      %p165 = scmp.lt.s32.totalorder %s164, 31
      %s166 = scalar_select %p165, %s164, 31
      %s167 = smul.addr %s166, 2
      %s168 = smul.addr %s167, 8
      %s169 = scalar_lea.vmem %s0, %s168
      %s170 = smul.u32 16, %s14
      %s171 = smul.u32 16, %s14
      %p172 = scmp.lt.s32.totalorder %s171, 31
      %s173 = scalar_select %p172, %s171, 31
      %s174 = smul.addr %s173, 8
      %s175 = scalar_lea.vmem %s3, %s174
      %s176 = smul.u32 16, %s14
      %v177 = vld [vmem:[%s169] sm:$0xff]
      %v178 = vld [vmem:[%s169 + $0x8] sm:$0xff]
      %v179 = vld [vmem:[%s169 + $0x10] sm:$0xff]
      %v180 = vld [vmem:[%s169 + $0x18] sm:$0xff]
      %v181 = vld [vmem:[%s169 + $0x20] sm:$0xff]
      %v182 = vld [vmem:[%s169 + $0x28] sm:$0xff]
      %v183 = vld [vmem:[%s169 + $0x30] sm:$0xff]
      %v184 = vld [vmem:[%s169 + $0x38] sm:$0xff]
      %v185 = vld [vmem:[%s169 + $0x40] sm:$0xff]
      %v186 = vld [vmem:[%s169 + $0x48] sm:$0xff]
      %v187 = vld [vmem:[%s169 + $0x50] sm:$0xff]
      %v188 = vld [vmem:[%s169 + $0x58] sm:$0xff]
      %v189 = vld [vmem:[%s169 + $0x60] sm:$0xff]
      %v190 = vld [vmem:[%s169 + $0x68] sm:$0xff]
      %v191 = vld [vmem:[%s169 + $0x70] sm:$0xff]
      %v192 = vld [vmem:[%s169 + $0x78] sm:$0xff]
      %v193 = vld [vmem:[%s169 + $0x80] sm:$0xff]
      %v194 = vld [vmem:[%s169 + $0x88] sm:$0xff]
      %v195 = vld [vmem:[%s169 + $0x90] sm:$0xff]
      %v196 = vld [vmem:[%s169 + $0x98] sm:$0xff]
      %v197 = vld [vmem:[%s169 + $0xa0] sm:$0xff]
      %v198 = vld [vmem:[%s169 + $0xa8] sm:$0xff]
      %v199 = vld [vmem:[%s169 + $0xb0] sm:$0xff]
      %v200 = vld [vmem:[%s169 + $0xb8] sm:$0xff]
      %v201 = vld [vmem:[%s169 + $0xc0] sm:$0xff]
      %v202 = vld [vmem:[%s169 + $0xc8] sm:$0xff]
      %v203 = vld [vmem:[%s169 + $0xd0] sm:$0xff]
      %v204 = vld [vmem:[%s169 + $0xd8] sm:$0xff]
      %v205 = vld [vmem:[%s169 + $0xe0] sm:$0xff]
      %v206 = vld [vmem:[%s169 + $0xe8] sm:$0xff]
      %v207 = vld [vmem:[%s169 + $0xf0] sm:$0xff]
      %v208 = vld [vmem:[%s169 + $0xf8] sm:$0xff]
      %v209 = vld [vmem:[%s1] sm:$0xff]
      %v210 = vld [vmem:[%s1 + $0x8] sm:$0xff]
      %v211 = vld [vmem:[%s1 + $0x10] sm:$0xff]
      %v212 = vld [vmem:[%s1 + $0x18] sm:$0xff]
      %v213 = vld [vmem:[%s1 + $0x20] sm:$0xff]
      %v214 = vld [vmem:[%s1 + $0x28] sm:$0xff]
      %v215 = vld [vmem:[%s1 + $0x30] sm:$0xff]
      %v216 = vld [vmem:[%s1 + $0x38] sm:$0xff]
      %v217 = vld [vmem:[%s1 + $0x40] sm:$0xff]
      %v218 = vld [vmem:[%s1 + $0x48] sm:$0xff]
      %v219 = vld [vmem:[%s1 + $0x50] sm:$0xff]
      %v220 = vld [vmem:[%s1 + $0x58] sm:$0xff]
      %v221 = vld [vmem:[%s1 + $0x60] sm:$0xff]
      %v222 = vld [vmem:[%s1 + $0x68] sm:$0xff]
      %v223 = vld [vmem:[%s1 + $0x70] sm:$0xff]
      %v224 = vld [vmem:[%s1 + $0x78] sm:$0xff]
      %v225 = vld [vmem:[%s1 + $0x80] sm:$0xff]
      %v226 = vld [vmem:[%s1 + $0x88] sm:$0xff]
      %v227 = vld [vmem:[%s1 + $0x90] sm:$0xff]
      %v228 = vld [vmem:[%s1 + $0x98] sm:$0xff]
      %v229 = vld [vmem:[%s1 + $0xa0] sm:$0xff]
      %v230 = vld [vmem:[%s1 + $0xa8] sm:$0xff]
      %v231 = vld [vmem:[%s1 + $0xb0] sm:$0xff]
      %v232 = vld [vmem:[%s1 + $0xb8] sm:$0xff]
      %v233 = vld [vmem:[%s1 + $0xc0] sm:$0xff]
      %v234 = vld [vmem:[%s1 + $0xc8] sm:$0xff]
      %v235 = vld [vmem:[%s1 + $0xd0] sm:$0xff]
      %v236 = vld [vmem:[%s1 + $0xd8] sm:$0xff]
      %v237 = vld [vmem:[%s1 + $0xe0] sm:$0xff]
      %v238 = vld [vmem:[%s1 + $0xe8] sm:$0xff]
      %v239 = vld [vmem:[%s1 + $0xf0] sm:$0xff]
      %v240 = vld [vmem:[%s1 + $0xf8] sm:$0xff]
      %v241 = vld [vmem:[%s2] sm:$0x1]
      %v243 = vlaneseq
      %v244 = vshrl.u32 %v243, 7
      %v245 = vsub.s32 0, %v244
      %v246 = vrot.slane %v241, %v245
      %248 = vmatprep.subr.mxu0 0.0
      %249 = vmatpush1.msra.mxu0 %v209
      %250 = vmatprep.subr.mxu0 0.0
      %251 = vmatpush1.msra.mxu0 %v210
      %252 = vmatprep.subr.mxu0 0.0
      %253 = vmatpush1.msra.mxu0 %v211
      %254 = vmatprep.subr.mxu0 0.0
      %255 = vmatpush1.msra.mxu0 %v212
      %256 = vmatprep.subr.mxu0 0.0
      %257 = vmatpush1.msra.mxu0 %v213
      %258 = vmatprep.subr.mxu0 0.0
      %259 = vmatpush1.msra.mxu0 %v214
      %260 = vmatprep.subr.mxu0 0.0
      %261 = vmatpush1.msra.mxu0 %v215
      %262 = vmatprep.subr.mxu0 0.0
      %263 = vmatpush1.msra.mxu0 %v216
      %264 = vmatprep.subr.mxu0 0.0
      %265 = vmatpush1.msra.mxu0 %v217
      %266 = vmatprep.subr.mxu0 0.0
      %267 = vmatpush1.msra.mxu0 %v218
      %268 = vmatprep.subr.mxu0 0.0
      %269 = vmatpush1.msra.mxu0 %v219
      %270 = vmatprep.subr.mxu0 0.0
      %271 = vmatpush1.msra.mxu0 %v220
      %272 = vmatprep.subr.mxu0 0.0
      %273 = vmatpush1.msra.mxu0 %v221
      %274 = vmatprep.subr.mxu0 0.0
      %275 = vmatpush1.msra.mxu0 %v222
      %276 = vmatprep.subr.mxu0 0.0
      %277 = vmatpush1.msra.mxu0 %v223
      %278 = vmatprep.subr.mxu0 0.0
      %279 = vmatpush1.msra.mxu0 %v224
      %280 = vmatprep.subr.mxu0 0.0
      %281 = vmatpush1.msra.mxu0 %v225
      %282 = vmatprep.subr.mxu0 0.0
      %283 = vmatpush1.msra.mxu0 %v226
      %284 = vmatprep.subr.mxu0 0.0
      %285 = vmatpush1.msra.mxu0 %v227
      %286 = vmatprep.subr.mxu0 0.0
      %287 = vmatpush1.msra.mxu0 %v228
      %288 = vmatprep.subr.mxu0 0.0
      %289 = vmatpush1.msra.mxu0 %v229
      %290 = vmatprep.subr.mxu0 0.0
      %291 = vmatpush1.msra.mxu0 %v230
      %292 = vmatprep.subr.mxu0 0.0
      %293 = vmatpush1.msra.mxu0 %v231
      %294 = vmatprep.subr.mxu0 0.0
      %295 = vmatpush1.msra.mxu0 %v232
      %296 = vmatprep.subr.mxu0 0.0
      %297 = vmatpush1.msra.mxu0 %v233
      %298 = vmatprep.subr.mxu0 0.0
      %299 = vmatpush1.msra.mxu0 %v234
      %300 = vmatprep.subr.mxu0 0.0
      %301 = vmatpush1.msra.mxu0 %v235
      %302 = vmatprep.subr.mxu0 0.0
      %303 = vmatpush1.msra.mxu0 %v236
      %304 = vmatprep.subr.mxu0 0.0
      %305 = vmatpush1.msra.mxu0 %v237
      %306 = vmatprep.subr.mxu0 0.0
      %307 = vmatpush1.msra.mxu0 %v238
      %308 = vmatprep.subr.mxu0 0.0
      %309 = vmatpush1.msra.mxu0 %v239
      %310 = vmatprep.subr.mxu0 0.0
      %311 = vmatpush1.msra.mxu0 %v240
      %312 = vmatprep.mubr.f32.mxu0 %v178
      %313 = vmatmul.mubr.f32.gmra.mrb[0].mxu0 %v177
      %v314 = vpop.f32.mrb[0].mxu0
      %v315 = vadd.f32 %v246, %v314
      %v316 = vpop.f32.mrb[0].mxu0
      %317 = vmatprep.mubr.f32.mxu0 %v180
      %318 = vmatmul.mubr.f32.gmra.mrb[0].mxu0 %v179
      %v319 = vpop.f32.mrb[0].mxu0
      %v320 = vadd.f32 %v246, %v319
      %v321 = vpop.f32.mrb[0].mxu0
      %322 = vmatprep.mubr.f32.mxu0 %v182
      %323 = vmatmul.mubr.f32.gmra.mrb[0].mxu0 %v181
      %v324 = vpop.f32.mrb[0].mxu0
      %v325 = vadd.f32 %v246, %v324
      %v326 = vpop.f32.mrb[0].mxu0
      %327 = vmatprep.mubr.f32.mxu0 %v184
      %328 = vmatmul.mubr.f32.gmra.mrb[0].mxu0 %v183
      %v329 = vpop.f32.mrb[0].mxu0
      %v330 = vadd.f32 %v246, %v329
      %v331 = vpop.f32.mrb[0].mxu0
      %332 = vmatprep.mubr.f32.mxu0 %v186
      %333 = vmatmul.mubr.f32.gmra.mrb[0].mxu0 %v185
      %v334 = vpop.f32.mrb[0].mxu0
      %v335 = vadd.f32 %v246, %v334
      %v336 = vpop.f32.mrb[0].mxu0
      %337 = vmatprep.mubr.f32.mxu0 %v188
      %338 = vmatmul.mubr.f32.gmra.mrb[0].mxu0 %v187
      %v339 = vpop.f32.mrb[0].mxu0
      %v340 = vadd.f32 %v246, %v339
      %v341 = vpop.f32.mrb[0].mxu0
      %342 = vmatprep.mubr.f32.mxu0 %v190
      %343 = vmatmul.mubr.f32.gmra.mrb[0].mxu0 %v189
      %v344 = vpop.f32.mrb[0].mxu0
      %v345 = vadd.f32 %v246, %v344
      %v346 = vpop.f32.mrb[0].mxu0
      %347 = vmatprep.mubr.f32.mxu0 %v192
      %348 = vmatmul.mubr.f32.gmra.mrb[0].mxu0 %v191
      %v349 = vpop.f32.mrb[0].mxu0
      %v350 = vadd.f32 %v246, %v349
      %v351 = vpop.f32.mrb[0].mxu0
      %352 = vmatprep.mubr.f32.mxu0 %v194
      %353 = vmatmul.mubr.f32.gmra.mrb[0].mxu0 %v193
      %v354 = vpop.f32.mrb[0].mxu0
      %v355 = vadd.f32 %v246, %v354
      %v356 = vpop.f32.mrb[0].mxu0
      %357 = vmatprep.mubr.f32.mxu0 %v196
      %358 = vmatmul.mubr.f32.gmra.mrb[0].mxu0 %v195
      %v359 = vpop.f32.mrb[0].mxu0
      %v360 = vadd.f32 %v246, %v359
      %v361 = vpop.f32.mrb[0].mxu0
      %362 = vmatprep.mubr.f32.mxu0 %v198
      %363 = vmatmul.mubr.f32.gmra.mrb[0].mxu0 %v197
      %v364 = vpop.f32.mrb[0].mxu0
      %v365 = vadd.f32 %v246, %v364
      %v366 = vpop.f32.mrb[0].mxu0
      %367 = vmatprep.mubr.f32.mxu0 %v200
      %368 = vmatmul.mubr.f32.gmra.mrb[0].mxu0 %v199
      %v369 = vpop.f32.mrb[0].mxu0
      %v370 = vadd.f32 %v246, %v369
      %v371 = vpop.f32.mrb[0].mxu0
      %372 = vmatprep.mubr.f32.mxu0 %v202
      %373 = vmatmul.mubr.f32.gmra.mrb[0].mxu0 %v201
      %v374 = vpop.f32.mrb[0].mxu0
      %v375 = vadd.f32 %v246, %v374
      %v376 = vpop.f32.mrb[0].mxu0
      %377 = vmatprep.mubr.f32.mxu0 %v204
      %378 = vmatmul.mubr.f32.gmra.mrb[0].mxu0 %v203
      %v379 = vpop.f32.mrb[0].mxu0
      %v380 = vadd.f32 %v246, %v379
      %v381 = vpop.f32.mrb[0].mxu0
      %382 = vmatprep.mubr.f32.mxu0 %v206
      %383 = vmatmul.mubr.f32.gmra.mrb[0].mxu0 %v205
      %v384 = vpop.f32.mrb[0].mxu0
      %v385 = vadd.f32 %v246, %v384
      %v386 = vpop.f32.mrb[0].mxu0
      %387 = vmatprep.mubr.f32.mxu0 %v208
      %388 = vmatmul.mubr.f32.gmra.mrb[0].mxu0 %v207
      %v389 = vpop.f32.mrb[0].mxu0
      %v390 = vadd.f32 %v246, %v389
      %v391 = vpop.f32.mrb[0].mxu0
      %392 = vdwg.mxu0
      %vm393 = vcmask 15360
      %394 = vst.msk [vmem:[%s175] sm:$0xff] %vm393, %v315
      %395 = vst.msk [vmem:[%s175 + $0x8] sm:$0xff] %vm393, %v320
      %396 = vst.msk [vmem:[%s175 + $0x10] sm:$0xff] %vm393, %v325
      %397 = vst.msk [vmem:[%s175 + $0x18] sm:$0xff] %vm393, %v330
      %398 = vst.msk [vmem:[%s175 + $0x20] sm:$0xff] %vm393, %v335
      %399 = vst.msk [vmem:[%s175 + $0x28] sm:$0xff] %vm393, %v340
      %400 = vst.msk [vmem:[%s175 + $0x30] sm:$0xff] %vm393, %v345
      %401 = vst.msk [vmem:[%s175 + $0x38] sm:$0xff] %vm393, %v350
      %402 = vst.msk [vmem:[%s175 + $0x40] sm:$0xff] %vm393, %v355
      %403 = vst.msk [vmem:[%s175 + $0x48] sm:$0xff] %vm393, %v360
      %404 = vst.msk [vmem:[%s175 + $0x50] sm:$0xff] %vm393, %v365
      %405 = vst.msk [vmem:[%s175 + $0x58] sm:$0xff] %vm393, %v370
      %406 = vst.msk [vmem:[%s175 + $0x60] sm:$0xff] %vm393, %v375
      %407 = vst.msk [vmem:[%s175 + $0x68] sm:$0xff] %vm393, %v380
      %408 = vst.msk [vmem:[%s175 + $0x70] sm:$0xff] %vm393, %v385
      %409 = vst.msk [vmem:[%s175 + $0x78] sm:$0xff] %vm393, %v390
      %s410 = smul.u32 16, %s14
      %p411 = scmp.lt.s32.totalorder %s410, 31
      %s412 = scalar_select %p411, %s410, 31
      %s413 = smul.addr %s412, 8
      %s414 = scalar_lea.vmem %s3, %s413
      // Predicated region
      $region33: #{_lambda_.25} parent=31 // pred_check
        %p415 = pneg %p100
      $region34: #{_lambda_.25} parent=31 // pred_check_branch
        %417 = sbr.rel (%p415) target = $region36
      $region35: #{_lambda_.25} parent=31 // pred_region
        %s418 = smul.u32 16, %s14
      $region36: #{_lambda_.25} parent=31 // pred_fallthru
        _
    $region32: #{_lambda_.25} parent=5 // pred_fallthru
      _
    %p419 = scmp.le.s32.totalorder 2, %s9
    // Predicated region
    $region37: #{_lambda_.25} parent=5 // pred_check
      %p420 = pneg %p419
    $region38: #{_lambda_.25} parent=5 // pred_check_branch
      %422 = sbr.rel (%p420) target = $region40
    $region39: #{_lambda_.25} parent=5 // pred_region
      %s423 = ssub.s32 %s9, 2
      // Predicated region
      $region41: #{_lambda_.25} parent=39 // pred_check
        %p424 = pneg %p106
      $region42: #{_lambda_.25} parent=39 // pred_check_branch
        %426 = sbr.rel (%p424) target = $region44
      $region43: #{_lambda_.25} parent=39 // pred_region
        %s427 = smul.u32 16, %s15
        %p428 = scmp.lt.s32.totalorder %s427, 31
        %s429 = scalar_select %p428, %s427, 31
        %s430 = smul.addr %s429, 8
        %s431 = scalar_lea.vmem %s3, %s430
      $region44: #{_lambda_.25} parent=39 // pred_fallthru
        _
    $region40: #{_lambda_.25} parent=5 // pred_fallthru
      _
  $region6: #{_lambda_.25} parent=0 // loop_footer
    %s13 = sadd.s32 1, %s9
  $region7: #{_lambda_.25} parent=0 // loop_footer_branch
    %8 = sbr.rel target = $region3
  $region8: #{_lambda_.25} parent=0 // loop_exit
    _

</llo_original>
